<compile_context>
chip_gen: v6e
topology: v6e:2x2x1
jax: 0.10.0
libtpu: 0.0.40
codegen_flags: <defaults>
</compile_context>

<pallas_src>
import functools
import math

import jax
import jax.numpy as jnp
from jax.experimental import pallas as pl
from jax.experimental.pallas import tpu as pltpu  # noqa: F401  (kept per template)


CFG = dict(
    img_size=16, patch=4, in_ch=3, hidden=32, heads=4, mlp_dim=64, layers=2,
    rr_dim=10, img_fea_dim=16, sex_dim=1, age_dim=1, num_classes=2,
)

LN_EPS = 1e-6      # ViT convention (torch LayerNorm default would be 1e-5)
N_CLIN = 4         # rr, img_fea, sex, age
NEG_INF = -1e9

# row indices inside each per-layer "vec" parameter block
V_LN1_G, V_LN1_B, V_BQ, V_BK, V_BV, V_BO, V_LN2_G, V_LN2_B = range(8)
V_BFC1 = 8                       # followed by nc rows of fc1 bias chunks, then bfc2
# rows inside the final "final_vec" block
F_NORM_G, F_NORM_B, F_HEAD_B = 0, 1, 2


def _round8(n):
    return -(-n // 8) * 8


def _layout(cfg):
    """Static row layout of the single packed parameter matrix `wp` (rows, H)."""
    H = cfg["hidden"]; L = cfg["layers"]; mlp = cfg["mlp_dim"]
    p = cfg["patch"]; P = (cfg["img_size"] // p) ** 2
    Cpp = cfg["in_ch"] * p * p
    assert mlp % H == 0 and mlp // H <= 7, "MLP packing assumes mlp_dim = k*hidden, k<=7"
    nc = mlp // H
    S_real = P + 1 + N_CLIN                       # 21 real tokens
    S_pad = _round8(S_real)                       # 24 -> per-batch offsets 8-aligned
    KC = cfg["rr_dim"] + cfg["img_fea_dim"] + cfg["sex_dim"] + cfg["age_dim"]
    KC_pad = _round8(KC + N_CLIN)                 # features + 4 bias-indicator cols

    off, r = {}, 0

    def take(name, n):
        nonlocal r
        off[name] = r
        r += _round8(n)

    take("patch_w", Cpp)
    take("clin_w", KC_pad)
    take("tok_bias", S_pad)
    for l in range(L):
        for nm in ("wq", "wk", "wv", "wo"):
            take(f"{nm}{l}", H)
        for c in range(nc):
            take(f"wfc1_{l}_{c}", H)
        for c in range(nc):
            take(f"wfc2_{l}_{c}", H)
        take(f"vec{l}", 16)
    take("final_vec", 8)
    take("head_w", H)
    off["_rows"] = r
    off["_meta"] = dict(H=H, L=L, mlp=mlp, nc=nc, P=P, Cpp=Cpp,
                        S_real=S_real, S_pad=S_pad, KC=KC, KC_pad=KC_pad)
    return off


def extract_patches(x, p):
    """NCHW -> (B, num_patches, C*p*p); matches Conv2d(kernel=stride=p) + flatten/T."""
    B, C, Hh, Ww = x.shape
    gh, gw = Hh // p, Ww // p
    x = x.reshape(B, C, gh, p, gw, p)
    x = jnp.transpose(x, (0, 2, 4, 1, 3, 5))
    return x.reshape(B, gh * gw, C * p * p)


# ----------------------------------------------------------------------------
# The single fused Pallas kernel
# ----------------------------------------------------------------------------

def _fused_forward_kernel(patches_ref, clin_ref, wp_ref,
                          logits_ref, pooled_ref, attn_ref,
                          *, B, heads, num_classes, lay):
    m = lay["_meta"]
    H, L, nc = m["H"], m["L"], m["nc"]
    P, S_real, S_pad = m["P"], m["S_real"], m["S_pad"]
    dh = H // heads
    BS = B * S_pad
    f32 = jnp.float32

    def blk(name, n):                 # static 8-aligned row-slab load from packed params
        o = lay[name]
        return wp_ref[o:o + n, :]

    def row(name, i):                 # single (1, H) parameter row
        o = lay[name] + i
        return wp_ref[o:o + 1, :]

    def layernorm(v, g, b):
        mu = jnp.mean(v, axis=-1, keepdims=True)
        var = jnp.mean((v - mu) ** 2, axis=-1, keepdims=True)
        return (v - mu) * jax.lax.rsqrt(var + LN_EPS) * g + b

    # ---------------- embeddings: everything stays in values/vregs ----------------
    emb = jnp.dot(patches_ref[...], blk("patch_w", m["Cpp"]),
                  preferred_element_type=f32)                         # (B*P, H)
    clin = jnp.dot(clin_ref[...], blk("clin_w", m["KC_pad"]),
                   preferred_element_type=f32)                        # (B*4, H) incl. bias
    tok_bias = blk("tok_bias", S_pad)                                 # (S_pad, H)

    n_pad_tok = S_pad - (1 + P + N_CLIN)
    pieces = []
    for b in range(B):
        pieces.append(jnp.zeros((1, H), f32))                         # cls slot (cls+pos in tok_bias)
        pieces.append(emb[b * P:(b + 1) * P, :])
        pieces.append(clin[b * N_CLIN:(b + 1) * N_CLIN, :])
        if n_pad_tok:
            pieces.append(jnp.zeros((n_pad_tok, H), f32))
    x = jnp.concatenate(pieces, axis=0) + jnp.concatenate([tok_bias] * B, axis=0)  # (BS, H)

    # ---------------- constant masks (hoisted out of the layer loop) ----------------
    ri = jax.lax.broadcasted_iota(jnp.int32, (BS, BS), 0)
    ci = jax.lax.broadcasted_iota(jnp.int32, (BS, BS), 1)
    valid = None
    for b in range(B):
        vb = ((ri >= b * S_pad) & (ri < (b + 1) * S_pad) &
              (ci >= b * S_pad) & (ci < b * S_pad + S_real))
        valid = vb if valid is None else (valid | vb)
    # same-batch AND real-key -> 0, else -1e9 (makes the block-diag softmax exact)
    neg_mask = jnp.where(valid, 0.0, NEG_INF).astype(f32)             # (BS, BS)

    lane = jax.lax.broadcasted_iota(jnp.int32, (1, H), 1)
    head_mask = [jnp.where((lane >= h * dh) & (lane < (h + 1) * dh), 1.0, 0.0).astype(f32)
                 for h in range(heads)]

    # ---------------- transformer blocks ----------------
    for l in range(L):
        vname = f"vec{l}"
        ln1_g, ln1_b = row(vname, V_LN1_G), row(vname, V_LN1_B)
        bq, bk = row(vname, V_BQ), row(vname, V_BK)
        bv, bo = row(vname, V_BV), row(vname, V_BO)
        ln2_g, ln2_b = row(vname, V_LN2_G), row(vname, V_LN2_B)
        bfc2 = row(vname, V_BFC1 + nc)

        # --- multi-head self attention (pre-norm); 1/sqrt(dh) folded into wq/bq ---
        xn = layernorm(x, ln1_g, ln1_b)
        qf = jnp.dot(xn, blk(f"wq{l}", H), preferred_element_type=f32) + bq
        kf = jnp.dot(xn, blk(f"wk{l}", H), preferred_element_type=f32) + bk
        vf = jnp.dot(xn, blk(f"wv{l}", H), preferred_element_type=f32) + bv

        ctx = None
        for h in range(heads):
            # Per-head scores over ALL batches at once; q is lane-masked to head h's
            # dh columns (zeros contribute nothing to the contraction), cross-batch
            # and pad-key entries are additively masked, so this equals the
            # per-(batch, head) softmax exactly.
            s = jax.lax.dot_general(qf * head_mask[h], kf,
                                    (((1,), (1,)), ((), ())),
                                    preferred_element_type=f32) + neg_mask
            s = s - jnp.max(s, axis=-1, keepdims=True)
            e = jnp.exp(s)
            p_ = e * pl.reciprocal(jnp.sum(e, axis=-1, keepdims=True), approx=True)
            # one contiguous (BS, BS) slab per (layer, head); wrapper slices the
            # per-batch diagonal (S, S) blocks back out.
            attn_ref[l * heads + h, :, :] = p_.astype(attn_ref.dtype)
            c = jnp.dot(p_, vf * head_mask[h], preferred_element_type=f32)
            ctx = c if ctx is None else ctx + c                       # heads land in their own cols
        x = x + jnp.dot(ctx, blk(f"wo{l}", H), preferred_element_type=f32) + bo

        # --- MLP (pre-norm); hidden dim processed in H-wide column chunks so all
        #     weights fit the single (rows, H) packed parameter array ---
        xn2 = layernorm(x, ln2_g, ln2_b)
        mlp_out = bfc2
        for c in range(nc):
            # TODO(synk): torch nn.GELU default is exact erf; tanh approximation used here.
            hck = jax.nn.gelu(
                jnp.dot(xn2, blk(f"wfc1_{l}_{c}", H), preferred_element_type=f32)
                + row(vname, V_BFC1 + c))
            mlp_out = mlp_out + jnp.dot(hck, blk(f"wfc2_{l}_{c}", H),
                                        preferred_element_type=f32)
        x = x + mlp_out

    # ------- final norm, mean-pool over the S_real real tokens, classification head -------
    fx = layernorm(x, row("final_vec", F_NORM_G), row("final_vec", F_NORM_B))
    pr = jax.lax.broadcasted_iota(jnp.int32, (B, BS), 0)
    pc = jax.lax.broadcasted_iota(jnp.int32, (B, BS), 1)
    pool_valid = (pc >= pr * S_pad) & (pc < pr * S_pad + S_real)
    pool_mat = jnp.where(pool_valid, 1.0 / S_real, 0.0).astype(f32)   # (B, BS)
    pooled = jnp.dot(pool_mat, fx, preferred_element_type=f32)        # (B, H)
    pooled_ref[...] = pooled.astype(pooled_ref.dtype)
    lg = jnp.dot(pooled, blk("head_w", H), preferred_element_type=f32) \
        + row("final_vec", F_HEAD_B)                                  # (B, H); real logits in cols 0:C
    logits_ref[...] = lg[:, :num_classes].astype(logits_ref.dtype)


# ----------------------------------------------------------------------------
# Parameters (packed into one flat array) & wrapper
# ----------------------------------------------------------------------------

def init_params(key, cfg=CFG):
    lay = _layout(cfg)
    m = lay["_meta"]
    H, L, nc, P, Cpp = m["H"], m["L"], m["nc"], m["P"], m["Cpp"]
    mlp, S_pad = m["mlp"], m["S_pad"]
    C = cfg["num_classes"]
    scale = 1.0 / math.sqrt(H // cfg["heads"])

    keys = iter(jax.random.split(key, 128))

    def nrm(shape, s=0.02):
        return s * jax.random.normal(next(keys), shape, jnp.float32)

    wp = jnp.zeros((lay["_rows"], H), jnp.float32)

    def put(name, val, row_off=0):
        nonlocal wp
        o = lay[name] + row_off
        wp = wp.at[o:o + val.shape[0], :val.shape[1]].set(val)

    # patch embedding (Conv2d kernel=stride=patch) as a (Cpp, H) matmul; its bias
    # is folded into tok_bias below.
    patch_w = nrm((Cpp, H))
    patch_b = jnp.zeros((1, H), jnp.float32)
    put("patch_w", patch_w)

    # clinical projections: per-token weight blocks stacked along K; the 4 bias
    # rows (rows KC..KC+3) are selected by the 1.0 indicator columns of the data.
    dims = (cfg["rr_dim"], cfg["img_fea_dim"], cfg["sex_dim"], cfg["age_dim"])
    o = 0
    for j, d in enumerate(dims):
        put("clin_w", nrm((d, H)), row_off=o)
        o += d
    # bias rows stay zero-initialized (as in the previous version)

    cls = nrm((1, H))
    pos = nrm((P + 1, H))
    tok_bias = jnp.zeros((S_pad, H), jnp.float32)
    tok_bias = tok_bias.at[0:1, :].set(cls + pos[0:1, :])              # cls + pos[0]
    tok_bias = tok_bias.at[1:P + 1, :].set(pos[1:, :] + patch_b)       # pos + conv bias
    put("tok_bias", tok_bias)

    for l in range(L):
        put(f"wq{l}", nrm((H, H)) * scale)        # softmax 1/sqrt(dh) folded into wq
        put(f"wk{l}", nrm((H, H)))
        put(f"wv{l}", nrm((H, H)))
        put(f"wo{l}", nrm((H, H)))
        wfc1 = nrm((H, mlp))
        wfc2 = nrm((mlp, H))
        for c in range(nc):
            put(f"wfc1_{l}_{c}", wfc1[:, c * H:(c + 1) * H])
            put(f"wfc2_{l}_{c}", wfc2[c * H:(c + 1) * H, :])
        vec = jnp.zeros((16, H), jnp.float32)
        vec = vec.at[V_LN1_G, :].set(1.0)
        vec = vec.at[V_LN2_G, :].set(1.0)
        # attention / MLP biases zero-init (a loaded bq would also be scaled by `scale`)
        put(f"vec{l}", vec)

    fv = jnp.zeros((8, H), jnp.float32)
    fv = fv.at[F_NORM_G, :].set(1.0)              # encoder_norm gamma
    put("final_vec", fv)
    head_w = jnp.zeros((H, H), jnp.float32).at[:, :C].set(nrm((H, C)))
    put("head_w", head_w)
    return {"wp": wp}


def llnm_forward(params, x, rr, img_fea, sex, age, cfg=CFG):
    lay = _layout(cfg)
    m = lay["_meta"]
    B = x.shape[0]
    P, Cpp, H = m["P"], m["Cpp"], m["H"]
    S_real, S_pad = m["S_real"], m["S_pad"]
    L, heads, C = m["L"], cfg["heads"], cfg["num_classes"]
    BS = B * S_pad

    # Wrapper-side layout plumbing only (reshape / scatter into aligned rows).
    patches = extract_patches(x, cfg["patch"]).reshape(B * P, Cpp)

    # Clinical token rows: (B*4, KC_pad), each token's features in its own K block
    # plus a 1.0 indicator column that selects its bias row inside clin_w.
    feats = (rr, img_fea, sex, age)
    rows, o = [], 0
    for j, f in enumerate(feats):
        d = f.shape[1]
        rrow = jnp.zeros((B, m["KC_pad"]), jnp.float32)
        rrow = rrow.at[:, o:o + d].set(f.astype(jnp.float32))
        rrow = rrow.at[:, m["KC"] + j].set(1.0)
        rows.append(rrow)
        o += d
    clin = jnp.stack(rows, axis=1).reshape(B * N_CLIN, m["KC_pad"])

    kernel = functools.partial(_fused_forward_kernel,
                               B=B, heads=heads, num_classes=C, lay=lay)

    # Single invocation (no grid): 3 inputs (patches, clin rows, packed params),
    # everything VMEM-resident.  A batch-parallel grid axis for the v7x second
    # TensorCore is intentionally not added at B=2 (fixed per-step cost > win).
    logits, pooled, attn_full = pl.pallas_call(
        kernel,
        out_shape=(
            jax.ShapeDtypeStruct((B, C), jnp.float32),
            jax.ShapeDtypeStruct((B, H), jnp.float32),
            jax.ShapeDtypeStruct((L * heads, BS, BS), jnp.float32),
        ),
    )(patches, clin, params["wp"])

    # Extract per-(layer, batch, head) (S, S) diagonal blocks of the block-diag probs.
    attn_full = attn_full.reshape(L, heads, BS, BS)
    attn_weights = []
    for l in range(L):
        blocks = [attn_full[l, :, b * S_pad:b * S_pad + S_real,
                            b * S_pad:b * S_pad + S_real] for b in range(B)]
        attn_weights.append(jnp.stack(blocks, axis=0))    # (B, heads, S, S)
    return logits, attn_weights, pooled


# ----------------------------------------------------------------------------
# Main
# ----------------------------------------------------------------------------

if __name__ == "__main__":
    key = jax.random.PRNGKey(0)
    k1, k2, k3, k4, k5 = jax.random.split(key, 5)

    B = 2
    x = jax.random.normal(k1, (B, CFG["in_ch"], CFG["img_size"], CFG["img_size"]),
                          jnp.float32)
    rr = jax.random.normal(k2, (B, CFG["rr_dim"]), jnp.float32)
    img_fea = jax.random.normal(k3, (B, CFG["img_fea_dim"]), jnp.float32)
    sex = jax.random.normal(k4, (B, CFG["sex_dim"]), jnp.float32)
    age = jax.random.normal(k5, (B, CFG["age_dim"]), jnp.float32)

    params = init_params(jax.random.PRNGKey(42), CFG)

    fwd = jax.jit(llnm_forward)
    logits, attn_weights, pooled = fwd(params, x, rr, img_fea, sex, age)
    jax.block_until_ready(logits)
    jax.block_until_ready(pooled)
    for a in attn_weights:
        jax.block_until_ready(a)

    S = (CFG["img_size"] // CFG["patch"]) ** 2 + 1 + N_CLIN
    assert logits.shape == (B, CFG["num_classes"])
    assert pooled.shape == (B, CFG["hidden"])
    assert len(attn_weights) == CFG["layers"]
    assert attn_weights[0].shape == (B, CFG["heads"], S, S)
    assert bool(jnp.all(jnp.isfinite(logits)))
    # attention rows over the 21 real keys should sum to ~1 (approx reciprocal)
    rowsum = jnp.sum(attn_weights[0], axis=-1)
    assert bool(jnp.all(jnp.abs(rowsum - 1.0) < 1e-2))
    print("KERNEL_OK")
</pallas_src>

<mosaic_0001>
module attributes {stable_mosaic.version = 11 : i64} {
  func.func @_fused_forward_kernel(%arg0: memref<32x48xf32, #tpu.memory_space<vmem>>, %arg1: memref<8x32xf32, #tpu.memory_space<vmem>>, %arg2: memref<688x32xf32, #tpu.memory_space<vmem>>, %arg3: memref<2x2xf32, #tpu.memory_space<vmem>>, %arg4: memref<2x32xf32, #tpu.memory_space<vmem>>, %arg5: memref<8x48x48xf32, #tpu.memory_space<vmem>>) attributes {dimension_semantics = [], scalar_prefetch = 0 : i64, scratch_operands = 0 : i64, tpu.core_type = #tpu.core_type<tc>} {
    %c0 = arith.constant 0 : index
    %c0_0 = arith.constant 0 : index
    %0 = vector.load %arg0[%c0, %c0_0] : memref<32x48xf32, #tpu.memory_space<vmem>>, vector<32x48xf32>
    %c0_1 = arith.constant 0 : index
    %c0_2 = arith.constant 0 : index
    %1 = vector.load %arg2[%c0_1, %c0_2] : memref<688x32xf32, #tpu.memory_space<vmem>>, vector<48x32xf32>
    %cst = arith.constant dense<0.000000e+00> : vector<32x32xf32>
    %2 = tpu.matmul %0, %1, %cst {dimension_numbers = #tpu.dot_dimension_numbers<[1], [0], [0], [1], [0, 0, 1, 1], [], []>} : vector<32x48xf32>, vector<48x32xf32>, vector<32x32xf32> -> vector<32x32xf32>
    %c0_3 = arith.constant 0 : index
    %c0_4 = arith.constant 0 : index
    %3 = vector.load %arg1[%c0_3, %c0_4] : memref<8x32xf32, #tpu.memory_space<vmem>>, vector<8x32xf32>
    %c48 = arith.constant 48 : index
    %c0_5 = arith.constant 0 : index
    %4 = vector.load %arg2[%c48, %c0_5] : memref<688x32xf32, #tpu.memory_space<vmem>>, vector<32x32xf32>
    %cst_6 = arith.constant dense<0.000000e+00> : vector<8x32xf32>
    %5 = tpu.matmul %3, %4, %cst_6 {dimension_numbers = #tpu.dot_dimension_numbers<[1], [0], [0], [1], [0, 0, 1, 1], [], []>} : vector<8x32xf32>, vector<32x32xf32>, vector<8x32xf32> -> vector<8x32xf32>
    %c80 = arith.constant 80 : index
    %c0_7 = arith.constant 0 : index
    %6 = vector.load %arg2[%c80, %c0_7] : memref<688x32xf32, #tpu.memory_space<vmem>>, vector<24x32xf32>
    %cst_8 = arith.constant 0.000000e+00 : f32
    %7 = vector.broadcast %cst_8 : f32 to vector<1x32xf32>
    %8 = vector.extract_strided_slice %2 {offsets = [0, 0], sizes = [16, 32], strides = [1, 1]} : vector<32x32xf32> to vector<16x32xf32>
    %9 = vector.extract_strided_slice %5 {offsets = [0, 0], sizes = [4, 32], strides = [1, 1]} : vector<8x32xf32> to vector<4x32xf32>
    %cst_9 = arith.constant 0.000000e+00 : f32
    %10 = vector.broadcast %cst_9 : f32 to vector<3x32xf32>
    %cst_10 = arith.constant 0.000000e+00 : f32
    %11 = vector.broadcast %cst_10 : f32 to vector<1x32xf32>
    %12 = vector.extract_strided_slice %2 {offsets = [16, 0], sizes = [16, 32], strides = [1, 1]} : vector<32x32xf32> to vector<16x32xf32>
    %13 = vector.extract_strided_slice %5 {offsets = [4, 0], sizes = [4, 32], strides = [1, 1]} : vector<8x32xf32> to vector<4x32xf32>
    %cst_11 = arith.constant 0.000000e+00 : f32
    %14 = vector.broadcast %cst_11 : f32 to vector<3x32xf32>
    %15 = tpu.concatenate %7, %8, %9, %10, %11, %12, %13, %14 in 0 : vector<1x32xf32>, vector<16x32xf32>, vector<4x32xf32>, vector<3x32xf32>, vector<1x32xf32>, vector<16x32xf32>, vector<4x32xf32>, vector<3x32xf32> -> vector<48x32xf32>
    %16 = tpu.concatenate %6, %6 in 0 : vector<24x32xf32>, vector<24x32xf32> -> vector<48x32xf32>
    %17 = arith.addf %15, %16 : vector<48x32xf32>
    %18 = tpu.iota {dimensions = array<i32: 0>} : vector<48x48xi32>
    %19 = tpu.iota {dimensions = array<i32: 1>} : vector<48x48xi32>
    %c0_i32 = arith.constant 0 : i32
    %20 = vector.broadcast %c0_i32 : i32 to vector<48x48xi32>
    %21 = arith.cmpi sge, %18, %20 : vector<48x48xi32>
    %c24_i32 = arith.constant 24 : i32
    %22 = vector.broadcast %c24_i32 : i32 to vector<48x48xi32>
    %23 = arith.cmpi slt, %18, %22 : vector<48x48xi32>
    %24 = arith.andi %21, %23 : vector<48x48xi1>
    %c0_i32_12 = arith.constant 0 : i32
    %25 = vector.broadcast %c0_i32_12 : i32 to vector<48x48xi32>
    %26 = arith.cmpi sge, %19, %25 : vector<48x48xi32>
    %27 = arith.andi %24, %26 : vector<48x48xi1>
    %c21_i32 = arith.constant 21 : i32
    %28 = vector.broadcast %c21_i32 : i32 to vector<48x48xi32>
    %29 = arith.cmpi slt, %19, %28 : vector<48x48xi32>
    %30 = arith.andi %27, %29 : vector<48x48xi1>
    %c24_i32_13 = arith.constant 24 : i32
    %31 = vector.broadcast %c24_i32_13 : i32 to vector<48x48xi32>
    %32 = arith.cmpi sge, %18, %31 : vector<48x48xi32>
    %c48_i32 = arith.constant 48 : i32
    %33 = vector.broadcast %c48_i32 : i32 to vector<48x48xi32>
    %34 = arith.cmpi slt, %18, %33 : vector<48x48xi32>
    %35 = arith.andi %32, %34 : vector<48x48xi1>
    %c24_i32_14 = arith.constant 24 : i32
    %36 = vector.broadcast %c24_i32_14 : i32 to vector<48x48xi32>
    %37 = arith.cmpi sge, %19, %36 : vector<48x48xi32>
    %38 = arith.andi %35, %37 : vector<48x48xi1>
    %c45_i32 = arith.constant 45 : i32
    %39 = vector.broadcast %c45_i32 : i32 to vector<48x48xi32>
    %40 = arith.cmpi slt, %19, %39 : vector<48x48xi32>
    %41 = arith.andi %38, %40 : vector<48x48xi1>
    %42 = arith.ori %30, %41 : vector<48x48xi1>
    %cst_15 = arith.constant 0.000000e+00 : f32
    %cst_16 = arith.constant -1.000000e+09 : f32
    %43 = vector.broadcast %cst_15 : f32 to vector<48x48xf32>
    %44 = vector.broadcast %cst_16 : f32 to vector<48x48xf32>
    %45 = arith.select %42, %43, %44 : vector<48x48xi1>, vector<48x48xf32>
    %46 = tpu.iota {dimensions = array<i32: 1>} : vector<1x32xi32>
    %c0_i32_17 = arith.constant 0 : i32
    %47 = vector.broadcast %c0_i32_17 : i32 to vector<1x32xi32>
    %48 = arith.cmpi sge, %46, %47 : vector<1x32xi32>
    %c8_i32 = arith.constant 8 : i32
    %49 = vector.broadcast %c8_i32 : i32 to vector<1x32xi32>
    %50 = arith.cmpi slt, %46, %49 : vector<1x32xi32>
    %51 = arith.andi %48, %50 : vector<1x32xi1>
    %cst_18 = arith.constant 1.000000e+00 : f32
    %cst_19 = arith.constant 0.000000e+00 : f32
    %52 = vector.broadcast %cst_18 : f32 to vector<1x32xf32>
    %53 = vector.broadcast %cst_19 : f32 to vector<1x32xf32>
    %54 = arith.select %51, %52, %53 : vector<1x32xi1>, vector<1x32xf32>
    %c8_i32_20 = arith.constant 8 : i32
    %55 = vector.broadcast %c8_i32_20 : i32 to vector<1x32xi32>
    %56 = arith.cmpi sge, %46, %55 : vector<1x32xi32>
    %c16_i32 = arith.constant 16 : i32
    %57 = vector.broadcast %c16_i32 : i32 to vector<1x32xi32>
    %58 = arith.cmpi slt, %46, %57 : vector<1x32xi32>
    %59 = arith.andi %56, %58 : vector<1x32xi1>
    %cst_21 = arith.constant 1.000000e+00 : f32
    %cst_22 = arith.constant 0.000000e+00 : f32
    %60 = vector.broadcast %cst_21 : f32 to vector<1x32xf32>
    %61 = vector.broadcast %cst_22 : f32 to vector<1x32xf32>
    %62 = arith.select %59, %60, %61 : vector<1x32xi1>, vector<1x32xf32>
    %c16_i32_23 = arith.constant 16 : i32
    %63 = vector.broadcast %c16_i32_23 : i32 to vector<1x32xi32>
    %64 = arith.cmpi sge, %46, %63 : vector<1x32xi32>
    %c24_i32_24 = arith.constant 24 : i32
    %65 = vector.broadcast %c24_i32_24 : i32 to vector<1x32xi32>
    %66 = arith.cmpi slt, %46, %65 : vector<1x32xi32>
    %67 = arith.andi %64, %66 : vector<1x32xi1>
    %cst_25 = arith.constant 1.000000e+00 : f32
    %cst_26 = arith.constant 0.000000e+00 : f32
    %68 = vector.broadcast %cst_25 : f32 to vector<1x32xf32>
    %69 = vector.broadcast %cst_26 : f32 to vector<1x32xf32>
    %70 = arith.select %67, %68, %69 : vector<1x32xi1>, vector<1x32xf32>
    %c24_i32_27 = arith.constant 24 : i32
    %71 = vector.broadcast %c24_i32_27 : i32 to vector<1x32xi32>
    %72 = arith.cmpi sge, %46, %71 : vector<1x32xi32>
    %c32_i32 = arith.constant 32 : i32
    %73 = vector.broadcast %c32_i32 : i32 to vector<1x32xi32>
    %74 = arith.cmpi slt, %46, %73 : vector<1x32xi32>
    %75 = arith.andi %72, %74 : vector<1x32xi1>
    %cst_28 = arith.constant 1.000000e+00 : f32
    %cst_29 = arith.constant 0.000000e+00 : f32
    %76 = vector.broadcast %cst_28 : f32 to vector<1x32xf32>
    %77 = vector.broadcast %cst_29 : f32 to vector<1x32xf32>
    %78 = arith.select %75, %76, %77 : vector<1x32xi1>, vector<1x32xf32>
    %c360 = arith.constant 360 : index
    %c0_30 = arith.constant 0 : index
    %79 = vector.load %arg2[%c360, %c0_30] : memref<688x32xf32, #tpu.memory_space<vmem>>, vector<1x32xf32>
    %c361 = arith.constant 361 : index
    %c0_31 = arith.constant 0 : index
    %80 = vector.load %arg2[%c361, %c0_31] : memref<688x32xf32, #tpu.memory_space<vmem>>, vector<1x32xf32>
    %c362 = arith.constant 362 : index
    %c0_32 = arith.constant 0 : index
    %81 = vector.load %arg2[%c362, %c0_32] : memref<688x32xf32, #tpu.memory_space<vmem>>, vector<1x32xf32>
    %c363 = arith.constant 363 : index
    %c0_33 = arith.constant 0 : index
    %82 = vector.load %arg2[%c363, %c0_33] : memref<688x32xf32, #tpu.memory_space<vmem>>, vector<1x32xf32>
    %c364 = arith.constant 364 : index
    %c0_34 = arith.constant 0 : index
    %83 = vector.load %arg2[%c364, %c0_34] : memref<688x32xf32, #tpu.memory_space<vmem>>, vector<1x32xf32>
    %c365 = arith.constant 365 : index
    %c0_35 = arith.constant 0 : index
    %84 = vector.load %arg2[%c365, %c0_35] : memref<688x32xf32, #tpu.memory_space<vmem>>, vector<1x32xf32>
    %c366 = arith.constant 366 : index
    %c0_36 = arith.constant 0 : index
    %85 = vector.load %arg2[%c366, %c0_36] : memref<688x32xf32, #tpu.memory_space<vmem>>, vector<1x32xf32>
    %c367 = arith.constant 367 : index
    %c0_37 = arith.constant 0 : index
    %86 = vector.load %arg2[%c367, %c0_37] : memref<688x32xf32, #tpu.memory_space<vmem>>, vector<1x32xf32>
    %c370 = arith.constant 370 : index
    %c0_38 = arith.constant 0 : index
    %87 = vector.load %arg2[%c370, %c0_38] : memref<688x32xf32, #tpu.memory_space<vmem>>, vector<1x32xf32>
    %cst_39 = arith.constant dense<0.000000e+00> : vector<48xf32>
    %88 = vector.multi_reduction <add>, %17, %cst_39 [1] : vector<48x32xf32> to vector<48xf32>
    %89 = vector.shape_cast %88 : vector<48xf32> to vector<48x1xf32>
    %cst_40 = arith.constant 3.200000e+01 : f32
    %90 = vector.broadcast %cst_40 : f32 to vector<48x1xf32>
    %91 = arith.divf %89, %90 : vector<48x1xf32>
    %92 = vector.broadcast %91 : vector<48x1xf32> to vector<48x32xf32>
    %93 = arith.subf %17, %92 : vector<48x32xf32>
    %94 = arith.mulf %93, %93 : vector<48x32xf32>
    %cst_41 = arith.constant dense<0.000000e+00> : vector<48xf32>
    %95 = vector.multi_reduction <add>, %94, %cst_41 [1] : vector<48x32xf32> to vector<48xf32>
    %96 = vector.shape_cast %95 : vector<48xf32> to vector<48x1xf32>
    %cst_42 = arith.constant 3.200000e+01 : f32
    %97 = vector.broadcast %cst_42 : f32 to vector<48x1xf32>
    %98 = arith.divf %96, %97 : vector<48x1xf32>
    %99 = vector.broadcast %91 : vector<48x1xf32> to vector<48x32xf32>
    %100 = arith.subf %17, %99 : vector<48x32xf32>
    %cst_43 = arith.constant 9.99999997E-7 : f32
    %101 = vector.broadcast %cst_43 : f32 to vector<48x1xf32>
    %102 = arith.addf %98, %101 : vector<48x1xf32>
    %103 = math.rsqrt %102 : vector<48x1xf32>
    %104 = vector.broadcast %103 : vector<48x1xf32> to vector<48x32xf32>
    %105 = arith.mulf %100, %104 : vector<48x32xf32>
    %106 = vector.broadcast %79 : vector<1x32xf32> to vector<48x32xf32>
    %107 = arith.mulf %105, %106 : vector<48x32xf32>
    %108 = vector.broadcast %80 : vector<1x32xf32> to vector<48x32xf32>
    %109 = arith.addf %107, %108 : vector<48x32xf32>
    %c104 = arith.constant 104 : index
    %c0_44 = arith.constant 0 : index
    %110 = vector.load %arg2[%c104, %c0_44] : memref<688x32xf32, #tpu.memory_space<vmem>>, vector<32x32xf32>
    %cst_45 = arith.constant dense<0.000000e+00> : vector<48x32xf32>
    %111 = tpu.matmul %109, %110, %cst_45 {dimension_numbers = #tpu.dot_dimension_numbers<[1], [0], [0], [1], [0, 0, 1, 1], [], []>} : vector<48x32xf32>, vector<32x32xf32>, vector<48x32xf32> -> vector<48x32xf32>
    %112 = vector.broadcast %81 : vector<1x32xf32> to vector<48x32xf32>
    %113 = arith.addf %111, %112 : vector<48x32xf32>
    %c136 = arith.constant 136 : index
    %c0_46 = arith.constant 0 : index
    %114 = vector.load %arg2[%c136, %c0_46] : memref<688x32xf32, #tpu.memory_space<vmem>>, vector<32x32xf32>
    %cst_47 = arith.constant dense<0.000000e+00> : vector<48x32xf32>
    %115 = tpu.matmul %109, %114, %cst_47 {dimension_numbers = #tpu.dot_dimension_numbers<[1], [0], [0], [1], [0, 0, 1, 1], [], []>} : vector<48x32xf32>, vector<32x32xf32>, vector<48x32xf32> -> vector<48x32xf32>
    %116 = vector.broadcast %82 : vector<1x32xf32> to vector<48x32xf32>
    %117 = arith.addf %115, %116 : vector<48x32xf32>
    %c168 = arith.constant 168 : index
    %c0_48 = arith.constant 0 : index
    %118 = vector.load %arg2[%c168, %c0_48] : memref<688x32xf32, #tpu.memory_space<vmem>>, vector<32x32xf32>
    %cst_49 = arith.constant dense<0.000000e+00> : vector<48x32xf32>
    %119 = tpu.matmul %109, %118, %cst_49 {dimension_numbers = #tpu.dot_dimension_numbers<[1], [0], [0], [1], [0, 0, 1, 1], [], []>} : vector<48x32xf32>, vector<32x32xf32>, vector<48x32xf32> -> vector<48x32xf32>
    %120 = vector.broadcast %83 : vector<1x32xf32> to vector<48x32xf32>
    %121 = arith.addf %119, %120 : vector<48x32xf32>
    %122 = vector.broadcast %54 : vector<1x32xf32> to vector<48x32xf32>
    %123 = arith.mulf %113, %122 : vector<48x32xf32>
    %cst_50 = arith.constant dense<0.000000e+00> : vector<48x48xf32>
    %124 = tpu.matmul %123, %117, %cst_50 {dimension_numbers = #tpu.dot_dimension_numbers<[1], [1], [0], [0], [0, 0, 1, 0], [], []>} : vector<48x32xf32>, vector<48x32xf32>, vector<48x48xf32> -> vector<48x48xf32>
    %125 = arith.addf %124, %45 : vector<48x48xf32>
    %cst_51 = arith.constant dense<0xFF800000> : vector<48xf32>
    %126 = vector.multi_reduction <maximumf>, %125, %cst_51 [1] : vector<48x48xf32> to vector<48xf32>
    %127 = vector.shape_cast %126 : vector<48xf32> to vector<48x1xf32>
    %128 = vector.broadcast %127 : vector<48x1xf32> to vector<48x48xf32>
    %129 = arith.subf %125, %128 : vector<48x48xf32>
    %130 = math.exp %129 : vector<48x48xf32>
    %cst_52 = arith.constant dense<0.000000e+00> : vector<48xf32>
    %131 = vector.multi_reduction <add>, %130, %cst_52 [1] : vector<48x48xf32> to vector<48xf32>
    %132 = vector.shape_cast %131 : vector<48xf32> to vector<48x1xf32>
    %133 = tpu.reciprocal %132 {approx = true} : vector<48x1xf32> -> vector<48x1xf32>
    %134 = vector.broadcast %133 : vector<48x1xf32> to vector<48x48xf32>
    %135 = arith.mulf %130, %134 : vector<48x48xf32>
    %c0_53 = arith.constant 0 : index
    %c0_54 = arith.constant 0 : index
    %c0_55 = arith.constant 0 : index
    %136 = vector.load %arg5[%c0_53, %c0_54, %c0_55] : memref<8x48x48xf32, #tpu.memory_space<vmem>>, vector<1x48x48xf32>
    %137 = vector.shape_cast %136 : vector<1x48x48xf32> to vector<48x48xf32>
    %138 = vector.shape_cast %135 : vector<48x48xf32> to vector<1x48x48xf32>
    tpu.vector_store %arg5[%c0_53, %c0_54, %c0_55], %138 {strides = array<i32>} : memref<8x48x48xf32, #tpu.memory_space<vmem>>, vector<1x48x48xf32>,
    %139 = vector.broadcast %54 : vector<1x32xf32> to vector<48x32xf32>
    %140 = arith.mulf %121, %139 : vector<48x32xf32>
    %cst_56 = arith.constant dense<0.000000e+00> : vector<48x32xf32>
    %141 = tpu.matmul %135, %140, %cst_56 {dimension_numbers = #tpu.dot_dimension_numbers<[1], [0], [0], [1], [0, 0, 1, 1], [], []>} : vector<48x48xf32>, vector<48x32xf32>, vector<48x32xf32> -> vector<48x32xf32>
    %142 = vector.broadcast %62 : vector<1x32xf32> to vector<48x32xf32>
    %143 = arith.mulf %113, %142 : vector<48x32xf32>
    %cst_57 = arith.constant dense<0.000000e+00> : vector<48x48xf32>
    %144 = tpu.matmul %143, %117, %cst_57 {dimension_numbers = #tpu.dot_dimension_numbers<[1], [1], [0], [0], [0, 0, 1, 0], [], []>} : vector<48x32xf32>, vector<48x32xf32>, vector<48x48xf32> -> vector<48x48xf32>
    %145 = arith.addf %144, %45 : vector<48x48xf32>
    %cst_58 = arith.constant dense<0xFF800000> : vector<48xf32>
    %146 = vector.multi_reduction <maximumf>, %145, %cst_58 [1] : vector<48x48xf32> to vector<48xf32>
    %147 = vector.shape_cast %146 : vector<48xf32> to vector<48x1xf32>
    %148 = vector.broadcast %147 : vector<48x1xf32> to vector<48x48xf32>
    %149 = arith.subf %145, %148 : vector<48x48xf32>
    %150 = math.exp %149 : vector<48x48xf32>
    %cst_59 = arith.constant dense<0.000000e+00> : vector<48xf32>
    %151 = vector.multi_reduction <add>, %150, %cst_59 [1] : vector<48x48xf32> to vector<48xf32>
    %152 = vector.shape_cast %151 : vector<48xf32> to vector<48x1xf32>
    %153 = tpu.reciprocal %152 {approx = true} : vector<48x1xf32> -> vector<48x1xf32>
    %154 = vector.broadcast %153 : vector<48x1xf32> to vector<48x48xf32>
    %155 = arith.mulf %150, %154 : vector<48x48xf32>
    %c1 = arith.constant 1 : index
    %c0_60 = arith.constant 0 : index
    %c0_61 = arith.constant 0 : index
    %156 = vector.load %arg5[%c1, %c0_60, %c0_61] : memref<8x48x48xf32, #tpu.memory_space<vmem>>, vector<1x48x48xf32>
    %157 = vector.shape_cast %156 : vector<1x48x48xf32> to vector<48x48xf32>
    %158 = vector.shape_cast %155 : vector<48x48xf32> to vector<1x48x48xf32>
    tpu.vector_store %arg5[%c1, %c0_60, %c0_61], %158 {strides = array<i32>} : memref<8x48x48xf32, #tpu.memory_space<vmem>>, vector<1x48x48xf32>,
    %159 = vector.broadcast %62 : vector<1x32xf32> to vector<48x32xf32>
    %160 = arith.mulf %121, %159 : vector<48x32xf32>
    %cst_62 = arith.constant dense<0.000000e+00> : vector<48x32xf32>
    %161 = tpu.matmul %155, %160, %cst_62 {dimension_numbers = #tpu.dot_dimension_numbers<[1], [0], [0], [1], [0, 0, 1, 1], [], []>} : vector<48x48xf32>, vector<48x32xf32>, vector<48x32xf32> -> vector<48x32xf32>
    %162 = arith.addf %141, %161 : vector<48x32xf32>
    %163 = vector.broadcast %70 : vector<1x32xf32> to vector<48x32xf32>
    %164 = arith.mulf %113, %163 : vector<48x32xf32>
    %cst_63 = arith.constant dense<0.000000e+00> : vector<48x48xf32>
    %165 = tpu.matmul %164, %117, %cst_63 {dimension_numbers = #tpu.dot_dimension_numbers<[1], [1], [0], [0], [0, 0, 1, 0], [], []>} : vector<48x32xf32>, vector<48x32xf32>, vector<48x48xf32> -> vector<48x48xf32>
    %166 = arith.addf %165, %45 : vector<48x48xf32>
    %cst_64 = arith.constant dense<0xFF800000> : vector<48xf32>
    %167 = vector.multi_reduction <maximumf>, %166, %cst_64 [1] : vector<48x48xf32> to vector<48xf32>
    %168 = vector.shape_cast %167 : vector<48xf32> to vector<48x1xf32>
    %169 = vector.broadcast %168 : vector<48x1xf32> to vector<48x48xf32>
    %170 = arith.subf %166, %169 : vector<48x48xf32>
    %171 = math.exp %170 : vector<48x48xf32>
    %cst_65 = arith.constant dense<0.000000e+00> : vector<48xf32>
    %172 = vector.multi_reduction <add>, %171, %cst_65 [1] : vector<48x48xf32> to vector<48xf32>
    %173 = vector.shape_cast %172 : vector<48xf32> to vector<48x1xf32>
    %174 = tpu.reciprocal %173 {approx = true} : vector<48x1xf32> -> vector<48x1xf32>
    %175 = vector.broadcast %174 : vector<48x1xf32> to vector<48x48xf32>
    %176 = arith.mulf %171, %175 : vector<48x48xf32>
    %c2 = arith.constant 2 : index
    %c0_66 = arith.constant 0 : index
    %c0_67 = arith.constant 0 : index
    %177 = vector.load %arg5[%c2, %c0_66, %c0_67] : memref<8x48x48xf32, #tpu.memory_space<vmem>>, vector<1x48x48xf32>
    %178 = vector.shape_cast %177 : vector<1x48x48xf32> to vector<48x48xf32>
    %179 = vector.shape_cast %176 : vector<48x48xf32> to vector<1x48x48xf32>
    tpu.vector_store %arg5[%c2, %c0_66, %c0_67], %179 {strides = array<i32>} : memref<8x48x48xf32, #tpu.memory_space<vmem>>, vector<1x48x48xf32>,
    %180 = vector.broadcast %70 : vector<1x32xf32> to vector<48x32xf32>
    %181 = arith.mulf %121, %180 : vector<48x32xf32>
    %cst_68 = arith.constant dense<0.000000e+00> : vector<48x32xf32>
    %182 = tpu.matmul %176, %181, %cst_68 {dimension_numbers = #tpu.dot_dimension_numbers<[1], [0], [0], [1], [0, 0, 1, 1], [], []>} : vector<48x48xf32>, vector<48x32xf32>, vector<48x32xf32> -> vector<48x32xf32>
    %183 = arith.addf %162, %182 : vector<48x32xf32>
    %184 = vector.broadcast %78 : vector<1x32xf32> to vector<48x32xf32>
    %185 = arith.mulf %113, %184 : vector<48x32xf32>
    %cst_69 = arith.constant dense<0.000000e+00> : vector<48x48xf32>
    %186 = tpu.matmul %185, %117, %cst_69 {dimension_numbers = #tpu.dot_dimension_numbers<[1], [1], [0], [0], [0, 0, 1, 0], [], []>} : vector<48x32xf32>, vector<48x32xf32>, vector<48x48xf32> -> vector<48x48xf32>
    %187 = arith.addf %186, %45 : vector<48x48xf32>
    %cst_70 = arith.constant dense<0xFF800000> : vector<48xf32>
    %188 = vector.multi_reduction <maximumf>, %187, %cst_70 [1] : vector<48x48xf32> to vector<48xf32>
    %189 = vector.shape_cast %188 : vector<48xf32> to vector<48x1xf32>
    %190 = vector.broadcast %189 : vector<48x1xf32> to vector<48x48xf32>
    %191 = arith.subf %187, %190 : vector<48x48xf32>
    %192 = math.exp %191 : vector<48x48xf32>
    %cst_71 = arith.constant dense<0.000000e+00> : vector<48xf32>
    %193 = vector.multi_reduction <add>, %192, %cst_71 [1] : vector<48x48xf32> to vector<48xf32>
    %194 = vector.shape_cast %193 : vector<48xf32> to vector<48x1xf32>
    %195 = tpu.reciprocal %194 {approx = true} : vector<48x1xf32> -> vector<48x1xf32>
    %196 = vector.broadcast %195 : vector<48x1xf32> to vector<48x48xf32>
    %197 = arith.mulf %192, %196 : vector<48x48xf32>
    %c3 = arith.constant 3 : index
    %c0_72 = arith.constant 0 : index
    %c0_73 = arith.constant 0 : index
    %198 = vector.load %arg5[%c3, %c0_72, %c0_73] : memref<8x48x48xf32, #tpu.memory_space<vmem>>, vector<1x48x48xf32>
    %199 = vector.shape_cast %198 : vector<1x48x48xf32> to vector<48x48xf32>
    %200 = vector.shape_cast %197 : vector<48x48xf32> to vector<1x48x48xf32>
    tpu.vector_store %arg5[%c3, %c0_72, %c0_73], %200 {strides = array<i32>} : memref<8x48x48xf32, #tpu.memory_space<vmem>>, vector<1x48x48xf32>,
    %201 = vector.broadcast %78 : vector<1x32xf32> to vector<48x32xf32>
    %202 = arith.mulf %121, %201 : vector<48x32xf32>
    %cst_74 = arith.constant dense<0.000000e+00> : vector<48x32xf32>
    %203 = tpu.matmul %197, %202, %cst_74 {dimension_numbers = #tpu.dot_dimension_numbers<[1], [0], [0], [1], [0, 0, 1, 1], [], []>} : vector<48x48xf32>, vector<48x32xf32>, vector<48x32xf32> -> vector<48x32xf32>
    %204 = arith.addf %183, %203 : vector<48x32xf32>
    %c200 = arith.constant 200 : index
    %c0_75 = arith.constant 0 : index
    %205 = vector.load %arg2[%c200, %c0_75] : memref<688x32xf32, #tpu.memory_space<vmem>>, vector<32x32xf32>
    %cst_76 = arith.constant dense<0.000000e+00> : vector<48x32xf32>
    %206 = tpu.matmul %204, %205, %cst_76 {dimension_numbers = #tpu.dot_dimension_numbers<[1], [0], [0], [1], [0, 0, 1, 1], [], []>} : vector<48x32xf32>, vector<32x32xf32>, vector<48x32xf32> -> vector<48x32xf32>
    %207 = arith.addf %17, %206 : vector<48x32xf32>
    %208 = vector.broadcast %84 : vector<1x32xf32> to vector<48x32xf32>
    %209 = arith.addf %207, %208 : vector<48x32xf32>
    %cst_77 = arith.constant dense<0.000000e+00> : vector<48xf32>
    %210 = vector.multi_reduction <add>, %209, %cst_77 [1] : vector<48x32xf32> to vector<48xf32>
    %211 = vector.shape_cast %210 : vector<48xf32> to vector<48x1xf32>
    %cst_78 = arith.constant 3.200000e+01 : f32
    %212 = vector.broadcast %cst_78 : f32 to vector<48x1xf32>
    %213 = arith.divf %211, %212 : vector<48x1xf32>
    %214 = vector.broadcast %213 : vector<48x1xf32> to vector<48x32xf32>
    %215 = arith.subf %209, %214 : vector<48x32xf32>
    %216 = arith.mulf %215, %215 : vector<48x32xf32>
    %cst_79 = arith.constant dense<0.000000e+00> : vector<48xf32>
    %217 = vector.multi_reduction <add>, %216, %cst_79 [1] : vector<48x32xf32> to vector<48xf32>
    %218 = vector.shape_cast %217 : vector<48xf32> to vector<48x1xf32>
    %cst_80 = arith.constant 3.200000e+01 : f32
    %219 = vector.broadcast %cst_80 : f32 to vector<48x1xf32>
    %220 = arith.divf %218, %219 : vector<48x1xf32>
    %221 = vector.broadcast %213 : vector<48x1xf32> to vector<48x32xf32>
    %222 = arith.subf %209, %221 : vector<48x32xf32>
    %cst_81 = arith.constant 9.99999997E-7 : f32
    %223 = vector.broadcast %cst_81 : f32 to vector<48x1xf32>
    %224 = arith.addf %220, %223 : vector<48x1xf32>
    %225 = math.rsqrt %224 : vector<48x1xf32>
    %226 = vector.broadcast %225 : vector<48x1xf32> to vector<48x32xf32>
    %227 = arith.mulf %222, %226 : vector<48x32xf32>
    %228 = vector.broadcast %85 : vector<1x32xf32> to vector<48x32xf32>
    %229 = arith.mulf %227, %228 : vector<48x32xf32>
    %230 = vector.broadcast %86 : vector<1x32xf32> to vector<48x32xf32>
    %231 = arith.addf %229, %230 : vector<48x32xf32>
    %c232 = arith.constant 232 : index
    %c0_82 = arith.constant 0 : index
    %232 = vector.load %arg2[%c232, %c0_82] : memref<688x32xf32, #tpu.memory_space<vmem>>, vector<32x32xf32>
    %cst_83 = arith.constant dense<0.000000e+00> : vector<48x32xf32>
    %233 = tpu.matmul %231, %232, %cst_83 {dimension_numbers = #tpu.dot_dimension_numbers<[1], [0], [0], [1], [0, 0, 1, 1], [], []>} : vector<48x32xf32>, vector<32x32xf32>, vector<48x32xf32> -> vector<48x32xf32>
    %c368 = arith.constant 368 : index
    %c0_84 = arith.constant 0 : index
    %234 = vector.load %arg2[%c368, %c0_84] : memref<688x32xf32, #tpu.memory_space<vmem>>, vector<1x32xf32>
    %235 = vector.broadcast %234 : vector<1x32xf32> to vector<48x32xf32>
    %236 = arith.addf %233, %235 : vector<48x32xf32>
    %237 = arith.mulf %236, %236 : vector<48x32xf32>
    %238 = arith.mulf %236, %237 : vector<48x32xf32>
    %cst_85 = arith.constant 4.471500e-02 : f32
    %239 = vector.broadcast %cst_85 : f32 to vector<48x32xf32>
    %240 = arith.mulf %239, %238 : vector<48x32xf32>
    %241 = arith.addf %236, %240 : vector<48x32xf32>
    %cst_86 = arith.constant 0.797884583 : f32
    %242 = vector.broadcast %cst_86 : f32 to vector<48x32xf32>
    %243 = arith.mulf %242, %241 : vector<48x32xf32>
    %244 = math.tanh %243 : vector<48x32xf32>
    %cst_87 = arith.constant 1.000000e+00 : f32
    %245 = vector.broadcast %cst_87 : f32 to vector<48x32xf32>
    %246 = arith.addf %245, %244 : vector<48x32xf32>
    %cst_88 = arith.constant 5.000000e-01 : f32
    %247 = vector.broadcast %cst_88 : f32 to vector<48x32xf32>
    %248 = arith.mulf %247, %246 : vector<48x32xf32>
    %249 = arith.mulf %236, %248 : vector<48x32xf32>
    %c296 = arith.constant 296 : index
    %c0_89 = arith.constant 0 : index
    %250 = vector.load %arg2[%c296, %c0_89] : memref<688x32xf32, #tpu.memory_space<vmem>>, vector<32x32xf32>
    %cst_90 = arith.constant dense<0.000000e+00> : vector<48x32xf32>
    %251 = tpu.matmul %249, %250, %cst_90 {dimension_numbers = #tpu.dot_dimension_numbers<[1], [0], [0], [1], [0, 0, 1, 1], [], []>} : vector<48x32xf32>, vector<32x32xf32>, vector<48x32xf32> -> vector<48x32xf32>
    %252 = vector.broadcast %87 : vector<1x32xf32> to vector<48x32xf32>
    %253 = arith.addf %252, %251 : vector<48x32xf32>
    %c264 = arith.constant 264 : index
    %c0_91 = arith.constant 0 : index
    %254 = vector.load %arg2[%c264, %c0_91] : memref<688x32xf32, #tpu.memory_space<vmem>>, vector<32x32xf32>
    %cst_92 = arith.constant dense<0.000000e+00> : vector<48x32xf32>
    %255 = tpu.matmul %231, %254, %cst_92 {dimension_numbers = #tpu.dot_dimension_numbers<[1], [0], [0], [1], [0, 0, 1, 1], [], []>} : vector<48x32xf32>, vector<32x32xf32>, vector<48x32xf32> -> vector<48x32xf32>
    %c369 = arith.constant 369 : index
    %c0_93 = arith.constant 0 : index
    %256 = vector.load %arg2[%c369, %c0_93] : memref<688x32xf32, #tpu.memory_space<vmem>>, vector<1x32xf32>
    %257 = vector.broadcast %256 : vector<1x32xf32> to vector<48x32xf32>
    %258 = arith.addf %255, %257 : vector<48x32xf32>
    %259 = arith.mulf %258, %258 : vector<48x32xf32>
    %260 = arith.mulf %258, %259 : vector<48x32xf32>
    %cst_94 = arith.constant 4.471500e-02 : f32
    %261 = vector.broadcast %cst_94 : f32 to vector<48x32xf32>
    %262 = arith.mulf %261, %260 : vector<48x32xf32>
    %263 = arith.addf %258, %262 : vector<48x32xf32>
    %cst_95 = arith.constant 0.797884583 : f32
    %264 = vector.broadcast %cst_95 : f32 to vector<48x32xf32>
    %265 = arith.mulf %264, %263 : vector<48x32xf32>
    %266 = math.tanh %265 : vector<48x32xf32>
    %cst_96 = arith.constant 1.000000e+00 : f32
    %267 = vector.broadcast %cst_96 : f32 to vector<48x32xf32>
    %268 = arith.addf %267, %266 : vector<48x32xf32>
    %cst_97 = arith.constant 5.000000e-01 : f32
    %269 = vector.broadcast %cst_97 : f32 to vector<48x32xf32>
    %270 = arith.mulf %269, %268 : vector<48x32xf32>
    %271 = arith.mulf %258, %270 : vector<48x32xf32>
    %c328 = arith.constant 328 : index
    %c0_98 = arith.constant 0 : index
    %272 = vector.load %arg2[%c328, %c0_98] : memref<688x32xf32, #tpu.memory_space<vmem>>, vector<32x32xf32>
    %cst_99 = arith.constant dense<0.000000e+00> : vector<48x32xf32>
    %273 = tpu.matmul %271, %272, %cst_99 {dimension_numbers = #tpu.dot_dimension_numbers<[1], [0], [0], [1], [0, 0, 1, 1], [], []>} : vector<48x32xf32>, vector<32x32xf32>, vector<48x32xf32> -> vector<48x32xf32>
    %274 = arith.addf %253, %273 : vector<48x32xf32>
    %275 = arith.addf %209, %274 : vector<48x32xf32>
    %c632 = arith.constant 632 : index
    %c0_100 = arith.constant 0 : index
    %276 = vector.load %arg2[%c632, %c0_100] : memref<688x32xf32, #tpu.memory_space<vmem>>, vector<1x32xf32>
    %c633 = arith.constant 633 : index
    %c0_101 = arith.constant 0 : index
    %277 = vector.load %arg2[%c633, %c0_101] : memref<688x32xf32, #tpu.memory_space<vmem>>, vector<1x32xf32>
    %c634 = arith.constant 634 : index
    %c0_102 = arith.constant 0 : index
    %278 = vector.load %arg2[%c634, %c0_102] : memref<688x32xf32, #tpu.memory_space<vmem>>, vector<1x32xf32>
    %c635 = arith.constant 635 : index
    %c0_103 = arith.constant 0 : index
    %279 = vector.load %arg2[%c635, %c0_103] : memref<688x32xf32, #tpu.memory_space<vmem>>, vector<1x32xf32>
    %c636 = arith.constant 636 : index
    %c0_104 = arith.constant 0 : index
    %280 = vector.load %arg2[%c636, %c0_104] : memref<688x32xf32, #tpu.memory_space<vmem>>, vector<1x32xf32>
    %c637 = arith.constant 637 : index
    %c0_105 = arith.constant 0 : index
    %281 = vector.load %arg2[%c637, %c0_105] : memref<688x32xf32, #tpu.memory_space<vmem>>, vector<1x32xf32>
    %c638 = arith.constant 638 : index
    %c0_106 = arith.constant 0 : index
    %282 = vector.load %arg2[%c638, %c0_106] : memref<688x32xf32, #tpu.memory_space<vmem>>, vector<1x32xf32>
    %c639 = arith.constant 639 : index
    %c0_107 = arith.constant 0 : index
    %283 = vector.load %arg2[%c639, %c0_107] : memref<688x32xf32, #tpu.memory_space<vmem>>, vector<1x32xf32>
    %c642 = arith.constant 642 : index
    %c0_108 = arith.constant 0 : index
    %284 = vector.load %arg2[%c642, %c0_108] : memref<688x32xf32, #tpu.memory_space<vmem>>, vector<1x32xf32>
    %cst_109 = arith.constant dense<0.000000e+00> : vector<48xf32>
    %285 = vector.multi_reduction <add>, %275, %cst_109 [1] : vector<48x32xf32> to vector<48xf32>
    %286 = vector.shape_cast %285 : vector<48xf32> to vector<48x1xf32>
    %cst_110 = arith.constant 3.200000e+01 : f32
    %287 = vector.broadcast %cst_110 : f32 to vector<48x1xf32>
    %288 = arith.divf %286, %287 : vector<48x1xf32>
    %289 = vector.broadcast %288 : vector<48x1xf32> to vector<48x32xf32>
    %290 = arith.subf %275, %289 : vector<48x32xf32>
    %291 = arith.mulf %290, %290 : vector<48x32xf32>
    %cst_111 = arith.constant dense<0.000000e+00> : vector<48xf32>
    %292 = vector.multi_reduction <add>, %291, %cst_111 [1] : vector<48x32xf32> to vector<48xf32>
    %293 = vector.shape_cast %292 : vector<48xf32> to vector<48x1xf32>
    %cst_112 = arith.constant 3.200000e+01 : f32
    %294 = vector.broadcast %cst_112 : f32 to vector<48x1xf32>
    %295 = arith.divf %293, %294 : vector<48x1xf32>
    %296 = vector.broadcast %288 : vector<48x1xf32> to vector<48x32xf32>
    %297 = arith.subf %275, %296 : vector<48x32xf32>
    %cst_113 = arith.constant 9.99999997E-7 : f32
    %298 = vector.broadcast %cst_113 : f32 to vector<48x1xf32>
    %299 = arith.addf %295, %298 : vector<48x1xf32>
    %300 = math.rsqrt %299 : vector<48x1xf32>
    %301 = vector.broadcast %300 : vector<48x1xf32> to vector<48x32xf32>
    %302 = arith.mulf %297, %301 : vector<48x32xf32>
    %303 = vector.broadcast %276 : vector<1x32xf32> to vector<48x32xf32>
    %304 = arith.mulf %302, %303 : vector<48x32xf32>
    %305 = vector.broadcast %277 : vector<1x32xf32> to vector<48x32xf32>
    %306 = arith.addf %304, %305 : vector<48x32xf32>
    %c376 = arith.constant 376 : index
    %c0_114 = arith.constant 0 : index
    %307 = vector.load %arg2[%c376, %c0_114] : memref<688x32xf32, #tpu.memory_space<vmem>>, vector<32x32xf32>
    %cst_115 = arith.constant dense<0.000000e+00> : vector<48x32xf32>
    %308 = tpu.matmul %306, %307, %cst_115 {dimension_numbers = #tpu.dot_dimension_numbers<[1], [0], [0], [1], [0, 0, 1, 1], [], []>} : vector<48x32xf32>, vector<32x32xf32>, vector<48x32xf32> -> vector<48x32xf32>
    %309 = vector.broadcast %278 : vector<1x32xf32> to vector<48x32xf32>
    %310 = arith.addf %308, %309 : vector<48x32xf32>
    %c408 = arith.constant 408 : index
    %c0_116 = arith.constant 0 : index
    %311 = vector.load %arg2[%c408, %c0_116] : memref<688x32xf32, #tpu.memory_space<vmem>>, vector<32x32xf32>
    %cst_117 = arith.constant dense<0.000000e+00> : vector<48x32xf32>
    %312 = tpu.matmul %306, %311, %cst_117 {dimension_numbers = #tpu.dot_dimension_numbers<[1], [0], [0], [1], [0, 0, 1, 1], [], []>} : vector<48x32xf32>, vector<32x32xf32>, vector<48x32xf32> -> vector<48x32xf32>
    %313 = vector.broadcast %279 : vector<1x32xf32> to vector<48x32xf32>
    %314 = arith.addf %312, %313 : vector<48x32xf32>
    %c440 = arith.constant 440 : index
    %c0_118 = arith.constant 0 : index
    %315 = vector.load %arg2[%c440, %c0_118] : memref<688x32xf32, #tpu.memory_space<vmem>>, vector<32x32xf32>
    %cst_119 = arith.constant dense<0.000000e+00> : vector<48x32xf32>
    %316 = tpu.matmul %306, %315, %cst_119 {dimension_numbers = #tpu.dot_dimension_numbers<[1], [0], [0], [1], [0, 0, 1, 1], [], []>} : vector<48x32xf32>, vector<32x32xf32>, vector<48x32xf32> -> vector<48x32xf32>
    %317 = vector.broadcast %280 : vector<1x32xf32> to vector<48x32xf32>
    %318 = arith.addf %316, %317 : vector<48x32xf32>
    %319 = vector.broadcast %54 : vector<1x32xf32> to vector<48x32xf32>
    %320 = arith.mulf %310, %319 : vector<48x32xf32>
    %cst_120 = arith.constant dense<0.000000e+00> : vector<48x48xf32>
    %321 = tpu.matmul %320, %314, %cst_120 {dimension_numbers = #tpu.dot_dimension_numbers<[1], [1], [0], [0], [0, 0, 1, 0], [], []>} : vector<48x32xf32>, vector<48x32xf32>, vector<48x48xf32> -> vector<48x48xf32>
    %322 = arith.addf %321, %45 : vector<48x48xf32>
    %cst_121 = arith.constant dense<0xFF800000> : vector<48xf32>
    %323 = vector.multi_reduction <maximumf>, %322, %cst_121 [1] : vector<48x48xf32> to vector<48xf32>
    %324 = vector.shape_cast %323 : vector<48xf32> to vector<48x1xf32>
    %325 = vector.broadcast %324 : vector<48x1xf32> to vector<48x48xf32>
    %326 = arith.subf %322, %325 : vector<48x48xf32>
    %327 = math.exp %326 : vector<48x48xf32>
    %cst_122 = arith.constant dense<0.000000e+00> : vector<48xf32>
    %328 = vector.multi_reduction <add>, %327, %cst_122 [1] : vector<48x48xf32> to vector<48xf32>
    %329 = vector.shape_cast %328 : vector<48xf32> to vector<48x1xf32>
    %330 = tpu.reciprocal %329 {approx = true} : vector<48x1xf32> -> vector<48x1xf32>
    %331 = vector.broadcast %330 : vector<48x1xf32> to vector<48x48xf32>
    %332 = arith.mulf %327, %331 : vector<48x48xf32>
    %c4 = arith.constant 4 : index
    %c0_123 = arith.constant 0 : index
    %c0_124 = arith.constant 0 : index
    %333 = vector.load %arg5[%c4, %c0_123, %c0_124] : memref<8x48x48xf32, #tpu.memory_space<vmem>>, vector<1x48x48xf32>
    %334 = vector.shape_cast %333 : vector<1x48x48xf32> to vector<48x48xf32>
    %335 = vector.shape_cast %332 : vector<48x48xf32> to vector<1x48x48xf32>
    tpu.vector_store %arg5[%c4, %c0_123, %c0_124], %335 {strides = array<i32>} : memref<8x48x48xf32, #tpu.memory_space<vmem>>, vector<1x48x48xf32>,
    %336 = vector.broadcast %54 : vector<1x32xf32> to vector<48x32xf32>
    %337 = arith.mulf %318, %336 : vector<48x32xf32>
    %cst_125 = arith.constant dense<0.000000e+00> : vector<48x32xf32>
    %338 = tpu.matmul %332, %337, %cst_125 {dimension_numbers = #tpu.dot_dimension_numbers<[1], [0], [0], [1], [0, 0, 1, 1], [], []>} : vector<48x48xf32>, vector<48x32xf32>, vector<48x32xf32> -> vector<48x32xf32>
    %339 = vector.broadcast %62 : vector<1x32xf32> to vector<48x32xf32>
    %340 = arith.mulf %310, %339 : vector<48x32xf32>
    %cst_126 = arith.constant dense<0.000000e+00> : vector<48x48xf32>
    %341 = tpu.matmul %340, %314, %cst_126 {dimension_numbers = #tpu.dot_dimension_numbers<[1], [1], [0], [0], [0, 0, 1, 0], [], []>} : vector<48x32xf32>, vector<48x32xf32>, vector<48x48xf32> -> vector<48x48xf32>
    %342 = arith.addf %341, %45 : vector<48x48xf32>
    %cst_127 = arith.constant dense<0xFF800000> : vector<48xf32>
    %343 = vector.multi_reduction <maximumf>, %342, %cst_127 [1] : vector<48x48xf32> to vector<48xf32>
    %344 = vector.shape_cast %343 : vector<48xf32> to vector<48x1xf32>
    %345 = vector.broadcast %344 : vector<48x1xf32> to vector<48x48xf32>
    %346 = arith.subf %342, %345 : vector<48x48xf32>
    %347 = math.exp %346 : vector<48x48xf32>
    %cst_128 = arith.constant dense<0.000000e+00> : vector<48xf32>
    %348 = vector.multi_reduction <add>, %347, %cst_128 [1] : vector<48x48xf32> to vector<48xf32>
    %349 = vector.shape_cast %348 : vector<48xf32> to vector<48x1xf32>
    %350 = tpu.reciprocal %349 {approx = true} : vector<48x1xf32> -> vector<48x1xf32>
    %351 = vector.broadcast %350 : vector<48x1xf32> to vector<48x48xf32>
    %352 = arith.mulf %347, %351 : vector<48x48xf32>
    %c5 = arith.constant 5 : index
    %c0_129 = arith.constant 0 : index
    %c0_130 = arith.constant 0 : index
    %353 = vector.load %arg5[%c5, %c0_129, %c0_130] : memref<8x48x48xf32, #tpu.memory_space<vmem>>, vector<1x48x48xf32>
    %354 = vector.shape_cast %353 : vector<1x48x48xf32> to vector<48x48xf32>
    %355 = vector.shape_cast %352 : vector<48x48xf32> to vector<1x48x48xf32>
    tpu.vector_store %arg5[%c5, %c0_129, %c0_130], %355 {strides = array<i32>} : memref<8x48x48xf32, #tpu.memory_space<vmem>>, vector<1x48x48xf32>,
    %356 = vector.broadcast %62 : vector<1x32xf32> to vector<48x32xf32>
    %357 = arith.mulf %318, %356 : vector<48x32xf32>
    %cst_131 = arith.constant dense<0.000000e+00> : vector<48x32xf32>
    %358 = tpu.matmul %352, %357, %cst_131 {dimension_numbers = #tpu.dot_dimension_numbers<[1], [0], [0], [1], [0, 0, 1, 1], [], []>} : vector<48x48xf32>, vector<48x32xf32>, vector<48x32xf32> -> vector<48x32xf32>
    %359 = arith.addf %338, %358 : vector<48x32xf32>
    %360 = vector.broadcast %70 : vector<1x32xf32> to vector<48x32xf32>
    %361 = arith.mulf %310, %360 : vector<48x32xf32>
    %cst_132 = arith.constant dense<0.000000e+00> : vector<48x48xf32>
    %362 = tpu.matmul %361, %314, %cst_132 {dimension_numbers = #tpu.dot_dimension_numbers<[1], [1], [0], [0], [0, 0, 1, 0], [], []>} : vector<48x32xf32>, vector<48x32xf32>, vector<48x48xf32> -> vector<48x48xf32>
    %363 = arith.addf %362, %45 : vector<48x48xf32>
    %cst_133 = arith.constant dense<0xFF800000> : vector<48xf32>
    %364 = vector.multi_reduction <maximumf>, %363, %cst_133 [1] : vector<48x48xf32> to vector<48xf32>
    %365 = vector.shape_cast %364 : vector<48xf32> to vector<48x1xf32>
    %366 = vector.broadcast %365 : vector<48x1xf32> to vector<48x48xf32>
    %367 = arith.subf %363, %366 : vector<48x48xf32>
    %368 = math.exp %367 : vector<48x48xf32>
    %cst_134 = arith.constant dense<0.000000e+00> : vector<48xf32>
    %369 = vector.multi_reduction <add>, %368, %cst_134 [1] : vector<48x48xf32> to vector<48xf32>
    %370 = vector.shape_cast %369 : vector<48xf32> to vector<48x1xf32>
    %371 = tpu.reciprocal %370 {approx = true} : vector<48x1xf32> -> vector<48x1xf32>
    %372 = vector.broadcast %371 : vector<48x1xf32> to vector<48x48xf32>
    %373 = arith.mulf %368, %372 : vector<48x48xf32>
    %c6 = arith.constant 6 : index
    %c0_135 = arith.constant 0 : index
    %c0_136 = arith.constant 0 : index
    %374 = vector.load %arg5[%c6, %c0_135, %c0_136] : memref<8x48x48xf32, #tpu.memory_space<vmem>>, vector<1x48x48xf32>
    %375 = vector.shape_cast %374 : vector<1x48x48xf32> to vector<48x48xf32>
    %376 = vector.shape_cast %373 : vector<48x48xf32> to vector<1x48x48xf32>
    tpu.vector_store %arg5[%c6, %c0_135, %c0_136], %376 {strides = array<i32>} : memref<8x48x48xf32, #tpu.memory_space<vmem>>, vector<1x48x48xf32>,
    %377 = vector.broadcast %70 : vector<1x32xf32> to vector<48x32xf32>
    %378 = arith.mulf %318, %377 : vector<48x32xf32>
    %cst_137 = arith.constant dense<0.000000e+00> : vector<48x32xf32>
    %379 = tpu.matmul %373, %378, %cst_137 {dimension_numbers = #tpu.dot_dimension_numbers<[1], [0], [0], [1], [0, 0, 1, 1], [], []>} : vector<48x48xf32>, vector<48x32xf32>, vector<48x32xf32> -> vector<48x32xf32>
    %380 = arith.addf %359, %379 : vector<48x32xf32>
    %381 = vector.broadcast %78 : vector<1x32xf32> to vector<48x32xf32>
    %382 = arith.mulf %310, %381 : vector<48x32xf32>
    %cst_138 = arith.constant dense<0.000000e+00> : vector<48x48xf32>
    %383 = tpu.matmul %382, %314, %cst_138 {dimension_numbers = #tpu.dot_dimension_numbers<[1], [1], [0], [0], [0, 0, 1, 0], [], []>} : vector<48x32xf32>, vector<48x32xf32>, vector<48x48xf32> -> vector<48x48xf32>
    %384 = arith.addf %383, %45 : vector<48x48xf32>
    %cst_139 = arith.constant dense<0xFF800000> : vector<48xf32>
    %385 = vector.multi_reduction <maximumf>, %384, %cst_139 [1] : vector<48x48xf32> to vector<48xf32>
    %386 = vector.shape_cast %385 : vector<48xf32> to vector<48x1xf32>
    %387 = vector.broadcast %386 : vector<48x1xf32> to vector<48x48xf32>
    %388 = arith.subf %384, %387 : vector<48x48xf32>
    %389 = math.exp %388 : vector<48x48xf32>
    %cst_140 = arith.constant dense<0.000000e+00> : vector<48xf32>
    %390 = vector.multi_reduction <add>, %389, %cst_140 [1] : vector<48x48xf32> to vector<48xf32>
    %391 = vector.shape_cast %390 : vector<48xf32> to vector<48x1xf32>
    %392 = tpu.reciprocal %391 {approx = true} : vector<48x1xf32> -> vector<48x1xf32>
    %393 = vector.broadcast %392 : vector<48x1xf32> to vector<48x48xf32>
    %394 = arith.mulf %389, %393 : vector<48x48xf32>
    %c7 = arith.constant 7 : index
    %c0_141 = arith.constant 0 : index
    %c0_142 = arith.constant 0 : index
    %395 = vector.load %arg5[%c7, %c0_141, %c0_142] : memref<8x48x48xf32, #tpu.memory_space<vmem>>, vector<1x48x48xf32>
    %396 = vector.shape_cast %395 : vector<1x48x48xf32> to vector<48x48xf32>
    %397 = vector.shape_cast %394 : vector<48x48xf32> to vector<1x48x48xf32>
    tpu.vector_store %arg5[%c7, %c0_141, %c0_142], %397 {strides = array<i32>} : memref<8x48x48xf32, #tpu.memory_space<vmem>>, vector<1x48x48xf32>,
    %398 = vector.broadcast %78 : vector<1x32xf32> to vector<48x32xf32>
    %399 = arith.mulf %318, %398 : vector<48x32xf32>
    %cst_143 = arith.constant dense<0.000000e+00> : vector<48x32xf32>
    %400 = tpu.matmul %394, %399, %cst_143 {dimension_numbers = #tpu.dot_dimension_numbers<[1], [0], [0], [1], [0, 0, 1, 1], [], []>} : vector<48x48xf32>, vector<48x32xf32>, vector<48x32xf32> -> vector<48x32xf32>
    %401 = arith.addf %380, %400 : vector<48x32xf32>
    %c472 = arith.constant 472 : index
    %c0_144 = arith.constant 0 : index
    %402 = vector.load %arg2[%c472, %c0_144] : memref<688x32xf32, #tpu.memory_space<vmem>>, vector<32x32xf32>
    %cst_145 = arith.constant dense<0.000000e+00> : vector<48x32xf32>
    %403 = tpu.matmul %401, %402, %cst_145 {dimension_numbers = #tpu.dot_dimension_numbers<[1], [0], [0], [1], [0, 0, 1, 1], [], []>} : vector<48x32xf32>, vector<32x32xf32>, vector<48x32xf32> -> vector<48x32xf32>
    %404 = arith.addf %275, %403 : vector<48x32xf32>
    %405 = vector.broadcast %281 : vector<1x32xf32> to vector<48x32xf32>
    %406 = arith.addf %404, %405 : vector<48x32xf32>
    %cst_146 = arith.constant dense<0.000000e+00> : vector<48xf32>
    %407 = vector.multi_reduction <add>, %406, %cst_146 [1] : vector<48x32xf32> to vector<48xf32>
    %408 = vector.shape_cast %407 : vector<48xf32> to vector<48x1xf32>
    %cst_147 = arith.constant 3.200000e+01 : f32
    %409 = vector.broadcast %cst_147 : f32 to vector<48x1xf32>
    %410 = arith.divf %408, %409 : vector<48x1xf32>
    %411 = vector.broadcast %410 : vector<48x1xf32> to vector<48x32xf32>
    %412 = arith.subf %406, %411 : vector<48x32xf32>
    %413 = arith.mulf %412, %412 : vector<48x32xf32>
    %cst_148 = arith.constant dense<0.000000e+00> : vector<48xf32>
    %414 = vector.multi_reduction <add>, %413, %cst_148 [1] : vector<48x32xf32> to vector<48xf32>
    %415 = vector.shape_cast %414 : vector<48xf32> to vector<48x1xf32>
    %cst_149 = arith.constant 3.200000e+01 : f32
    %416 = vector.broadcast %cst_149 : f32 to vector<48x1xf32>
    %417 = arith.divf %415, %416 : vector<48x1xf32>
    %418 = vector.broadcast %410 : vector<48x1xf32> to vector<48x32xf32>
    %419 = arith.subf %406, %418 : vector<48x32xf32>
    %cst_150 = arith.constant 9.99999997E-7 : f32
    %420 = vector.broadcast %cst_150 : f32 to vector<48x1xf32>
    %421 = arith.addf %417, %420 : vector<48x1xf32>
    %422 = math.rsqrt %421 : vector<48x1xf32>
    %423 = vector.broadcast %422 : vector<48x1xf32> to vector<48x32xf32>
    %424 = arith.mulf %419, %423 : vector<48x32xf32>
    %425 = vector.broadcast %282 : vector<1x32xf32> to vector<48x32xf32>
    %426 = arith.mulf %424, %425 : vector<48x32xf32>
    %427 = vector.broadcast %283 : vector<1x32xf32> to vector<48x32xf32>
    %428 = arith.addf %426, %427 : vector<48x32xf32>
    %c504 = arith.constant 504 : index
    %c0_151 = arith.constant 0 : index
    %429 = vector.load %arg2[%c504, %c0_151] : memref<688x32xf32, #tpu.memory_space<vmem>>, vector<32x32xf32>
    %cst_152 = arith.constant dense<0.000000e+00> : vector<48x32xf32>
    %430 = tpu.matmul %428, %429, %cst_152 {dimension_numbers = #tpu.dot_dimension_numbers<[1], [0], [0], [1], [0, 0, 1, 1], [], []>} : vector<48x32xf32>, vector<32x32xf32>, vector<48x32xf32> -> vector<48x32xf32>
    %c640 = arith.constant 640 : index
    %c0_153 = arith.constant 0 : index
    %431 = vector.load %arg2[%c640, %c0_153] : memref<688x32xf32, #tpu.memory_space<vmem>>, vector<1x32xf32>
    %432 = vector.broadcast %431 : vector<1x32xf32> to vector<48x32xf32>
    %433 = arith.addf %430, %432 : vector<48x32xf32>
    %434 = arith.mulf %433, %433 : vector<48x32xf32>
    %435 = arith.mulf %433, %434 : vector<48x32xf32>
    %cst_154 = arith.constant 4.471500e-02 : f32
    %436 = vector.broadcast %cst_154 : f32 to vector<48x32xf32>
    %437 = arith.mulf %436, %435 : vector<48x32xf32>
    %438 = arith.addf %433, %437 : vector<48x32xf32>
    %cst_155 = arith.constant 0.797884583 : f32
    %439 = vector.broadcast %cst_155 : f32 to vector<48x32xf32>
    %440 = arith.mulf %439, %438 : vector<48x32xf32>
    %441 = math.tanh %440 : vector<48x32xf32>
    %cst_156 = arith.constant 1.000000e+00 : f32
    %442 = vector.broadcast %cst_156 : f32 to vector<48x32xf32>
    %443 = arith.addf %442, %441 : vector<48x32xf32>
    %cst_157 = arith.constant 5.000000e-01 : f32
    %444 = vector.broadcast %cst_157 : f32 to vector<48x32xf32>
    %445 = arith.mulf %444, %443 : vector<48x32xf32>
    %446 = arith.mulf %433, %445 : vector<48x32xf32>
    %c568 = arith.constant 568 : index
    %c0_158 = arith.constant 0 : index
    %447 = vector.load %arg2[%c568, %c0_158] : memref<688x32xf32, #tpu.memory_space<vmem>>, vector<32x32xf32>
    %cst_159 = arith.constant dense<0.000000e+00> : vector<48x32xf32>
    %448 = tpu.matmul %446, %447, %cst_159 {dimension_numbers = #tpu.dot_dimension_numbers<[1], [0], [0], [1], [0, 0, 1, 1], [], []>} : vector<48x32xf32>, vector<32x32xf32>, vector<48x32xf32> -> vector<48x32xf32>
    %449 = vector.broadcast %284 : vector<1x32xf32> to vector<48x32xf32>
    %450 = arith.addf %449, %448 : vector<48x32xf32>
    %c536 = arith.constant 536 : index
    %c0_160 = arith.constant 0 : index
    %451 = vector.load %arg2[%c536, %c0_160] : memref<688x32xf32, #tpu.memory_space<vmem>>, vector<32x32xf32>
    %cst_161 = arith.constant dense<0.000000e+00> : vector<48x32xf32>
    %452 = tpu.matmul %428, %451, %cst_161 {dimension_numbers = #tpu.dot_dimension_numbers<[1], [0], [0], [1], [0, 0, 1, 1], [], []>} : vector<48x32xf32>, vector<32x32xf32>, vector<48x32xf32> -> vector<48x32xf32>
    %c641 = arith.constant 641 : index
    %c0_162 = arith.constant 0 : index
    %453 = vector.load %arg2[%c641, %c0_162] : memref<688x32xf32, #tpu.memory_space<vmem>>, vector<1x32xf32>
    %454 = vector.broadcast %453 : vector<1x32xf32> to vector<48x32xf32>
    %455 = arith.addf %452, %454 : vector<48x32xf32>
    %456 = arith.mulf %455, %455 : vector<48x32xf32>
    %457 = arith.mulf %455, %456 : vector<48x32xf32>
    %cst_163 = arith.constant 4.471500e-02 : f32
    %458 = vector.broadcast %cst_163 : f32 to vector<48x32xf32>
    %459 = arith.mulf %458, %457 : vector<48x32xf32>
    %460 = arith.addf %455, %459 : vector<48x32xf32>
    %cst_164 = arith.constant 0.797884583 : f32
    %461 = vector.broadcast %cst_164 : f32 to vector<48x32xf32>
    %462 = arith.mulf %461, %460 : vector<48x32xf32>
    %463 = math.tanh %462 : vector<48x32xf32>
    %cst_165 = arith.constant 1.000000e+00 : f32
    %464 = vector.broadcast %cst_165 : f32 to vector<48x32xf32>
    %465 = arith.addf %464, %463 : vector<48x32xf32>
    %cst_166 = arith.constant 5.000000e-01 : f32
    %466 = vector.broadcast %cst_166 : f32 to vector<48x32xf32>
    %467 = arith.mulf %466, %465 : vector<48x32xf32>
    %468 = arith.mulf %455, %467 : vector<48x32xf32>
    %c600 = arith.constant 600 : index
    %c0_167 = arith.constant 0 : index
    %469 = vector.load %arg2[%c600, %c0_167] : memref<688x32xf32, #tpu.memory_space<vmem>>, vector<32x32xf32>
    %cst_168 = arith.constant dense<0.000000e+00> : vector<48x32xf32>
    %470 = tpu.matmul %468, %469, %cst_168 {dimension_numbers = #tpu.dot_dimension_numbers<[1], [0], [0], [1], [0, 0, 1, 1], [], []>} : vector<48x32xf32>, vector<32x32xf32>, vector<48x32xf32> -> vector<48x32xf32>
    %471 = arith.addf %450, %470 : vector<48x32xf32>
    %472 = arith.addf %406, %471 : vector<48x32xf32>
    %c648 = arith.constant 648 : index
    %c0_169 = arith.constant 0 : index
    %473 = vector.load %arg2[%c648, %c0_169] : memref<688x32xf32, #tpu.memory_space<vmem>>, vector<1x32xf32>
    %c649 = arith.constant 649 : index
    %c0_170 = arith.constant 0 : index
    %474 = vector.load %arg2[%c649, %c0_170] : memref<688x32xf32, #tpu.memory_space<vmem>>, vector<1x32xf32>
    %cst_171 = arith.constant dense<0.000000e+00> : vector<48xf32>
    %475 = vector.multi_reduction <add>, %472, %cst_171 [1] : vector<48x32xf32> to vector<48xf32>
    %476 = vector.shape_cast %475 : vector<48xf32> to vector<48x1xf32>
    %cst_172 = arith.constant 3.200000e+01 : f32
    %477 = vector.broadcast %cst_172 : f32 to vector<48x1xf32>
    %478 = arith.divf %476, %477 : vector<48x1xf32>
    %479 = vector.broadcast %478 : vector<48x1xf32> to vector<48x32xf32>
    %480 = arith.subf %472, %479 : vector<48x32xf32>
    %481 = arith.mulf %480, %480 : vector<48x32xf32>
    %cst_173 = arith.constant dense<0.000000e+00> : vector<48xf32>
    %482 = vector.multi_reduction <add>, %481, %cst_173 [1] : vector<48x32xf32> to vector<48xf32>
    %483 = vector.shape_cast %482 : vector<48xf32> to vector<48x1xf32>
    %cst_174 = arith.constant 3.200000e+01 : f32
    %484 = vector.broadcast %cst_174 : f32 to vector<48x1xf32>
    %485 = arith.divf %483, %484 : vector<48x1xf32>
    %486 = vector.broadcast %478 : vector<48x1xf32> to vector<48x32xf32>
    %487 = arith.subf %472, %486 : vector<48x32xf32>
    %cst_175 = arith.constant 9.99999997E-7 : f32
    %488 = vector.broadcast %cst_175 : f32 to vector<48x1xf32>
    %489 = arith.addf %485, %488 : vector<48x1xf32>
    %490 = math.rsqrt %489 : vector<48x1xf32>
    %491 = vector.broadcast %490 : vector<48x1xf32> to vector<48x32xf32>
    %492 = arith.mulf %487, %491 : vector<48x32xf32>
    %493 = vector.broadcast %473 : vector<1x32xf32> to vector<48x32xf32>
    %494 = arith.mulf %492, %493 : vector<48x32xf32>
    %495 = vector.broadcast %474 : vector<1x32xf32> to vector<48x32xf32>
    %496 = arith.addf %494, %495 : vector<48x32xf32>
    %497 = tpu.iota {dimensions = array<i32: 0>} : vector<2x48xi32>
    %498 = tpu.iota {dimensions = array<i32: 1>} : vector<2x48xi32>
    %c24_i32_176 = arith.constant 24 : i32
    %499 = vector.broadcast %c24_i32_176 : i32 to vector<2x48xi32>
    %500 = arith.muli %497, %499 : vector<2x48xi32>
    %501 = arith.cmpi sge, %498, %500 : vector<2x48xi32>
    %c24_i32_177 = arith.constant 24 : i32
    %502 = vector.broadcast %c24_i32_177 : i32 to vector<2x48xi32>
    %503 = arith.muli %497, %502 : vector<2x48xi32>
    %c21_i32_178 = arith.constant 21 : i32
    %504 = vector.broadcast %c21_i32_178 : i32 to vector<2x48xi32>
    %505 = arith.addi %503, %504 : vector<2x48xi32>
    %506 = arith.cmpi slt, %498, %505 : vector<2x48xi32>
    %507 = arith.andi %501, %506 : vector<2x48xi1>
    %cst_179 = arith.constant 0.0476190485 : f32
    %cst_180 = arith.constant 0.000000e+00 : f32
    %508 = vector.broadcast %cst_179 : f32 to vector<2x48xf32>
    %509 = vector.broadcast %cst_180 : f32 to vector<2x48xf32>
    %510 = arith.select %507, %508, %509 : vector<2x48xi1>, vector<2x48xf32>
    %cst_181 = arith.constant dense<0.000000e+00> : vector<2x32xf32>
    %511 = tpu.matmul %510, %496, %cst_181 {dimension_numbers = #tpu.dot_dimension_numbers<[1], [0], [0], [1], [0, 0, 1, 1], [], []>} : vector<2x48xf32>, vector<48x32xf32>, vector<2x32xf32> -> vector<2x32xf32>
    %c0_182 = arith.constant 0 : index
    %c0_183 = arith.constant 0 : index
    %512 = vector.load %arg4[%c0_182, %c0_183] : memref<2x32xf32, #tpu.memory_space<vmem>>, vector<2x32xf32>
    tpu.vector_store %arg4[%c0_182, %c0_183], %511 {strides = array<i32>} : memref<2x32xf32, #tpu.memory_space<vmem>>, vector<2x32xf32>,
    %c656 = arith.constant 656 : index
    %c0_184 = arith.constant 0 : index
    %513 = vector.load %arg2[%c656, %c0_184] : memref<688x32xf32, #tpu.memory_space<vmem>>, vector<32x32xf32>
    %cst_185 = arith.constant dense<0.000000e+00> : vector<2x32xf32>
    %514 = tpu.matmul %511, %513, %cst_185 {dimension_numbers = #tpu.dot_dimension_numbers<[1], [0], [0], [1], [0, 0, 1, 1], [], []>} : vector<2x32xf32>, vector<32x32xf32>, vector<2x32xf32> -> vector<2x32xf32>
    %c650 = arith.constant 650 : index
    %c0_186 = arith.constant 0 : index
    %515 = vector.load %arg2[%c650, %c0_186] : memref<688x32xf32, #tpu.memory_space<vmem>>, vector<1x32xf32>
    %516 = vector.broadcast %515 : vector<1x32xf32> to vector<2x32xf32>
    %517 = arith.addf %514, %516 : vector<2x32xf32>
    %518 = vector.extract_strided_slice %517 {offsets = [0, 0], sizes = [2, 2], strides = [1, 1]} : vector<2x32xf32> to vector<2x2xf32>
    %c0_187 = arith.constant 0 : index
    %c0_188 = arith.constant 0 : index
    %519 = vector.load %arg3[%c0_187, %c0_188] : memref<2x2xf32, #tpu.memory_space<vmem>>, vector<2x2xf32>
    tpu.vector_store %arg3[%c0_187, %c0_188], %518 {strides = array<i32>} : memref<2x2xf32, #tpu.memory_space<vmem>>, vector<2x2xf32>,
    return
  }
}

</mosaic_0001>

<llo_original>
// kernel: llnm_forward.1
$region0: #{llnm_forward.1}
  #allocation0 [shape = 'u32[]', space=smem, size = 0x4, offset = 0x4, fixed_abs, tag = 'smem constant byte address 0x4 - core index']
  #allocation1 [shape = 'u32[144,128]{1,0:T(1,128)}', space=vmem, size = 0x12000, scoped, tag = 'internal scratch']
  %s0 = inlined_call_operand.vmem [shape: f32[32,48], index: 0, kind: input, shape index: {}]
  %s1 = inlined_call_operand.vmem [shape: f32[8,32], index: 1, kind: input, shape index: {}]
  %s2 = inlined_call_operand.vmem [shape: f32[688,32], index: 2, kind: input, shape index: {}]
  %s3 = inlined_call_operand.hbm [shape: f32[2,2], index: 3, kind: output, shape index: {0}]
  %s4 = inlined_call_operand.hbm [shape: f32[2,32], index: 4, kind: output, shape index: {1}]
  %s5 = inlined_call_operand.vmem [shape: f32[8,48,48], index: 5, kind: output, shape index: {2}]
  %6 = xla_tuple %s3, %s4, %s5
  %s7 = sld [smem:[#allocation0]]
  $region38: #{llnm_forward.1} parent=0
    _
  %s9 = ssub.s32 1, %s7
  %s10 = scalar_select 0, %s9, %s7
  $region1: #{llnm_forward.1} parent=0
    #allocation2 [shape = 'u8[1024]{0}', space=vmem, size = 0x400, scoped, tag = 'output window, operand 0, single buffered']
    #allocation3 [shape = 's32[1]{0}', space=sflag, size = 0x4, scoped, tag = 'scoped memory for llnm_forward.1']
    #allocation4 [shape = 'u8[1024]{0}', space=vmem, size = 0x400, scoped, tag = 'output window, operand 1, single buffered']
    #allocation5 [shape = 's32[1]{0}', space=sflag, size = 0x4, scoped, tag = 'scoped memory for llnm_forward.1']
    %11 = vsyncpa [#allocation3], 0
    %12 = vsyncpa [#allocation5], 0
    // Predicated region
    $region2: #{llnm_forward.1} parent=1 // pred_check
      _
    $region3: #{llnm_forward.1} parent=1 // pred_check_branch
      %14 = sbr.rel (0) target = $region5
    $region4: #{llnm_forward.1} parent=1 // pred_region
      _
    $region5: #{llnm_forward.1} parent=1 // pred_fallthru
      _
    // Predicated region
    $region6: #{llnm_forward.1} parent=1 // pred_check
      _
    $region7: #{llnm_forward.1} parent=1 // pred_check_branch
      %16 = sbr.rel (0) target = $region9
    $region8: #{llnm_forward.1} parent=1 // pred_region
      _
    $region9: #{llnm_forward.1} parent=1 // pred_fallthru
      _
    // Predicated region
    $region10: #{llnm_forward.1} parent=1 // pred_check
      _
    $region11: #{llnm_forward.1} parent=1 // pred_check_branch
      %18 = sbr.rel (0) target = $region13
    $region12: #{llnm_forward.1} parent=1 // pred_region
      _
    $region13: #{llnm_forward.1} parent=1 // pred_fallthru
      _
    %v19 = vld [vmem:[%s0] sm:$0xff]
    %v20 = vld [vmem:[%s0 + $0x8] sm:$0xff]
    %v21 = vld [vmem:[%s0 + $0x10] sm:$0xff]
    %v22 = vld [vmem:[%s0 + $0x18] sm:$0xff]
    %v23 = vld [vmem:[%s2] sm:$0xff]
    %v24 = vld [vmem:[%s2 + $0x8] sm:$0xff]
    %v25 = vld [vmem:[%s2 + $0x10] sm:$0xff]
    %v26 = vld [vmem:[%s2 + $0x18] sm:$0xff]
    %v27 = vld [vmem:[%s2 + $0x20] sm:$0xff]
    %v28 = vld [vmem:[%s2 + $0x28] sm:$0xff]
    %vm29 = vcmask 392192
    %v31 = vsel %vm29, %v19, 0
    %v34 = vsel %vm29, %v20, 0
    %v37 = vsel %vm29, %v21, 0
    %v40 = vsel %vm29, %v22, 0
    %42 = vmatprep.subr.mxu0 0.0
    %43 = vmatpush1.msra.mxu0 0.0
    %44 = vmatprep.subr.mxu0 0.0
    %45 = vmatpush1.msra.mxu0 0.0
    %46 = vmatprep.subr.mxu0 0.0
    %47 = vmatpush1.msra.mxu0 0.0
    %48 = vmatprep.subr.mxu0 0.0
    %49 = vmatpush1.msra.mxu0 0.0
    %50 = vmatprep.subr.mxu0 0.0
    %51 = vmatpush1.msra.mxu0 0.0
    %52 = vmatprep.subr.mxu0 0.0
    %53 = vmatpush1.msra.mxu0 0.0
    %54 = vmatprep.subr.mxu0 0.0
    %55 = vmatpush1.msra.mxu0 0.0
    %56 = vmatprep.subr.mxu0 0.0
    %57 = vmatpush1.msra.mxu0 0.0
    %58 = vmatprep.subr.mxu0 0.0
    %59 = vmatpush1.msra.mxu0 0.0
    %60 = vmatprep.subr.mxu0 0.0
    %61 = vmatpush1.msra.mxu0 0.0
    %62 = vmatprep.subr.mxu0 0.0
    %63 = vmatpush1.msra.mxu0 %v28
    %64 = vmatprep.subr.mxu0 0.0
    %65 = vmatpush1.msra.mxu0 %v27
    %66 = vmatprep.subr.mxu0 0.0
    %67 = vmatpush1.msra.mxu0 %v26
    %68 = vmatprep.subr.mxu0 0.0
    %69 = vmatpush1.msra.mxu0 %v25
    %70 = vmatprep.subr.mxu0 0.0
    %71 = vmatpush1.msra.mxu0 %v24
    %72 = vmatprep.subr.mxu0 0.0
    %73 = vmatpush1.msra.mxu0 %v23
    %74 = vmatprep.subr.mxu0 0.0
    %75 = vmatpush2.msra.mxu0 0.0
    %76 = vmatprep.subr.mxu0 0.0
    %77 = vmatpush2.msra.mxu0 0.0
    %78 = vmatprep.subr.mxu0 0.0
    %79 = vmatpush2.msra.mxu0 0.0
    %80 = vmatprep.subr.mxu0 0.0
    %81 = vmatpush2.msra.mxu0 0.0
    %82 = vmatprep.subr.mxu0 0.0
    %83 = vmatpush2.msra.mxu0 0.0
    %84 = vmatprep.subr.mxu0 0.0
    %85 = vmatpush2.msra.mxu0 0.0
    %86 = vmatprep.subr.mxu0 0.0
    %87 = vmatpush2.msra.mxu0 0.0
    %88 = vmatprep.subr.mxu0 0.0
    %89 = vmatpush2.msra.mxu0 0.0
    %90 = vmatprep.subr.mxu0 0.0
    %91 = vmatpush2.msra.mxu0 0.0
    %92 = vmatprep.subr.mxu0 0.0
    %93 = vmatpush2.msra.mxu0 0.0
    %94 = vmatprep.subr.mxu0 0.0
    %95 = vmatpush2.msra.mxu0 0.0
    %96 = vmatprep.subr.mxu0 0.0
    %97 = vmatpush2.msra.mxu0 0.0
    %98 = vmatprep.subr.mxu0 0.0
    %99 = vmatpush2.msra.mxu0 0.0
    %100 = vmatprep.subr.mxu0 0.0
    %101 = vmatpush2.msra.mxu0 0.0
    %102 = vmatprep.subr.mxu0 0.0
    %103 = vmatpush2.msra.mxu0 0.0
    %104 = vmatprep.subr.mxu0 0.0
    %105 = vmatpush2.msra.mxu0 0.0
    %106 = vmatprep.mubr.f32.mxu0 0.0
    %107 = vmatmul.mubr.f32.gmra.mxu0 %v31
    %v108 = vpop.f32.mrf.mxu0
    %v109 = vadd.f32 0.0, %v108
    %v110 = vpop.f32.mrf.mxu0
    %111 = vmatprep.mubr.f32.mxu0 0.0
    %112 = vmatmul.mubr.f32.gmra.mxu0 %v34
    %v113 = vpop.f32.mrf.mxu0
    %v114 = vadd.f32 0.0, %v113
    %v115 = vpop.f32.mrf.mxu0
    %116 = vmatprep.mubr.f32.mxu0 0.0
    %117 = vmatmul.mubr.f32.gmra.mxu0 %v37
    %v118 = vpop.f32.mrf.mxu0
    %v119 = vadd.f32 0.0, %v118
    %v120 = vpop.f32.mrf.mxu0
    %121 = vmatprep.mubr.f32.mxu0 0.0
    %122 = vmatmul.mubr.f32.gmra.mxu0 %v40
    %v123 = vpop.f32.mrf.mxu0
    %v124 = vadd.f32 0.0, %v123
    %v125 = vpop.f32.mrf.mxu0
    %126 = vdwg.mxu0
    %v127 = vld [vmem:[%s1] sm:$0xff]
    %v128 = vld [vmem:[%s2 + $0x30] sm:$0xff]
    %v129 = vld [vmem:[%s2 + $0x38] sm:$0xff]
    %v130 = vld [vmem:[%s2 + $0x40] sm:$0xff]
    %v131 = vld [vmem:[%s2 + $0x48] sm:$0xff]
    %vm132 = vcmask 261120
    %v134 = vsel %vm132, %v127, 0
    %136 = vmatprep.subr.mxu0 0.0
    %137 = vmatpush1.msra.mxu0 0.0
    %138 = vmatprep.subr.mxu0 0.0
    %139 = vmatpush1.msra.mxu0 0.0
    %140 = vmatprep.subr.mxu0 0.0
    %141 = vmatpush1.msra.mxu0 0.0
    %142 = vmatprep.subr.mxu0 0.0
    %143 = vmatpush1.msra.mxu0 0.0
    %144 = vmatprep.subr.mxu0 0.0
    %145 = vmatpush1.msra.mxu0 0.0
    %146 = vmatprep.subr.mxu0 0.0
    %147 = vmatpush1.msra.mxu0 0.0
    %148 = vmatprep.subr.mxu0 0.0
    %149 = vmatpush1.msra.mxu0 0.0
    %150 = vmatprep.subr.mxu0 0.0
    %151 = vmatpush1.msra.mxu0 0.0
    %152 = vmatprep.subr.mxu0 0.0
    %153 = vmatpush1.msra.mxu0 0.0
    %154 = vmatprep.subr.mxu0 0.0
    %155 = vmatpush1.msra.mxu0 0.0
    %156 = vmatprep.subr.mxu0 0.0
    %157 = vmatpush1.msra.mxu0 0.0
    %158 = vmatprep.subr.mxu0 0.0
    %159 = vmatpush1.msra.mxu0 0.0
    %160 = vmatprep.subr.mxu0 0.0
    %161 = vmatpush1.msra.mxu0 %v131
    %162 = vmatprep.subr.mxu0 0.0
    %163 = vmatpush1.msra.mxu0 %v130
    %164 = vmatprep.subr.mxu0 0.0
    %165 = vmatpush1.msra.mxu0 %v129
    %166 = vmatprep.subr.mxu0 0.0
    %167 = vmatpush1.msra.mxu0 %v128
    %168 = vmatprep.subr.mxu0 0.0
    %169 = vmatpush2.msra.mxu0 0.0
    %170 = vmatprep.subr.mxu0 0.0
    %171 = vmatpush2.msra.mxu0 0.0
    %172 = vmatprep.subr.mxu0 0.0
    %173 = vmatpush2.msra.mxu0 0.0
    %174 = vmatprep.subr.mxu0 0.0
    %175 = vmatpush2.msra.mxu0 0.0
    %176 = vmatprep.subr.mxu0 0.0
    %177 = vmatpush2.msra.mxu0 0.0
    %178 = vmatprep.subr.mxu0 0.0
    %179 = vmatpush2.msra.mxu0 0.0
    %180 = vmatprep.subr.mxu0 0.0
    %181 = vmatpush2.msra.mxu0 0.0
    %182 = vmatprep.subr.mxu0 0.0
    %183 = vmatpush2.msra.mxu0 0.0
    %184 = vmatprep.subr.mxu0 0.0
    %185 = vmatpush2.msra.mxu0 0.0
    %186 = vmatprep.subr.mxu0 0.0
    %187 = vmatpush2.msra.mxu0 0.0
    %188 = vmatprep.subr.mxu0 0.0
    %189 = vmatpush2.msra.mxu0 0.0
    %190 = vmatprep.subr.mxu0 0.0
    %191 = vmatpush2.msra.mxu0 0.0
    %192 = vmatprep.subr.mxu0 0.0
    %193 = vmatpush2.msra.mxu0 0.0
    %194 = vmatprep.subr.mxu0 0.0
    %195 = vmatpush2.msra.mxu0 0.0
    %196 = vmatprep.subr.mxu0 0.0
    %197 = vmatpush2.msra.mxu0 0.0
    %198 = vmatprep.subr.mxu0 0.0
    %199 = vmatpush2.msra.mxu0 0.0
    %200 = vmatprep.mubr.f32.mxu0 0.0
    %201 = vmatmul.mubr.f32.gmra.mxu0 %v134
    %v202 = vpop.f32.mrf.mxu0
    %v203 = vadd.f32 0.0, %v202
    %v204 = vpop.f32.mrf.mxu0
    %205 = vdwg.mxu0
    %v206 = vld [vmem:[%s2 + $0x50] sm:$0xff]
    %v207 = vld [vmem:[%s2 + $0x58] sm:$0xff]
    %v208 = vld [vmem:[%s2 + $0x60] sm:$0xff]
    %vm211 = vcmask 1040384
    %v212 = vrot.slane %v109, 7
    %v213 = vrot.slane %v114, 7
    %v214 = vsel %vm211, %v212, %v213
    %v219 = vrot.slane %v203, 7
    %v223 = vrot.slane %v119, 7
    %v224 = vrot.slane %v124, 7
    %v225 = vsel %vm211, %v223, %v224
    %v229 = vrot.slane %v203, 3
    %v231 = vsel %vm211, 0.0, %v212
    %v232 = vsel %vm211, %v213, %v219
    %vm233 = vcmask 1044480
    %v234 = vsel %vm233, %v232, 0.0
    %v235 = vsel %vm211, 0.0, %v223
    %v236 = vsel %vm211, %v224, %v229
    %v237 = vsel %vm233, %v236, 0.0
    %v238 = vadd.f32 %v231, %v206
    %v239 = vadd.f32 %v214, %v207
    %v240 = vadd.f32 %v234, %v208
    %v241 = vadd.f32 %v235, %v206
    %v242 = vadd.f32 %v225, %v207
    %v243 = vadd.f32 %v237, %v208
    %v244 = vlaneseq
    %v245 = vshrl.u32 %v244, 7
    %v246 = vadd.s32 %v245, 8
    %v247 = vadd.s32 %v245, 16
    %v248 = vadd.s32 %v245, 24
    %v249 = vadd.s32 %v245, 32
    %v250 = vadd.s32 %v245, 40
    %v251 = vlaneseq
    %v252 = vand.u32 %v251, 127
    %vm253 = vcmp.ge.s32.totalorder %v245, 0
    %vm254 = vcmp.ge.s32.totalorder %v246, 0
    %vm255 = vcmp.ge.s32.totalorder %v247, 0
    %vm256 = vcmp.ge.s32.totalorder %v248, 0
    %vm257 = vcmp.ge.s32.totalorder %v249, 0
    %vm258 = vcmp.ge.s32.totalorder %v250, 0
    %vm259 = vcmp.lt.s32.totalorder %v245, 24
    %vm260 = vcmp.lt.s32.totalorder %v246, 24
    %vm261 = vcmp.lt.s32.totalorder %v247, 24
    %vm262 = vcmp.lt.s32.totalorder %v248, 24
    %vm263 = vcmp.lt.s32.totalorder %v249, 24
    %vm264 = vcmp.lt.s32.totalorder %v250, 24
    %vm265 = vmand %vm253, %vm259
    %vm266 = vmand %vm254, %vm260
    %vm267 = vmand %vm255, %vm261
    %vm268 = vmand %vm256, %vm262
    %vm269 = vmand %vm257, %vm263
    %vm270 = vmand %vm258, %vm264
    %vm271 = vcmp.ge.s32.totalorder %v252, 0
    %vm272 = vmand %vm265, %vm271
    %vm273 = vmand %vm266, %vm271
    %vm274 = vmand %vm267, %vm271
    %vm275 = vmand %vm268, %vm271
    %vm276 = vmand %vm269, %vm271
    %vm277 = vmand %vm270, %vm271
    %vm278 = vcmp.lt.s32.totalorder %v252, 21
    %vm279 = vmand %vm272, %vm278
    %vm280 = vmand %vm273, %vm278
    %vm281 = vmand %vm274, %vm278
    %vm282 = vmand %vm275, %vm278
    %vm283 = vmand %vm276, %vm278
    %vm284 = vmand %vm277, %vm278
    %vm285 = vcmp.ge.s32.totalorder %v245, 24
    %vm286 = vcmp.ge.s32.totalorder %v246, 24
    %vm287 = vcmp.ge.s32.totalorder %v247, 24
    %vm288 = vcmp.ge.s32.totalorder %v248, 24
    %vm289 = vcmp.ge.s32.totalorder %v249, 24
    %vm290 = vcmp.ge.s32.totalorder %v250, 24
    %vm291 = vcmp.lt.s32.totalorder %v245, 48
    %vm292 = vcmp.lt.s32.totalorder %v246, 48
    %vm293 = vcmp.lt.s32.totalorder %v247, 48
    %vm294 = vcmp.lt.s32.totalorder %v248, 48
    %vm295 = vcmp.lt.s32.totalorder %v249, 48
    %vm296 = vcmp.lt.s32.totalorder %v250, 48
    %vm297 = vmand %vm285, %vm291
    %vm298 = vmand %vm286, %vm292
    %vm299 = vmand %vm287, %vm293
    %vm300 = vmand %vm288, %vm294
    %vm301 = vmand %vm289, %vm295
    %vm302 = vmand %vm290, %vm296
    %vm303 = vcmp.ge.s32.totalorder %v252, 24
    %vm304 = vmand %vm297, %vm303
    %vm305 = vmand %vm298, %vm303
    %vm306 = vmand %vm299, %vm303
    %vm307 = vmand %vm300, %vm303
    %vm308 = vmand %vm301, %vm303
    %vm309 = vmand %vm302, %vm303
    %vm310 = vcmp.lt.s32.totalorder %v252, 45
    %vm311 = vmand %vm304, %vm310
    %vm312 = vmand %vm305, %vm310
    %vm313 = vmand %vm306, %vm310
    %vm314 = vmand %vm307, %vm310
    %vm315 = vmand %vm308, %vm310
    %vm316 = vmand %vm309, %vm310
    %vm317 = vmor %vm279, %vm311
    %vm318 = vmor %vm280, %vm312
    %vm319 = vmor %vm281, %vm313
    %vm320 = vmor %vm282, %vm314
    %vm321 = vmor %vm283, %vm315
    %vm322 = vmor %vm284, %vm316
    %v323 = vsel %vm317, 0.0, -1e+09
    %v324 = vsel %vm318, 0.0, -1e+09
    %v325 = vsel %vm319, 0.0, -1e+09
    %v326 = vsel %vm320, 0.0, -1e+09
    %v327 = vsel %vm321, 0.0, -1e+09
    %v328 = vsel %vm322, 0.0, -1e+09
    %vm329 = vcmp.lt.s32.totalorder %v252, 8
    %vm330 = vmand %vm271, %vm329
    %v331 = vsel %vm330, 1.0, 0.0
    %vm332 = vcmp.ge.s32.totalorder %v252, 8
    %vm333 = vcmp.lt.s32.totalorder %v252, 16
    %vm334 = vmand %vm332, %vm333
    %v335 = vsel %vm334, 1.0, 0.0
    %vm336 = vcmp.ge.s32.totalorder %v252, 16
    %vm337 = vcmp.lt.s32.totalorder %v252, 24
    %vm338 = vmand %vm336, %vm337
    %v339 = vsel %vm338, 1.0, 0.0
    %vm340 = vcmp.lt.s32.totalorder %v252, 32
    %vm341 = vmand %vm303, %vm340
    %v342 = vsel %vm341, 1.0, 0.0
    %v343 = vld [vmem:[%s2 + $0x168] sm:$0x1]
    %v344 = vld [vmem:[%s2 + $0x169] sm:$0x1]
    %v345 = vld [vmem:[%s2 + $0x16a] sm:$0x1]
    %v346 = vld [vmem:[%s2 + $0x16b] sm:$0x1]
    %v347 = vld [vmem:[%s2 + $0x16c] sm:$0x1]
    %v348 = vld [vmem:[%s2 + $0x16d] sm:$0x1]
    %v349 = vld [vmem:[%s2 + $0x16e] sm:$0x1]
    %v350 = vld [vmem:[%s2 + $0x16f] sm:$0x1]
    %v351 = vld [vmem:[%s2 + $0x172] sm:$0x1]
    %v352 = vsel %vm132, %v238, 0.0
    %353 = vadd.xlane.f32.xlu0 %v352
    %v354 = vpop.xlane.xlu0 %353
    %v355 = vsel %vm132, %v239, 0.0
    %356 = vadd.xlane.f32.xlu0 %v355
    %v357 = vpop.xlane.xlu0 %356
    %v358 = vsel %vm132, %v240, 0.0
    %359 = vadd.xlane.f32.xlu0 %v358
    %v360 = vpop.xlane.xlu0 %359
    %v361 = vsel %vm132, %v241, 0.0
    %362 = vadd.xlane.f32.xlu0 %v361
    %v363 = vpop.xlane.xlu0 %362
    %v364 = vsel %vm132, %v242, 0.0
    %365 = vadd.xlane.f32.xlu0 %v364
    %v366 = vpop.xlane.xlu0 %365
    %v367 = vsel %vm132, %v243, 0.0
    %368 = vadd.xlane.f32.xlu0 %v367
    %v369 = vpop.xlane.xlu0 %368
    %v370 = vrcp.pop 32.0
    %v371 = vmul.f32 %v354, %v370
    %v372 = vmul.f32 %v357, %v370
    %v373 = vmul.f32 %v360, %v370
    %v374 = vmul.f32 %v363, %v370
    %v375 = vmul.f32 %v366, %v370
    %v376 = vmul.f32 %v369, %v370
    %v377 = vsub.f32 %v238, %v371
    %v378 = vsub.f32 %v239, %v372
    %v379 = vsub.f32 %v240, %v373
    %v380 = vsub.f32 %v241, %v374
    %v381 = vsub.f32 %v242, %v375
    %v382 = vsub.f32 %v243, %v376
    %v383 = vmul.f32 %v377, %v377
    %v384 = vmul.f32 %v378, %v378
    %v385 = vmul.f32 %v379, %v379
    %v386 = vmul.f32 %v380, %v380
    %v387 = vmul.f32 %v381, %v381
    %v388 = vmul.f32 %v382, %v382
    %v389 = vsel %vm132, %v383, 0.0
    %390 = vadd.xlane.f32.xlu0 %v389
    %v391 = vpop.xlane.xlu0 %390
    %v392 = vsel %vm132, %v384, 0.0
    %393 = vadd.xlane.f32.xlu0 %v392
    %v394 = vpop.xlane.xlu0 %393
    %v395 = vsel %vm132, %v385, 0.0
    %396 = vadd.xlane.f32.xlu0 %v395
    %v397 = vpop.xlane.xlu0 %396
    %v398 = vsel %vm132, %v386, 0.0
    %399 = vadd.xlane.f32.xlu0 %v398
    %v400 = vpop.xlane.xlu0 %399
    %v401 = vsel %vm132, %v387, 0.0
    %402 = vadd.xlane.f32.xlu0 %v401
    %v403 = vpop.xlane.xlu0 %402
    %v404 = vsel %vm132, %v388, 0.0
    %405 = vadd.xlane.f32.xlu0 %v404
    %v406 = vpop.xlane.xlu0 %405
    %v407 = vmul.f32 %v391, %v370
    %v408 = vmul.f32 %v394, %v370
    %v409 = vmul.f32 %v397, %v370
    %v410 = vmul.f32 %v400, %v370
    %v411 = vmul.f32 %v403, %v370
    %v412 = vmul.f32 %v406, %v370
    %v413 = vadd.f32 %v407, 1e-06
    %v414 = vadd.f32 %v408, 1e-06
    %v415 = vadd.f32 %v409, 1e-06
    %v416 = vadd.f32 %v410, 1e-06
    %v417 = vadd.f32 %v411, 1e-06
    %v418 = vadd.f32 %v412, 1e-06
    %v419 = vrsqrt.pop %v413
    %v420 = vrsqrt.pop %v414
    %v421 = vrsqrt.pop %v415
    %v422 = vrsqrt.pop %v416
    %v423 = vrsqrt.pop %v417
    %v424 = vrsqrt.pop %v418
    %v425 = vmul.f32 %v377, %v419
    %v426 = vmul.f32 %v378, %v420
    %v427 = vmul.f32 %v379, %v421
    %v428 = vmul.f32 %v380, %v422
    %v429 = vmul.f32 %v381, %v423
    %v430 = vmul.f32 %v382, %v424
    %v431 = vlaneseq
    %v432 = vshrl.u32 %v431, 7
    %v433 = vsub.s32 0, %v432
    %v434 = vrot.slane %v343, %v433
    %v435 = vmul.f32 %v425, %v434
    %v436 = vmul.f32 %v426, %v434
    %v437 = vmul.f32 %v427, %v434
    %v438 = vmul.f32 %v428, %v434
    %v439 = vmul.f32 %v429, %v434
    %v440 = vmul.f32 %v430, %v434
    %v441 = vlaneseq
    %v442 = vshrl.u32 %v441, 7
    %v443 = vsub.s32 0, %v442
    %v444 = vrot.slane %v344, %v443
    %v445 = vadd.f32 %v435, %v444
    %v446 = vadd.f32 %v436, %v444
    %v447 = vadd.f32 %v437, %v444
    %v448 = vadd.f32 %v438, %v444
    %v449 = vadd.f32 %v439, %v444
    %v450 = vadd.f32 %v440, %v444
    %v451 = vld [vmem:[%s2 + $0x68] sm:$0xff]
    %v452 = vld [vmem:[%s2 + $0x70] sm:$0xff]
    %v453 = vld [vmem:[%s2 + $0x78] sm:$0xff]
    %v454 = vld [vmem:[%s2 + $0x80] sm:$0xff]
    %v455 = vlaneseq
    %v456 = vshrl.u32 %v455, 7
    %v457 = vsub.s32 0, %v456
    %v458 = vrot.slane %v345, %v457
    %v460 = vsel %vm132, %v445, 0
    %v463 = vsel %vm132, %v446, 0
    %v466 = vsel %vm132, %v447, 0
    %v469 = vsel %vm132, %v448, 0
    %v472 = vsel %vm132, %v449, 0
    %v475 = vsel %vm132, %v450, 0
    %477 = vmatprep.subr.mxu0 0.0
    %478 = vmatpush1.msra.mxu0 0.0
    %479 = vmatprep.subr.mxu0 0.0
    %480 = vmatpush1.msra.mxu0 0.0
    %481 = vmatprep.subr.mxu0 0.0
    %482 = vmatpush1.msra.mxu0 0.0
    %483 = vmatprep.subr.mxu0 0.0
    %484 = vmatpush1.msra.mxu0 0.0
    %485 = vmatprep.subr.mxu0 0.0
    %486 = vmatpush1.msra.mxu0 0.0
    %487 = vmatprep.subr.mxu0 0.0
    %488 = vmatpush1.msra.mxu0 0.0
    %489 = vmatprep.subr.mxu0 0.0
    %490 = vmatpush1.msra.mxu0 0.0
    %491 = vmatprep.subr.mxu0 0.0
    %492 = vmatpush1.msra.mxu0 0.0
    %493 = vmatprep.subr.mxu0 0.0
    %494 = vmatpush1.msra.mxu0 0.0
    %495 = vmatprep.subr.mxu0 0.0
    %496 = vmatpush1.msra.mxu0 0.0
    %497 = vmatprep.subr.mxu0 0.0
    %498 = vmatpush1.msra.mxu0 0.0
    %499 = vmatprep.subr.mxu0 0.0
    %500 = vmatpush1.msra.mxu0 0.0
    %501 = vmatprep.subr.mxu0 0.0
    %502 = vmatpush1.msra.mxu0 %v454
    %503 = vmatprep.subr.mxu0 0.0
    %504 = vmatpush1.msra.mxu0 %v453
    %505 = vmatprep.subr.mxu0 0.0
    %506 = vmatpush1.msra.mxu0 %v452
    %507 = vmatprep.subr.mxu0 0.0
    %508 = vmatpush1.msra.mxu0 %v451
    %509 = vmatprep.subr.mxu0 0.0
    %510 = vmatpush2.msra.mxu0 0.0
    %511 = vmatprep.subr.mxu0 0.0
    %512 = vmatpush2.msra.mxu0 0.0
    %513 = vmatprep.subr.mxu0 0.0
    %514 = vmatpush2.msra.mxu0 0.0
    %515 = vmatprep.subr.mxu0 0.0
    %516 = vmatpush2.msra.mxu0 0.0
    %517 = vmatprep.subr.mxu0 0.0
    %518 = vmatpush2.msra.mxu0 0.0
    %519 = vmatprep.subr.mxu0 0.0
    %520 = vmatpush2.msra.mxu0 0.0
    %521 = vmatprep.subr.mxu0 0.0
    %522 = vmatpush2.msra.mxu0 0.0
    %523 = vmatprep.subr.mxu0 0.0
    %524 = vmatpush2.msra.mxu0 0.0
    %525 = vmatprep.subr.mxu0 0.0
    %526 = vmatpush2.msra.mxu0 0.0
    %527 = vmatprep.subr.mxu0 0.0
    %528 = vmatpush2.msra.mxu0 0.0
    %529 = vmatprep.subr.mxu0 0.0
    %530 = vmatpush2.msra.mxu0 0.0
    %531 = vmatprep.subr.mxu0 0.0
    %532 = vmatpush2.msra.mxu0 0.0
    %533 = vmatprep.subr.mxu0 0.0
    %534 = vmatpush2.msra.mxu0 0.0
    %535 = vmatprep.subr.mxu0 0.0
    %536 = vmatpush2.msra.mxu0 0.0
    %537 = vmatprep.subr.mxu0 0.0
    %538 = vmatpush2.msra.mxu0 0.0
    %539 = vmatprep.subr.mxu0 0.0
    %540 = vmatpush2.msra.mxu0 0.0
    %541 = vmatprep.mubr.f32.mxu0 0.0
    %542 = vmatmul.mubr.f32.gmra.mxu0 %v460
    %v543 = vpop.f32.mrf.mxu0
    %v544 = vadd.f32 %v458, %v543
    %v545 = vpop.f32.mrf.mxu0
    %546 = vmatprep.mubr.f32.mxu0 0.0
    %547 = vmatmul.mubr.f32.gmra.mxu0 %v463
    %v548 = vpop.f32.mrf.mxu0
    %v549 = vadd.f32 %v458, %v548
    %v550 = vpop.f32.mrf.mxu0
    %551 = vmatprep.mubr.f32.mxu0 0.0
    %552 = vmatmul.mubr.f32.gmra.mxu0 %v466
    %v553 = vpop.f32.mrf.mxu0
    %v554 = vadd.f32 %v458, %v553
    %v555 = vpop.f32.mrf.mxu0
    %556 = vmatprep.mubr.f32.mxu0 0.0
    %557 = vmatmul.mubr.f32.gmra.mxu0 %v469
    %v558 = vpop.f32.mrf.mxu0
    %v559 = vadd.f32 %v458, %v558
    %v560 = vpop.f32.mrf.mxu0
    %561 = vmatprep.mubr.f32.mxu0 0.0
    %562 = vmatmul.mubr.f32.gmra.mxu0 %v472
    %v563 = vpop.f32.mrf.mxu0
    %v564 = vadd.f32 %v458, %v563
    %v565 = vpop.f32.mrf.mxu0
    %566 = vmatprep.mubr.f32.mxu0 0.0
    %567 = vmatmul.mubr.f32.gmra.mxu0 %v475
    %v568 = vpop.f32.mrf.mxu0
    %v569 = vadd.f32 %v458, %v568
    %v570 = vpop.f32.mrf.mxu0
    %571 = vdwg.mxu0
    %v572 = vld [vmem:[%s2 + $0x88] sm:$0xff]
    %v573 = vld [vmem:[%s2 + $0x90] sm:$0xff]
    %v574 = vld [vmem:[%s2 + $0x98] sm:$0xff]
    %v575 = vld [vmem:[%s2 + $0xa0] sm:$0xff]
    %v576 = vlaneseq
    %v577 = vshrl.u32 %v576, 7
    %v578 = vsub.s32 0, %v577
    %v579 = vrot.slane %v346, %v578
    %580 = vmatprep.subr.mxu0 0.0
    %581 = vmatpush1.msra.mxu0 0.0
    %582 = vmatprep.subr.mxu0 0.0
    %583 = vmatpush1.msra.mxu0 0.0
    %584 = vmatprep.subr.mxu0 0.0
    %585 = vmatpush1.msra.mxu0 0.0
    %586 = vmatprep.subr.mxu0 0.0
    %587 = vmatpush1.msra.mxu0 0.0
    %588 = vmatprep.subr.mxu0 0.0
    %589 = vmatpush1.msra.mxu0 0.0
    %590 = vmatprep.subr.mxu0 0.0
    %591 = vmatpush1.msra.mxu0 0.0
    %592 = vmatprep.subr.mxu0 0.0
    %593 = vmatpush1.msra.mxu0 0.0
    %594 = vmatprep.subr.mxu0 0.0
    %595 = vmatpush1.msra.mxu0 0.0
    %596 = vmatprep.subr.mxu0 0.0
    %597 = vmatpush1.msra.mxu0 0.0
    %598 = vmatprep.subr.mxu0 0.0
    %599 = vmatpush1.msra.mxu0 0.0
    %600 = vmatprep.subr.mxu0 0.0
    %601 = vmatpush1.msra.mxu0 0.0
    %602 = vmatprep.subr.mxu0 0.0
    %603 = vmatpush1.msra.mxu0 0.0
    %604 = vmatprep.subr.mxu0 0.0
    %605 = vmatpush1.msra.mxu0 %v575
    %606 = vmatprep.subr.mxu0 0.0
    %607 = vmatpush1.msra.mxu0 %v574
    %608 = vmatprep.subr.mxu0 0.0
    %609 = vmatpush1.msra.mxu0 %v573
    %610 = vmatprep.subr.mxu0 0.0
    %611 = vmatpush1.msra.mxu0 %v572
    %612 = vmatprep.subr.mxu0 0.0
    %613 = vmatpush2.msra.mxu0 0.0
    %614 = vmatprep.subr.mxu0 0.0
    %615 = vmatpush2.msra.mxu0 0.0
    %616 = vmatprep.subr.mxu0 0.0
    %617 = vmatpush2.msra.mxu0 0.0
    %618 = vmatprep.subr.mxu0 0.0
    %619 = vmatpush2.msra.mxu0 0.0
    %620 = vmatprep.subr.mxu0 0.0
    %621 = vmatpush2.msra.mxu0 0.0
    %622 = vmatprep.subr.mxu0 0.0
    %623 = vmatpush2.msra.mxu0 0.0
    %624 = vmatprep.subr.mxu0 0.0
    %625 = vmatpush2.msra.mxu0 0.0
    %626 = vmatprep.subr.mxu0 0.0
    %627 = vmatpush2.msra.mxu0 0.0
    %628 = vmatprep.subr.mxu0 0.0
    %629 = vmatpush2.msra.mxu0 0.0
    %630 = vmatprep.subr.mxu0 0.0
    %631 = vmatpush2.msra.mxu0 0.0
    %632 = vmatprep.subr.mxu0 0.0
    %633 = vmatpush2.msra.mxu0 0.0
    %634 = vmatprep.subr.mxu0 0.0
    %635 = vmatpush2.msra.mxu0 0.0
    %636 = vmatprep.subr.mxu0 0.0
    %637 = vmatpush2.msra.mxu0 0.0
    %638 = vmatprep.subr.mxu0 0.0
    %639 = vmatpush2.msra.mxu0 0.0
    %640 = vmatprep.subr.mxu0 0.0
    %641 = vmatpush2.msra.mxu0 0.0
    %642 = vmatprep.subr.mxu0 0.0
    %643 = vmatpush2.msra.mxu0 0.0
    %644 = vmatprep.mubr.f32.mxu0 0.0
    %645 = vmatmul.mubr.f32.gmra.mxu0 %v460
    %v646 = vpop.f32.mrf.mxu0
    %v647 = vadd.f32 %v579, %v646
    %v648 = vpop.f32.mrf.mxu0
    %649 = vmatprep.mubr.f32.mxu0 0.0
    %650 = vmatmul.mubr.f32.gmra.mxu0 %v463
    %v651 = vpop.f32.mrf.mxu0
    %v652 = vadd.f32 %v579, %v651
    %v653 = vpop.f32.mrf.mxu0
    %654 = vmatprep.mubr.f32.mxu0 0.0
    %655 = vmatmul.mubr.f32.gmra.mxu0 %v466
    %v656 = vpop.f32.mrf.mxu0
    %v657 = vadd.f32 %v579, %v656
    %v658 = vpop.f32.mrf.mxu0
    %659 = vmatprep.mubr.f32.mxu0 0.0
    %660 = vmatmul.mubr.f32.gmra.mxu0 %v469
    %v661 = vpop.f32.mrf.mxu0
    %v662 = vadd.f32 %v579, %v661
    %v663 = vpop.f32.mrf.mxu0
    %664 = vmatprep.mubr.f32.mxu0 0.0
    %665 = vmatmul.mubr.f32.gmra.mxu0 %v472
    %v666 = vpop.f32.mrf.mxu0
    %v667 = vadd.f32 %v579, %v666
    %v668 = vpop.f32.mrf.mxu0
    %669 = vmatprep.mubr.f32.mxu0 0.0
    %670 = vmatmul.mubr.f32.gmra.mxu0 %v475
    %v671 = vpop.f32.mrf.mxu0
    %v672 = vadd.f32 %v579, %v671
    %v673 = vpop.f32.mrf.mxu0
    %674 = vdwg.mxu0
    %v675 = vld [vmem:[%s2 + $0xa8] sm:$0xff]
    %v676 = vld [vmem:[%s2 + $0xb0] sm:$0xff]
    %v677 = vld [vmem:[%s2 + $0xb8] sm:$0xff]
    %v678 = vld [vmem:[%s2 + $0xc0] sm:$0xff]
    %v679 = vlaneseq
    %v680 = vshrl.u32 %v679, 7
    %v681 = vsub.s32 0, %v680
    %v682 = vrot.slane %v347, %v681
    %683 = vmatprep.subr.mxu0 0.0
    %684 = vmatpush1.msra.mxu0 0.0
    %685 = vmatprep.subr.mxu0 0.0
    %686 = vmatpush1.msra.mxu0 0.0
    %687 = vmatprep.subr.mxu0 0.0
    %688 = vmatpush1.msra.mxu0 0.0
    %689 = vmatprep.subr.mxu0 0.0
    %690 = vmatpush1.msra.mxu0 0.0
    %691 = vmatprep.subr.mxu0 0.0
    %692 = vmatpush1.msra.mxu0 0.0
    %693 = vmatprep.subr.mxu0 0.0
    %694 = vmatpush1.msra.mxu0 0.0
    %695 = vmatprep.subr.mxu0 0.0
    %696 = vmatpush1.msra.mxu0 0.0
    %697 = vmatprep.subr.mxu0 0.0
    %698 = vmatpush1.msra.mxu0 0.0
    %699 = vmatprep.subr.mxu0 0.0
    %700 = vmatpush1.msra.mxu0 0.0
    %701 = vmatprep.subr.mxu0 0.0
    %702 = vmatpush1.msra.mxu0 0.0
    %703 = vmatprep.subr.mxu0 0.0
    %704 = vmatpush1.msra.mxu0 0.0
    %705 = vmatprep.subr.mxu0 0.0
    %706 = vmatpush1.msra.mxu0 0.0
    %707 = vmatprep.subr.mxu0 0.0
    %708 = vmatpush1.msra.mxu0 %v678
    %709 = vmatprep.subr.mxu0 0.0
    %710 = vmatpush1.msra.mxu0 %v677
    %711 = vmatprep.subr.mxu0 0.0
    %712 = vmatpush1.msra.mxu0 %v676
    %713 = vmatprep.subr.mxu0 0.0
    %714 = vmatpush1.msra.mxu0 %v675
    %715 = vmatprep.subr.mxu0 0.0
    %716 = vmatpush2.msra.mxu0 0.0
    %717 = vmatprep.subr.mxu0 0.0
    %718 = vmatpush2.msra.mxu0 0.0
    %719 = vmatprep.subr.mxu0 0.0
    %720 = vmatpush2.msra.mxu0 0.0
    %721 = vmatprep.subr.mxu0 0.0
    %722 = vmatpush2.msra.mxu0 0.0
    %723 = vmatprep.subr.mxu0 0.0
    %724 = vmatpush2.msra.mxu0 0.0
    %725 = vmatprep.subr.mxu0 0.0
    %726 = vmatpush2.msra.mxu0 0.0
    %727 = vmatprep.subr.mxu0 0.0
    %728 = vmatpush2.msra.mxu0 0.0
    %729 = vmatprep.subr.mxu0 0.0
    %730 = vmatpush2.msra.mxu0 0.0
    %731 = vmatprep.subr.mxu0 0.0
    %732 = vmatpush2.msra.mxu0 0.0
    %733 = vmatprep.subr.mxu0 0.0
    %734 = vmatpush2.msra.mxu0 0.0
    %735 = vmatprep.subr.mxu0 0.0
    %736 = vmatpush2.msra.mxu0 0.0
    %737 = vmatprep.subr.mxu0 0.0
    %738 = vmatpush2.msra.mxu0 0.0
    %739 = vmatprep.subr.mxu0 0.0
    %740 = vmatpush2.msra.mxu0 0.0
    %741 = vmatprep.subr.mxu0 0.0
    %742 = vmatpush2.msra.mxu0 0.0
    %743 = vmatprep.subr.mxu0 0.0
    %744 = vmatpush2.msra.mxu0 0.0
    %745 = vmatprep.subr.mxu0 0.0
    %746 = vmatpush2.msra.mxu0 0.0
    %747 = vmatprep.mubr.f32.mxu0 0.0
    %748 = vmatmul.mubr.f32.gmra.mxu0 %v460
    %v749 = vpop.f32.mrf.mxu0
    %v750 = vadd.f32 %v682, %v749
    %v751 = vpop.f32.mrf.mxu0
    %752 = vmatprep.mubr.f32.mxu0 0.0
    %753 = vmatmul.mubr.f32.gmra.mxu0 %v463
    %v754 = vpop.f32.mrf.mxu0
    %v755 = vadd.f32 %v682, %v754
    %v756 = vpop.f32.mrf.mxu0
    %757 = vmatprep.mubr.f32.mxu0 0.0
    %758 = vmatmul.mubr.f32.gmra.mxu0 %v466
    %v759 = vpop.f32.mrf.mxu0
    %v760 = vadd.f32 %v682, %v759
    %v761 = vpop.f32.mrf.mxu0
    %762 = vmatprep.mubr.f32.mxu0 0.0
    %763 = vmatmul.mubr.f32.gmra.mxu0 %v469
    %v764 = vpop.f32.mrf.mxu0
    %v765 = vadd.f32 %v682, %v764
    %v766 = vpop.f32.mrf.mxu0
    %767 = vmatprep.mubr.f32.mxu0 0.0
    %768 = vmatmul.mubr.f32.gmra.mxu0 %v472
    %v769 = vpop.f32.mrf.mxu0
    %v770 = vadd.f32 %v682, %v769
    %v771 = vpop.f32.mrf.mxu0
    %772 = vmatprep.mubr.f32.mxu0 0.0
    %773 = vmatmul.mubr.f32.gmra.mxu0 %v475
    %v774 = vpop.f32.mrf.mxu0
    %v775 = vadd.f32 %v682, %v774
    %v776 = vpop.f32.mrf.mxu0
    %777 = vdwg.mxu0
    %v778 = vmul.f32 %v544, %v331
    %v779 = vmul.f32 %v549, %v331
    %v780 = vmul.f32 %v554, %v331
    %v781 = vmul.f32 %v559, %v331
    %v782 = vmul.f32 %v564, %v331
    %v783 = vmul.f32 %v569, %v331
    %v785 = vsel %vm132, %v778, 0
    %v788 = vsel %vm132, %v779, 0
    %v791 = vsel %vm132, %v780, 0
    %v794 = vsel %vm132, %v781, 0
    %v797 = vsel %vm132, %v782, 0
    %v800 = vsel %vm132, %v783, 0
    %v803 = vsel %vm132, %v647, 0
    %v806 = vsel %vm132, %v652, 0
    %v809 = vsel %vm132, %v657, 0
    %v812 = vsel %vm132, %v662, 0
    %v815 = vsel %vm132, %v667, 0
    %v818 = vsel %vm132, %v672, 0
    %820 = vmatprep.subr.mxu0 0.0
    %821 = vmatpush1.xpose.msra.mxu0 0.0
    %822 = vmatprep.subr.mxu0 0.0
    %823 = vmatpush1.xpose.msra.mxu0 0.0
    %824 = vmatprep.subr.mxu0 0.0
    %825 = vmatpush1.xpose.msra.mxu0 0.0
    %826 = vmatprep.subr.mxu0 0.0
    %827 = vmatpush1.xpose.msra.mxu0 0.0
    %828 = vmatprep.subr.mxu0 0.0
    %829 = vmatpush1.xpose.msra.mxu0 0.0
    %830 = vmatprep.subr.mxu0 0.0
    %831 = vmatpush1.xpose.msra.mxu0 0.0
    %832 = vmatprep.subr.mxu0 0.0
    %833 = vmatpush1.xpose.msra.mxu0 0.0
    %834 = vmatprep.subr.mxu0 0.0
    %835 = vmatpush1.xpose.msra.mxu0 0.0
    %836 = vmatprep.subr.mxu0 0.0
    %837 = vmatpush1.xpose.msra.mxu0 0.0
    %838 = vmatprep.subr.mxu0 0.0
    %839 = vmatpush1.xpose.msra.mxu0 0.0
    %840 = vmatprep.subr.mxu0 0.0
    %841 = vmatpush1.xpose.msra.mxu0 %v818
    %842 = vmatprep.subr.mxu0 0.0
    %843 = vmatpush1.xpose.msra.mxu0 %v815
    %844 = vmatprep.subr.mxu0 0.0
    %845 = vmatpush1.xpose.msra.mxu0 %v812
    %846 = vmatprep.subr.mxu0 0.0
    %847 = vmatpush1.xpose.msra.mxu0 %v809
    %848 = vmatprep.subr.mxu0 0.0
    %849 = vmatpush1.xpose.msra.mxu0 %v806
    %850 = vmatprep.subr.mxu0 0.0
    %851 = vmatpush1.xpose.msra.mxu0 %v803
    %852 = vmatprep.subr.mxu0 0.0
    %853 = vmatpush2.xpose.msra.mxu0 0.0
    %854 = vmatprep.subr.mxu0 0.0
    %855 = vmatpush2.xpose.msra.mxu0 0.0
    %856 = vmatprep.subr.mxu0 0.0
    %857 = vmatpush2.xpose.msra.mxu0 0.0
    %858 = vmatprep.subr.mxu0 0.0
    %859 = vmatpush2.xpose.msra.mxu0 0.0
    %860 = vmatprep.subr.mxu0 0.0
    %861 = vmatpush2.xpose.msra.mxu0 0.0
    %862 = vmatprep.subr.mxu0 0.0
    %863 = vmatpush2.xpose.msra.mxu0 0.0
    %864 = vmatprep.subr.mxu0 0.0
    %865 = vmatpush2.xpose.msra.mxu0 0.0
    %866 = vmatprep.subr.mxu0 0.0
    %867 = vmatpush2.xpose.msra.mxu0 0.0
    %868 = vmatprep.subr.mxu0 0.0
    %869 = vmatpush2.xpose.msra.mxu0 0.0
    %870 = vmatprep.subr.mxu0 0.0
    %871 = vmatpush2.xpose.msra.mxu0 0.0
    %872 = vmatprep.subr.mxu0 0.0
    %873 = vmatpush2.xpose.msra.mxu0 0.0
    %874 = vmatprep.subr.mxu0 0.0
    %875 = vmatpush2.xpose.msra.mxu0 0.0
    %876 = vmatprep.subr.mxu0 0.0
    %877 = vmatpush2.xpose.msra.mxu0 0.0
    %878 = vmatprep.subr.mxu0 0.0
    %879 = vmatpush2.xpose.msra.mxu0 0.0
    %880 = vmatprep.subr.mxu0 0.0
    %881 = vmatpush2.xpose.msra.mxu0 0.0
    %882 = vmatprep.subr.mxu0 0.0
    %883 = vmatpush2.xpose.msra.mxu0 0.0
    %884 = vmatprep.mubr.f32.mxu0 0.0
    %885 = vmatmul.mubr.f32.gmra.mxu0 %v785
    %v886 = vpop.f32.mrf.mxu0
    %v887 = vadd.f32 %v323, %v886
    %v888 = vpop.f32.mrf.mxu0
    %889 = vmatprep.mubr.f32.mxu0 0.0
    %890 = vmatmul.mubr.f32.gmra.mxu0 %v788
    %v891 = vpop.f32.mrf.mxu0
    %v892 = vadd.f32 %v324, %v891
    %v893 = vpop.f32.mrf.mxu0
    %894 = vmatprep.mubr.f32.mxu0 0.0
    %895 = vmatmul.mubr.f32.gmra.mxu0 %v791
    %v896 = vpop.f32.mrf.mxu0
    %v897 = vadd.f32 %v325, %v896
    %v898 = vpop.f32.mrf.mxu0
    %899 = vmatprep.mubr.f32.mxu0 0.0
    %900 = vmatmul.mubr.f32.gmra.mxu0 %v794
    %v901 = vpop.f32.mrf.mxu0
    %v902 = vadd.f32 %v326, %v901
    %v903 = vpop.f32.mrf.mxu0
    %904 = vmatprep.mubr.f32.mxu0 0.0
    %905 = vmatmul.mubr.f32.gmra.mxu0 %v797
    %v906 = vpop.f32.mrf.mxu0
    %v907 = vadd.f32 %v327, %v906
    %v908 = vpop.f32.mrf.mxu0
    %909 = vmatprep.mubr.f32.mxu0 0.0
    %910 = vmatmul.mubr.f32.gmra.mxu0 %v800
    %v911 = vpop.f32.mrf.mxu0
    %v912 = vadd.f32 %v328, %v911
    %v913 = vpop.f32.mrf.mxu0
    %914 = vdwg.mxu0
    %v915 = vsel %vm29, %v887, -inf
    %916 = vmax.xlane.f32.xlu0 %v915
    %v917 = vpop.xlane.xlu0 %916
    %v918 = vsel %vm29, %v892, -inf
    %919 = vmax.xlane.f32.xlu0 %v918
    %v920 = vpop.xlane.xlu0 %919
    %v921 = vsel %vm29, %v897, -inf
    %922 = vmax.xlane.f32.xlu0 %v921
    %v923 = vpop.xlane.xlu0 %922
    %v924 = vsel %vm29, %v902, -inf
    %925 = vmax.xlane.f32.xlu0 %v924
    %v926 = vpop.xlane.xlu0 %925
    %v927 = vsel %vm29, %v907, -inf
    %928 = vmax.xlane.f32.xlu0 %v927
    %v929 = vpop.xlane.xlu0 %928
    %v930 = vsel %vm29, %v912, -inf
    %931 = vmax.xlane.f32.xlu0 %v930
    %v932 = vpop.xlane.xlu0 %931
    %v933 = vsub.f32 %v887, %v917
    %v934 = vsub.f32 %v892, %v920
    %v935 = vsub.f32 %v897, %v923
    %v936 = vsub.f32 %v902, %v926
    %v937 = vsub.f32 %v907, %v929
    %v938 = vsub.f32 %v912, %v932
    %v939 = vmul.f32 %v933, 1.442695
    %v940 = vpow.pop %v939
    %v941 = vmul.f32 %v934, 1.442695
    %v942 = vpow.pop %v941
    %v943 = vmul.f32 %v935, 1.442695
    %v944 = vpow.pop %v943
    %v945 = vmul.f32 %v936, 1.442695
    %v946 = vpow.pop %v945
    %v947 = vmul.f32 %v937, 1.442695
    %v948 = vpow.pop %v947
    %v949 = vmul.f32 %v938, 1.442695
    %v950 = vpow.pop %v949
    %v951 = vsel %vm29, %v940, 0.0
    %952 = vadd.xlane.f32.xlu0 %v951
    %v953 = vpop.xlane.xlu0 %952
    %v954 = vsel %vm29, %v942, 0.0
    %955 = vadd.xlane.f32.xlu0 %v954
    %v956 = vpop.xlane.xlu0 %955
    %v957 = vsel %vm29, %v944, 0.0
    %958 = vadd.xlane.f32.xlu0 %v957
    %v959 = vpop.xlane.xlu0 %958
    %v960 = vsel %vm29, %v946, 0.0
    %961 = vadd.xlane.f32.xlu0 %v960
    %v962 = vpop.xlane.xlu0 %961
    %v963 = vsel %vm29, %v948, 0.0
    %964 = vadd.xlane.f32.xlu0 %v963
    %v965 = vpop.xlane.xlu0 %964
    %v966 = vsel %vm29, %v950, 0.0
    %967 = vadd.xlane.f32.xlu0 %v966
    %v968 = vpop.xlane.xlu0 %967
    %v969 = vrcp.pop %v953
    %v970 = vrcp.pop %v956
    %v971 = vrcp.pop %v959
    %v972 = vrcp.pop %v962
    %v973 = vrcp.pop %v965
    %v974 = vrcp.pop %v968
    %v975 = vmul.f32 %v940, %v969
    %v976 = vmul.f32 %v942, %v970
    %v977 = vmul.f32 %v944, %v971
    %v978 = vmul.f32 %v946, %v972
    %v979 = vmul.f32 %v948, %v973
    %v980 = vmul.f32 %v950, %v974
    %981 = vst.msk [vmem:[%s5] sm:$0xff] %vm29, %v975
    %982 = vst.msk [vmem:[%s5 + $0x8] sm:$0xff] %vm29, %v976
    %983 = vst.msk [vmem:[%s5 + $0x10] sm:$0xff] %vm29, %v977
    %984 = vst.msk [vmem:[%s5 + $0x18] sm:$0xff] %vm29, %v978
    %985 = vst.msk [vmem:[%s5 + $0x20] sm:$0xff] %vm29, %v979
    %986 = vst.msk [vmem:[%s5 + $0x28] sm:$0xff] %vm29, %v980
    %v987 = vmul.f32 %v750, %v331
    %v988 = vmul.f32 %v755, %v331
    %v989 = vmul.f32 %v760, %v331
    %v990 = vmul.f32 %v765, %v331
    %v991 = vmul.f32 %v770, %v331
    %v992 = vmul.f32 %v775, %v331
    %v993 = vmul.f32 %v544, %v335
    %v994 = vmul.f32 %v549, %v335
    %v995 = vmul.f32 %v554, %v335
    %v996 = vmul.f32 %v559, %v335
    %v997 = vmul.f32 %v564, %v335
    %v998 = vmul.f32 %v569, %v335
    %v1000 = vsel %vm132, %v993, 0
    %v1003 = vsel %vm132, %v994, 0
    %v1006 = vsel %vm132, %v995, 0
    %v1009 = vsel %vm132, %v996, 0
    %v1012 = vsel %vm132, %v997, 0
    %v1015 = vsel %vm132, %v998, 0
    %1017 = vmatprep.subr.mxu0 0.0
    %1018 = vmatpush1.xpose.msra.mxu0 0.0
    %1019 = vmatprep.subr.mxu0 0.0
    %1020 = vmatpush1.xpose.msra.mxu0 0.0
    %1021 = vmatprep.subr.mxu0 0.0
    %1022 = vmatpush1.xpose.msra.mxu0 0.0
    %1023 = vmatprep.subr.mxu0 0.0
    %1024 = vmatpush1.xpose.msra.mxu0 0.0
    %1025 = vmatprep.subr.mxu0 0.0
    %1026 = vmatpush1.xpose.msra.mxu0 0.0
    %1027 = vmatprep.subr.mxu0 0.0
    %1028 = vmatpush1.xpose.msra.mxu0 0.0
    %1029 = vmatprep.subr.mxu0 0.0
    %1030 = vmatpush1.xpose.msra.mxu0 0.0
    %1031 = vmatprep.subr.mxu0 0.0
    %1032 = vmatpush1.xpose.msra.mxu0 0.0
    %1033 = vmatprep.subr.mxu0 0.0
    %1034 = vmatpush1.xpose.msra.mxu0 0.0
    %1035 = vmatprep.subr.mxu0 0.0
    %1036 = vmatpush1.xpose.msra.mxu0 0.0
    %1037 = vmatprep.subr.mxu0 0.0
    %1038 = vmatpush1.xpose.msra.mxu0 %v818
    %1039 = vmatprep.subr.mxu0 0.0
    %1040 = vmatpush1.xpose.msra.mxu0 %v815
    %1041 = vmatprep.subr.mxu0 0.0
    %1042 = vmatpush1.xpose.msra.mxu0 %v812
    %1043 = vmatprep.subr.mxu0 0.0
    %1044 = vmatpush1.xpose.msra.mxu0 %v809
    %1045 = vmatprep.subr.mxu0 0.0
    %1046 = vmatpush1.xpose.msra.mxu0 %v806
    %1047 = vmatprep.subr.mxu0 0.0
    %1048 = vmatpush1.xpose.msra.mxu0 %v803
    %1049 = vmatprep.subr.mxu0 0.0
    %1050 = vmatpush2.xpose.msra.mxu0 0.0
    %1051 = vmatprep.subr.mxu0 0.0
    %1052 = vmatpush2.xpose.msra.mxu0 0.0
    %1053 = vmatprep.subr.mxu0 0.0
    %1054 = vmatpush2.xpose.msra.mxu0 0.0
    %1055 = vmatprep.subr.mxu0 0.0
    %1056 = vmatpush2.xpose.msra.mxu0 0.0
    %1057 = vmatprep.subr.mxu0 0.0
    %1058 = vmatpush2.xpose.msra.mxu0 0.0
    %1059 = vmatprep.subr.mxu0 0.0
    %1060 = vmatpush2.xpose.msra.mxu0 0.0
    %1061 = vmatprep.subr.mxu0 0.0
    %1062 = vmatpush2.xpose.msra.mxu0 0.0
    %1063 = vmatprep.subr.mxu0 0.0
    %1064 = vmatpush2.xpose.msra.mxu0 0.0
    %1065 = vmatprep.subr.mxu0 0.0
    %1066 = vmatpush2.xpose.msra.mxu0 0.0
    %1067 = vmatprep.subr.mxu0 0.0
    %1068 = vmatpush2.xpose.msra.mxu0 0.0
    %1069 = vmatprep.subr.mxu0 0.0
    %1070 = vmatpush2.xpose.msra.mxu0 0.0
    %1071 = vmatprep.subr.mxu0 0.0
    %1072 = vmatpush2.xpose.msra.mxu0 0.0
    %1073 = vmatprep.subr.mxu0 0.0
    %1074 = vmatpush2.xpose.msra.mxu0 0.0
    %1075 = vmatprep.subr.mxu0 0.0
    %1076 = vmatpush2.xpose.msra.mxu0 0.0
    %1077 = vmatprep.subr.mxu0 0.0
    %1078 = vmatpush2.xpose.msra.mxu0 0.0
    %1079 = vmatprep.subr.mxu0 0.0
    %1080 = vmatpush2.xpose.msra.mxu0 0.0
    %1081 = vmatprep.mubr.f32.mxu0 0.0
    %1082 = vmatmul.mubr.f32.gmra.mxu0 %v1000
    %v1083 = vpop.f32.mrf.mxu0
    %v1084 = vadd.f32 %v323, %v1083
    %v1085 = vpop.f32.mrf.mxu0
    %1086 = vmatprep.mubr.f32.mxu0 0.0
    %1087 = vmatmul.mubr.f32.gmra.mxu0 %v1003
    %v1088 = vpop.f32.mrf.mxu0
    %v1089 = vadd.f32 %v324, %v1088
    %v1090 = vpop.f32.mrf.mxu0
    %1091 = vmatprep.mubr.f32.mxu0 0.0
    %1092 = vmatmul.mubr.f32.gmra.mxu0 %v1006
    %v1093 = vpop.f32.mrf.mxu0
    %v1094 = vadd.f32 %v325, %v1093
    %v1095 = vpop.f32.mrf.mxu0
    %1096 = vmatprep.mubr.f32.mxu0 0.0
    %1097 = vmatmul.mubr.f32.gmra.mxu0 %v1009
    %v1098 = vpop.f32.mrf.mxu0
    %v1099 = vadd.f32 %v326, %v1098
    %v1100 = vpop.f32.mrf.mxu0
    %1101 = vmatprep.mubr.f32.mxu0 0.0
    %1102 = vmatmul.mubr.f32.gmra.mxu0 %v1012
    %v1103 = vpop.f32.mrf.mxu0
    %v1104 = vadd.f32 %v327, %v1103
    %v1105 = vpop.f32.mrf.mxu0
    %1106 = vmatprep.mubr.f32.mxu0 0.0
    %1107 = vmatmul.mubr.f32.gmra.mxu0 %v1015
    %v1108 = vpop.f32.mrf.mxu0
    %v1109 = vadd.f32 %v328, %v1108
    %v1110 = vpop.f32.mrf.mxu0
    %1111 = vdwg.mxu0
    %v1112 = vsel %vm29, %v1084, -inf
    %1113 = vmax.xlane.f32.xlu0 %v1112
    %v1114 = vpop.xlane.xlu0 %1113
    %v1115 = vsel %vm29, %v1089, -inf
    %1116 = vmax.xlane.f32.xlu0 %v1115
    %v1117 = vpop.xlane.xlu0 %1116
    %v1118 = vsel %vm29, %v1094, -inf
    %1119 = vmax.xlane.f32.xlu0 %v1118
    %v1120 = vpop.xlane.xlu0 %1119
    %v1121 = vsel %vm29, %v1099, -inf
    %1122 = vmax.xlane.f32.xlu0 %v1121
    %v1123 = vpop.xlane.xlu0 %1122
    %v1124 = vsel %vm29, %v1104, -inf
    %1125 = vmax.xlane.f32.xlu0 %v1124
    %v1126 = vpop.xlane.xlu0 %1125
    %v1127 = vsel %vm29, %v1109, -inf
    %1128 = vmax.xlane.f32.xlu0 %v1127
    %v1129 = vpop.xlane.xlu0 %1128
    %v1130 = vsub.f32 %v1084, %v1114
    %v1131 = vsub.f32 %v1089, %v1117
    %v1132 = vsub.f32 %v1094, %v1120
    %v1133 = vsub.f32 %v1099, %v1123
    %v1134 = vsub.f32 %v1104, %v1126
    %v1135 = vsub.f32 %v1109, %v1129
    %v1136 = vmul.f32 %v1130, 1.442695
    %v1137 = vpow.pop %v1136
    %v1138 = vmul.f32 %v1131, 1.442695
    %v1139 = vpow.pop %v1138
    %v1140 = vmul.f32 %v1132, 1.442695
    %v1141 = vpow.pop %v1140
    %v1142 = vmul.f32 %v1133, 1.442695
    %v1143 = vpow.pop %v1142
    %v1144 = vmul.f32 %v1134, 1.442695
    %v1145 = vpow.pop %v1144
    %v1146 = vmul.f32 %v1135, 1.442695
    %v1147 = vpow.pop %v1146
    %v1148 = vsel %vm29, %v1137, 0.0
    %1149 = vadd.xlane.f32.xlu0 %v1148
    %v1150 = vpop.xlane.xlu0 %1149
    %v1151 = vsel %vm29, %v1139, 0.0
    %1152 = vadd.xlane.f32.xlu0 %v1151
    %v1153 = vpop.xlane.xlu0 %1152
    %v1154 = vsel %vm29, %v1141, 0.0
    %1155 = vadd.xlane.f32.xlu0 %v1154
    %v1156 = vpop.xlane.xlu0 %1155
    %v1157 = vsel %vm29, %v1143, 0.0
    %1158 = vadd.xlane.f32.xlu0 %v1157
    %v1159 = vpop.xlane.xlu0 %1158
    %v1160 = vsel %vm29, %v1145, 0.0
    %1161 = vadd.xlane.f32.xlu0 %v1160
    %v1162 = vpop.xlane.xlu0 %1161
    %v1163 = vsel %vm29, %v1147, 0.0
    %1164 = vadd.xlane.f32.xlu0 %v1163
    %v1165 = vpop.xlane.xlu0 %1164
    %v1166 = vrcp.pop %v1150
    %v1167 = vrcp.pop %v1153
    %v1168 = vrcp.pop %v1156
    %v1169 = vrcp.pop %v1159
    %v1170 = vrcp.pop %v1162
    %v1171 = vrcp.pop %v1165
    %v1172 = vmul.f32 %v1137, %v1166
    %v1173 = vmul.f32 %v1139, %v1167
    %v1174 = vmul.f32 %v1141, %v1168
    %v1175 = vmul.f32 %v1143, %v1169
    %v1176 = vmul.f32 %v1145, %v1170
    %v1177 = vmul.f32 %v1147, %v1171
    %s1178 = scalar_lea.vmem %s5, 48
    %1179 = vst.msk [vmem:[%s1178] sm:$0xff] %vm29, %v1172
    %1180 = vst.msk [vmem:[%s1178 + $0x8] sm:$0xff] %vm29, %v1173
    %1181 = vst.msk [vmem:[%s1178 + $0x10] sm:$0xff] %vm29, %v1174
    %1182 = vst.msk [vmem:[%s1178 + $0x18] sm:$0xff] %vm29, %v1175
    %1183 = vst.msk [vmem:[%s1178 + $0x20] sm:$0xff] %vm29, %v1176
    %1184 = vst.msk [vmem:[%s1178 + $0x28] sm:$0xff] %vm29, %v1177
    %v1185 = vmul.f32 %v750, %v335
    %v1186 = vmul.f32 %v755, %v335
    %v1187 = vmul.f32 %v760, %v335
    %v1188 = vmul.f32 %v765, %v335
    %v1189 = vmul.f32 %v770, %v335
    %v1190 = vmul.f32 %v775, %v335
    %v1192 = vsel %vm29, %v1172, 0
    %v1195 = vsel %vm29, %v1173, 0
    %v1198 = vsel %vm29, %v1174, 0
    %v1201 = vsel %vm29, %v1175, 0
    %v1204 = vsel %vm29, %v1176, 0
    %v1207 = vsel %vm29, %v1177, 0
    %1209 = vmatprep.subr.mxu0 0.0
    %1210 = vmatpush1.msra.mxu0 0.0
    %1211 = vmatprep.subr.mxu0 0.0
    %1212 = vmatpush1.msra.mxu0 0.0
    %1213 = vmatprep.subr.mxu0 0.0
    %1214 = vmatpush1.msra.mxu0 0.0
    %1215 = vmatprep.subr.mxu0 0.0
    %1216 = vmatpush1.msra.mxu0 0.0
    %1217 = vmatprep.subr.mxu0 0.0
    %1218 = vmatpush1.msra.mxu0 0.0
    %1219 = vmatprep.subr.mxu0 0.0
    %1220 = vmatpush1.msra.mxu0 0.0
    %1221 = vmatprep.subr.mxu0 0.0
    %1222 = vmatpush1.msra.mxu0 0.0
    %1223 = vmatprep.subr.mxu0 0.0
    %1224 = vmatpush1.msra.mxu0 0.0
    %1225 = vmatprep.subr.mxu0 0.0
    %1226 = vmatpush1.msra.mxu0 0.0
    %1227 = vmatprep.subr.mxu0 0.0
    %1228 = vmatpush1.msra.mxu0 0.0
    %1229 = vmatprep.subr.mxu0 0.0
    %1230 = vmatpush1.msra.mxu0 %v1190
    %1231 = vmatprep.subr.mxu0 0.0
    %1232 = vmatpush1.msra.mxu0 %v1189
    %1233 = vmatprep.subr.mxu0 0.0
    %1234 = vmatpush1.msra.mxu0 %v1188
    %1235 = vmatprep.subr.mxu0 0.0
    %1236 = vmatpush1.msra.mxu0 %v1187
    %1237 = vmatprep.subr.mxu0 0.0
    %1238 = vmatpush1.msra.mxu0 %v1186
    %1239 = vmatprep.subr.mxu0 0.0
    %1240 = vmatpush1.msra.mxu0 %v1185
    %1241 = vmatprep.subr.mxu0 0.0
    %1242 = vmatpush2.msra.mxu0 0.0
    %1243 = vmatprep.subr.mxu0 0.0
    %1244 = vmatpush2.msra.mxu0 0.0
    %1245 = vmatprep.subr.mxu0 0.0
    %1246 = vmatpush2.msra.mxu0 0.0
    %1247 = vmatprep.subr.mxu0 0.0
    %1248 = vmatpush2.msra.mxu0 0.0
    %1249 = vmatprep.subr.mxu0 0.0
    %1250 = vmatpush2.msra.mxu0 0.0
    %1251 = vmatprep.subr.mxu0 0.0
    %1252 = vmatpush2.msra.mxu0 0.0
    %1253 = vmatprep.subr.mxu0 0.0
    %1254 = vmatpush2.msra.mxu0 0.0
    %1255 = vmatprep.subr.mxu0 0.0
    %1256 = vmatpush2.msra.mxu0 0.0
    %1257 = vmatprep.subr.mxu0 0.0
    %1258 = vmatpush2.msra.mxu0 0.0
    %1259 = vmatprep.subr.mxu0 0.0
    %1260 = vmatpush2.msra.mxu0 0.0
    %1261 = vmatprep.subr.mxu0 0.0
    %1262 = vmatpush2.msra.mxu0 0.0
    %1263 = vmatprep.subr.mxu0 0.0
    %1264 = vmatpush2.msra.mxu0 0.0
    %1265 = vmatprep.subr.mxu0 0.0
    %1266 = vmatpush2.msra.mxu0 0.0
    %1267 = vmatprep.subr.mxu0 0.0
    %1268 = vmatpush2.msra.mxu0 0.0
    %1269 = vmatprep.subr.mxu0 0.0
    %1270 = vmatpush2.msra.mxu0 0.0
    %1271 = vmatprep.subr.mxu0 0.0
    %1272 = vmatpush2.msra.mxu0 0.0
    %1273 = vmatprep.mubr.f32.mxu0 0.0
    %1274 = vmatmul.mubr.f32.gmra.mxu0 %v1192
    %v1275 = vpop.f32.mrf.mxu0
    %v1276 = vadd.f32 0.0, %v1275
    %v1277 = vpop.f32.mrf.mxu0
    %1278 = vmatprep.mubr.f32.mxu0 0.0
    %1279 = vmatmul.mubr.f32.gmra.mxu0 %v1195
    %v1280 = vpop.f32.mrf.mxu0
    %v1281 = vadd.f32 0.0, %v1280
    %v1282 = vpop.f32.mrf.mxu0
    %1283 = vmatprep.mubr.f32.mxu0 0.0
    %1284 = vmatmul.mubr.f32.gmra.mxu0 %v1198
    %v1285 = vpop.f32.mrf.mxu0
    %v1286 = vadd.f32 0.0, %v1285
    %v1287 = vpop.f32.mrf.mxu0
    %1288 = vmatprep.mubr.f32.mxu0 0.0
    %1289 = vmatmul.mubr.f32.gmra.mxu0 %v1201
    %v1290 = vpop.f32.mrf.mxu0
    %v1291 = vadd.f32 0.0, %v1290
    %v1292 = vpop.f32.mrf.mxu0
    %1293 = vmatprep.mubr.f32.mxu0 0.0
    %1294 = vmatmul.mubr.f32.gmra.mxu0 %v1204
    %v1295 = vpop.f32.mrf.mxu0
    %v1296 = vadd.f32 0.0, %v1295
    %v1297 = vpop.f32.mrf.mxu0
    %1298 = vmatprep.mubr.f32.mxu0 0.0
    %1299 = vmatmul.mubr.f32.gmra.mxu0 %v1207
    %v1300 = vpop.f32.mrf.mxu0
    %v1301 = vadd.f32 0.0, %v1300
    %v1302 = vpop.f32.mrf.mxu0
    %1303 = vdwg.mxu0
    %v1305 = vsel %vm29, %v975, 0
    %v1308 = vsel %vm29, %v976, 0
    %v1311 = vsel %vm29, %v977, 0
    %v1314 = vsel %vm29, %v978, 0
    %v1317 = vsel %vm29, %v979, 0
    %v1320 = vsel %vm29, %v980, 0
    %1322 = vmatprep.subr.mxu0 0.0
    %1323 = vmatpush1.msra.mxu0 0.0
    %1324 = vmatprep.subr.mxu0 0.0
    %1325 = vmatpush1.msra.mxu0 0.0
    %1326 = vmatprep.subr.mxu0 0.0
    %1327 = vmatpush1.msra.mxu0 0.0
    %1328 = vmatprep.subr.mxu0 0.0
    %1329 = vmatpush1.msra.mxu0 0.0
    %1330 = vmatprep.subr.mxu0 0.0
    %1331 = vmatpush1.msra.mxu0 0.0
    %1332 = vmatprep.subr.mxu0 0.0
    %1333 = vmatpush1.msra.mxu0 0.0
    %1334 = vmatprep.subr.mxu0 0.0
    %1335 = vmatpush1.msra.mxu0 0.0
    %1336 = vmatprep.subr.mxu0 0.0
    %1337 = vmatpush1.msra.mxu0 0.0
    %1338 = vmatprep.subr.mxu0 0.0
    %1339 = vmatpush1.msra.mxu0 0.0
    %1340 = vmatprep.subr.mxu0 0.0
    %1341 = vmatpush1.msra.mxu0 0.0
    %1342 = vmatprep.subr.mxu0 0.0
    %1343 = vmatpush1.msra.mxu0 %v992
    %1344 = vmatprep.subr.mxu0 0.0
    %1345 = vmatpush1.msra.mxu0 %v991
    %1346 = vmatprep.subr.mxu0 0.0
    %1347 = vmatpush1.msra.mxu0 %v990
    %1348 = vmatprep.subr.mxu0 0.0
    %1349 = vmatpush1.msra.mxu0 %v989
    %1350 = vmatprep.subr.mxu0 0.0
    %1351 = vmatpush1.msra.mxu0 %v988
    %1352 = vmatprep.subr.mxu0 0.0
    %1353 = vmatpush1.msra.mxu0 %v987
    %1354 = vmatprep.subr.mxu0 0.0
    %1355 = vmatpush2.msra.mxu0 0.0
    %1356 = vmatprep.subr.mxu0 0.0
    %1357 = vmatpush2.msra.mxu0 0.0
    %1358 = vmatprep.subr.mxu0 0.0
    %1359 = vmatpush2.msra.mxu0 0.0
    %1360 = vmatprep.subr.mxu0 0.0
    %1361 = vmatpush2.msra.mxu0 0.0
    %1362 = vmatprep.subr.mxu0 0.0
    %1363 = vmatpush2.msra.mxu0 0.0
    %1364 = vmatprep.subr.mxu0 0.0
    %1365 = vmatpush2.msra.mxu0 0.0
    %1366 = vmatprep.subr.mxu0 0.0
    %1367 = vmatpush2.msra.mxu0 0.0
    %1368 = vmatprep.subr.mxu0 0.0
    %1369 = vmatpush2.msra.mxu0 0.0
    %1370 = vmatprep.subr.mxu0 0.0
    %1371 = vmatpush2.msra.mxu0 0.0
    %1372 = vmatprep.subr.mxu0 0.0
    %1373 = vmatpush2.msra.mxu0 0.0
    %1374 = vmatprep.subr.mxu0 0.0
    %1375 = vmatpush2.msra.mxu0 0.0
    %1376 = vmatprep.subr.mxu0 0.0
    %1377 = vmatpush2.msra.mxu0 0.0
    %1378 = vmatprep.subr.mxu0 0.0
    %1379 = vmatpush2.msra.mxu0 0.0
    %1380 = vmatprep.subr.mxu0 0.0
    %1381 = vmatpush2.msra.mxu0 0.0
    %1382 = vmatprep.subr.mxu0 0.0
    %1383 = vmatpush2.msra.mxu0 0.0
    %1384 = vmatprep.subr.mxu0 0.0
    %1385 = vmatpush2.msra.mxu0 0.0
    %1386 = vmatprep.mubr.f32.mxu0 0.0
    %1387 = vmatmul.mubr.f32.gmra.mxu0 %v1305
    %v1388 = vpop.f32.mrf.mxu0
    %v1389 = vadd.f32 %v1276, %v1388
    %v1390 = vpop.f32.mrf.mxu0
    %1391 = vmatprep.mubr.f32.mxu0 0.0
    %1392 = vmatmul.mubr.f32.gmra.mxu0 %v1308
    %v1393 = vpop.f32.mrf.mxu0
    %v1394 = vadd.f32 %v1281, %v1393
    %v1395 = vpop.f32.mrf.mxu0
    %1396 = vmatprep.mubr.f32.mxu0 0.0
    %1397 = vmatmul.mubr.f32.gmra.mxu0 %v1311
    %v1398 = vpop.f32.mrf.mxu0
    %v1399 = vadd.f32 %v1286, %v1398
    %v1400 = vpop.f32.mrf.mxu0
    %1401 = vmatprep.mubr.f32.mxu0 0.0
    %1402 = vmatmul.mubr.f32.gmra.mxu0 %v1314
    %v1403 = vpop.f32.mrf.mxu0
    %v1404 = vadd.f32 %v1291, %v1403
    %v1405 = vpop.f32.mrf.mxu0
    %1406 = vmatprep.mubr.f32.mxu0 0.0
    %1407 = vmatmul.mubr.f32.gmra.mxu0 %v1317
    %v1408 = vpop.f32.mrf.mxu0
    %v1409 = vadd.f32 %v1296, %v1408
    %v1410 = vpop.f32.mrf.mxu0
    %1411 = vmatprep.mubr.f32.mxu0 0.0
    %1412 = vmatmul.mubr.f32.gmra.mxu0 %v1320
    %v1413 = vpop.f32.mrf.mxu0
    %v1414 = vadd.f32 %v1301, %v1413
    %v1415 = vpop.f32.mrf.mxu0
    %1416 = vdwg.mxu0
    %v1417 = vmul.f32 %v544, %v339
    %v1418 = vmul.f32 %v549, %v339
    %v1419 = vmul.f32 %v554, %v339
    %v1420 = vmul.f32 %v559, %v339
    %v1421 = vmul.f32 %v564, %v339
    %v1422 = vmul.f32 %v569, %v339
    %v1424 = vsel %vm132, %v1417, 0
    %v1427 = vsel %vm132, %v1418, 0
    %v1430 = vsel %vm132, %v1419, 0
    %v1433 = vsel %vm132, %v1420, 0
    %v1436 = vsel %vm132, %v1421, 0
    %v1439 = vsel %vm132, %v1422, 0
    %1441 = vmatprep.subr.mxu0 0.0
    %1442 = vmatpush1.xpose.msra.mxu0 0.0
    %1443 = vmatprep.subr.mxu0 0.0
    %1444 = vmatpush1.xpose.msra.mxu0 0.0
    %1445 = vmatprep.subr.mxu0 0.0
    %1446 = vmatpush1.xpose.msra.mxu0 0.0
    %1447 = vmatprep.subr.mxu0 0.0
    %1448 = vmatpush1.xpose.msra.mxu0 0.0
    %1449 = vmatprep.subr.mxu0 0.0
    %1450 = vmatpush1.xpose.msra.mxu0 0.0
    %1451 = vmatprep.subr.mxu0 0.0
    %1452 = vmatpush1.xpose.msra.mxu0 0.0
    %1453 = vmatprep.subr.mxu0 0.0
    %1454 = vmatpush1.xpose.msra.mxu0 0.0
    %1455 = vmatprep.subr.mxu0 0.0
    %1456 = vmatpush1.xpose.msra.mxu0 0.0
    %1457 = vmatprep.subr.mxu0 0.0
    %1458 = vmatpush1.xpose.msra.mxu0 0.0
    %1459 = vmatprep.subr.mxu0 0.0
    %1460 = vmatpush1.xpose.msra.mxu0 0.0
    %1461 = vmatprep.subr.mxu0 0.0
    %1462 = vmatpush1.xpose.msra.mxu0 %v818
    %1463 = vmatprep.subr.mxu0 0.0
    %1464 = vmatpush1.xpose.msra.mxu0 %v815
    %1465 = vmatprep.subr.mxu0 0.0
    %1466 = vmatpush1.xpose.msra.mxu0 %v812
    %1467 = vmatprep.subr.mxu0 0.0
    %1468 = vmatpush1.xpose.msra.mxu0 %v809
    %1469 = vmatprep.subr.mxu0 0.0
    %1470 = vmatpush1.xpose.msra.mxu0 %v806
    %1471 = vmatprep.subr.mxu0 0.0
    %1472 = vmatpush1.xpose.msra.mxu0 %v803
    %1473 = vmatprep.subr.mxu0 0.0
    %1474 = vmatpush2.xpose.msra.mxu0 0.0
    %1475 = vmatprep.subr.mxu0 0.0
    %1476 = vmatpush2.xpose.msra.mxu0 0.0
    %1477 = vmatprep.subr.mxu0 0.0
    %1478 = vmatpush2.xpose.msra.mxu0 0.0
    %1479 = vmatprep.subr.mxu0 0.0
    %1480 = vmatpush2.xpose.msra.mxu0 0.0
    %1481 = vmatprep.subr.mxu0 0.0
    %1482 = vmatpush2.xpose.msra.mxu0 0.0
    %1483 = vmatprep.subr.mxu0 0.0
    %1484 = vmatpush2.xpose.msra.mxu0 0.0
    %1485 = vmatprep.subr.mxu0 0.0
    %1486 = vmatpush2.xpose.msra.mxu0 0.0
    %1487 = vmatprep.subr.mxu0 0.0
    %1488 = vmatpush2.xpose.msra.mxu0 0.0
    %1489 = vmatprep.subr.mxu0 0.0
    %1490 = vmatpush2.xpose.msra.mxu0 0.0
    %1491 = vmatprep.subr.mxu0 0.0
    %1492 = vmatpush2.xpose.msra.mxu0 0.0
    %1493 = vmatprep.subr.mxu0 0.0
    %1494 = vmatpush2.xpose.msra.mxu0 0.0
    %1495 = vmatprep.subr.mxu0 0.0
    %1496 = vmatpush2.xpose.msra.mxu0 0.0
    %1497 = vmatprep.subr.mxu0 0.0
    %1498 = vmatpush2.xpose.msra.mxu0 0.0
    %1499 = vmatprep.subr.mxu0 0.0
    %1500 = vmatpush2.xpose.msra.mxu0 0.0
    %1501 = vmatprep.subr.mxu0 0.0
    %1502 = vmatpush2.xpose.msra.mxu0 0.0
    %1503 = vmatprep.subr.mxu0 0.0
    %1504 = vmatpush2.xpose.msra.mxu0 0.0
    %1505 = vmatprep.mubr.f32.mxu0 0.0
    %1506 = vmatmul.mubr.f32.gmra.mxu0 %v1424
    %v1507 = vpop.f32.mrf.mxu0
    %v1508 = vadd.f32 %v323, %v1507
    %v1509 = vpop.f32.mrf.mxu0
    %1510 = vmatprep.mubr.f32.mxu0 0.0
    %1511 = vmatmul.mubr.f32.gmra.mxu0 %v1427
    %v1512 = vpop.f32.mrf.mxu0
    %v1513 = vadd.f32 %v324, %v1512
    %v1514 = vpop.f32.mrf.mxu0
    %1515 = vmatprep.mubr.f32.mxu0 0.0
    %1516 = vmatmul.mubr.f32.gmra.mxu0 %v1430
    %v1517 = vpop.f32.mrf.mxu0
    %v1518 = vadd.f32 %v325, %v1517
    %v1519 = vpop.f32.mrf.mxu0
    %1520 = vmatprep.mubr.f32.mxu0 0.0
    %1521 = vmatmul.mubr.f32.gmra.mxu0 %v1433
    %v1522 = vpop.f32.mrf.mxu0
    %v1523 = vadd.f32 %v326, %v1522
    %v1524 = vpop.f32.mrf.mxu0
    %1525 = vmatprep.mubr.f32.mxu0 0.0
    %1526 = vmatmul.mubr.f32.gmra.mxu0 %v1436
    %v1527 = vpop.f32.mrf.mxu0
    %v1528 = vadd.f32 %v327, %v1527
    %v1529 = vpop.f32.mrf.mxu0
    %1530 = vmatprep.mubr.f32.mxu0 0.0
    %1531 = vmatmul.mubr.f32.gmra.mxu0 %v1439
    %v1532 = vpop.f32.mrf.mxu0
    %v1533 = vadd.f32 %v328, %v1532
    %v1534 = vpop.f32.mrf.mxu0
    %1535 = vdwg.mxu0
    %v1536 = vsel %vm29, %v1508, -inf
    %1537 = vmax.xlane.f32.xlu0 %v1536
    %v1538 = vpop.xlane.xlu0 %1537
    %v1539 = vsel %vm29, %v1513, -inf
    %1540 = vmax.xlane.f32.xlu0 %v1539
    %v1541 = vpop.xlane.xlu0 %1540
    %v1542 = vsel %vm29, %v1518, -inf
    %1543 = vmax.xlane.f32.xlu0 %v1542
    %v1544 = vpop.xlane.xlu0 %1543
    %v1545 = vsel %vm29, %v1523, -inf
    %1546 = vmax.xlane.f32.xlu0 %v1545
    %v1547 = vpop.xlane.xlu0 %1546
    %v1548 = vsel %vm29, %v1528, -inf
    %1549 = vmax.xlane.f32.xlu0 %v1548
    %v1550 = vpop.xlane.xlu0 %1549
    %v1551 = vsel %vm29, %v1533, -inf
    %1552 = vmax.xlane.f32.xlu0 %v1551
    %v1553 = vpop.xlane.xlu0 %1552
    %v1554 = vsub.f32 %v1508, %v1538
    %v1555 = vsub.f32 %v1513, %v1541
    %v1556 = vsub.f32 %v1518, %v1544
    %v1557 = vsub.f32 %v1523, %v1547
    %v1558 = vsub.f32 %v1528, %v1550
    %v1559 = vsub.f32 %v1533, %v1553
    %v1560 = vmul.f32 %v1554, 1.442695
    %v1561 = vpow.pop %v1560
    %v1562 = vmul.f32 %v1555, 1.442695
    %v1563 = vpow.pop %v1562
    %v1564 = vmul.f32 %v1556, 1.442695
    %v1565 = vpow.pop %v1564
    %v1566 = vmul.f32 %v1557, 1.442695
    %v1567 = vpow.pop %v1566
    %v1568 = vmul.f32 %v1558, 1.442695
    %v1569 = vpow.pop %v1568
    %v1570 = vmul.f32 %v1559, 1.442695
    %v1571 = vpow.pop %v1570
    %v1572 = vsel %vm29, %v1561, 0.0
    %1573 = vadd.xlane.f32.xlu0 %v1572
    %v1574 = vpop.xlane.xlu0 %1573
    %v1575 = vsel %vm29, %v1563, 0.0
    %1576 = vadd.xlane.f32.xlu0 %v1575
    %v1577 = vpop.xlane.xlu0 %1576
    %v1578 = vsel %vm29, %v1565, 0.0
    %1579 = vadd.xlane.f32.xlu0 %v1578
    %v1580 = vpop.xlane.xlu0 %1579
    %v1581 = vsel %vm29, %v1567, 0.0
    %1582 = vadd.xlane.f32.xlu0 %v1581
    %v1583 = vpop.xlane.xlu0 %1582
    %v1584 = vsel %vm29, %v1569, 0.0
    %1585 = vadd.xlane.f32.xlu0 %v1584
    %v1586 = vpop.xlane.xlu0 %1585
    %v1587 = vsel %vm29, %v1571, 0.0
    %1588 = vadd.xlane.f32.xlu0 %v1587
    %v1589 = vpop.xlane.xlu0 %1588
    %v1590 = vrcp.pop %v1574
    %v1591 = vrcp.pop %v1577
    %v1592 = vrcp.pop %v1580
    %v1593 = vrcp.pop %v1583
    %v1594 = vrcp.pop %v1586
    %v1595 = vrcp.pop %v1589
    %v1596 = vmul.f32 %v1561, %v1590
    %v1597 = vmul.f32 %v1563, %v1591
    %v1598 = vmul.f32 %v1565, %v1592
    %v1599 = vmul.f32 %v1567, %v1593
    %v1600 = vmul.f32 %v1569, %v1594
    %v1601 = vmul.f32 %v1571, %v1595
    %s1602 = scalar_lea.vmem %s5, 96
    %1603 = vst.msk [vmem:[%s1602] sm:$0xff] %vm29, %v1596
    %1604 = vst.msk [vmem:[%s1602 + $0x8] sm:$0xff] %vm29, %v1597
    %1605 = vst.msk [vmem:[%s1602 + $0x10] sm:$0xff] %vm29, %v1598
    %1606 = vst.msk [vmem:[%s1602 + $0x18] sm:$0xff] %vm29, %v1599
    %1607 = vst.msk [vmem:[%s1602 + $0x20] sm:$0xff] %vm29, %v1600
    %1608 = vst.msk [vmem:[%s1602 + $0x28] sm:$0xff] %vm29, %v1601
    %v1609 = vmul.f32 %v750, %v339
    %v1610 = vmul.f32 %v755, %v339
    %v1611 = vmul.f32 %v760, %v339
    %v1612 = vmul.f32 %v765, %v339
    %v1613 = vmul.f32 %v770, %v339
    %v1614 = vmul.f32 %v775, %v339
    %v1616 = vsel %vm29, %v1596, 0
    %v1619 = vsel %vm29, %v1597, 0
    %v1622 = vsel %vm29, %v1598, 0
    %v1625 = vsel %vm29, %v1599, 0
    %v1628 = vsel %vm29, %v1600, 0
    %v1631 = vsel %vm29, %v1601, 0
    %1633 = vmatprep.subr.mxu0 0.0
    %1634 = vmatpush1.msra.mxu0 0.0
    %1635 = vmatprep.subr.mxu0 0.0
    %1636 = vmatpush1.msra.mxu0 0.0
    %1637 = vmatprep.subr.mxu0 0.0
    %1638 = vmatpush1.msra.mxu0 0.0
    %1639 = vmatprep.subr.mxu0 0.0
    %1640 = vmatpush1.msra.mxu0 0.0
    %1641 = vmatprep.subr.mxu0 0.0
    %1642 = vmatpush1.msra.mxu0 0.0
    %1643 = vmatprep.subr.mxu0 0.0
    %1644 = vmatpush1.msra.mxu0 0.0
    %1645 = vmatprep.subr.mxu0 0.0
    %1646 = vmatpush1.msra.mxu0 0.0
    %1647 = vmatprep.subr.mxu0 0.0
    %1648 = vmatpush1.msra.mxu0 0.0
    %1649 = vmatprep.subr.mxu0 0.0
    %1650 = vmatpush1.msra.mxu0 0.0
    %1651 = vmatprep.subr.mxu0 0.0
    %1652 = vmatpush1.msra.mxu0 0.0
    %1653 = vmatprep.subr.mxu0 0.0
    %1654 = vmatpush1.msra.mxu0 %v1614
    %1655 = vmatprep.subr.mxu0 0.0
    %1656 = vmatpush1.msra.mxu0 %v1613
    %1657 = vmatprep.subr.mxu0 0.0
    %1658 = vmatpush1.msra.mxu0 %v1612
    %1659 = vmatprep.subr.mxu0 0.0
    %1660 = vmatpush1.msra.mxu0 %v1611
    %1661 = vmatprep.subr.mxu0 0.0
    %1662 = vmatpush1.msra.mxu0 %v1610
    %1663 = vmatprep.subr.mxu0 0.0
    %1664 = vmatpush1.msra.mxu0 %v1609
    %1665 = vmatprep.subr.mxu0 0.0
    %1666 = vmatpush2.msra.mxu0 0.0
    %1667 = vmatprep.subr.mxu0 0.0
    %1668 = vmatpush2.msra.mxu0 0.0
    %1669 = vmatprep.subr.mxu0 0.0
    %1670 = vmatpush2.msra.mxu0 0.0
    %1671 = vmatprep.subr.mxu0 0.0
    %1672 = vmatpush2.msra.mxu0 0.0
    %1673 = vmatprep.subr.mxu0 0.0
    %1674 = vmatpush2.msra.mxu0 0.0
    %1675 = vmatprep.subr.mxu0 0.0
    %1676 = vmatpush2.msra.mxu0 0.0
    %1677 = vmatprep.subr.mxu0 0.0
    %1678 = vmatpush2.msra.mxu0 0.0
    %1679 = vmatprep.subr.mxu0 0.0
    %1680 = vmatpush2.msra.mxu0 0.0
    %1681 = vmatprep.subr.mxu0 0.0
    %1682 = vmatpush2.msra.mxu0 0.0
    %1683 = vmatprep.subr.mxu0 0.0
    %1684 = vmatpush2.msra.mxu0 0.0
    %1685 = vmatprep.subr.mxu0 0.0
    %1686 = vmatpush2.msra.mxu0 0.0
    %1687 = vmatprep.subr.mxu0 0.0
    %1688 = vmatpush2.msra.mxu0 0.0
    %1689 = vmatprep.subr.mxu0 0.0
    %1690 = vmatpush2.msra.mxu0 0.0
    %1691 = vmatprep.subr.mxu0 0.0
    %1692 = vmatpush2.msra.mxu0 0.0
    %1693 = vmatprep.subr.mxu0 0.0
    %1694 = vmatpush2.msra.mxu0 0.0
    %1695 = vmatprep.subr.mxu0 0.0
    %1696 = vmatpush2.msra.mxu0 0.0
    %1697 = vmatprep.mubr.f32.mxu0 0.0
    %1698 = vmatmul.mubr.f32.gmra.mxu0 %v1616
    %v1699 = vpop.f32.mrf.mxu0
    %v1700 = vadd.f32 0.0, %v1699
    %v1701 = vpop.f32.mrf.mxu0
    %1702 = vmatprep.mubr.f32.mxu0 0.0
    %1703 = vmatmul.mubr.f32.gmra.mxu0 %v1619
    %v1704 = vpop.f32.mrf.mxu0
    %v1705 = vadd.f32 0.0, %v1704
    %v1706 = vpop.f32.mrf.mxu0
    %1707 = vmatprep.mubr.f32.mxu0 0.0
    %1708 = vmatmul.mubr.f32.gmra.mxu0 %v1622
    %v1709 = vpop.f32.mrf.mxu0
    %v1710 = vadd.f32 0.0, %v1709
    %v1711 = vpop.f32.mrf.mxu0
    %1712 = vmatprep.mubr.f32.mxu0 0.0
    %1713 = vmatmul.mubr.f32.gmra.mxu0 %v1625
    %v1714 = vpop.f32.mrf.mxu0
    %v1715 = vadd.f32 0.0, %v1714
    %v1716 = vpop.f32.mrf.mxu0
    %1717 = vmatprep.mubr.f32.mxu0 0.0
    %1718 = vmatmul.mubr.f32.gmra.mxu0 %v1628
    %v1719 = vpop.f32.mrf.mxu0
    %v1720 = vadd.f32 0.0, %v1719
    %v1721 = vpop.f32.mrf.mxu0
    %1722 = vmatprep.mubr.f32.mxu0 0.0
    %1723 = vmatmul.mubr.f32.gmra.mxu0 %v1631
    %v1724 = vpop.f32.mrf.mxu0
    %v1725 = vadd.f32 0.0, %v1724
    %v1726 = vpop.f32.mrf.mxu0
    %1727 = vdwg.mxu0
    %v1728 = vadd.f32 %v1389, %v1700
    %v1729 = vadd.f32 %v1394, %v1705
    %v1730 = vadd.f32 %v1399, %v1710
    %v1731 = vadd.f32 %v1404, %v1715
    %v1732 = vadd.f32 %v1409, %v1720
    %v1733 = vadd.f32 %v1414, %v1725
    %v1734 = vmul.f32 %v544, %v342
    %v1735 = vmul.f32 %v549, %v342
    %v1736 = vmul.f32 %v554, %v342
    %v1737 = vmul.f32 %v559, %v342
    %v1738 = vmul.f32 %v564, %v342
    %v1739 = vmul.f32 %v569, %v342
    %v1741 = vsel %vm132, %v1734, 0
    %v1744 = vsel %vm132, %v1735, 0
    %v1747 = vsel %vm132, %v1736, 0
    %v1750 = vsel %vm132, %v1737, 0
    %v1753 = vsel %vm132, %v1738, 0
    %v1756 = vsel %vm132, %v1739, 0
    %1758 = vmatprep.subr.mxu0 0.0
    %1759 = vmatpush1.xpose.msra.mxu0 0.0
    %1760 = vmatprep.subr.mxu0 0.0
    %1761 = vmatpush1.xpose.msra.mxu0 0.0
    %1762 = vmatprep.subr.mxu0 0.0
    %1763 = vmatpush1.xpose.msra.mxu0 0.0
    %1764 = vmatprep.subr.mxu0 0.0
    %1765 = vmatpush1.xpose.msra.mxu0 0.0
    %1766 = vmatprep.subr.mxu0 0.0
    %1767 = vmatpush1.xpose.msra.mxu0 0.0
    %1768 = vmatprep.subr.mxu0 0.0
    %1769 = vmatpush1.xpose.msra.mxu0 0.0
    %1770 = vmatprep.subr.mxu0 0.0
    %1771 = vmatpush1.xpose.msra.mxu0 0.0
    %1772 = vmatprep.subr.mxu0 0.0
    %1773 = vmatpush1.xpose.msra.mxu0 0.0
    %1774 = vmatprep.subr.mxu0 0.0
    %1775 = vmatpush1.xpose.msra.mxu0 0.0
    %1776 = vmatprep.subr.mxu0 0.0
    %1777 = vmatpush1.xpose.msra.mxu0 0.0
    %1778 = vmatprep.subr.mxu0 0.0
    %1779 = vmatpush1.xpose.msra.mxu0 %v818
    %1780 = vmatprep.subr.mxu0 0.0
    %1781 = vmatpush1.xpose.msra.mxu0 %v815
    %1782 = vmatprep.subr.mxu0 0.0
    %1783 = vmatpush1.xpose.msra.mxu0 %v812
    %1784 = vmatprep.subr.mxu0 0.0
    %1785 = vmatpush1.xpose.msra.mxu0 %v809
    %1786 = vmatprep.subr.mxu0 0.0
    %1787 = vmatpush1.xpose.msra.mxu0 %v806
    %1788 = vmatprep.subr.mxu0 0.0
    %1789 = vmatpush1.xpose.msra.mxu0 %v803
    %1790 = vmatprep.subr.mxu0 0.0
    %1791 = vmatpush2.xpose.msra.mxu0 0.0
    %1792 = vmatprep.subr.mxu0 0.0
    %1793 = vmatpush2.xpose.msra.mxu0 0.0
    %1794 = vmatprep.subr.mxu0 0.0
    %1795 = vmatpush2.xpose.msra.mxu0 0.0
    %1796 = vmatprep.subr.mxu0 0.0
    %1797 = vmatpush2.xpose.msra.mxu0 0.0
    %1798 = vmatprep.subr.mxu0 0.0
    %1799 = vmatpush2.xpose.msra.mxu0 0.0
    %1800 = vmatprep.subr.mxu0 0.0
    %1801 = vmatpush2.xpose.msra.mxu0 0.0
    %1802 = vmatprep.subr.mxu0 0.0
    %1803 = vmatpush2.xpose.msra.mxu0 0.0
    %1804 = vmatprep.subr.mxu0 0.0
    %1805 = vmatpush2.xpose.msra.mxu0 0.0
    %1806 = vmatprep.subr.mxu0 0.0
    %1807 = vmatpush2.xpose.msra.mxu0 0.0
    %1808 = vmatprep.subr.mxu0 0.0
    %1809 = vmatpush2.xpose.msra.mxu0 0.0
    %1810 = vmatprep.subr.mxu0 0.0
    %1811 = vmatpush2.xpose.msra.mxu0 0.0
    %1812 = vmatprep.subr.mxu0 0.0
    %1813 = vmatpush2.xpose.msra.mxu0 0.0
    %1814 = vmatprep.subr.mxu0 0.0
    %1815 = vmatpush2.xpose.msra.mxu0 0.0
    %1816 = vmatprep.subr.mxu0 0.0
    %1817 = vmatpush2.xpose.msra.mxu0 0.0
    %1818 = vmatprep.subr.mxu0 0.0
    %1819 = vmatpush2.xpose.msra.mxu0 0.0
    %1820 = vmatprep.subr.mxu0 0.0
    %1821 = vmatpush2.xpose.msra.mxu0 0.0
    %1822 = vmatprep.mubr.f32.mxu0 0.0
    %1823 = vmatmul.mubr.f32.gmra.mxu0 %v1741
    %v1824 = vpop.f32.mrf.mxu0
    %v1825 = vadd.f32 %v323, %v1824
    %v1826 = vpop.f32.mrf.mxu0
    %1827 = vmatprep.mubr.f32.mxu0 0.0
    %1828 = vmatmul.mubr.f32.gmra.mxu0 %v1744
    %v1829 = vpop.f32.mrf.mxu0
    %v1830 = vadd.f32 %v324, %v1829
    %v1831 = vpop.f32.mrf.mxu0
    %1832 = vmatprep.mubr.f32.mxu0 0.0
    %1833 = vmatmul.mubr.f32.gmra.mxu0 %v1747
    %v1834 = vpop.f32.mrf.mxu0
    %v1835 = vadd.f32 %v325, %v1834
    %v1836 = vpop.f32.mrf.mxu0
    %1837 = vmatprep.mubr.f32.mxu0 0.0
    %1838 = vmatmul.mubr.f32.gmra.mxu0 %v1750
    %v1839 = vpop.f32.mrf.mxu0
    %v1840 = vadd.f32 %v326, %v1839
    %v1841 = vpop.f32.mrf.mxu0
    %1842 = vmatprep.mubr.f32.mxu0 0.0
    %1843 = vmatmul.mubr.f32.gmra.mxu0 %v1753
    %v1844 = vpop.f32.mrf.mxu0
    %v1845 = vadd.f32 %v327, %v1844
    %v1846 = vpop.f32.mrf.mxu0
    %1847 = vmatprep.mubr.f32.mxu0 0.0
    %1848 = vmatmul.mubr.f32.gmra.mxu0 %v1756
    %v1849 = vpop.f32.mrf.mxu0
    %v1850 = vadd.f32 %v328, %v1849
    %v1851 = vpop.f32.mrf.mxu0
    %1852 = vdwg.mxu0
    %v1853 = vsel %vm29, %v1825, -inf
    %1854 = vmax.xlane.f32.xlu0 %v1853
    %v1855 = vpop.xlane.xlu0 %1854
    %v1856 = vsel %vm29, %v1830, -inf
    %1857 = vmax.xlane.f32.xlu0 %v1856
    %v1858 = vpop.xlane.xlu0 %1857
    %v1859 = vsel %vm29, %v1835, -inf
    %1860 = vmax.xlane.f32.xlu0 %v1859
    %v1861 = vpop.xlane.xlu0 %1860
    %v1862 = vsel %vm29, %v1840, -inf
    %1863 = vmax.xlane.f32.xlu0 %v1862
    %v1864 = vpop.xlane.xlu0 %1863
    %v1865 = vsel %vm29, %v1845, -inf
    %1866 = vmax.xlane.f32.xlu0 %v1865
    %v1867 = vpop.xlane.xlu0 %1866
    %v1868 = vsel %vm29, %v1850, -inf
    %1869 = vmax.xlane.f32.xlu0 %v1868
    %v1870 = vpop.xlane.xlu0 %1869
    %v1871 = vsub.f32 %v1825, %v1855
    %v1872 = vsub.f32 %v1830, %v1858
    %v1873 = vsub.f32 %v1835, %v1861
    %v1874 = vsub.f32 %v1840, %v1864
    %v1875 = vsub.f32 %v1845, %v1867
    %v1876 = vsub.f32 %v1850, %v1870
    %v1877 = vmul.f32 %v1871, 1.442695
    %v1878 = vpow.pop %v1877
    %v1879 = vmul.f32 %v1872, 1.442695
    %v1880 = vpow.pop %v1879
    %v1881 = vmul.f32 %v1873, 1.442695
    %v1882 = vpow.pop %v1881
    %v1883 = vmul.f32 %v1874, 1.442695
    %v1884 = vpow.pop %v1883
    %v1885 = vmul.f32 %v1875, 1.442695
    %v1886 = vpow.pop %v1885
    %v1887 = vmul.f32 %v1876, 1.442695
    %v1888 = vpow.pop %v1887
    %v1889 = vsel %vm29, %v1878, 0.0
    %1890 = vadd.xlane.f32.xlu0 %v1889
    %v1891 = vpop.xlane.xlu0 %1890
    %v1892 = vsel %vm29, %v1880, 0.0
    %1893 = vadd.xlane.f32.xlu0 %v1892
    %v1894 = vpop.xlane.xlu0 %1893
    %v1895 = vsel %vm29, %v1882, 0.0
    %1896 = vadd.xlane.f32.xlu0 %v1895
    %v1897 = vpop.xlane.xlu0 %1896
    %v1898 = vsel %vm29, %v1884, 0.0
    %1899 = vadd.xlane.f32.xlu0 %v1898
    %v1900 = vpop.xlane.xlu0 %1899
    %v1901 = vsel %vm29, %v1886, 0.0
    %1902 = vadd.xlane.f32.xlu0 %v1901
    %v1903 = vpop.xlane.xlu0 %1902
    %v1904 = vsel %vm29, %v1888, 0.0
    %1905 = vadd.xlane.f32.xlu0 %v1904
    %v1906 = vpop.xlane.xlu0 %1905
    %v1907 = vrcp.pop %v1891
    %v1908 = vrcp.pop %v1894
    %v1909 = vrcp.pop %v1897
    %v1910 = vrcp.pop %v1900
    %v1911 = vrcp.pop %v1903
    %v1912 = vrcp.pop %v1906
    %v1913 = vmul.f32 %v1878, %v1907
    %v1914 = vmul.f32 %v1880, %v1908
    %v1915 = vmul.f32 %v1882, %v1909
    %v1916 = vmul.f32 %v1884, %v1910
    %v1917 = vmul.f32 %v1886, %v1911
    %v1918 = vmul.f32 %v1888, %v1912
    %s1919 = scalar_lea.vmem %s5, 144
    %1920 = vst.msk [vmem:[%s1919] sm:$0xff] %vm29, %v1913
    %1921 = vst.msk [vmem:[%s1919 + $0x8] sm:$0xff] %vm29, %v1914
    %1922 = vst.msk [vmem:[%s1919 + $0x10] sm:$0xff] %vm29, %v1915
    %1923 = vst.msk [vmem:[%s1919 + $0x18] sm:$0xff] %vm29, %v1916
    %1924 = vst.msk [vmem:[%s1919 + $0x20] sm:$0xff] %vm29, %v1917
    %1925 = vst.msk [vmem:[%s1919 + $0x28] sm:$0xff] %vm29, %v1918
    %v1926 = vmul.f32 %v750, %v342
    %v1927 = vmul.f32 %v755, %v342
    %v1928 = vmul.f32 %v760, %v342
    %v1929 = vmul.f32 %v765, %v342
    %v1930 = vmul.f32 %v770, %v342
    %v1931 = vmul.f32 %v775, %v342
    %v1933 = vsel %vm29, %v1913, 0
    %v1936 = vsel %vm29, %v1914, 0
    %v1939 = vsel %vm29, %v1915, 0
    %v1942 = vsel %vm29, %v1916, 0
    %v1945 = vsel %vm29, %v1917, 0
    %v1948 = vsel %vm29, %v1918, 0
    %1950 = vmatprep.subr.mxu0 0.0
    %1951 = vmatpush1.msra.mxu0 0.0
    %1952 = vmatprep.subr.mxu0 0.0
    %1953 = vmatpush1.msra.mxu0 0.0
    %1954 = vmatprep.subr.mxu0 0.0
    %1955 = vmatpush1.msra.mxu0 0.0
    %1956 = vmatprep.subr.mxu0 0.0
    %1957 = vmatpush1.msra.mxu0 0.0
    %1958 = vmatprep.subr.mxu0 0.0
    %1959 = vmatpush1.msra.mxu0 0.0
    %1960 = vmatprep.subr.mxu0 0.0
    %1961 = vmatpush1.msra.mxu0 0.0
    %1962 = vmatprep.subr.mxu0 0.0
    %1963 = vmatpush1.msra.mxu0 0.0
    %1964 = vmatprep.subr.mxu0 0.0
    %1965 = vmatpush1.msra.mxu0 0.0
    %1966 = vmatprep.subr.mxu0 0.0
    %1967 = vmatpush1.msra.mxu0 0.0
    %1968 = vmatprep.subr.mxu0 0.0
    %1969 = vmatpush1.msra.mxu0 0.0
    %1970 = vmatprep.subr.mxu0 0.0
    %1971 = vmatpush1.msra.mxu0 %v1931
    %1972 = vmatprep.subr.mxu0 0.0
    %1973 = vmatpush1.msra.mxu0 %v1930
    %1974 = vmatprep.subr.mxu0 0.0
    %1975 = vmatpush1.msra.mxu0 %v1929
    %1976 = vmatprep.subr.mxu0 0.0
    %1977 = vmatpush1.msra.mxu0 %v1928
    %1978 = vmatprep.subr.mxu0 0.0
    %1979 = vmatpush1.msra.mxu0 %v1927
    %1980 = vmatprep.subr.mxu0 0.0
    %1981 = vmatpush1.msra.mxu0 %v1926
    %1982 = vmatprep.subr.mxu0 0.0
    %1983 = vmatpush2.msra.mxu0 0.0
    %1984 = vmatprep.subr.mxu0 0.0
    %1985 = vmatpush2.msra.mxu0 0.0
    %1986 = vmatprep.subr.mxu0 0.0
    %1987 = vmatpush2.msra.mxu0 0.0
    %1988 = vmatprep.subr.mxu0 0.0
    %1989 = vmatpush2.msra.mxu0 0.0
    %1990 = vmatprep.subr.mxu0 0.0
    %1991 = vmatpush2.msra.mxu0 0.0
    %1992 = vmatprep.subr.mxu0 0.0
    %1993 = vmatpush2.msra.mxu0 0.0
    %1994 = vmatprep.subr.mxu0 0.0
    %1995 = vmatpush2.msra.mxu0 0.0
    %1996 = vmatprep.subr.mxu0 0.0
    %1997 = vmatpush2.msra.mxu0 0.0
    %1998 = vmatprep.subr.mxu0 0.0
    %1999 = vmatpush2.msra.mxu0 0.0
    %2000 = vmatprep.subr.mxu0 0.0
    %2001 = vmatpush2.msra.mxu0 0.0
    %2002 = vmatprep.subr.mxu0 0.0
    %2003 = vmatpush2.msra.mxu0 0.0
    %2004 = vmatprep.subr.mxu0 0.0
    %2005 = vmatpush2.msra.mxu0 0.0
    %2006 = vmatprep.subr.mxu0 0.0
    %2007 = vmatpush2.msra.mxu0 0.0
    %2008 = vmatprep.subr.mxu0 0.0
    %2009 = vmatpush2.msra.mxu0 0.0
    %2010 = vmatprep.subr.mxu0 0.0
    %2011 = vmatpush2.msra.mxu0 0.0
    %2012 = vmatprep.subr.mxu0 0.0
    %2013 = vmatpush2.msra.mxu0 0.0
    %2014 = vmatprep.mubr.f32.mxu0 0.0
    %2015 = vmatmul.mubr.f32.gmra.mxu0 %v1933
    %v2016 = vpop.f32.mrf.mxu0
    %v2017 = vadd.f32 0.0, %v2016
    %v2018 = vpop.f32.mrf.mxu0
    %2019 = vmatprep.mubr.f32.mxu0 0.0
    %2020 = vmatmul.mubr.f32.gmra.mxu0 %v1936
    %v2021 = vpop.f32.mrf.mxu0
    %v2022 = vadd.f32 0.0, %v2021
    %v2023 = vpop.f32.mrf.mxu0
    %2024 = vmatprep.mubr.f32.mxu0 0.0
    %2025 = vmatmul.mubr.f32.gmra.mxu0 %v1939
    %v2026 = vpop.f32.mrf.mxu0
    %v2027 = vadd.f32 0.0, %v2026
    %v2028 = vpop.f32.mrf.mxu0
    %2029 = vmatprep.mubr.f32.mxu0 0.0
    %2030 = vmatmul.mubr.f32.gmra.mxu0 %v1942
    %v2031 = vpop.f32.mrf.mxu0
    %v2032 = vadd.f32 0.0, %v2031
    %v2033 = vpop.f32.mrf.mxu0
    %2034 = vmatprep.mubr.f32.mxu0 0.0
    %2035 = vmatmul.mubr.f32.gmra.mxu0 %v1945
    %v2036 = vpop.f32.mrf.mxu0
    %v2037 = vadd.f32 0.0, %v2036
    %v2038 = vpop.f32.mrf.mxu0
    %2039 = vmatprep.mubr.f32.mxu0 0.0
    %2040 = vmatmul.mubr.f32.gmra.mxu0 %v1948
    %v2041 = vpop.f32.mrf.mxu0
    %v2042 = vadd.f32 0.0, %v2041
    %v2043 = vpop.f32.mrf.mxu0
    %2044 = vdwg.mxu0
    %v2045 = vadd.f32 %v1728, %v2017
    %v2046 = vadd.f32 %v1729, %v2022
    %v2047 = vadd.f32 %v1730, %v2027
    %v2048 = vadd.f32 %v1731, %v2032
    %v2049 = vadd.f32 %v1732, %v2037
    %v2050 = vadd.f32 %v1733, %v2042
    %v2051 = vld [vmem:[%s2 + $0xc8] sm:$0xff]
    %v2052 = vld [vmem:[%s2 + $0xd0] sm:$0xff]
    %v2053 = vld [vmem:[%s2 + $0xd8] sm:$0xff]
    %v2054 = vld [vmem:[%s2 + $0xe0] sm:$0xff]
    %v2056 = vsel %vm132, %v2045, 0
    %v2059 = vsel %vm132, %v2046, 0
    %v2062 = vsel %vm132, %v2047, 0
    %v2065 = vsel %vm132, %v2048, 0
    %v2068 = vsel %vm132, %v2049, 0
    %v2071 = vsel %vm132, %v2050, 0
    %2073 = vmatprep.subr.mxu0 0.0
    %2074 = vmatpush1.msra.mxu0 0.0
    %2075 = vmatprep.subr.mxu0 0.0
    %2076 = vmatpush1.msra.mxu0 0.0
    %2077 = vmatprep.subr.mxu0 0.0
    %2078 = vmatpush1.msra.mxu0 0.0
    %2079 = vmatprep.subr.mxu0 0.0
    %2080 = vmatpush1.msra.mxu0 0.0
    %2081 = vmatprep.subr.mxu0 0.0
    %2082 = vmatpush1.msra.mxu0 0.0
    %2083 = vmatprep.subr.mxu0 0.0
    %2084 = vmatpush1.msra.mxu0 0.0
    %2085 = vmatprep.subr.mxu0 0.0
    %2086 = vmatpush1.msra.mxu0 0.0
    %2087 = vmatprep.subr.mxu0 0.0
    %2088 = vmatpush1.msra.mxu0 0.0
    %2089 = vmatprep.subr.mxu0 0.0
    %2090 = vmatpush1.msra.mxu0 0.0
    %2091 = vmatprep.subr.mxu0 0.0
    %2092 = vmatpush1.msra.mxu0 0.0
    %2093 = vmatprep.subr.mxu0 0.0
    %2094 = vmatpush1.msra.mxu0 0.0
    %2095 = vmatprep.subr.mxu0 0.0
    %2096 = vmatpush1.msra.mxu0 0.0
    %2097 = vmatprep.subr.mxu0 0.0
    %2098 = vmatpush1.msra.mxu0 %v2054
    %2099 = vmatprep.subr.mxu0 0.0
    %2100 = vmatpush1.msra.mxu0 %v2053
    %2101 = vmatprep.subr.mxu0 0.0
    %2102 = vmatpush1.msra.mxu0 %v2052
    %2103 = vmatprep.subr.mxu0 0.0
    %2104 = vmatpush1.msra.mxu0 %v2051
    %2105 = vmatprep.subr.mxu0 0.0
    %2106 = vmatpush2.msra.mxu0 0.0
    %2107 = vmatprep.subr.mxu0 0.0
    %2108 = vmatpush2.msra.mxu0 0.0
    %2109 = vmatprep.subr.mxu0 0.0
    %2110 = vmatpush2.msra.mxu0 0.0
    %2111 = vmatprep.subr.mxu0 0.0
    %2112 = vmatpush2.msra.mxu0 0.0
    %2113 = vmatprep.subr.mxu0 0.0
    %2114 = vmatpush2.msra.mxu0 0.0
    %2115 = vmatprep.subr.mxu0 0.0
    %2116 = vmatpush2.msra.mxu0 0.0
    %2117 = vmatprep.subr.mxu0 0.0
    %2118 = vmatpush2.msra.mxu0 0.0
    %2119 = vmatprep.subr.mxu0 0.0
    %2120 = vmatpush2.msra.mxu0 0.0
    %2121 = vmatprep.subr.mxu0 0.0
    %2122 = vmatpush2.msra.mxu0 0.0
    %2123 = vmatprep.subr.mxu0 0.0
    %2124 = vmatpush2.msra.mxu0 0.0
    %2125 = vmatprep.subr.mxu0 0.0
    %2126 = vmatpush2.msra.mxu0 0.0
    %2127 = vmatprep.subr.mxu0 0.0
    %2128 = vmatpush2.msra.mxu0 0.0
    %2129 = vmatprep.subr.mxu0 0.0
    %2130 = vmatpush2.msra.mxu0 0.0
    %2131 = vmatprep.subr.mxu0 0.0
    %2132 = vmatpush2.msra.mxu0 0.0
    %2133 = vmatprep.subr.mxu0 0.0
    %2134 = vmatpush2.msra.mxu0 0.0
    %2135 = vmatprep.subr.mxu0 0.0
    %2136 = vmatpush2.msra.mxu0 0.0
    %2137 = vmatprep.mubr.f32.mxu0 0.0
    %2138 = vmatmul.mubr.f32.gmra.mxu0 %v2056
    %v2139 = vpop.f32.mrf.mxu0
    %v2140 = vadd.f32 0.0, %v2139
    %v2141 = vpop.f32.mrf.mxu0
    %2142 = vmatprep.mubr.f32.mxu0 0.0
    %2143 = vmatmul.mubr.f32.gmra.mxu0 %v2059
    %v2144 = vpop.f32.mrf.mxu0
    %v2145 = vadd.f32 0.0, %v2144
    %v2146 = vpop.f32.mrf.mxu0
    %2147 = vmatprep.mubr.f32.mxu0 0.0
    %2148 = vmatmul.mubr.f32.gmra.mxu0 %v2062
    %v2149 = vpop.f32.mrf.mxu0
    %v2150 = vadd.f32 0.0, %v2149
    %v2151 = vpop.f32.mrf.mxu0
    %2152 = vmatprep.mubr.f32.mxu0 0.0
    %2153 = vmatmul.mubr.f32.gmra.mxu0 %v2065
    %v2154 = vpop.f32.mrf.mxu0
    %v2155 = vadd.f32 0.0, %v2154
    %v2156 = vpop.f32.mrf.mxu0
    %2157 = vmatprep.mubr.f32.mxu0 0.0
    %2158 = vmatmul.mubr.f32.gmra.mxu0 %v2068
    %v2159 = vpop.f32.mrf.mxu0
    %v2160 = vadd.f32 0.0, %v2159
    %v2161 = vpop.f32.mrf.mxu0
    %2162 = vmatprep.mubr.f32.mxu0 0.0
    %2163 = vmatmul.mubr.f32.gmra.mxu0 %v2071
    %v2164 = vpop.f32.mrf.mxu0
    %v2165 = vadd.f32 0.0, %v2164
    %v2166 = vpop.f32.mrf.mxu0
    %2167 = vdwg.mxu0
    %v2168 = vadd.f32 %v238, %v2140
    %v2169 = vadd.f32 %v239, %v2145
    %v2170 = vadd.f32 %v240, %v2150
    %v2171 = vadd.f32 %v241, %v2155
    %v2172 = vadd.f32 %v242, %v2160
    %v2173 = vadd.f32 %v243, %v2165
    %v2174 = vlaneseq
    %v2175 = vshrl.u32 %v2174, 7
    %v2176 = vsub.s32 0, %v2175
    %v2177 = vrot.slane %v348, %v2176
    %v2178 = vadd.f32 %v2168, %v2177
    %v2179 = vadd.f32 %v2169, %v2177
    %v2180 = vadd.f32 %v2170, %v2177
    %v2181 = vadd.f32 %v2171, %v2177
    %v2182 = vadd.f32 %v2172, %v2177
    %v2183 = vadd.f32 %v2173, %v2177
    %v2184 = vsel %vm132, %v2178, 0.0
    %2185 = vadd.xlane.f32.xlu0 %v2184
    %v2186 = vpop.xlane.xlu0 %2185
    %v2187 = vsel %vm132, %v2179, 0.0
    %2188 = vadd.xlane.f32.xlu0 %v2187
    %v2189 = vpop.xlane.xlu0 %2188
    %v2190 = vsel %vm132, %v2180, 0.0
    %2191 = vadd.xlane.f32.xlu0 %v2190
    %v2192 = vpop.xlane.xlu0 %2191
    %v2193 = vsel %vm132, %v2181, 0.0
    %2194 = vadd.xlane.f32.xlu0 %v2193
    %v2195 = vpop.xlane.xlu0 %2194
    %v2196 = vsel %vm132, %v2182, 0.0
    %2197 = vadd.xlane.f32.xlu0 %v2196
    %v2198 = vpop.xlane.xlu0 %2197
    %v2199 = vsel %vm132, %v2183, 0.0
    %2200 = vadd.xlane.f32.xlu0 %v2199
    %v2201 = vpop.xlane.xlu0 %2200
    %v2202 = vmul.f32 %v2186, %v370
    %v2203 = vmul.f32 %v2189, %v370
    %v2204 = vmul.f32 %v2192, %v370
    %v2205 = vmul.f32 %v2195, %v370
    %v2206 = vmul.f32 %v2198, %v370
    %v2207 = vmul.f32 %v2201, %v370
    %v2208 = vsub.f32 %v2178, %v2202
    %v2209 = vsub.f32 %v2179, %v2203
    %v2210 = vsub.f32 %v2180, %v2204
    %v2211 = vsub.f32 %v2181, %v2205
    %v2212 = vsub.f32 %v2182, %v2206
    %v2213 = vsub.f32 %v2183, %v2207
    %v2214 = vmul.f32 %v2208, %v2208
    %v2215 = vmul.f32 %v2209, %v2209
    %v2216 = vmul.f32 %v2210, %v2210
    %v2217 = vmul.f32 %v2211, %v2211
    %v2218 = vmul.f32 %v2212, %v2212
    %v2219 = vmul.f32 %v2213, %v2213
    %v2220 = vsel %vm132, %v2214, 0.0
    %2221 = vadd.xlane.f32.xlu0 %v2220
    %v2222 = vpop.xlane.xlu0 %2221
    %v2223 = vsel %vm132, %v2215, 0.0
    %2224 = vadd.xlane.f32.xlu0 %v2223
    %v2225 = vpop.xlane.xlu0 %2224
    %v2226 = vsel %vm132, %v2216, 0.0
    %2227 = vadd.xlane.f32.xlu0 %v2226
    %v2228 = vpop.xlane.xlu0 %2227
    %v2229 = vsel %vm132, %v2217, 0.0
    %2230 = vadd.xlane.f32.xlu0 %v2229
    %v2231 = vpop.xlane.xlu0 %2230
    %v2232 = vsel %vm132, %v2218, 0.0
    %2233 = vadd.xlane.f32.xlu0 %v2232
    %v2234 = vpop.xlane.xlu0 %2233
    %v2235 = vsel %vm132, %v2219, 0.0
    %2236 = vadd.xlane.f32.xlu0 %v2235
    %v2237 = vpop.xlane.xlu0 %2236
    %v2238 = vmul.f32 %v2222, %v370
    %v2239 = vmul.f32 %v2225, %v370
    %v2240 = vmul.f32 %v2228, %v370
    %v2241 = vmul.f32 %v2231, %v370
    %v2242 = vmul.f32 %v2234, %v370
    %v2243 = vmul.f32 %v2237, %v370
    %v2244 = vadd.f32 %v2238, 1e-06
    %v2245 = vadd.f32 %v2239, 1e-06
    %v2246 = vadd.f32 %v2240, 1e-06
    %v2247 = vadd.f32 %v2241, 1e-06
    %v2248 = vadd.f32 %v2242, 1e-06
    %v2249 = vadd.f32 %v2243, 1e-06
    %v2250 = vrsqrt.pop %v2244
    %v2251 = vrsqrt.pop %v2245
    %v2252 = vrsqrt.pop %v2246
    %v2253 = vrsqrt.pop %v2247
    %v2254 = vrsqrt.pop %v2248
    %v2255 = vrsqrt.pop %v2249
    %v2256 = vmul.f32 %v2208, %v2250
    %v2257 = vmul.f32 %v2209, %v2251
    %v2258 = vmul.f32 %v2210, %v2252
    %v2259 = vmul.f32 %v2211, %v2253
    %v2260 = vmul.f32 %v2212, %v2254
    %v2261 = vmul.f32 %v2213, %v2255
    %v2262 = vlaneseq
    %v2263 = vshrl.u32 %v2262, 7
    %v2264 = vsub.s32 0, %v2263
    %v2265 = vrot.slane %v349, %v2264
    %v2266 = vmul.f32 %v2256, %v2265
    %v2267 = vmul.f32 %v2257, %v2265
    %v2268 = vmul.f32 %v2258, %v2265
    %v2269 = vmul.f32 %v2259, %v2265
    %v2270 = vmul.f32 %v2260, %v2265
    %v2271 = vmul.f32 %v2261, %v2265
    %v2272 = vlaneseq
    %v2273 = vshrl.u32 %v2272, 7
    %v2274 = vsub.s32 0, %v2273
    %v2275 = vrot.slane %v350, %v2274
    %v2276 = vadd.f32 %v2266, %v2275
    %v2277 = vadd.f32 %v2267, %v2275
    %v2278 = vadd.f32 %v2268, %v2275
    %v2279 = vadd.f32 %v2269, %v2275
    %v2280 = vadd.f32 %v2270, %v2275
    %v2281 = vadd.f32 %v2271, %v2275
    %v2282 = vld [vmem:[%s2 + $0xe8] sm:$0xff]
    %v2283 = vld [vmem:[%s2 + $0xf0] sm:$0xff]
    %v2284 = vld [vmem:[%s2 + $0xf8] sm:$0xff]
    %v2285 = vld [vmem:[%s2 + $0x100] sm:$0xff]
    %v2286 = vld [vmem:[%s2 + $0x170] sm:$0x1]
    %v2287 = vlaneseq
    %v2288 = vshrl.u32 %v2287, 7
    %v2289 = vsub.s32 0, %v2288
    %v2290 = vrot.slane %v2286, %v2289
    %v2292 = vsel %vm132, %v2276, 0
    %v2295 = vsel %vm132, %v2277, 0
    %v2298 = vsel %vm132, %v2278, 0
    %v2301 = vsel %vm132, %v2279, 0
    %v2304 = vsel %vm132, %v2280, 0
    %v2307 = vsel %vm132, %v2281, 0
    %2309 = vmatprep.subr.mxu0 0.0
    %2310 = vmatpush1.msra.mxu0 0.0
    %2311 = vmatprep.subr.mxu0 0.0
    %2312 = vmatpush1.msra.mxu0 0.0
    %2313 = vmatprep.subr.mxu0 0.0
    %2314 = vmatpush1.msra.mxu0 0.0
    %2315 = vmatprep.subr.mxu0 0.0
    %2316 = vmatpush1.msra.mxu0 0.0
    %2317 = vmatprep.subr.mxu0 0.0
    %2318 = vmatpush1.msra.mxu0 0.0
    %2319 = vmatprep.subr.mxu0 0.0
    %2320 = vmatpush1.msra.mxu0 0.0
    %2321 = vmatprep.subr.mxu0 0.0
    %2322 = vmatpush1.msra.mxu0 0.0
    %2323 = vmatprep.subr.mxu0 0.0
    %2324 = vmatpush1.msra.mxu0 0.0
    %2325 = vmatprep.subr.mxu0 0.0
    %2326 = vmatpush1.msra.mxu0 0.0
    %2327 = vmatprep.subr.mxu0 0.0
    %2328 = vmatpush1.msra.mxu0 0.0
    %2329 = vmatprep.subr.mxu0 0.0
    %2330 = vmatpush1.msra.mxu0 0.0
    %2331 = vmatprep.subr.mxu0 0.0
    %2332 = vmatpush1.msra.mxu0 0.0
    %2333 = vmatprep.subr.mxu0 0.0
    %2334 = vmatpush1.msra.mxu0 %v2285
    %2335 = vmatprep.subr.mxu0 0.0
    %2336 = vmatpush1.msra.mxu0 %v2284
    %2337 = vmatprep.subr.mxu0 0.0
    %2338 = vmatpush1.msra.mxu0 %v2283
    %2339 = vmatprep.subr.mxu0 0.0
    %2340 = vmatpush1.msra.mxu0 %v2282
    %2341 = vmatprep.subr.mxu0 0.0
    %2342 = vmatpush2.msra.mxu0 0.0
    %2343 = vmatprep.subr.mxu0 0.0
    %2344 = vmatpush2.msra.mxu0 0.0
    %2345 = vmatprep.subr.mxu0 0.0
    %2346 = vmatpush2.msra.mxu0 0.0
    %2347 = vmatprep.subr.mxu0 0.0
    %2348 = vmatpush2.msra.mxu0 0.0
    %2349 = vmatprep.subr.mxu0 0.0
    %2350 = vmatpush2.msra.mxu0 0.0
    %2351 = vmatprep.subr.mxu0 0.0
    %2352 = vmatpush2.msra.mxu0 0.0
    %2353 = vmatprep.subr.mxu0 0.0
    %2354 = vmatpush2.msra.mxu0 0.0
    %2355 = vmatprep.subr.mxu0 0.0
    %2356 = vmatpush2.msra.mxu0 0.0
    %2357 = vmatprep.subr.mxu0 0.0
    %2358 = vmatpush2.msra.mxu0 0.0
    %2359 = vmatprep.subr.mxu0 0.0
    %2360 = vmatpush2.msra.mxu0 0.0
    %2361 = vmatprep.subr.mxu0 0.0
    %2362 = vmatpush2.msra.mxu0 0.0
    %2363 = vmatprep.subr.mxu0 0.0
    %2364 = vmatpush2.msra.mxu0 0.0
    %2365 = vmatprep.subr.mxu0 0.0
    %2366 = vmatpush2.msra.mxu0 0.0
    %2367 = vmatprep.subr.mxu0 0.0
    %2368 = vmatpush2.msra.mxu0 0.0
    %2369 = vmatprep.subr.mxu0 0.0
    %2370 = vmatpush2.msra.mxu0 0.0
    %2371 = vmatprep.subr.mxu0 0.0
    %2372 = vmatpush2.msra.mxu0 0.0
    %2373 = vmatprep.mubr.f32.mxu0 0.0
    %2374 = vmatmul.mubr.f32.gmra.mxu0 %v2292
    %v2375 = vpop.f32.mrf.mxu0
    %v2376 = vadd.f32 %v2290, %v2375
    %v2377 = vpop.f32.mrf.mxu0
    %2378 = vmatprep.mubr.f32.mxu0 0.0
    %2379 = vmatmul.mubr.f32.gmra.mxu0 %v2295
    %v2380 = vpop.f32.mrf.mxu0
    %v2381 = vadd.f32 %v2290, %v2380
    %v2382 = vpop.f32.mrf.mxu0
    %2383 = vmatprep.mubr.f32.mxu0 0.0
    %2384 = vmatmul.mubr.f32.gmra.mxu0 %v2298
    %v2385 = vpop.f32.mrf.mxu0
    %v2386 = vadd.f32 %v2290, %v2385
    %v2387 = vpop.f32.mrf.mxu0
    %2388 = vmatprep.mubr.f32.mxu0 0.0
    %2389 = vmatmul.mubr.f32.gmra.mxu0 %v2301
    %v2390 = vpop.f32.mrf.mxu0
    %v2391 = vadd.f32 %v2290, %v2390
    %v2392 = vpop.f32.mrf.mxu0
    %2393 = vmatprep.mubr.f32.mxu0 0.0
    %2394 = vmatmul.mubr.f32.gmra.mxu0 %v2304
    %v2395 = vpop.f32.mrf.mxu0
    %v2396 = vadd.f32 %v2290, %v2395
    %v2397 = vpop.f32.mrf.mxu0
    %2398 = vmatprep.mubr.f32.mxu0 0.0
    %2399 = vmatmul.mubr.f32.gmra.mxu0 %v2307
    %v2400 = vpop.f32.mrf.mxu0
    %v2401 = vadd.f32 %v2290, %v2400
    %v2402 = vpop.f32.mrf.mxu0
    %2403 = vdwg.mxu0
    %v2404 = vmul.f32 %v2376, %v2376
    %v2405 = vmul.f32 %v2381, %v2381
    %v2406 = vmul.f32 %v2386, %v2386
    %v2407 = vmul.f32 %v2391, %v2391
    %v2408 = vmul.f32 %v2396, %v2396
    %v2409 = vmul.f32 %v2401, %v2401
    %v2410 = vmul.f32 %v2376, %v2404
    %v2411 = vmul.f32 %v2381, %v2405
    %v2412 = vmul.f32 %v2386, %v2406
    %v2413 = vmul.f32 %v2391, %v2407
    %v2414 = vmul.f32 %v2396, %v2408
    %v2415 = vmul.f32 %v2401, %v2409
    %v2416 = vmul.f32 %v2410, 0.044715
    %v2417 = vmul.f32 %v2411, 0.044715
    %v2418 = vmul.f32 %v2412, 0.044715
    %v2419 = vmul.f32 %v2413, 0.044715
    %v2420 = vmul.f32 %v2414, 0.044715
    %v2421 = vmul.f32 %v2415, 0.044715
    %v2422 = vadd.f32 %v2376, %v2416
    %v2423 = vadd.f32 %v2381, %v2417
    %v2424 = vadd.f32 %v2386, %v2418
    %v2425 = vadd.f32 %v2391, %v2419
    %v2426 = vadd.f32 %v2396, %v2420
    %v2427 = vadd.f32 %v2401, %v2421
    %v2428 = vmul.f32 %v2422, 0.7978846
    %v2429 = vmul.f32 %v2423, 0.7978846
    %v2430 = vmul.f32 %v2424, 0.7978846
    %v2431 = vmul.f32 %v2425, 0.7978846
    %v2432 = vmul.f32 %v2426, 0.7978846
    %v2433 = vmul.f32 %v2427, 0.7978846
    %v2434 = vtanh.pop %v2428
    %v2435 = vtanh.pop %v2429
    %v2436 = vtanh.pop %v2430
    %v2437 = vtanh.pop %v2431
    %v2438 = vtanh.pop %v2432
    %v2439 = vtanh.pop %v2433
    %v2440 = vadd.f32 %v2434, 1.0
    %v2441 = vadd.f32 %v2435, 1.0
    %v2442 = vadd.f32 %v2436, 1.0
    %v2443 = vadd.f32 %v2437, 1.0
    %v2444 = vadd.f32 %v2438, 1.0
    %v2445 = vadd.f32 %v2439, 1.0
    %v2446 = vmul.f32 %v2440, 0.5
    %v2447 = vmul.f32 %v2441, 0.5
    %v2448 = vmul.f32 %v2442, 0.5
    %v2449 = vmul.f32 %v2443, 0.5
    %v2450 = vmul.f32 %v2444, 0.5
    %v2451 = vmul.f32 %v2445, 0.5
    %v2452 = vmul.f32 %v2376, %v2446
    %v2453 = vmul.f32 %v2381, %v2447
    %v2454 = vmul.f32 %v2386, %v2448
    %v2455 = vmul.f32 %v2391, %v2449
    %v2456 = vmul.f32 %v2396, %v2450
    %v2457 = vmul.f32 %v2401, %v2451
    %v2458 = vld [vmem:[%s2 + $0x128] sm:$0xff]
    %v2459 = vld [vmem:[%s2 + $0x130] sm:$0xff]
    %v2460 = vld [vmem:[%s2 + $0x138] sm:$0xff]
    %v2461 = vld [vmem:[%s2 + $0x140] sm:$0xff]
    %v2463 = vsel %vm132, %v2452, 0
    %v2466 = vsel %vm132, %v2453, 0
    %v2469 = vsel %vm132, %v2454, 0
    %v2472 = vsel %vm132, %v2455, 0
    %v2475 = vsel %vm132, %v2456, 0
    %v2478 = vsel %vm132, %v2457, 0
    %2480 = vmatprep.subr.mxu0 0.0
    %2481 = vmatpush1.msra.mxu0 0.0
    %2482 = vmatprep.subr.mxu0 0.0
    %2483 = vmatpush1.msra.mxu0 0.0
    %2484 = vmatprep.subr.mxu0 0.0
    %2485 = vmatpush1.msra.mxu0 0.0
    %2486 = vmatprep.subr.mxu0 0.0
    %2487 = vmatpush1.msra.mxu0 0.0
    %2488 = vmatprep.subr.mxu0 0.0
    %2489 = vmatpush1.msra.mxu0 0.0
    %2490 = vmatprep.subr.mxu0 0.0
    %2491 = vmatpush1.msra.mxu0 0.0
    %2492 = vmatprep.subr.mxu0 0.0
    %2493 = vmatpush1.msra.mxu0 0.0
    %2494 = vmatprep.subr.mxu0 0.0
    %2495 = vmatpush1.msra.mxu0 0.0
    %2496 = vmatprep.subr.mxu0 0.0
    %2497 = vmatpush1.msra.mxu0 0.0
    %2498 = vmatprep.subr.mxu0 0.0
    %2499 = vmatpush1.msra.mxu0 0.0
    %2500 = vmatprep.subr.mxu0 0.0
    %2501 = vmatpush1.msra.mxu0 0.0
    %2502 = vmatprep.subr.mxu0 0.0
    %2503 = vmatpush1.msra.mxu0 0.0
    %2504 = vmatprep.subr.mxu0 0.0
    %2505 = vmatpush1.msra.mxu0 %v2461
    %2506 = vmatprep.subr.mxu0 0.0
    %2507 = vmatpush1.msra.mxu0 %v2460
    %2508 = vmatprep.subr.mxu0 0.0
    %2509 = vmatpush1.msra.mxu0 %v2459
    %2510 = vmatprep.subr.mxu0 0.0
    %2511 = vmatpush1.msra.mxu0 %v2458
    %2512 = vmatprep.subr.mxu0 0.0
    %2513 = vmatpush2.msra.mxu0 0.0
    %2514 = vmatprep.subr.mxu0 0.0
    %2515 = vmatpush2.msra.mxu0 0.0
    %2516 = vmatprep.subr.mxu0 0.0
    %2517 = vmatpush2.msra.mxu0 0.0
    %2518 = vmatprep.subr.mxu0 0.0
    %2519 = vmatpush2.msra.mxu0 0.0
    %2520 = vmatprep.subr.mxu0 0.0
    %2521 = vmatpush2.msra.mxu0 0.0
    %2522 = vmatprep.subr.mxu0 0.0
    %2523 = vmatpush2.msra.mxu0 0.0
    %2524 = vmatprep.subr.mxu0 0.0
    %2525 = vmatpush2.msra.mxu0 0.0
    %2526 = vmatprep.subr.mxu0 0.0
    %2527 = vmatpush2.msra.mxu0 0.0
    %2528 = vmatprep.subr.mxu0 0.0
    %2529 = vmatpush2.msra.mxu0 0.0
    %2530 = vmatprep.subr.mxu0 0.0
    %2531 = vmatpush2.msra.mxu0 0.0
    %2532 = vmatprep.subr.mxu0 0.0
    %2533 = vmatpush2.msra.mxu0 0.0
    %2534 = vmatprep.subr.mxu0 0.0
    %2535 = vmatpush2.msra.mxu0 0.0
    %2536 = vmatprep.subr.mxu0 0.0
    %2537 = vmatpush2.msra.mxu0 0.0
    %2538 = vmatprep.subr.mxu0 0.0
    %2539 = vmatpush2.msra.mxu0 0.0
    %2540 = vmatprep.subr.mxu0 0.0
    %2541 = vmatpush2.msra.mxu0 0.0
    %2542 = vmatprep.subr.mxu0 0.0
    %2543 = vmatpush2.msra.mxu0 0.0
    %2544 = vmatprep.mubr.f32.mxu0 0.0
    %2545 = vmatmul.mubr.f32.gmra.mxu0 %v2463
    %v2546 = vpop.f32.mrf.mxu0
    %v2547 = vadd.f32 0.0, %v2546
    %v2548 = vpop.f32.mrf.mxu0
    %2549 = vmatprep.mubr.f32.mxu0 0.0
    %2550 = vmatmul.mubr.f32.gmra.mxu0 %v2466
    %v2551 = vpop.f32.mrf.mxu0
    %v2552 = vadd.f32 0.0, %v2551
    %v2553 = vpop.f32.mrf.mxu0
    %2554 = vmatprep.mubr.f32.mxu0 0.0
    %2555 = vmatmul.mubr.f32.gmra.mxu0 %v2469
    %v2556 = vpop.f32.mrf.mxu0
    %v2557 = vadd.f32 0.0, %v2556
    %v2558 = vpop.f32.mrf.mxu0
    %2559 = vmatprep.mubr.f32.mxu0 0.0
    %2560 = vmatmul.mubr.f32.gmra.mxu0 %v2472
    %v2561 = vpop.f32.mrf.mxu0
    %v2562 = vadd.f32 0.0, %v2561
    %v2563 = vpop.f32.mrf.mxu0
    %2564 = vmatprep.mubr.f32.mxu0 0.0
    %2565 = vmatmul.mubr.f32.gmra.mxu0 %v2475
    %v2566 = vpop.f32.mrf.mxu0
    %v2567 = vadd.f32 0.0, %v2566
    %v2568 = vpop.f32.mrf.mxu0
    %2569 = vmatprep.mubr.f32.mxu0 0.0
    %2570 = vmatmul.mubr.f32.gmra.mxu0 %v2478
    %v2571 = vpop.f32.mrf.mxu0
    %v2572 = vadd.f32 0.0, %v2571
    %v2573 = vpop.f32.mrf.mxu0
    %2574 = vdwg.mxu0
    %v2575 = vlaneseq
    %v2576 = vshrl.u32 %v2575, 7
    %v2577 = vsub.s32 0, %v2576
    %v2578 = vrot.slane %v351, %v2577
    %v2579 = vadd.f32 %v2578, %v2547
    %v2580 = vadd.f32 %v2578, %v2552
    %v2581 = vadd.f32 %v2578, %v2557
    %v2582 = vadd.f32 %v2578, %v2562
    %v2583 = vadd.f32 %v2578, %v2567
    %v2584 = vadd.f32 %v2578, %v2572
    %v2585 = vld [vmem:[%s2 + $0x108] sm:$0xff]
    %v2586 = vld [vmem:[%s2 + $0x110] sm:$0xff]
    %v2587 = vld [vmem:[%s2 + $0x118] sm:$0xff]
    %v2588 = vld [vmem:[%s2 + $0x120] sm:$0xff]
    %v2589 = vld [vmem:[%s2 + $0x171] sm:$0x1]
    %v2590 = vlaneseq
    %v2591 = vshrl.u32 %v2590, 7
    %v2592 = vsub.s32 0, %v2591
    %v2593 = vrot.slane %v2589, %v2592
    %2594 = vmatprep.subr.mxu0 0.0
    %2595 = vmatpush1.msra.mxu0 0.0
    %2596 = vmatprep.subr.mxu0 0.0
    %2597 = vmatpush1.msra.mxu0 0.0
    %2598 = vmatprep.subr.mxu0 0.0
    %2599 = vmatpush1.msra.mxu0 0.0
    %2600 = vmatprep.subr.mxu0 0.0
    %2601 = vmatpush1.msra.mxu0 0.0
    %2602 = vmatprep.subr.mxu0 0.0
    %2603 = vmatpush1.msra.mxu0 0.0
    %2604 = vmatprep.subr.mxu0 0.0
    %2605 = vmatpush1.msra.mxu0 0.0
    %2606 = vmatprep.subr.mxu0 0.0
    %2607 = vmatpush1.msra.mxu0 0.0
    %2608 = vmatprep.subr.mxu0 0.0
    %2609 = vmatpush1.msra.mxu0 0.0
    %2610 = vmatprep.subr.mxu0 0.0
    %2611 = vmatpush1.msra.mxu0 0.0
    %2612 = vmatprep.subr.mxu0 0.0
    %2613 = vmatpush1.msra.mxu0 0.0
    %2614 = vmatprep.subr.mxu0 0.0
    %2615 = vmatpush1.msra.mxu0 0.0
    %2616 = vmatprep.subr.mxu0 0.0
    %2617 = vmatpush1.msra.mxu0 0.0
    %2618 = vmatprep.subr.mxu0 0.0
    %2619 = vmatpush1.msra.mxu0 %v2588
    %2620 = vmatprep.subr.mxu0 0.0
    %2621 = vmatpush1.msra.mxu0 %v2587
    %2622 = vmatprep.subr.mxu0 0.0
    %2623 = vmatpush1.msra.mxu0 %v2586
    %2624 = vmatprep.subr.mxu0 0.0
    %2625 = vmatpush1.msra.mxu0 %v2585
    %2626 = vmatprep.subr.mxu0 0.0
    %2627 = vmatpush2.msra.mxu0 0.0
    %2628 = vmatprep.subr.mxu0 0.0
    %2629 = vmatpush2.msra.mxu0 0.0
    %2630 = vmatprep.subr.mxu0 0.0
    %2631 = vmatpush2.msra.mxu0 0.0
    %2632 = vmatprep.subr.mxu0 0.0
    %2633 = vmatpush2.msra.mxu0 0.0
    %2634 = vmatprep.subr.mxu0 0.0
    %2635 = vmatpush2.msra.mxu0 0.0
    %2636 = vmatprep.subr.mxu0 0.0
    %2637 = vmatpush2.msra.mxu0 0.0
    %2638 = vmatprep.subr.mxu0 0.0
    %2639 = vmatpush2.msra.mxu0 0.0
    %2640 = vmatprep.subr.mxu0 0.0
    %2641 = vmatpush2.msra.mxu0 0.0
    %2642 = vmatprep.subr.mxu0 0.0
    %2643 = vmatpush2.msra.mxu0 0.0
    %2644 = vmatprep.subr.mxu0 0.0
    %2645 = vmatpush2.msra.mxu0 0.0
    %2646 = vmatprep.subr.mxu0 0.0
    %2647 = vmatpush2.msra.mxu0 0.0
    %2648 = vmatprep.subr.mxu0 0.0
    %2649 = vmatpush2.msra.mxu0 0.0
    %2650 = vmatprep.subr.mxu0 0.0
    %2651 = vmatpush2.msra.mxu0 0.0
    %2652 = vmatprep.subr.mxu0 0.0
    %2653 = vmatpush2.msra.mxu0 0.0
    %2654 = vmatprep.subr.mxu0 0.0
    %2655 = vmatpush2.msra.mxu0 0.0
    %2656 = vmatprep.subr.mxu0 0.0
    %2657 = vmatpush2.msra.mxu0 0.0
    %2658 = vmatprep.mubr.f32.mxu0 0.0
    %2659 = vmatmul.mubr.f32.gmra.mxu0 %v2292
    %v2660 = vpop.f32.mrf.mxu0
    %v2661 = vadd.f32 %v2593, %v2660
    %v2662 = vpop.f32.mrf.mxu0
    %2663 = vmatprep.mubr.f32.mxu0 0.0
    %2664 = vmatmul.mubr.f32.gmra.mxu0 %v2295
    %v2665 = vpop.f32.mrf.mxu0
    %v2666 = vadd.f32 %v2593, %v2665
    %v2667 = vpop.f32.mrf.mxu0
    %2668 = vmatprep.mubr.f32.mxu0 0.0
    %2669 = vmatmul.mubr.f32.gmra.mxu0 %v2298
    %v2670 = vpop.f32.mrf.mxu0
    %v2671 = vadd.f32 %v2593, %v2670
    %v2672 = vpop.f32.mrf.mxu0
    %2673 = vmatprep.mubr.f32.mxu0 0.0
    %2674 = vmatmul.mubr.f32.gmra.mxu0 %v2301
    %v2675 = vpop.f32.mrf.mxu0
    %v2676 = vadd.f32 %v2593, %v2675
    %v2677 = vpop.f32.mrf.mxu0
    %2678 = vmatprep.mubr.f32.mxu0 0.0
    %2679 = vmatmul.mubr.f32.gmra.mxu0 %v2304
    %v2680 = vpop.f32.mrf.mxu0
    %v2681 = vadd.f32 %v2593, %v2680
    %v2682 = vpop.f32.mrf.mxu0
    %2683 = vmatprep.mubr.f32.mxu0 0.0
    %2684 = vmatmul.mubr.f32.gmra.mxu0 %v2307
    %v2685 = vpop.f32.mrf.mxu0
    %v2686 = vadd.f32 %v2593, %v2685
    %v2687 = vpop.f32.mrf.mxu0
    %2688 = vdwg.mxu0
    %v2689 = vmul.f32 %v2661, %v2661
    %v2690 = vmul.f32 %v2666, %v2666
    %v2691 = vmul.f32 %v2671, %v2671
    %v2692 = vmul.f32 %v2676, %v2676
    %v2693 = vmul.f32 %v2681, %v2681
    %v2694 = vmul.f32 %v2686, %v2686
    %v2695 = vmul.f32 %v2661, %v2689
    %v2696 = vmul.f32 %v2666, %v2690
    %v2697 = vmul.f32 %v2671, %v2691
    %v2698 = vmul.f32 %v2676, %v2692
    %v2699 = vmul.f32 %v2681, %v2693
    %v2700 = vmul.f32 %v2686, %v2694
    %v2701 = vmul.f32 %v2695, 0.044715
    %v2702 = vmul.f32 %v2696, 0.044715
    %v2703 = vmul.f32 %v2697, 0.044715
    %v2704 = vmul.f32 %v2698, 0.044715
    %v2705 = vmul.f32 %v2699, 0.044715
    %v2706 = vmul.f32 %v2700, 0.044715
    %v2707 = vadd.f32 %v2661, %v2701
    %v2708 = vadd.f32 %v2666, %v2702
    %v2709 = vadd.f32 %v2671, %v2703
    %v2710 = vadd.f32 %v2676, %v2704
    %v2711 = vadd.f32 %v2681, %v2705
    %v2712 = vadd.f32 %v2686, %v2706
    %v2713 = vmul.f32 %v2707, 0.7978846
    %v2714 = vmul.f32 %v2708, 0.7978846
    %v2715 = vmul.f32 %v2709, 0.7978846
    %v2716 = vmul.f32 %v2710, 0.7978846
    %v2717 = vmul.f32 %v2711, 0.7978846
    %v2718 = vmul.f32 %v2712, 0.7978846
    %v2719 = vtanh.pop %v2713
    %v2720 = vtanh.pop %v2714
    %v2721 = vtanh.pop %v2715
    %v2722 = vtanh.pop %v2716
    %v2723 = vtanh.pop %v2717
    %v2724 = vtanh.pop %v2718
    %v2725 = vadd.f32 %v2719, 1.0
    %v2726 = vadd.f32 %v2720, 1.0
    %v2727 = vadd.f32 %v2721, 1.0
    %v2728 = vadd.f32 %v2722, 1.0
    %v2729 = vadd.f32 %v2723, 1.0
    %v2730 = vadd.f32 %v2724, 1.0
    %v2731 = vmul.f32 %v2725, 0.5
    %v2732 = vmul.f32 %v2726, 0.5
    %v2733 = vmul.f32 %v2727, 0.5
    %v2734 = vmul.f32 %v2728, 0.5
    %v2735 = vmul.f32 %v2729, 0.5
    %v2736 = vmul.f32 %v2730, 0.5
    %v2737 = vmul.f32 %v2661, %v2731
    %v2738 = vmul.f32 %v2666, %v2732
    %v2739 = vmul.f32 %v2671, %v2733
    %v2740 = vmul.f32 %v2676, %v2734
    %v2741 = vmul.f32 %v2681, %v2735
    %v2742 = vmul.f32 %v2686, %v2736
    %v2743 = vld [vmem:[%s2 + $0x148] sm:$0xff]
    %v2744 = vld [vmem:[%s2 + $0x150] sm:$0xff]
    %v2745 = vld [vmem:[%s2 + $0x158] sm:$0xff]
    %v2746 = vld [vmem:[%s2 + $0x160] sm:$0xff]
    %v2748 = vsel %vm132, %v2737, 0
    %v2751 = vsel %vm132, %v2738, 0
    %v2754 = vsel %vm132, %v2739, 0
    %v2757 = vsel %vm132, %v2740, 0
    %v2760 = vsel %vm132, %v2741, 0
    %v2763 = vsel %vm132, %v2742, 0
    %2765 = vmatprep.subr.mxu0 0.0
    %2766 = vmatpush1.msra.mxu0 0.0
    %2767 = vmatprep.subr.mxu0 0.0
    %2768 = vmatpush1.msra.mxu0 0.0
    %2769 = vmatprep.subr.mxu0 0.0
    %2770 = vmatpush1.msra.mxu0 0.0
    %2771 = vmatprep.subr.mxu0 0.0
    %2772 = vmatpush1.msra.mxu0 0.0
    %2773 = vmatprep.subr.mxu0 0.0
    %2774 = vmatpush1.msra.mxu0 0.0
    %2775 = vmatprep.subr.mxu0 0.0
    %2776 = vmatpush1.msra.mxu0 0.0
    %2777 = vmatprep.subr.mxu0 0.0
    %2778 = vmatpush1.msra.mxu0 0.0
    %2779 = vmatprep.subr.mxu0 0.0
    %2780 = vmatpush1.msra.mxu0 0.0
    %2781 = vmatprep.subr.mxu0 0.0
    %2782 = vmatpush1.msra.mxu0 0.0
    %2783 = vmatprep.subr.mxu0 0.0
    %2784 = vmatpush1.msra.mxu0 0.0
    %2785 = vmatprep.subr.mxu0 0.0
    %2786 = vmatpush1.msra.mxu0 0.0
    %2787 = vmatprep.subr.mxu0 0.0
    %2788 = vmatpush1.msra.mxu0 0.0
    %2789 = vmatprep.subr.mxu0 0.0
    %2790 = vmatpush1.msra.mxu0 %v2746
    %2791 = vmatprep.subr.mxu0 0.0
    %2792 = vmatpush1.msra.mxu0 %v2745
    %2793 = vmatprep.subr.mxu0 0.0
    %2794 = vmatpush1.msra.mxu0 %v2744
    %2795 = vmatprep.subr.mxu0 0.0
    %2796 = vmatpush1.msra.mxu0 %v2743
    %2797 = vmatprep.subr.mxu0 0.0
    %2798 = vmatpush2.msra.mxu0 0.0
    %2799 = vmatprep.subr.mxu0 0.0
    %2800 = vmatpush2.msra.mxu0 0.0
    %2801 = vmatprep.subr.mxu0 0.0
    %2802 = vmatpush2.msra.mxu0 0.0
    %2803 = vmatprep.subr.mxu0 0.0
    %2804 = vmatpush2.msra.mxu0 0.0
    %2805 = vmatprep.subr.mxu0 0.0
    %2806 = vmatpush2.msra.mxu0 0.0
    %2807 = vmatprep.subr.mxu0 0.0
    %2808 = vmatpush2.msra.mxu0 0.0
    %2809 = vmatprep.subr.mxu0 0.0
    %2810 = vmatpush2.msra.mxu0 0.0
    %2811 = vmatprep.subr.mxu0 0.0
    %2812 = vmatpush2.msra.mxu0 0.0
    %2813 = vmatprep.subr.mxu0 0.0
    %2814 = vmatpush2.msra.mxu0 0.0
    %2815 = vmatprep.subr.mxu0 0.0
    %2816 = vmatpush2.msra.mxu0 0.0
    %2817 = vmatprep.subr.mxu0 0.0
    %2818 = vmatpush2.msra.mxu0 0.0
    %2819 = vmatprep.subr.mxu0 0.0
    %2820 = vmatpush2.msra.mxu0 0.0
    %2821 = vmatprep.subr.mxu0 0.0
    %2822 = vmatpush2.msra.mxu0 0.0
    %2823 = vmatprep.subr.mxu0 0.0
    %2824 = vmatpush2.msra.mxu0 0.0
    %2825 = vmatprep.subr.mxu0 0.0
    %2826 = vmatpush2.msra.mxu0 0.0
    %2827 = vmatprep.subr.mxu0 0.0
    %2828 = vmatpush2.msra.mxu0 0.0
    %2829 = vmatprep.mubr.f32.mxu0 0.0
    %2830 = vmatmul.mubr.f32.gmra.mxu0 %v2748
    %v2831 = vpop.f32.mrf.mxu0
    %v2832 = vadd.f32 0.0, %v2831
    %v2833 = vpop.f32.mrf.mxu0
    %2834 = vmatprep.mubr.f32.mxu0 0.0
    %2835 = vmatmul.mubr.f32.gmra.mxu0 %v2751
    %v2836 = vpop.f32.mrf.mxu0
    %v2837 = vadd.f32 0.0, %v2836
    %v2838 = vpop.f32.mrf.mxu0
    %2839 = vmatprep.mubr.f32.mxu0 0.0
    %2840 = vmatmul.mubr.f32.gmra.mxu0 %v2754
    %v2841 = vpop.f32.mrf.mxu0
    %v2842 = vadd.f32 0.0, %v2841
    %v2843 = vpop.f32.mrf.mxu0
    %2844 = vmatprep.mubr.f32.mxu0 0.0
    %2845 = vmatmul.mubr.f32.gmra.mxu0 %v2757
    %v2846 = vpop.f32.mrf.mxu0
    %v2847 = vadd.f32 0.0, %v2846
    %v2848 = vpop.f32.mrf.mxu0
    %2849 = vmatprep.mubr.f32.mxu0 0.0
    %2850 = vmatmul.mubr.f32.gmra.mxu0 %v2760
    %v2851 = vpop.f32.mrf.mxu0
    %v2852 = vadd.f32 0.0, %v2851
    %v2853 = vpop.f32.mrf.mxu0
    %2854 = vmatprep.mubr.f32.mxu0 0.0
    %2855 = vmatmul.mubr.f32.gmra.mxu0 %v2763
    %v2856 = vpop.f32.mrf.mxu0
    %v2857 = vadd.f32 0.0, %v2856
    %v2858 = vpop.f32.mrf.mxu0
    %2859 = vdwg.mxu0
    %v2860 = vadd.f32 %v2579, %v2832
    %v2861 = vadd.f32 %v2580, %v2837
    %v2862 = vadd.f32 %v2581, %v2842
    %v2863 = vadd.f32 %v2582, %v2847
    %v2864 = vadd.f32 %v2583, %v2852
    %v2865 = vadd.f32 %v2584, %v2857
    %v2866 = vadd.f32 %v2178, %v2860
    %v2867 = vadd.f32 %v2179, %v2861
    %v2868 = vadd.f32 %v2180, %v2862
    %v2869 = vadd.f32 %v2181, %v2863
    %v2870 = vadd.f32 %v2182, %v2864
    %v2871 = vadd.f32 %v2183, %v2865
    %v2872 = vld [vmem:[%s2 + $0x278] sm:$0x1]
    %v2873 = vld [vmem:[%s2 + $0x279] sm:$0x1]
    %v2874 = vld [vmem:[%s2 + $0x27a] sm:$0x1]
    %v2875 = vld [vmem:[%s2 + $0x27b] sm:$0x1]
    %v2876 = vld [vmem:[%s2 + $0x27c] sm:$0x1]
    %v2877 = vld [vmem:[%s2 + $0x27d] sm:$0x1]
    %v2878 = vld [vmem:[%s2 + $0x27e] sm:$0x1]
    %v2879 = vld [vmem:[%s2 + $0x27f] sm:$0x1]
    %v2880 = vld [vmem:[%s2 + $0x282] sm:$0x1]
    %v2881 = vsel %vm132, %v2866, 0.0
    %2882 = vadd.xlane.f32.xlu0 %v2881
    %v2883 = vpop.xlane.xlu0 %2882
    %v2884 = vsel %vm132, %v2867, 0.0
    %2885 = vadd.xlane.f32.xlu0 %v2884
    %v2886 = vpop.xlane.xlu0 %2885
    %v2887 = vsel %vm132, %v2868, 0.0
    %2888 = vadd.xlane.f32.xlu0 %v2887
    %v2889 = vpop.xlane.xlu0 %2888
    %v2890 = vsel %vm132, %v2869, 0.0
    %2891 = vadd.xlane.f32.xlu0 %v2890
    %v2892 = vpop.xlane.xlu0 %2891
    %v2893 = vsel %vm132, %v2870, 0.0
    %2894 = vadd.xlane.f32.xlu0 %v2893
    %v2895 = vpop.xlane.xlu0 %2894
    %v2896 = vsel %vm132, %v2871, 0.0
    %2897 = vadd.xlane.f32.xlu0 %v2896
    %v2898 = vpop.xlane.xlu0 %2897
    %v2899 = vmul.f32 %v2883, %v370
    %v2900 = vmul.f32 %v2886, %v370
    %v2901 = vmul.f32 %v2889, %v370
    %v2902 = vmul.f32 %v2892, %v370
    %v2903 = vmul.f32 %v2895, %v370
    %v2904 = vmul.f32 %v2898, %v370
    %v2905 = vsub.f32 %v2866, %v2899
    %v2906 = vsub.f32 %v2867, %v2900
    %v2907 = vsub.f32 %v2868, %v2901
    %v2908 = vsub.f32 %v2869, %v2902
    %v2909 = vsub.f32 %v2870, %v2903
    %v2910 = vsub.f32 %v2871, %v2904
    %v2911 = vmul.f32 %v2905, %v2905
    %v2912 = vmul.f32 %v2906, %v2906
    %v2913 = vmul.f32 %v2907, %v2907
    %v2914 = vmul.f32 %v2908, %v2908
    %v2915 = vmul.f32 %v2909, %v2909
    %v2916 = vmul.f32 %v2910, %v2910
    %v2917 = vsel %vm132, %v2911, 0.0
    %2918 = vadd.xlane.f32.xlu0 %v2917
    %v2919 = vpop.xlane.xlu0 %2918
    %v2920 = vsel %vm132, %v2912, 0.0
    %2921 = vadd.xlane.f32.xlu0 %v2920
    %v2922 = vpop.xlane.xlu0 %2921
    %v2923 = vsel %vm132, %v2913, 0.0
    %2924 = vadd.xlane.f32.xlu0 %v2923
    %v2925 = vpop.xlane.xlu0 %2924
    %v2926 = vsel %vm132, %v2914, 0.0
    %2927 = vadd.xlane.f32.xlu0 %v2926
    %v2928 = vpop.xlane.xlu0 %2927
    %v2929 = vsel %vm132, %v2915, 0.0
    %2930 = vadd.xlane.f32.xlu0 %v2929
    %v2931 = vpop.xlane.xlu0 %2930
    %v2932 = vsel %vm132, %v2916, 0.0
    %2933 = vadd.xlane.f32.xlu0 %v2932
    %v2934 = vpop.xlane.xlu0 %2933
    %v2935 = vmul.f32 %v2919, %v370
    %v2936 = vmul.f32 %v2922, %v370
    %v2937 = vmul.f32 %v2925, %v370
    %v2938 = vmul.f32 %v2928, %v370
    %v2939 = vmul.f32 %v2931, %v370
    %v2940 = vmul.f32 %v2934, %v370
    %v2941 = vadd.f32 %v2935, 1e-06
    %v2942 = vadd.f32 %v2936, 1e-06
    %v2943 = vadd.f32 %v2937, 1e-06
    %v2944 = vadd.f32 %v2938, 1e-06
    %v2945 = vadd.f32 %v2939, 1e-06
    %v2946 = vadd.f32 %v2940, 1e-06
    %v2947 = vrsqrt.pop %v2941
    %v2948 = vrsqrt.pop %v2942
    %v2949 = vrsqrt.pop %v2943
    %v2950 = vrsqrt.pop %v2944
    %v2951 = vrsqrt.pop %v2945
    %v2952 = vrsqrt.pop %v2946
    %v2953 = vmul.f32 %v2905, %v2947
    %v2954 = vmul.f32 %v2906, %v2948
    %v2955 = vmul.f32 %v2907, %v2949
    %v2956 = vmul.f32 %v2908, %v2950
    %v2957 = vmul.f32 %v2909, %v2951
    %v2958 = vmul.f32 %v2910, %v2952
    %v2959 = vlaneseq
    %v2960 = vshrl.u32 %v2959, 7
    %v2961 = vsub.s32 0, %v2960
    %v2962 = vrot.slane %v2872, %v2961
    %v2963 = vmul.f32 %v2953, %v2962
    %v2964 = vmul.f32 %v2954, %v2962
    %v2965 = vmul.f32 %v2955, %v2962
    %v2966 = vmul.f32 %v2956, %v2962
    %v2967 = vmul.f32 %v2957, %v2962
    %v2968 = vmul.f32 %v2958, %v2962
    %v2969 = vlaneseq
    %v2970 = vshrl.u32 %v2969, 7
    %v2971 = vsub.s32 0, %v2970
    %v2972 = vrot.slane %v2873, %v2971
    %v2973 = vadd.f32 %v2963, %v2972
    %v2974 = vadd.f32 %v2964, %v2972
    %v2975 = vadd.f32 %v2965, %v2972
    %v2976 = vadd.f32 %v2966, %v2972
    %v2977 = vadd.f32 %v2967, %v2972
    %v2978 = vadd.f32 %v2968, %v2972
    %v2979 = vld [vmem:[%s2 + $0x178] sm:$0xff]
    %v2980 = vld [vmem:[%s2 + $0x180] sm:$0xff]
    %v2981 = vld [vmem:[%s2 + $0x188] sm:$0xff]
    %v2982 = vld [vmem:[%s2 + $0x190] sm:$0xff]
    %v2983 = vlaneseq
    %v2984 = vshrl.u32 %v2983, 7
    %v2985 = vsub.s32 0, %v2984
    %v2986 = vrot.slane %v2874, %v2985
    %v2988 = vsel %vm132, %v2973, 0
    %v2991 = vsel %vm132, %v2974, 0
    %v2994 = vsel %vm132, %v2975, 0
    %v2997 = vsel %vm132, %v2976, 0
    %v3000 = vsel %vm132, %v2977, 0
    %v3003 = vsel %vm132, %v2978, 0
    %3005 = vmatprep.subr.mxu0 0.0
    %3006 = vmatpush1.msra.mxu0 0.0
    %3007 = vmatprep.subr.mxu0 0.0
    %3008 = vmatpush1.msra.mxu0 0.0
    %3009 = vmatprep.subr.mxu0 0.0
    %3010 = vmatpush1.msra.mxu0 0.0
    %3011 = vmatprep.subr.mxu0 0.0
    %3012 = vmatpush1.msra.mxu0 0.0
    %3013 = vmatprep.subr.mxu0 0.0
    %3014 = vmatpush1.msra.mxu0 0.0
    %3015 = vmatprep.subr.mxu0 0.0
    %3016 = vmatpush1.msra.mxu0 0.0
    %3017 = vmatprep.subr.mxu0 0.0
    %3018 = vmatpush1.msra.mxu0 0.0
    %3019 = vmatprep.subr.mxu0 0.0
    %3020 = vmatpush1.msra.mxu0 0.0
    %3021 = vmatprep.subr.mxu0 0.0
    %3022 = vmatpush1.msra.mxu0 0.0
    %3023 = vmatprep.subr.mxu0 0.0
    %3024 = vmatpush1.msra.mxu0 0.0
    %3025 = vmatprep.subr.mxu0 0.0
    %3026 = vmatpush1.msra.mxu0 0.0
    %3027 = vmatprep.subr.mxu0 0.0
    %3028 = vmatpush1.msra.mxu0 0.0
    %3029 = vmatprep.subr.mxu0 0.0
    %3030 = vmatpush1.msra.mxu0 %v2982
    %3031 = vmatprep.subr.mxu0 0.0
    %3032 = vmatpush1.msra.mxu0 %v2981
    %3033 = vmatprep.subr.mxu0 0.0
    %3034 = vmatpush1.msra.mxu0 %v2980
    %3035 = vmatprep.subr.mxu0 0.0
    %3036 = vmatpush1.msra.mxu0 %v2979
    %3037 = vmatprep.subr.mxu0 0.0
    %3038 = vmatpush2.msra.mxu0 0.0
    %3039 = vmatprep.subr.mxu0 0.0
    %3040 = vmatpush2.msra.mxu0 0.0
    %3041 = vmatprep.subr.mxu0 0.0
    %3042 = vmatpush2.msra.mxu0 0.0
    %3043 = vmatprep.subr.mxu0 0.0
    %3044 = vmatpush2.msra.mxu0 0.0
    %3045 = vmatprep.subr.mxu0 0.0
    %3046 = vmatpush2.msra.mxu0 0.0
    %3047 = vmatprep.subr.mxu0 0.0
    %3048 = vmatpush2.msra.mxu0 0.0
    %3049 = vmatprep.subr.mxu0 0.0
    %3050 = vmatpush2.msra.mxu0 0.0
    %3051 = vmatprep.subr.mxu0 0.0
    %3052 = vmatpush2.msra.mxu0 0.0
    %3053 = vmatprep.subr.mxu0 0.0
    %3054 = vmatpush2.msra.mxu0 0.0
    %3055 = vmatprep.subr.mxu0 0.0
    %3056 = vmatpush2.msra.mxu0 0.0
    %3057 = vmatprep.subr.mxu0 0.0
    %3058 = vmatpush2.msra.mxu0 0.0
    %3059 = vmatprep.subr.mxu0 0.0
    %3060 = vmatpush2.msra.mxu0 0.0
    %3061 = vmatprep.subr.mxu0 0.0
    %3062 = vmatpush2.msra.mxu0 0.0
    %3063 = vmatprep.subr.mxu0 0.0
    %3064 = vmatpush2.msra.mxu0 0.0
    %3065 = vmatprep.subr.mxu0 0.0
    %3066 = vmatpush2.msra.mxu0 0.0
    %3067 = vmatprep.subr.mxu0 0.0
    %3068 = vmatpush2.msra.mxu0 0.0
    %3069 = vmatprep.mubr.f32.mxu0 0.0
    %3070 = vmatmul.mubr.f32.gmra.mxu0 %v2988
    %v3071 = vpop.f32.mrf.mxu0
    %v3072 = vadd.f32 %v2986, %v3071
    %v3073 = vpop.f32.mrf.mxu0
    %3074 = vmatprep.mubr.f32.mxu0 0.0
    %3075 = vmatmul.mubr.f32.gmra.mxu0 %v2991
    %v3076 = vpop.f32.mrf.mxu0
    %v3077 = vadd.f32 %v2986, %v3076
    %v3078 = vpop.f32.mrf.mxu0
    %3079 = vmatprep.mubr.f32.mxu0 0.0
    %3080 = vmatmul.mubr.f32.gmra.mxu0 %v2994
    %v3081 = vpop.f32.mrf.mxu0
    %v3082 = vadd.f32 %v2986, %v3081
    %v3083 = vpop.f32.mrf.mxu0
    %3084 = vmatprep.mubr.f32.mxu0 0.0
    %3085 = vmatmul.mubr.f32.gmra.mxu0 %v2997
    %v3086 = vpop.f32.mrf.mxu0
    %v3087 = vadd.f32 %v2986, %v3086
    %v3088 = vpop.f32.mrf.mxu0
    %3089 = vmatprep.mubr.f32.mxu0 0.0
    %3090 = vmatmul.mubr.f32.gmra.mxu0 %v3000
    %v3091 = vpop.f32.mrf.mxu0
    %v3092 = vadd.f32 %v2986, %v3091
    %v3093 = vpop.f32.mrf.mxu0
    %3094 = vmatprep.mubr.f32.mxu0 0.0
    %3095 = vmatmul.mubr.f32.gmra.mxu0 %v3003
    %v3096 = vpop.f32.mrf.mxu0
    %v3097 = vadd.f32 %v2986, %v3096
    %v3098 = vpop.f32.mrf.mxu0
    %3099 = vdwg.mxu0
    %v3100 = vld [vmem:[%s2 + $0x198] sm:$0xff]
    %v3101 = vld [vmem:[%s2 + $0x1a0] sm:$0xff]
    %v3102 = vld [vmem:[%s2 + $0x1a8] sm:$0xff]
    %v3103 = vld [vmem:[%s2 + $0x1b0] sm:$0xff]
    %v3104 = vlaneseq
    %v3105 = vshrl.u32 %v3104, 7
    %v3106 = vsub.s32 0, %v3105
    %v3107 = vrot.slane %v2875, %v3106
    %3108 = vmatprep.subr.mxu0 0.0
    %3109 = vmatpush1.msra.mxu0 0.0
    %3110 = vmatprep.subr.mxu0 0.0
    %3111 = vmatpush1.msra.mxu0 0.0
    %3112 = vmatprep.subr.mxu0 0.0
    %3113 = vmatpush1.msra.mxu0 0.0
    %3114 = vmatprep.subr.mxu0 0.0
    %3115 = vmatpush1.msra.mxu0 0.0
    %3116 = vmatprep.subr.mxu0 0.0
    %3117 = vmatpush1.msra.mxu0 0.0
    %3118 = vmatprep.subr.mxu0 0.0
    %3119 = vmatpush1.msra.mxu0 0.0
    %3120 = vmatprep.subr.mxu0 0.0
    %3121 = vmatpush1.msra.mxu0 0.0
    %3122 = vmatprep.subr.mxu0 0.0
    %3123 = vmatpush1.msra.mxu0 0.0
    %3124 = vmatprep.subr.mxu0 0.0
    %3125 = vmatpush1.msra.mxu0 0.0
    %3126 = vmatprep.subr.mxu0 0.0
    %3127 = vmatpush1.msra.mxu0 0.0
    %3128 = vmatprep.subr.mxu0 0.0
    %3129 = vmatpush1.msra.mxu0 0.0
    %3130 = vmatprep.subr.mxu0 0.0
    %3131 = vmatpush1.msra.mxu0 0.0
    %3132 = vmatprep.subr.mxu0 0.0
    %3133 = vmatpush1.msra.mxu0 %v3103
    %3134 = vmatprep.subr.mxu0 0.0
    %3135 = vmatpush1.msra.mxu0 %v3102
    %3136 = vmatprep.subr.mxu0 0.0
    %3137 = vmatpush1.msra.mxu0 %v3101
    %3138 = vmatprep.subr.mxu0 0.0
    %3139 = vmatpush1.msra.mxu0 %v3100
    %3140 = vmatprep.subr.mxu0 0.0
    %3141 = vmatpush2.msra.mxu0 0.0
    %3142 = vmatprep.subr.mxu0 0.0
    %3143 = vmatpush2.msra.mxu0 0.0
    %3144 = vmatprep.subr.mxu0 0.0
    %3145 = vmatpush2.msra.mxu0 0.0
    %3146 = vmatprep.subr.mxu0 0.0
    %3147 = vmatpush2.msra.mxu0 0.0
    %3148 = vmatprep.subr.mxu0 0.0
    %3149 = vmatpush2.msra.mxu0 0.0
    %3150 = vmatprep.subr.mxu0 0.0
    %3151 = vmatpush2.msra.mxu0 0.0
    %3152 = vmatprep.subr.mxu0 0.0
    %3153 = vmatpush2.msra.mxu0 0.0
    %3154 = vmatprep.subr.mxu0 0.0
    %3155 = vmatpush2.msra.mxu0 0.0
    %3156 = vmatprep.subr.mxu0 0.0
    %3157 = vmatpush2.msra.mxu0 0.0
    %3158 = vmatprep.subr.mxu0 0.0
    %3159 = vmatpush2.msra.mxu0 0.0
    %3160 = vmatprep.subr.mxu0 0.0
    %3161 = vmatpush2.msra.mxu0 0.0
    %3162 = vmatprep.subr.mxu0 0.0
    %3163 = vmatpush2.msra.mxu0 0.0
    %3164 = vmatprep.subr.mxu0 0.0
    %3165 = vmatpush2.msra.mxu0 0.0
    %3166 = vmatprep.subr.mxu0 0.0
    %3167 = vmatpush2.msra.mxu0 0.0
    %3168 = vmatprep.subr.mxu0 0.0
    %3169 = vmatpush2.msra.mxu0 0.0
    %3170 = vmatprep.subr.mxu0 0.0
    %3171 = vmatpush2.msra.mxu0 0.0
    %3172 = vmatprep.mubr.f32.mxu0 0.0
    %3173 = vmatmul.mubr.f32.gmra.mxu0 %v2988
    %v3174 = vpop.f32.mrf.mxu0
    %v3175 = vadd.f32 %v3107, %v3174
    %v3176 = vpop.f32.mrf.mxu0
    %3177 = vmatprep.mubr.f32.mxu0 0.0
    %3178 = vmatmul.mubr.f32.gmra.mxu0 %v2991
    %v3179 = vpop.f32.mrf.mxu0
    %v3180 = vadd.f32 %v3107, %v3179
    %v3181 = vpop.f32.mrf.mxu0
    %3182 = vmatprep.mubr.f32.mxu0 0.0
    %3183 = vmatmul.mubr.f32.gmra.mxu0 %v2994
    %v3184 = vpop.f32.mrf.mxu0
    %v3185 = vadd.f32 %v3107, %v3184
    %v3186 = vpop.f32.mrf.mxu0
    %3187 = vmatprep.mubr.f32.mxu0 0.0
    %3188 = vmatmul.mubr.f32.gmra.mxu0 %v2997
    %v3189 = vpop.f32.mrf.mxu0
    %v3190 = vadd.f32 %v3107, %v3189
    %v3191 = vpop.f32.mrf.mxu0
    %3192 = vmatprep.mubr.f32.mxu0 0.0
    %3193 = vmatmul.mubr.f32.gmra.mxu0 %v3000
    %v3194 = vpop.f32.mrf.mxu0
    %v3195 = vadd.f32 %v3107, %v3194
    %v3196 = vpop.f32.mrf.mxu0
    %3197 = vmatprep.mubr.f32.mxu0 0.0
    %3198 = vmatmul.mubr.f32.gmra.mxu0 %v3003
    %v3199 = vpop.f32.mrf.mxu0
    %v3200 = vadd.f32 %v3107, %v3199
    %v3201 = vpop.f32.mrf.mxu0
    %3202 = vdwg.mxu0
    %v3203 = vld [vmem:[%s2 + $0x1b8] sm:$0xff]
    %v3204 = vld [vmem:[%s2 + $0x1c0] sm:$0xff]
    %v3205 = vld [vmem:[%s2 + $0x1c8] sm:$0xff]
    %v3206 = vld [vmem:[%s2 + $0x1d0] sm:$0xff]
    %v3207 = vlaneseq
    %v3208 = vshrl.u32 %v3207, 7
    %v3209 = vsub.s32 0, %v3208
    %v3210 = vrot.slane %v2876, %v3209
    %3211 = vmatprep.subr.mxu0 0.0
    %3212 = vmatpush1.msra.mxu0 0.0
    %3213 = vmatprep.subr.mxu0 0.0
    %3214 = vmatpush1.msra.mxu0 0.0
    %3215 = vmatprep.subr.mxu0 0.0
    %3216 = vmatpush1.msra.mxu0 0.0
    %3217 = vmatprep.subr.mxu0 0.0
    %3218 = vmatpush1.msra.mxu0 0.0
    %3219 = vmatprep.subr.mxu0 0.0
    %3220 = vmatpush1.msra.mxu0 0.0
    %3221 = vmatprep.subr.mxu0 0.0
    %3222 = vmatpush1.msra.mxu0 0.0
    %3223 = vmatprep.subr.mxu0 0.0
    %3224 = vmatpush1.msra.mxu0 0.0
    %3225 = vmatprep.subr.mxu0 0.0
    %3226 = vmatpush1.msra.mxu0 0.0
    %3227 = vmatprep.subr.mxu0 0.0
    %3228 = vmatpush1.msra.mxu0 0.0
    %3229 = vmatprep.subr.mxu0 0.0
    %3230 = vmatpush1.msra.mxu0 0.0
    %3231 = vmatprep.subr.mxu0 0.0
    %3232 = vmatpush1.msra.mxu0 0.0
    %3233 = vmatprep.subr.mxu0 0.0
    %3234 = vmatpush1.msra.mxu0 0.0
    %3235 = vmatprep.subr.mxu0 0.0
    %3236 = vmatpush1.msra.mxu0 %v3206
    %3237 = vmatprep.subr.mxu0 0.0
    %3238 = vmatpush1.msra.mxu0 %v3205
    %3239 = vmatprep.subr.mxu0 0.0
    %3240 = vmatpush1.msra.mxu0 %v3204
    %3241 = vmatprep.subr.mxu0 0.0
    %3242 = vmatpush1.msra.mxu0 %v3203
    %3243 = vmatprep.subr.mxu0 0.0
    %3244 = vmatpush2.msra.mxu0 0.0
    %3245 = vmatprep.subr.mxu0 0.0
    %3246 = vmatpush2.msra.mxu0 0.0
    %3247 = vmatprep.subr.mxu0 0.0
    %3248 = vmatpush2.msra.mxu0 0.0
    %3249 = vmatprep.subr.mxu0 0.0
    %3250 = vmatpush2.msra.mxu0 0.0
    %3251 = vmatprep.subr.mxu0 0.0
    %3252 = vmatpush2.msra.mxu0 0.0
    %3253 = vmatprep.subr.mxu0 0.0
    %3254 = vmatpush2.msra.mxu0 0.0
    %3255 = vmatprep.subr.mxu0 0.0
    %3256 = vmatpush2.msra.mxu0 0.0
    %3257 = vmatprep.subr.mxu0 0.0
    %3258 = vmatpush2.msra.mxu0 0.0
    %3259 = vmatprep.subr.mxu0 0.0
    %3260 = vmatpush2.msra.mxu0 0.0
    %3261 = vmatprep.subr.mxu0 0.0
    %3262 = vmatpush2.msra.mxu0 0.0
    %3263 = vmatprep.subr.mxu0 0.0
    %3264 = vmatpush2.msra.mxu0 0.0
    %3265 = vmatprep.subr.mxu0 0.0
    %3266 = vmatpush2.msra.mxu0 0.0
    %3267 = vmatprep.subr.mxu0 0.0
    %3268 = vmatpush2.msra.mxu0 0.0
    %3269 = vmatprep.subr.mxu0 0.0
    %3270 = vmatpush2.msra.mxu0 0.0
    %3271 = vmatprep.subr.mxu0 0.0
    %3272 = vmatpush2.msra.mxu0 0.0
    %3273 = vmatprep.subr.mxu0 0.0
    %3274 = vmatpush2.msra.mxu0 0.0
    %3275 = vmatprep.mubr.f32.mxu0 0.0
    %3276 = vmatmul.mubr.f32.gmra.mxu0 %v2988
    %v3277 = vpop.f32.mrf.mxu0
    %v3278 = vadd.f32 %v3210, %v3277
    %v3279 = vpop.f32.mrf.mxu0
    %3280 = vmatprep.mubr.f32.mxu0 0.0
    %3281 = vmatmul.mubr.f32.gmra.mxu0 %v2991
    %v3282 = vpop.f32.mrf.mxu0
    %v3283 = vadd.f32 %v3210, %v3282
    %v3284 = vpop.f32.mrf.mxu0
    %3285 = vmatprep.mubr.f32.mxu0 0.0
    %3286 = vmatmul.mubr.f32.gmra.mxu0 %v2994
    %v3287 = vpop.f32.mrf.mxu0
    %v3288 = vadd.f32 %v3210, %v3287
    %v3289 = vpop.f32.mrf.mxu0
    %3290 = vmatprep.mubr.f32.mxu0 0.0
    %3291 = vmatmul.mubr.f32.gmra.mxu0 %v2997
    %v3292 = vpop.f32.mrf.mxu0
    %v3293 = vadd.f32 %v3210, %v3292
    %v3294 = vpop.f32.mrf.mxu0
    %3295 = vmatprep.mubr.f32.mxu0 0.0
    %3296 = vmatmul.mubr.f32.gmra.mxu0 %v3000
    %v3297 = vpop.f32.mrf.mxu0
    %v3298 = vadd.f32 %v3210, %v3297
    %v3299 = vpop.f32.mrf.mxu0
    %3300 = vmatprep.mubr.f32.mxu0 0.0
    %3301 = vmatmul.mubr.f32.gmra.mxu0 %v3003
    %v3302 = vpop.f32.mrf.mxu0
    %v3303 = vadd.f32 %v3210, %v3302
    %v3304 = vpop.f32.mrf.mxu0
    %3305 = vdwg.mxu0
    %v3306 = vmul.f32 %v3072, %v331
    %v3307 = vmul.f32 %v3077, %v331
    %v3308 = vmul.f32 %v3082, %v331
    %v3309 = vmul.f32 %v3087, %v331
    %v3310 = vmul.f32 %v3092, %v331
    %v3311 = vmul.f32 %v3097, %v331
    %v3313 = vsel %vm132, %v3306, 0
    %v3316 = vsel %vm132, %v3307, 0
    %v3319 = vsel %vm132, %v3308, 0
    %v3322 = vsel %vm132, %v3309, 0
    %v3325 = vsel %vm132, %v3310, 0
    %v3328 = vsel %vm132, %v3311, 0
    %v3331 = vsel %vm132, %v3175, 0
    %v3334 = vsel %vm132, %v3180, 0
    %v3337 = vsel %vm132, %v3185, 0
    %v3340 = vsel %vm132, %v3190, 0
    %v3343 = vsel %vm132, %v3195, 0
    %v3346 = vsel %vm132, %v3200, 0
    %3348 = vmatprep.subr.mxu0 0.0
    %3349 = vmatpush1.xpose.msra.mxu0 0.0
    %3350 = vmatprep.subr.mxu0 0.0
    %3351 = vmatpush1.xpose.msra.mxu0 0.0
    %3352 = vmatprep.subr.mxu0 0.0
    %3353 = vmatpush1.xpose.msra.mxu0 0.0
    %3354 = vmatprep.subr.mxu0 0.0
    %3355 = vmatpush1.xpose.msra.mxu0 0.0
    %3356 = vmatprep.subr.mxu0 0.0
    %3357 = vmatpush1.xpose.msra.mxu0 0.0
    %3358 = vmatprep.subr.mxu0 0.0
    %3359 = vmatpush1.xpose.msra.mxu0 0.0
    %3360 = vmatprep.subr.mxu0 0.0
    %3361 = vmatpush1.xpose.msra.mxu0 0.0
    %3362 = vmatprep.subr.mxu0 0.0
    %3363 = vmatpush1.xpose.msra.mxu0 0.0
    %3364 = vmatprep.subr.mxu0 0.0
    %3365 = vmatpush1.xpose.msra.mxu0 0.0
    %3366 = vmatprep.subr.mxu0 0.0
    %3367 = vmatpush1.xpose.msra.mxu0 0.0
    %3368 = vmatprep.subr.mxu0 0.0
    %3369 = vmatpush1.xpose.msra.mxu0 %v3346
    %3370 = vmatprep.subr.mxu0 0.0
    %3371 = vmatpush1.xpose.msra.mxu0 %v3343
    %3372 = vmatprep.subr.mxu0 0.0
    %3373 = vmatpush1.xpose.msra.mxu0 %v3340
    %3374 = vmatprep.subr.mxu0 0.0
    %3375 = vmatpush1.xpose.msra.mxu0 %v3337
    %3376 = vmatprep.subr.mxu0 0.0
    %3377 = vmatpush1.xpose.msra.mxu0 %v3334
    %3378 = vmatprep.subr.mxu0 0.0
    %3379 = vmatpush1.xpose.msra.mxu0 %v3331
    %3380 = vmatprep.subr.mxu0 0.0
    %3381 = vmatpush2.xpose.msra.mxu0 0.0
    %3382 = vmatprep.subr.mxu0 0.0
    %3383 = vmatpush2.xpose.msra.mxu0 0.0
    %3384 = vmatprep.subr.mxu0 0.0
    %3385 = vmatpush2.xpose.msra.mxu0 0.0
    %3386 = vmatprep.subr.mxu0 0.0
    %3387 = vmatpush2.xpose.msra.mxu0 0.0
    %3388 = vmatprep.subr.mxu0 0.0
    %3389 = vmatpush2.xpose.msra.mxu0 0.0
    %3390 = vmatprep.subr.mxu0 0.0
    %3391 = vmatpush2.xpose.msra.mxu0 0.0
    %3392 = vmatprep.subr.mxu0 0.0
    %3393 = vmatpush2.xpose.msra.mxu0 0.0
    %3394 = vmatprep.subr.mxu0 0.0
    %3395 = vmatpush2.xpose.msra.mxu0 0.0
    %3396 = vmatprep.subr.mxu0 0.0
    %3397 = vmatpush2.xpose.msra.mxu0 0.0
    %3398 = vmatprep.subr.mxu0 0.0
    %3399 = vmatpush2.xpose.msra.mxu0 0.0
    %3400 = vmatprep.subr.mxu0 0.0
    %3401 = vmatpush2.xpose.msra.mxu0 0.0
    %3402 = vmatprep.subr.mxu0 0.0
    %3403 = vmatpush2.xpose.msra.mxu0 0.0
    %3404 = vmatprep.subr.mxu0 0.0
    %3405 = vmatpush2.xpose.msra.mxu0 0.0
    %3406 = vmatprep.subr.mxu0 0.0
    %3407 = vmatpush2.xpose.msra.mxu0 0.0
    %3408 = vmatprep.subr.mxu0 0.0
    %3409 = vmatpush2.xpose.msra.mxu0 0.0
    %3410 = vmatprep.subr.mxu0 0.0
    %3411 = vmatpush2.xpose.msra.mxu0 0.0
    %3412 = vmatprep.mubr.f32.mxu0 0.0
    %3413 = vmatmul.mubr.f32.gmra.mxu0 %v3313
    %v3414 = vpop.f32.mrf.mxu0
    %v3415 = vadd.f32 %v323, %v3414
    %v3416 = vpop.f32.mrf.mxu0
    %3417 = vmatprep.mubr.f32.mxu0 0.0
    %3418 = vmatmul.mubr.f32.gmra.mxu0 %v3316
    %v3419 = vpop.f32.mrf.mxu0
    %v3420 = vadd.f32 %v324, %v3419
    %v3421 = vpop.f32.mrf.mxu0
    %3422 = vmatprep.mubr.f32.mxu0 0.0
    %3423 = vmatmul.mubr.f32.gmra.mxu0 %v3319
    %v3424 = vpop.f32.mrf.mxu0
    %v3425 = vadd.f32 %v325, %v3424
    %v3426 = vpop.f32.mrf.mxu0
    %3427 = vmatprep.mubr.f32.mxu0 0.0
    %3428 = vmatmul.mubr.f32.gmra.mxu0 %v3322
    %v3429 = vpop.f32.mrf.mxu0
    %v3430 = vadd.f32 %v326, %v3429
    %v3431 = vpop.f32.mrf.mxu0
    %3432 = vmatprep.mubr.f32.mxu0 0.0
    %3433 = vmatmul.mubr.f32.gmra.mxu0 %v3325
    %v3434 = vpop.f32.mrf.mxu0
    %v3435 = vadd.f32 %v327, %v3434
    %v3436 = vpop.f32.mrf.mxu0
    %3437 = vmatprep.mubr.f32.mxu0 0.0
    %3438 = vmatmul.mubr.f32.gmra.mxu0 %v3328
    %v3439 = vpop.f32.mrf.mxu0
    %v3440 = vadd.f32 %v328, %v3439
    %v3441 = vpop.f32.mrf.mxu0
    %3442 = vdwg.mxu0
    %v3443 = vsel %vm29, %v3415, -inf
    %3444 = vmax.xlane.f32.xlu0 %v3443
    %v3445 = vpop.xlane.xlu0 %3444
    %v3446 = vsel %vm29, %v3420, -inf
    %3447 = vmax.xlane.f32.xlu0 %v3446
    %v3448 = vpop.xlane.xlu0 %3447
    %v3449 = vsel %vm29, %v3425, -inf
    %3450 = vmax.xlane.f32.xlu0 %v3449
    %v3451 = vpop.xlane.xlu0 %3450
    %v3452 = vsel %vm29, %v3430, -inf
    %3453 = vmax.xlane.f32.xlu0 %v3452
    %v3454 = vpop.xlane.xlu0 %3453
    %v3455 = vsel %vm29, %v3435, -inf
    %3456 = vmax.xlane.f32.xlu0 %v3455
    %v3457 = vpop.xlane.xlu0 %3456
    %v3458 = vsel %vm29, %v3440, -inf
    %3459 = vmax.xlane.f32.xlu0 %v3458
    %v3460 = vpop.xlane.xlu0 %3459
    %v3461 = vsub.f32 %v3415, %v3445
    %v3462 = vsub.f32 %v3420, %v3448
    %v3463 = vsub.f32 %v3425, %v3451
    %v3464 = vsub.f32 %v3430, %v3454
    %v3465 = vsub.f32 %v3435, %v3457
    %v3466 = vsub.f32 %v3440, %v3460
    %v3467 = vmul.f32 %v3461, 1.442695
    %v3468 = vpow.pop %v3467
    %v3469 = vmul.f32 %v3462, 1.442695
    %v3470 = vpow.pop %v3469
    %v3471 = vmul.f32 %v3463, 1.442695
    %v3472 = vpow.pop %v3471
    %v3473 = vmul.f32 %v3464, 1.442695
    %v3474 = vpow.pop %v3473
    %v3475 = vmul.f32 %v3465, 1.442695
    %v3476 = vpow.pop %v3475
    %v3477 = vmul.f32 %v3466, 1.442695
    %v3478 = vpow.pop %v3477
    %v3479 = vsel %vm29, %v3468, 0.0
    %3480 = vadd.xlane.f32.xlu0 %v3479
    %v3481 = vpop.xlane.xlu0 %3480
    %v3482 = vsel %vm29, %v3470, 0.0
    %3483 = vadd.xlane.f32.xlu0 %v3482
    %v3484 = vpop.xlane.xlu0 %3483
    %v3485 = vsel %vm29, %v3472, 0.0
    %3486 = vadd.xlane.f32.xlu0 %v3485
    %v3487 = vpop.xlane.xlu0 %3486
    %v3488 = vsel %vm29, %v3474, 0.0
    %3489 = vadd.xlane.f32.xlu0 %v3488
    %v3490 = vpop.xlane.xlu0 %3489
    %v3491 = vsel %vm29, %v3476, 0.0
    %3492 = vadd.xlane.f32.xlu0 %v3491
    %v3493 = vpop.xlane.xlu0 %3492
    %v3494 = vsel %vm29, %v3478, 0.0
    %3495 = vadd.xlane.f32.xlu0 %v3494
    %v3496 = vpop.xlane.xlu0 %3495
    %v3497 = vrcp.pop %v3481
    %v3498 = vrcp.pop %v3484
    %v3499 = vrcp.pop %v3487
    %v3500 = vrcp.pop %v3490
    %v3501 = vrcp.pop %v3493
    %v3502 = vrcp.pop %v3496
    %v3503 = vmul.f32 %v3468, %v3497
    %v3504 = vmul.f32 %v3470, %v3498
    %v3505 = vmul.f32 %v3472, %v3499
    %v3506 = vmul.f32 %v3474, %v3500
    %v3507 = vmul.f32 %v3476, %v3501
    %v3508 = vmul.f32 %v3478, %v3502
    %s3509 = scalar_lea.vmem %s5, 192
    %3510 = vst.msk [vmem:[%s3509] sm:$0xff] %vm29, %v3503
    %3511 = vst.msk [vmem:[%s3509 + $0x8] sm:$0xff] %vm29, %v3504
    %3512 = vst.msk [vmem:[%s3509 + $0x10] sm:$0xff] %vm29, %v3505
    %3513 = vst.msk [vmem:[%s3509 + $0x18] sm:$0xff] %vm29, %v3506
    %3514 = vst.msk [vmem:[%s3509 + $0x20] sm:$0xff] %vm29, %v3507
    %3515 = vst.msk [vmem:[%s3509 + $0x28] sm:$0xff] %vm29, %v3508
    %v3516 = vmul.f32 %v3278, %v331
    %v3517 = vmul.f32 %v3283, %v331
    %v3518 = vmul.f32 %v3288, %v331
    %v3519 = vmul.f32 %v3293, %v331
    %v3520 = vmul.f32 %v3298, %v331
    %v3521 = vmul.f32 %v3303, %v331
    %v3522 = vmul.f32 %v3072, %v335
    %v3523 = vmul.f32 %v3077, %v335
    %v3524 = vmul.f32 %v3082, %v335
    %v3525 = vmul.f32 %v3087, %v335
    %v3526 = vmul.f32 %v3092, %v335
    %v3527 = vmul.f32 %v3097, %v335
    %v3529 = vsel %vm132, %v3522, 0
    %v3532 = vsel %vm132, %v3523, 0
    %v3535 = vsel %vm132, %v3524, 0
    %v3538 = vsel %vm132, %v3525, 0
    %v3541 = vsel %vm132, %v3526, 0
    %v3544 = vsel %vm132, %v3527, 0
    %3546 = vmatprep.subr.mxu0 0.0
    %3547 = vmatpush1.xpose.msra.mxu0 0.0
    %3548 = vmatprep.subr.mxu0 0.0
    %3549 = vmatpush1.xpose.msra.mxu0 0.0
    %3550 = vmatprep.subr.mxu0 0.0
    %3551 = vmatpush1.xpose.msra.mxu0 0.0
    %3552 = vmatprep.subr.mxu0 0.0
    %3553 = vmatpush1.xpose.msra.mxu0 0.0
    %3554 = vmatprep.subr.mxu0 0.0
    %3555 = vmatpush1.xpose.msra.mxu0 0.0
    %3556 = vmatprep.subr.mxu0 0.0
    %3557 = vmatpush1.xpose.msra.mxu0 0.0
    %3558 = vmatprep.subr.mxu0 0.0
    %3559 = vmatpush1.xpose.msra.mxu0 0.0
    %3560 = vmatprep.subr.mxu0 0.0
    %3561 = vmatpush1.xpose.msra.mxu0 0.0
    %3562 = vmatprep.subr.mxu0 0.0
    %3563 = vmatpush1.xpose.msra.mxu0 0.0
    %3564 = vmatprep.subr.mxu0 0.0
    %3565 = vmatpush1.xpose.msra.mxu0 0.0
    %3566 = vmatprep.subr.mxu0 0.0
    %3567 = vmatpush1.xpose.msra.mxu0 %v3346
    %3568 = vmatprep.subr.mxu0 0.0
    %3569 = vmatpush1.xpose.msra.mxu0 %v3343
    %3570 = vmatprep.subr.mxu0 0.0
    %3571 = vmatpush1.xpose.msra.mxu0 %v3340
    %3572 = vmatprep.subr.mxu0 0.0
    %3573 = vmatpush1.xpose.msra.mxu0 %v3337
    %3574 = vmatprep.subr.mxu0 0.0
    %3575 = vmatpush1.xpose.msra.mxu0 %v3334
    %3576 = vmatprep.subr.mxu0 0.0
    %3577 = vmatpush1.xpose.msra.mxu0 %v3331
    %3578 = vmatprep.subr.mxu0 0.0
    %3579 = vmatpush2.xpose.msra.mxu0 0.0
    %3580 = vmatprep.subr.mxu0 0.0
    %3581 = vmatpush2.xpose.msra.mxu0 0.0
    %3582 = vmatprep.subr.mxu0 0.0
    %3583 = vmatpush2.xpose.msra.mxu0 0.0
    %3584 = vmatprep.subr.mxu0 0.0
    %3585 = vmatpush2.xpose.msra.mxu0 0.0
    %3586 = vmatprep.subr.mxu0 0.0
    %3587 = vmatpush2.xpose.msra.mxu0 0.0
    %3588 = vmatprep.subr.mxu0 0.0
    %3589 = vmatpush2.xpose.msra.mxu0 0.0
    %3590 = vmatprep.subr.mxu0 0.0
    %3591 = vmatpush2.xpose.msra.mxu0 0.0
    %3592 = vmatprep.subr.mxu0 0.0
    %3593 = vmatpush2.xpose.msra.mxu0 0.0
    %3594 = vmatprep.subr.mxu0 0.0
    %3595 = vmatpush2.xpose.msra.mxu0 0.0
    %3596 = vmatprep.subr.mxu0 0.0
    %3597 = vmatpush2.xpose.msra.mxu0 0.0
    %3598 = vmatprep.subr.mxu0 0.0
    %3599 = vmatpush2.xpose.msra.mxu0 0.0
    %3600 = vmatprep.subr.mxu0 0.0
    %3601 = vmatpush2.xpose.msra.mxu0 0.0
    %3602 = vmatprep.subr.mxu0 0.0
    %3603 = vmatpush2.xpose.msra.mxu0 0.0
    %3604 = vmatprep.subr.mxu0 0.0
    %3605 = vmatpush2.xpose.msra.mxu0 0.0
    %3606 = vmatprep.subr.mxu0 0.0
    %3607 = vmatpush2.xpose.msra.mxu0 0.0
    %3608 = vmatprep.subr.mxu0 0.0
    %3609 = vmatpush2.xpose.msra.mxu0 0.0
    %3610 = vmatprep.mubr.f32.mxu0 0.0
    %3611 = vmatmul.mubr.f32.gmra.mxu0 %v3529
    %v3612 = vpop.f32.mrf.mxu0
    %v3613 = vadd.f32 %v323, %v3612
    %v3614 = vpop.f32.mrf.mxu0
    %3615 = vmatprep.mubr.f32.mxu0 0.0
    %3616 = vmatmul.mubr.f32.gmra.mxu0 %v3532
    %v3617 = vpop.f32.mrf.mxu0
    %v3618 = vadd.f32 %v324, %v3617
    %v3619 = vpop.f32.mrf.mxu0
    %3620 = vmatprep.mubr.f32.mxu0 0.0
    %3621 = vmatmul.mubr.f32.gmra.mxu0 %v3535
    %v3622 = vpop.f32.mrf.mxu0
    %v3623 = vadd.f32 %v325, %v3622
    %v3624 = vpop.f32.mrf.mxu0
    %3625 = vmatprep.mubr.f32.mxu0 0.0
    %3626 = vmatmul.mubr.f32.gmra.mxu0 %v3538
    %v3627 = vpop.f32.mrf.mxu0
    %v3628 = vadd.f32 %v326, %v3627
    %v3629 = vpop.f32.mrf.mxu0
    %3630 = vmatprep.mubr.f32.mxu0 0.0
    %3631 = vmatmul.mubr.f32.gmra.mxu0 %v3541
    %v3632 = vpop.f32.mrf.mxu0
    %v3633 = vadd.f32 %v327, %v3632
    %v3634 = vpop.f32.mrf.mxu0
    %3635 = vmatprep.mubr.f32.mxu0 0.0
    %3636 = vmatmul.mubr.f32.gmra.mxu0 %v3544
    %v3637 = vpop.f32.mrf.mxu0
    %v3638 = vadd.f32 %v328, %v3637
    %v3639 = vpop.f32.mrf.mxu0
    %3640 = vdwg.mxu0
    %v3641 = vsel %vm29, %v3613, -inf
    %3642 = vmax.xlane.f32.xlu0 %v3641
    %v3643 = vpop.xlane.xlu0 %3642
    %v3644 = vsel %vm29, %v3618, -inf
    %3645 = vmax.xlane.f32.xlu0 %v3644
    %v3646 = vpop.xlane.xlu0 %3645
    %v3647 = vsel %vm29, %v3623, -inf
    %3648 = vmax.xlane.f32.xlu0 %v3647
    %v3649 = vpop.xlane.xlu0 %3648
    %v3650 = vsel %vm29, %v3628, -inf
    %3651 = vmax.xlane.f32.xlu0 %v3650
    %v3652 = vpop.xlane.xlu0 %3651
    %v3653 = vsel %vm29, %v3633, -inf
    %3654 = vmax.xlane.f32.xlu0 %v3653
    %v3655 = vpop.xlane.xlu0 %3654
    %v3656 = vsel %vm29, %v3638, -inf
    %3657 = vmax.xlane.f32.xlu0 %v3656
    %v3658 = vpop.xlane.xlu0 %3657
    %v3659 = vsub.f32 %v3613, %v3643
    %v3660 = vsub.f32 %v3618, %v3646
    %v3661 = vsub.f32 %v3623, %v3649
    %v3662 = vsub.f32 %v3628, %v3652
    %v3663 = vsub.f32 %v3633, %v3655
    %v3664 = vsub.f32 %v3638, %v3658
    %v3665 = vmul.f32 %v3659, 1.442695
    %v3666 = vpow.pop %v3665
    %v3667 = vmul.f32 %v3660, 1.442695
    %v3668 = vpow.pop %v3667
    %v3669 = vmul.f32 %v3661, 1.442695
    %v3670 = vpow.pop %v3669
    %v3671 = vmul.f32 %v3662, 1.442695
    %v3672 = vpow.pop %v3671
    %v3673 = vmul.f32 %v3663, 1.442695
    %v3674 = vpow.pop %v3673
    %v3675 = vmul.f32 %v3664, 1.442695
    %v3676 = vpow.pop %v3675
    %v3677 = vsel %vm29, %v3666, 0.0
    %3678 = vadd.xlane.f32.xlu0 %v3677
    %v3679 = vpop.xlane.xlu0 %3678
    %v3680 = vsel %vm29, %v3668, 0.0
    %3681 = vadd.xlane.f32.xlu0 %v3680
    %v3682 = vpop.xlane.xlu0 %3681
    %v3683 = vsel %vm29, %v3670, 0.0
    %3684 = vadd.xlane.f32.xlu0 %v3683
    %v3685 = vpop.xlane.xlu0 %3684
    %v3686 = vsel %vm29, %v3672, 0.0
    %3687 = vadd.xlane.f32.xlu0 %v3686
    %v3688 = vpop.xlane.xlu0 %3687
    %v3689 = vsel %vm29, %v3674, 0.0
    %3690 = vadd.xlane.f32.xlu0 %v3689
    %v3691 = vpop.xlane.xlu0 %3690
    %v3692 = vsel %vm29, %v3676, 0.0
    %3693 = vadd.xlane.f32.xlu0 %v3692
    %v3694 = vpop.xlane.xlu0 %3693
    %v3695 = vrcp.pop %v3679
    %v3696 = vrcp.pop %v3682
    %v3697 = vrcp.pop %v3685
    %v3698 = vrcp.pop %v3688
    %v3699 = vrcp.pop %v3691
    %v3700 = vrcp.pop %v3694
    %v3701 = vmul.f32 %v3666, %v3695
    %v3702 = vmul.f32 %v3668, %v3696
    %v3703 = vmul.f32 %v3670, %v3697
    %v3704 = vmul.f32 %v3672, %v3698
    %v3705 = vmul.f32 %v3674, %v3699
    %v3706 = vmul.f32 %v3676, %v3700
    %s3707 = scalar_lea.vmem %s5, 240
    %3708 = vst.msk [vmem:[%s3707] sm:$0xff] %vm29, %v3701
    %3709 = vst.msk [vmem:[%s3707 + $0x8] sm:$0xff] %vm29, %v3702
    %3710 = vst.msk [vmem:[%s3707 + $0x10] sm:$0xff] %vm29, %v3703
    %3711 = vst.msk [vmem:[%s3707 + $0x18] sm:$0xff] %vm29, %v3704
    %3712 = vst.msk [vmem:[%s3707 + $0x20] sm:$0xff] %vm29, %v3705
    %3713 = vst.msk [vmem:[%s3707 + $0x28] sm:$0xff] %vm29, %v3706
    %v3714 = vmul.f32 %v3278, %v335
    %v3715 = vmul.f32 %v3283, %v335
    %v3716 = vmul.f32 %v3288, %v335
    %v3717 = vmul.f32 %v3293, %v335
    %v3718 = vmul.f32 %v3298, %v335
    %v3719 = vmul.f32 %v3303, %v335
    %v3721 = vsel %vm29, %v3701, 0
    %v3724 = vsel %vm29, %v3702, 0
    %v3727 = vsel %vm29, %v3703, 0
    %v3730 = vsel %vm29, %v3704, 0
    %v3733 = vsel %vm29, %v3705, 0
    %v3736 = vsel %vm29, %v3706, 0
    %3738 = vmatprep.subr.mxu0 0.0
    %3739 = vmatpush1.msra.mxu0 0.0
    %3740 = vmatprep.subr.mxu0 0.0
    %3741 = vmatpush1.msra.mxu0 0.0
    %3742 = vmatprep.subr.mxu0 0.0
    %3743 = vmatpush1.msra.mxu0 0.0
    %3744 = vmatprep.subr.mxu0 0.0
    %3745 = vmatpush1.msra.mxu0 0.0
    %3746 = vmatprep.subr.mxu0 0.0
    %3747 = vmatpush1.msra.mxu0 0.0
    %3748 = vmatprep.subr.mxu0 0.0
    %3749 = vmatpush1.msra.mxu0 0.0
    %3750 = vmatprep.subr.mxu0 0.0
    %3751 = vmatpush1.msra.mxu0 0.0
    %3752 = vmatprep.subr.mxu0 0.0
    %3753 = vmatpush1.msra.mxu0 0.0
    %3754 = vmatprep.subr.mxu0 0.0
    %3755 = vmatpush1.msra.mxu0 0.0
    %3756 = vmatprep.subr.mxu0 0.0
    %3757 = vmatpush1.msra.mxu0 0.0
    %3758 = vmatprep.subr.mxu0 0.0
    %3759 = vmatpush1.msra.mxu0 %v3719
    %3760 = vmatprep.subr.mxu0 0.0
    %3761 = vmatpush1.msra.mxu0 %v3718
    %3762 = vmatprep.subr.mxu0 0.0
    %3763 = vmatpush1.msra.mxu0 %v3717
    %3764 = vmatprep.subr.mxu0 0.0
    %3765 = vmatpush1.msra.mxu0 %v3716
    %3766 = vmatprep.subr.mxu0 0.0
    %3767 = vmatpush1.msra.mxu0 %v3715
    %3768 = vmatprep.subr.mxu0 0.0
    %3769 = vmatpush1.msra.mxu0 %v3714
    %3770 = vmatprep.subr.mxu0 0.0
    %3771 = vmatpush2.msra.mxu0 0.0
    %3772 = vmatprep.subr.mxu0 0.0
    %3773 = vmatpush2.msra.mxu0 0.0
    %3774 = vmatprep.subr.mxu0 0.0
    %3775 = vmatpush2.msra.mxu0 0.0
    %3776 = vmatprep.subr.mxu0 0.0
    %3777 = vmatpush2.msra.mxu0 0.0
    %3778 = vmatprep.subr.mxu0 0.0
    %3779 = vmatpush2.msra.mxu0 0.0
    %3780 = vmatprep.subr.mxu0 0.0
    %3781 = vmatpush2.msra.mxu0 0.0
    %3782 = vmatprep.subr.mxu0 0.0
    %3783 = vmatpush2.msra.mxu0 0.0
    %3784 = vmatprep.subr.mxu0 0.0
    %3785 = vmatpush2.msra.mxu0 0.0
    %3786 = vmatprep.subr.mxu0 0.0
    %3787 = vmatpush2.msra.mxu0 0.0
    %3788 = vmatprep.subr.mxu0 0.0
    %3789 = vmatpush2.msra.mxu0 0.0
    %3790 = vmatprep.subr.mxu0 0.0
    %3791 = vmatpush2.msra.mxu0 0.0
    %3792 = vmatprep.subr.mxu0 0.0
    %3793 = vmatpush2.msra.mxu0 0.0
    %3794 = vmatprep.subr.mxu0 0.0
    %3795 = vmatpush2.msra.mxu0 0.0
    %3796 = vmatprep.subr.mxu0 0.0
    %3797 = vmatpush2.msra.mxu0 0.0
    %3798 = vmatprep.subr.mxu0 0.0
    %3799 = vmatpush2.msra.mxu0 0.0
    %3800 = vmatprep.subr.mxu0 0.0
    %3801 = vmatpush2.msra.mxu0 0.0
    %3802 = vmatprep.mubr.f32.mxu0 0.0
    %3803 = vmatmul.mubr.f32.gmra.mxu0 %v3721
    %v3804 = vpop.f32.mrf.mxu0
    %v3805 = vadd.f32 0.0, %v3804
    %v3806 = vpop.f32.mrf.mxu0
    %3807 = vmatprep.mubr.f32.mxu0 0.0
    %3808 = vmatmul.mubr.f32.gmra.mxu0 %v3724
    %v3809 = vpop.f32.mrf.mxu0
    %v3810 = vadd.f32 0.0, %v3809
    %v3811 = vpop.f32.mrf.mxu0
    %3812 = vmatprep.mubr.f32.mxu0 0.0
    %3813 = vmatmul.mubr.f32.gmra.mxu0 %v3727
    %v3814 = vpop.f32.mrf.mxu0
    %v3815 = vadd.f32 0.0, %v3814
    %v3816 = vpop.f32.mrf.mxu0
    %3817 = vmatprep.mubr.f32.mxu0 0.0
    %3818 = vmatmul.mubr.f32.gmra.mxu0 %v3730
    %v3819 = vpop.f32.mrf.mxu0
    %v3820 = vadd.f32 0.0, %v3819
    %v3821 = vpop.f32.mrf.mxu0
    %3822 = vmatprep.mubr.f32.mxu0 0.0
    %3823 = vmatmul.mubr.f32.gmra.mxu0 %v3733
    %v3824 = vpop.f32.mrf.mxu0
    %v3825 = vadd.f32 0.0, %v3824
    %v3826 = vpop.f32.mrf.mxu0
    %3827 = vmatprep.mubr.f32.mxu0 0.0
    %3828 = vmatmul.mubr.f32.gmra.mxu0 %v3736
    %v3829 = vpop.f32.mrf.mxu0
    %v3830 = vadd.f32 0.0, %v3829
    %v3831 = vpop.f32.mrf.mxu0
    %3832 = vdwg.mxu0
    %v3834 = vsel %vm29, %v3503, 0
    %v3837 = vsel %vm29, %v3504, 0
    %v3840 = vsel %vm29, %v3505, 0
    %v3843 = vsel %vm29, %v3506, 0
    %v3846 = vsel %vm29, %v3507, 0
    %v3849 = vsel %vm29, %v3508, 0
    %3851 = vmatprep.subr.mxu0 0.0
    %3852 = vmatpush1.msra.mxu0 0.0
    %3853 = vmatprep.subr.mxu0 0.0
    %3854 = vmatpush1.msra.mxu0 0.0
    %3855 = vmatprep.subr.mxu0 0.0
    %3856 = vmatpush1.msra.mxu0 0.0
    %3857 = vmatprep.subr.mxu0 0.0
    %3858 = vmatpush1.msra.mxu0 0.0
    %3859 = vmatprep.subr.mxu0 0.0
    %3860 = vmatpush1.msra.mxu0 0.0
    %3861 = vmatprep.subr.mxu0 0.0
    %3862 = vmatpush1.msra.mxu0 0.0
    %3863 = vmatprep.subr.mxu0 0.0
    %3864 = vmatpush1.msra.mxu0 0.0
    %3865 = vmatprep.subr.mxu0 0.0
    %3866 = vmatpush1.msra.mxu0 0.0
    %3867 = vmatprep.subr.mxu0 0.0
    %3868 = vmatpush1.msra.mxu0 0.0
    %3869 = vmatprep.subr.mxu0 0.0
    %3870 = vmatpush1.msra.mxu0 0.0
    %3871 = vmatprep.subr.mxu0 0.0
    %3872 = vmatpush1.msra.mxu0 %v3521
    %3873 = vmatprep.subr.mxu0 0.0
    %3874 = vmatpush1.msra.mxu0 %v3520
    %3875 = vmatprep.subr.mxu0 0.0
    %3876 = vmatpush1.msra.mxu0 %v3519
    %3877 = vmatprep.subr.mxu0 0.0
    %3878 = vmatpush1.msra.mxu0 %v3518
    %3879 = vmatprep.subr.mxu0 0.0
    %3880 = vmatpush1.msra.mxu0 %v3517
    %3881 = vmatprep.subr.mxu0 0.0
    %3882 = vmatpush1.msra.mxu0 %v3516
    %3883 = vmatprep.subr.mxu0 0.0
    %3884 = vmatpush2.msra.mxu0 0.0
    %3885 = vmatprep.subr.mxu0 0.0
    %3886 = vmatpush2.msra.mxu0 0.0
    %3887 = vmatprep.subr.mxu0 0.0
    %3888 = vmatpush2.msra.mxu0 0.0
    %3889 = vmatprep.subr.mxu0 0.0
    %3890 = vmatpush2.msra.mxu0 0.0
    %3891 = vmatprep.subr.mxu0 0.0
    %3892 = vmatpush2.msra.mxu0 0.0
    %3893 = vmatprep.subr.mxu0 0.0
    %3894 = vmatpush2.msra.mxu0 0.0
    %3895 = vmatprep.subr.mxu0 0.0
    %3896 = vmatpush2.msra.mxu0 0.0
    %3897 = vmatprep.subr.mxu0 0.0
    %3898 = vmatpush2.msra.mxu0 0.0
    %3899 = vmatprep.subr.mxu0 0.0
    %3900 = vmatpush2.msra.mxu0 0.0
    %3901 = vmatprep.subr.mxu0 0.0
    %3902 = vmatpush2.msra.mxu0 0.0
    %3903 = vmatprep.subr.mxu0 0.0
    %3904 = vmatpush2.msra.mxu0 0.0
    %3905 = vmatprep.subr.mxu0 0.0
    %3906 = vmatpush2.msra.mxu0 0.0
    %3907 = vmatprep.subr.mxu0 0.0
    %3908 = vmatpush2.msra.mxu0 0.0
    %3909 = vmatprep.subr.mxu0 0.0
    %3910 = vmatpush2.msra.mxu0 0.0
    %3911 = vmatprep.subr.mxu0 0.0
    %3912 = vmatpush2.msra.mxu0 0.0
    %3913 = vmatprep.subr.mxu0 0.0
    %3914 = vmatpush2.msra.mxu0 0.0
    %3915 = vmatprep.mubr.f32.mxu0 0.0
    %3916 = vmatmul.mubr.f32.gmra.mxu0 %v3834
    %v3917 = vpop.f32.mrf.mxu0
    %v3918 = vadd.f32 %v3805, %v3917
    %v3919 = vpop.f32.mrf.mxu0
    %3920 = vmatprep.mubr.f32.mxu0 0.0
    %3921 = vmatmul.mubr.f32.gmra.mxu0 %v3837
    %v3922 = vpop.f32.mrf.mxu0
    %v3923 = vadd.f32 %v3810, %v3922
    %v3924 = vpop.f32.mrf.mxu0
    %3925 = vmatprep.mubr.f32.mxu0 0.0
    %3926 = vmatmul.mubr.f32.gmra.mxu0 %v3840
    %v3927 = vpop.f32.mrf.mxu0
    %v3928 = vadd.f32 %v3815, %v3927
    %v3929 = vpop.f32.mrf.mxu0
    %3930 = vmatprep.mubr.f32.mxu0 0.0
    %3931 = vmatmul.mubr.f32.gmra.mxu0 %v3843
    %v3932 = vpop.f32.mrf.mxu0
    %v3933 = vadd.f32 %v3820, %v3932
    %v3934 = vpop.f32.mrf.mxu0
    %3935 = vmatprep.mubr.f32.mxu0 0.0
    %3936 = vmatmul.mubr.f32.gmra.mxu0 %v3846
    %v3937 = vpop.f32.mrf.mxu0
    %v3938 = vadd.f32 %v3825, %v3937
    %v3939 = vpop.f32.mrf.mxu0
    %3940 = vmatprep.mubr.f32.mxu0 0.0
    %3941 = vmatmul.mubr.f32.gmra.mxu0 %v3849
    %v3942 = vpop.f32.mrf.mxu0
    %v3943 = vadd.f32 %v3830, %v3942
    %v3944 = vpop.f32.mrf.mxu0
    %3945 = vdwg.mxu0
    %v3946 = vmul.f32 %v3072, %v339
    %v3947 = vmul.f32 %v3077, %v339
    %v3948 = vmul.f32 %v3082, %v339
    %v3949 = vmul.f32 %v3087, %v339
    %v3950 = vmul.f32 %v3092, %v339
    %v3951 = vmul.f32 %v3097, %v339
    %v3953 = vsel %vm132, %v3946, 0
    %v3956 = vsel %vm132, %v3947, 0
    %v3959 = vsel %vm132, %v3948, 0
    %v3962 = vsel %vm132, %v3949, 0
    %v3965 = vsel %vm132, %v3950, 0
    %v3968 = vsel %vm132, %v3951, 0
    %3970 = vmatprep.subr.mxu0 0.0
    %3971 = vmatpush1.xpose.msra.mxu0 0.0
    %3972 = vmatprep.subr.mxu0 0.0
    %3973 = vmatpush1.xpose.msra.mxu0 0.0
    %3974 = vmatprep.subr.mxu0 0.0
    %3975 = vmatpush1.xpose.msra.mxu0 0.0
    %3976 = vmatprep.subr.mxu0 0.0
    %3977 = vmatpush1.xpose.msra.mxu0 0.0
    %3978 = vmatprep.subr.mxu0 0.0
    %3979 = vmatpush1.xpose.msra.mxu0 0.0
    %3980 = vmatprep.subr.mxu0 0.0
    %3981 = vmatpush1.xpose.msra.mxu0 0.0
    %3982 = vmatprep.subr.mxu0 0.0
    %3983 = vmatpush1.xpose.msra.mxu0 0.0
    %3984 = vmatprep.subr.mxu0 0.0
    %3985 = vmatpush1.xpose.msra.mxu0 0.0
    %3986 = vmatprep.subr.mxu0 0.0
    %3987 = vmatpush1.xpose.msra.mxu0 0.0
    %3988 = vmatprep.subr.mxu0 0.0
    %3989 = vmatpush1.xpose.msra.mxu0 0.0
    %3990 = vmatprep.subr.mxu0 0.0
    %3991 = vmatpush1.xpose.msra.mxu0 %v3346
    %3992 = vmatprep.subr.mxu0 0.0
    %3993 = vmatpush1.xpose.msra.mxu0 %v3343
    %3994 = vmatprep.subr.mxu0 0.0
    %3995 = vmatpush1.xpose.msra.mxu0 %v3340
    %3996 = vmatprep.subr.mxu0 0.0
    %3997 = vmatpush1.xpose.msra.mxu0 %v3337
    %3998 = vmatprep.subr.mxu0 0.0
    %3999 = vmatpush1.xpose.msra.mxu0 %v3334
    %4000 = vmatprep.subr.mxu0 0.0
    %4001 = vmatpush1.xpose.msra.mxu0 %v3331
    %4002 = vmatprep.subr.mxu0 0.0
    %4003 = vmatpush2.xpose.msra.mxu0 0.0
    %4004 = vmatprep.subr.mxu0 0.0
    %4005 = vmatpush2.xpose.msra.mxu0 0.0
    %4006 = vmatprep.subr.mxu0 0.0
    %4007 = vmatpush2.xpose.msra.mxu0 0.0
    %4008 = vmatprep.subr.mxu0 0.0
    %4009 = vmatpush2.xpose.msra.mxu0 0.0
    %4010 = vmatprep.subr.mxu0 0.0
    %4011 = vmatpush2.xpose.msra.mxu0 0.0
    %4012 = vmatprep.subr.mxu0 0.0
    %4013 = vmatpush2.xpose.msra.mxu0 0.0
    %4014 = vmatprep.subr.mxu0 0.0
    %4015 = vmatpush2.xpose.msra.mxu0 0.0
    %4016 = vmatprep.subr.mxu0 0.0
    %4017 = vmatpush2.xpose.msra.mxu0 0.0
    %4018 = vmatprep.subr.mxu0 0.0
    %4019 = vmatpush2.xpose.msra.mxu0 0.0
    %4020 = vmatprep.subr.mxu0 0.0
    %4021 = vmatpush2.xpose.msra.mxu0 0.0
    %4022 = vmatprep.subr.mxu0 0.0
    %4023 = vmatpush2.xpose.msra.mxu0 0.0
    %4024 = vmatprep.subr.mxu0 0.0
    %4025 = vmatpush2.xpose.msra.mxu0 0.0
    %4026 = vmatprep.subr.mxu0 0.0
    %4027 = vmatpush2.xpose.msra.mxu0 0.0
    %4028 = vmatprep.subr.mxu0 0.0
    %4029 = vmatpush2.xpose.msra.mxu0 0.0
    %4030 = vmatprep.subr.mxu0 0.0
    %4031 = vmatpush2.xpose.msra.mxu0 0.0
    %4032 = vmatprep.subr.mxu0 0.0
    %4033 = vmatpush2.xpose.msra.mxu0 0.0
    %4034 = vmatprep.mubr.f32.mxu0 0.0
    %4035 = vmatmul.mubr.f32.gmra.mxu0 %v3953
    %v4036 = vpop.f32.mrf.mxu0
    %v4037 = vadd.f32 %v323, %v4036
    %v4038 = vpop.f32.mrf.mxu0
    %4039 = vmatprep.mubr.f32.mxu0 0.0
    %4040 = vmatmul.mubr.f32.gmra.mxu0 %v3956
    %v4041 = vpop.f32.mrf.mxu0
    %v4042 = vadd.f32 %v324, %v4041
    %v4043 = vpop.f32.mrf.mxu0
    %4044 = vmatprep.mubr.f32.mxu0 0.0
    %4045 = vmatmul.mubr.f32.gmra.mxu0 %v3959
    %v4046 = vpop.f32.mrf.mxu0
    %v4047 = vadd.f32 %v325, %v4046
    %v4048 = vpop.f32.mrf.mxu0
    %4049 = vmatprep.mubr.f32.mxu0 0.0
    %4050 = vmatmul.mubr.f32.gmra.mxu0 %v3962
    %v4051 = vpop.f32.mrf.mxu0
    %v4052 = vadd.f32 %v326, %v4051
    %v4053 = vpop.f32.mrf.mxu0
    %4054 = vmatprep.mubr.f32.mxu0 0.0
    %4055 = vmatmul.mubr.f32.gmra.mxu0 %v3965
    %v4056 = vpop.f32.mrf.mxu0
    %v4057 = vadd.f32 %v327, %v4056
    %v4058 = vpop.f32.mrf.mxu0
    %4059 = vmatprep.mubr.f32.mxu0 0.0
    %4060 = vmatmul.mubr.f32.gmra.mxu0 %v3968
    %v4061 = vpop.f32.mrf.mxu0
    %v4062 = vadd.f32 %v328, %v4061
    %v4063 = vpop.f32.mrf.mxu0
    %4064 = vdwg.mxu0
    %v4065 = vsel %vm29, %v4037, -inf
    %4066 = vmax.xlane.f32.xlu0 %v4065
    %v4067 = vpop.xlane.xlu0 %4066
    %v4068 = vsel %vm29, %v4042, -inf
    %4069 = vmax.xlane.f32.xlu0 %v4068
    %v4070 = vpop.xlane.xlu0 %4069
    %v4071 = vsel %vm29, %v4047, -inf
    %4072 = vmax.xlane.f32.xlu0 %v4071
    %v4073 = vpop.xlane.xlu0 %4072
    %v4074 = vsel %vm29, %v4052, -inf
    %4075 = vmax.xlane.f32.xlu0 %v4074
    %v4076 = vpop.xlane.xlu0 %4075
    %v4077 = vsel %vm29, %v4057, -inf
    %4078 = vmax.xlane.f32.xlu0 %v4077
    %v4079 = vpop.xlane.xlu0 %4078
    %v4080 = vsel %vm29, %v4062, -inf
    %4081 = vmax.xlane.f32.xlu0 %v4080
    %v4082 = vpop.xlane.xlu0 %4081
    %v4083 = vsub.f32 %v4037, %v4067
    %v4084 = vsub.f32 %v4042, %v4070
    %v4085 = vsub.f32 %v4047, %v4073
    %v4086 = vsub.f32 %v4052, %v4076
    %v4087 = vsub.f32 %v4057, %v4079
    %v4088 = vsub.f32 %v4062, %v4082
    %v4089 = vmul.f32 %v4083, 1.442695
    %v4090 = vpow.pop %v4089
    %v4091 = vmul.f32 %v4084, 1.442695
    %v4092 = vpow.pop %v4091
    %v4093 = vmul.f32 %v4085, 1.442695
    %v4094 = vpow.pop %v4093
    %v4095 = vmul.f32 %v4086, 1.442695
    %v4096 = vpow.pop %v4095
    %v4097 = vmul.f32 %v4087, 1.442695
    %v4098 = vpow.pop %v4097
    %v4099 = vmul.f32 %v4088, 1.442695
    %v4100 = vpow.pop %v4099
    %v4101 = vsel %vm29, %v4090, 0.0
    %4102 = vadd.xlane.f32.xlu0 %v4101
    %v4103 = vpop.xlane.xlu0 %4102
    %v4104 = vsel %vm29, %v4092, 0.0
    %4105 = vadd.xlane.f32.xlu0 %v4104
    %v4106 = vpop.xlane.xlu0 %4105
    %v4107 = vsel %vm29, %v4094, 0.0
    %4108 = vadd.xlane.f32.xlu0 %v4107
    %v4109 = vpop.xlane.xlu0 %4108
    %v4110 = vsel %vm29, %v4096, 0.0
    %4111 = vadd.xlane.f32.xlu0 %v4110
    %v4112 = vpop.xlane.xlu0 %4111
    %v4113 = vsel %vm29, %v4098, 0.0
    %4114 = vadd.xlane.f32.xlu0 %v4113
    %v4115 = vpop.xlane.xlu0 %4114
    %v4116 = vsel %vm29, %v4100, 0.0
    %4117 = vadd.xlane.f32.xlu0 %v4116
    %v4118 = vpop.xlane.xlu0 %4117
    %v4119 = vrcp.pop %v4103
    %v4120 = vrcp.pop %v4106
    %v4121 = vrcp.pop %v4109
    %v4122 = vrcp.pop %v4112
    %v4123 = vrcp.pop %v4115
    %v4124 = vrcp.pop %v4118
    %v4125 = vmul.f32 %v4090, %v4119
    %v4126 = vmul.f32 %v4092, %v4120
    %v4127 = vmul.f32 %v4094, %v4121
    %v4128 = vmul.f32 %v4096, %v4122
    %v4129 = vmul.f32 %v4098, %v4123
    %v4130 = vmul.f32 %v4100, %v4124
    %s4131 = scalar_lea.vmem %s5, 288
    %4132 = vst.msk [vmem:[%s4131] sm:$0xff] %vm29, %v4125
    %4133 = vst.msk [vmem:[%s4131 + $0x8] sm:$0xff] %vm29, %v4126
    %4134 = vst.msk [vmem:[%s4131 + $0x10] sm:$0xff] %vm29, %v4127
    %4135 = vst.msk [vmem:[%s4131 + $0x18] sm:$0xff] %vm29, %v4128
    %4136 = vst.msk [vmem:[%s4131 + $0x20] sm:$0xff] %vm29, %v4129
    %4137 = vst.msk [vmem:[%s4131 + $0x28] sm:$0xff] %vm29, %v4130
    %v4138 = vmul.f32 %v3278, %v339
    %v4139 = vmul.f32 %v3283, %v339
    %v4140 = vmul.f32 %v3288, %v339
    %v4141 = vmul.f32 %v3293, %v339
    %v4142 = vmul.f32 %v3298, %v339
    %v4143 = vmul.f32 %v3303, %v339
    %v4145 = vsel %vm29, %v4125, 0
    %v4148 = vsel %vm29, %v4126, 0
    %v4151 = vsel %vm29, %v4127, 0
    %v4154 = vsel %vm29, %v4128, 0
    %v4157 = vsel %vm29, %v4129, 0
    %v4160 = vsel %vm29, %v4130, 0
    %4162 = vmatprep.subr.mxu0 0.0
    %4163 = vmatpush1.msra.mxu0 0.0
    %4164 = vmatprep.subr.mxu0 0.0
    %4165 = vmatpush1.msra.mxu0 0.0
    %4166 = vmatprep.subr.mxu0 0.0
    %4167 = vmatpush1.msra.mxu0 0.0
    %4168 = vmatprep.subr.mxu0 0.0
    %4169 = vmatpush1.msra.mxu0 0.0
    %4170 = vmatprep.subr.mxu0 0.0
    %4171 = vmatpush1.msra.mxu0 0.0
    %4172 = vmatprep.subr.mxu0 0.0
    %4173 = vmatpush1.msra.mxu0 0.0
    %4174 = vmatprep.subr.mxu0 0.0
    %4175 = vmatpush1.msra.mxu0 0.0
    %4176 = vmatprep.subr.mxu0 0.0
    %4177 = vmatpush1.msra.mxu0 0.0
    %4178 = vmatprep.subr.mxu0 0.0
    %4179 = vmatpush1.msra.mxu0 0.0
    %4180 = vmatprep.subr.mxu0 0.0
    %4181 = vmatpush1.msra.mxu0 0.0
    %4182 = vmatprep.subr.mxu0 0.0
    %4183 = vmatpush1.msra.mxu0 %v4143
    %4184 = vmatprep.subr.mxu0 0.0
    %4185 = vmatpush1.msra.mxu0 %v4142
    %4186 = vmatprep.subr.mxu0 0.0
    %4187 = vmatpush1.msra.mxu0 %v4141
    %4188 = vmatprep.subr.mxu0 0.0
    %4189 = vmatpush1.msra.mxu0 %v4140
    %4190 = vmatprep.subr.mxu0 0.0
    %4191 = vmatpush1.msra.mxu0 %v4139
    %4192 = vmatprep.subr.mxu0 0.0
    %4193 = vmatpush1.msra.mxu0 %v4138
    %4194 = vmatprep.subr.mxu0 0.0
    %4195 = vmatpush2.msra.mxu0 0.0
    %4196 = vmatprep.subr.mxu0 0.0
    %4197 = vmatpush2.msra.mxu0 0.0
    %4198 = vmatprep.subr.mxu0 0.0
    %4199 = vmatpush2.msra.mxu0 0.0
    %4200 = vmatprep.subr.mxu0 0.0
    %4201 = vmatpush2.msra.mxu0 0.0
    %4202 = vmatprep.subr.mxu0 0.0
    %4203 = vmatpush2.msra.mxu0 0.0
    %4204 = vmatprep.subr.mxu0 0.0
    %4205 = vmatpush2.msra.mxu0 0.0
    %4206 = vmatprep.subr.mxu0 0.0
    %4207 = vmatpush2.msra.mxu0 0.0
    %4208 = vmatprep.subr.mxu0 0.0
    %4209 = vmatpush2.msra.mxu0 0.0
    %4210 = vmatprep.subr.mxu0 0.0
    %4211 = vmatpush2.msra.mxu0 0.0
    %4212 = vmatprep.subr.mxu0 0.0
    %4213 = vmatpush2.msra.mxu0 0.0
    %4214 = vmatprep.subr.mxu0 0.0
    %4215 = vmatpush2.msra.mxu0 0.0
    %4216 = vmatprep.subr.mxu0 0.0
    %4217 = vmatpush2.msra.mxu0 0.0
    %4218 = vmatprep.subr.mxu0 0.0
    %4219 = vmatpush2.msra.mxu0 0.0
    %4220 = vmatprep.subr.mxu0 0.0
    %4221 = vmatpush2.msra.mxu0 0.0
    %4222 = vmatprep.subr.mxu0 0.0
    %4223 = vmatpush2.msra.mxu0 0.0
    %4224 = vmatprep.subr.mxu0 0.0
    %4225 = vmatpush2.msra.mxu0 0.0
    %4226 = vmatprep.mubr.f32.mxu0 0.0
    %4227 = vmatmul.mubr.f32.gmra.mxu0 %v4145
    %v4228 = vpop.f32.mrf.mxu0
    %v4229 = vadd.f32 0.0, %v4228
    %v4230 = vpop.f32.mrf.mxu0
    %4231 = vmatprep.mubr.f32.mxu0 0.0
    %4232 = vmatmul.mubr.f32.gmra.mxu0 %v4148
    %v4233 = vpop.f32.mrf.mxu0
    %v4234 = vadd.f32 0.0, %v4233
    %v4235 = vpop.f32.mrf.mxu0
    %4236 = vmatprep.mubr.f32.mxu0 0.0
    %4237 = vmatmul.mubr.f32.gmra.mxu0 %v4151
    %v4238 = vpop.f32.mrf.mxu0
    %v4239 = vadd.f32 0.0, %v4238
    %v4240 = vpop.f32.mrf.mxu0
    %4241 = vmatprep.mubr.f32.mxu0 0.0
    %4242 = vmatmul.mubr.f32.gmra.mxu0 %v4154
    %v4243 = vpop.f32.mrf.mxu0
    %v4244 = vadd.f32 0.0, %v4243
    %v4245 = vpop.f32.mrf.mxu0
    %4246 = vmatprep.mubr.f32.mxu0 0.0
    %4247 = vmatmul.mubr.f32.gmra.mxu0 %v4157
    %v4248 = vpop.f32.mrf.mxu0
    %v4249 = vadd.f32 0.0, %v4248
    %v4250 = vpop.f32.mrf.mxu0
    %4251 = vmatprep.mubr.f32.mxu0 0.0
    %4252 = vmatmul.mubr.f32.gmra.mxu0 %v4160
    %v4253 = vpop.f32.mrf.mxu0
    %v4254 = vadd.f32 0.0, %v4253
    %v4255 = vpop.f32.mrf.mxu0
    %4256 = vdwg.mxu0
    %v4257 = vadd.f32 %v3918, %v4229
    %v4258 = vadd.f32 %v3923, %v4234
    %v4259 = vadd.f32 %v3928, %v4239
    %v4260 = vadd.f32 %v3933, %v4244
    %v4261 = vadd.f32 %v3938, %v4249
    %v4262 = vadd.f32 %v3943, %v4254
    %v4263 = vmul.f32 %v3072, %v342
    %v4264 = vmul.f32 %v3077, %v342
    %v4265 = vmul.f32 %v3082, %v342
    %v4266 = vmul.f32 %v3087, %v342
    %v4267 = vmul.f32 %v3092, %v342
    %v4268 = vmul.f32 %v3097, %v342
    %v4270 = vsel %vm132, %v4263, 0
    %v4273 = vsel %vm132, %v4264, 0
    %v4276 = vsel %vm132, %v4265, 0
    %v4279 = vsel %vm132, %v4266, 0
    %v4282 = vsel %vm132, %v4267, 0
    %v4285 = vsel %vm132, %v4268, 0
    %4287 = vmatprep.subr.mxu0 0.0
    %4288 = vmatpush1.xpose.msra.mxu0 0.0
    %4289 = vmatprep.subr.mxu0 0.0
    %4290 = vmatpush1.xpose.msra.mxu0 0.0
    %4291 = vmatprep.subr.mxu0 0.0
    %4292 = vmatpush1.xpose.msra.mxu0 0.0
    %4293 = vmatprep.subr.mxu0 0.0
    %4294 = vmatpush1.xpose.msra.mxu0 0.0
    %4295 = vmatprep.subr.mxu0 0.0
    %4296 = vmatpush1.xpose.msra.mxu0 0.0
    %4297 = vmatprep.subr.mxu0 0.0
    %4298 = vmatpush1.xpose.msra.mxu0 0.0
    %4299 = vmatprep.subr.mxu0 0.0
    %4300 = vmatpush1.xpose.msra.mxu0 0.0
    %4301 = vmatprep.subr.mxu0 0.0
    %4302 = vmatpush1.xpose.msra.mxu0 0.0
    %4303 = vmatprep.subr.mxu0 0.0
    %4304 = vmatpush1.xpose.msra.mxu0 0.0
    %4305 = vmatprep.subr.mxu0 0.0
    %4306 = vmatpush1.xpose.msra.mxu0 0.0
    %4307 = vmatprep.subr.mxu0 0.0
    %4308 = vmatpush1.xpose.msra.mxu0 %v3346
    %4309 = vmatprep.subr.mxu0 0.0
    %4310 = vmatpush1.xpose.msra.mxu0 %v3343
    %4311 = vmatprep.subr.mxu0 0.0
    %4312 = vmatpush1.xpose.msra.mxu0 %v3340
    %4313 = vmatprep.subr.mxu0 0.0
    %4314 = vmatpush1.xpose.msra.mxu0 %v3337
    %4315 = vmatprep.subr.mxu0 0.0
    %4316 = vmatpush1.xpose.msra.mxu0 %v3334
    %4317 = vmatprep.subr.mxu0 0.0
    %4318 = vmatpush1.xpose.msra.mxu0 %v3331
    %4319 = vmatprep.subr.mxu0 0.0
    %4320 = vmatpush2.xpose.msra.mxu0 0.0
    %4321 = vmatprep.subr.mxu0 0.0
    %4322 = vmatpush2.xpose.msra.mxu0 0.0
    %4323 = vmatprep.subr.mxu0 0.0
    %4324 = vmatpush2.xpose.msra.mxu0 0.0
    %4325 = vmatprep.subr.mxu0 0.0
    %4326 = vmatpush2.xpose.msra.mxu0 0.0
    %4327 = vmatprep.subr.mxu0 0.0
    %4328 = vmatpush2.xpose.msra.mxu0 0.0
    %4329 = vmatprep.subr.mxu0 0.0
    %4330 = vmatpush2.xpose.msra.mxu0 0.0
    %4331 = vmatprep.subr.mxu0 0.0
    %4332 = vmatpush2.xpose.msra.mxu0 0.0
    %4333 = vmatprep.subr.mxu0 0.0
    %4334 = vmatpush2.xpose.msra.mxu0 0.0
    %4335 = vmatprep.subr.mxu0 0.0
    %4336 = vmatpush2.xpose.msra.mxu0 0.0
    %4337 = vmatprep.subr.mxu0 0.0
    %4338 = vmatpush2.xpose.msra.mxu0 0.0
    %4339 = vmatprep.subr.mxu0 0.0
    %4340 = vmatpush2.xpose.msra.mxu0 0.0
    %4341 = vmatprep.subr.mxu0 0.0
    %4342 = vmatpush2.xpose.msra.mxu0 0.0
    %4343 = vmatprep.subr.mxu0 0.0
    %4344 = vmatpush2.xpose.msra.mxu0 0.0
    %4345 = vmatprep.subr.mxu0 0.0
    %4346 = vmatpush2.xpose.msra.mxu0 0.0
    %4347 = vmatprep.subr.mxu0 0.0
    %4348 = vmatpush2.xpose.msra.mxu0 0.0
    %4349 = vmatprep.subr.mxu0 0.0
    %4350 = vmatpush2.xpose.msra.mxu0 0.0
    %4351 = vmatprep.mubr.f32.mxu0 0.0
    %4352 = vmatmul.mubr.f32.gmra.mxu0 %v4270
    %v4353 = vpop.f32.mrf.mxu0
    %v4354 = vadd.f32 %v323, %v4353
    %v4355 = vpop.f32.mrf.mxu0
    %4356 = vmatprep.mubr.f32.mxu0 0.0
    %4357 = vmatmul.mubr.f32.gmra.mxu0 %v4273
    %v4358 = vpop.f32.mrf.mxu0
    %v4359 = vadd.f32 %v324, %v4358
    %v4360 = vpop.f32.mrf.mxu0
    %4361 = vmatprep.mubr.f32.mxu0 0.0
    %4362 = vmatmul.mubr.f32.gmra.mxu0 %v4276
    %v4363 = vpop.f32.mrf.mxu0
    %v4364 = vadd.f32 %v325, %v4363
    %v4365 = vpop.f32.mrf.mxu0
    %4366 = vmatprep.mubr.f32.mxu0 0.0
    %4367 = vmatmul.mubr.f32.gmra.mxu0 %v4279
    %v4368 = vpop.f32.mrf.mxu0
    %v4369 = vadd.f32 %v326, %v4368
    %v4370 = vpop.f32.mrf.mxu0
    %4371 = vmatprep.mubr.f32.mxu0 0.0
    %4372 = vmatmul.mubr.f32.gmra.mxu0 %v4282
    %v4373 = vpop.f32.mrf.mxu0
    %v4374 = vadd.f32 %v327, %v4373
    %v4375 = vpop.f32.mrf.mxu0
    %4376 = vmatprep.mubr.f32.mxu0 0.0
    %4377 = vmatmul.mubr.f32.gmra.mxu0 %v4285
    %v4378 = vpop.f32.mrf.mxu0
    %v4379 = vadd.f32 %v328, %v4378
    %v4380 = vpop.f32.mrf.mxu0
    %4381 = vdwg.mxu0
    %v4382 = vsel %vm29, %v4354, -inf
    %4383 = vmax.xlane.f32.xlu0 %v4382
    %v4384 = vpop.xlane.xlu0 %4383
    %v4385 = vsel %vm29, %v4359, -inf
    %4386 = vmax.xlane.f32.xlu0 %v4385
    %v4387 = vpop.xlane.xlu0 %4386
    %v4388 = vsel %vm29, %v4364, -inf
    %4389 = vmax.xlane.f32.xlu0 %v4388
    %v4390 = vpop.xlane.xlu0 %4389
    %v4391 = vsel %vm29, %v4369, -inf
    %4392 = vmax.xlane.f32.xlu0 %v4391
    %v4393 = vpop.xlane.xlu0 %4392
    %v4394 = vsel %vm29, %v4374, -inf
    %4395 = vmax.xlane.f32.xlu0 %v4394
    %v4396 = vpop.xlane.xlu0 %4395
    %v4397 = vsel %vm29, %v4379, -inf
    %4398 = vmax.xlane.f32.xlu0 %v4397
    %v4399 = vpop.xlane.xlu0 %4398
    %v4400 = vsub.f32 %v4354, %v4384
    %v4401 = vsub.f32 %v4359, %v4387
    %v4402 = vsub.f32 %v4364, %v4390
    %v4403 = vsub.f32 %v4369, %v4393
    %v4404 = vsub.f32 %v4374, %v4396
    %v4405 = vsub.f32 %v4379, %v4399
    %v4406 = vmul.f32 %v4400, 1.442695
    %v4407 = vpow.pop %v4406
    %v4408 = vmul.f32 %v4401, 1.442695
    %v4409 = vpow.pop %v4408
    %v4410 = vmul.f32 %v4402, 1.442695
    %v4411 = vpow.pop %v4410
    %v4412 = vmul.f32 %v4403, 1.442695
    %v4413 = vpow.pop %v4412
    %v4414 = vmul.f32 %v4404, 1.442695
    %v4415 = vpow.pop %v4414
    %v4416 = vmul.f32 %v4405, 1.442695
    %v4417 = vpow.pop %v4416
    %v4418 = vsel %vm29, %v4407, 0.0
    %4419 = vadd.xlane.f32.xlu0 %v4418
    %v4420 = vpop.xlane.xlu0 %4419
    %v4421 = vsel %vm29, %v4409, 0.0
    %4422 = vadd.xlane.f32.xlu0 %v4421
    %v4423 = vpop.xlane.xlu0 %4422
    %v4424 = vsel %vm29, %v4411, 0.0
    %4425 = vadd.xlane.f32.xlu0 %v4424
    %v4426 = vpop.xlane.xlu0 %4425
    %v4427 = vsel %vm29, %v4413, 0.0
    %4428 = vadd.xlane.f32.xlu0 %v4427
    %v4429 = vpop.xlane.xlu0 %4428
    %v4430 = vsel %vm29, %v4415, 0.0
    %4431 = vadd.xlane.f32.xlu0 %v4430
    %v4432 = vpop.xlane.xlu0 %4431
    %v4433 = vsel %vm29, %v4417, 0.0
    %4434 = vadd.xlane.f32.xlu0 %v4433
    %v4435 = vpop.xlane.xlu0 %4434
    %v4436 = vrcp.pop %v4420
    %v4437 = vrcp.pop %v4423
    %v4438 = vrcp.pop %v4426
    %v4439 = vrcp.pop %v4429
    %v4440 = vrcp.pop %v4432
    %v4441 = vrcp.pop %v4435
    %v4442 = vmul.f32 %v4407, %v4436
    %v4443 = vmul.f32 %v4409, %v4437
    %v4444 = vmul.f32 %v4411, %v4438
    %v4445 = vmul.f32 %v4413, %v4439
    %v4446 = vmul.f32 %v4415, %v4440
    %v4447 = vmul.f32 %v4417, %v4441
    %s4448 = scalar_lea.vmem %s5, 336
    %4449 = vst.msk [vmem:[%s4448] sm:$0xff] %vm29, %v4442
    %4450 = vst.msk [vmem:[%s4448 + $0x8] sm:$0xff] %vm29, %v4443
    %4451 = vst.msk [vmem:[%s4448 + $0x10] sm:$0xff] %vm29, %v4444
    %4452 = vst.msk [vmem:[%s4448 + $0x18] sm:$0xff] %vm29, %v4445
    %4453 = vst.msk [vmem:[%s4448 + $0x20] sm:$0xff] %vm29, %v4446
    %4454 = vst.msk [vmem:[%s4448 + $0x28] sm:$0xff] %vm29, %v4447
    %v4455 = vmul.f32 %v3278, %v342
    %v4456 = vmul.f32 %v3283, %v342
    %v4457 = vmul.f32 %v3288, %v342
    %v4458 = vmul.f32 %v3293, %v342
    %v4459 = vmul.f32 %v3298, %v342
    %v4460 = vmul.f32 %v3303, %v342
    %v4462 = vsel %vm29, %v4442, 0
    %v4465 = vsel %vm29, %v4443, 0
    %v4468 = vsel %vm29, %v4444, 0
    %v4471 = vsel %vm29, %v4445, 0
    %v4474 = vsel %vm29, %v4446, 0
    %v4477 = vsel %vm29, %v4447, 0
    %4479 = vmatprep.subr.mxu0 0.0
    %4480 = vmatpush1.msra.mxu0 0.0
    %4481 = vmatprep.subr.mxu0 0.0
    %4482 = vmatpush1.msra.mxu0 0.0
    %4483 = vmatprep.subr.mxu0 0.0
    %4484 = vmatpush1.msra.mxu0 0.0
    %4485 = vmatprep.subr.mxu0 0.0
    %4486 = vmatpush1.msra.mxu0 0.0
    %4487 = vmatprep.subr.mxu0 0.0
    %4488 = vmatpush1.msra.mxu0 0.0
    %4489 = vmatprep.subr.mxu0 0.0
    %4490 = vmatpush1.msra.mxu0 0.0
    %4491 = vmatprep.subr.mxu0 0.0
    %4492 = vmatpush1.msra.mxu0 0.0
    %4493 = vmatprep.subr.mxu0 0.0
    %4494 = vmatpush1.msra.mxu0 0.0
    %4495 = vmatprep.subr.mxu0 0.0
    %4496 = vmatpush1.msra.mxu0 0.0
    %4497 = vmatprep.subr.mxu0 0.0
    %4498 = vmatpush1.msra.mxu0 0.0
    %4499 = vmatprep.subr.mxu0 0.0
    %4500 = vmatpush1.msra.mxu0 %v4460
    %4501 = vmatprep.subr.mxu0 0.0
    %4502 = vmatpush1.msra.mxu0 %v4459
    %4503 = vmatprep.subr.mxu0 0.0
    %4504 = vmatpush1.msra.mxu0 %v4458
    %4505 = vmatprep.subr.mxu0 0.0
    %4506 = vmatpush1.msra.mxu0 %v4457
    %4507 = vmatprep.subr.mxu0 0.0
    %4508 = vmatpush1.msra.mxu0 %v4456
    %4509 = vmatprep.subr.mxu0 0.0
    %4510 = vmatpush1.msra.mxu0 %v4455
    %4511 = vmatprep.subr.mxu0 0.0
    %4512 = vmatpush2.msra.mxu0 0.0
    %4513 = vmatprep.subr.mxu0 0.0
    %4514 = vmatpush2.msra.mxu0 0.0
    %4515 = vmatprep.subr.mxu0 0.0
    %4516 = vmatpush2.msra.mxu0 0.0
    %4517 = vmatprep.subr.mxu0 0.0
    %4518 = vmatpush2.msra.mxu0 0.0
    %4519 = vmatprep.subr.mxu0 0.0
    %4520 = vmatpush2.msra.mxu0 0.0
    %4521 = vmatprep.subr.mxu0 0.0
    %4522 = vmatpush2.msra.mxu0 0.0
    %4523 = vmatprep.subr.mxu0 0.0
    %4524 = vmatpush2.msra.mxu0 0.0
    %4525 = vmatprep.subr.mxu0 0.0
    %4526 = vmatpush2.msra.mxu0 0.0
    %4527 = vmatprep.subr.mxu0 0.0
    %4528 = vmatpush2.msra.mxu0 0.0
    %4529 = vmatprep.subr.mxu0 0.0
    %4530 = vmatpush2.msra.mxu0 0.0
    %4531 = vmatprep.subr.mxu0 0.0
    %4532 = vmatpush2.msra.mxu0 0.0
    %4533 = vmatprep.subr.mxu0 0.0
    %4534 = vmatpush2.msra.mxu0 0.0
    %4535 = vmatprep.subr.mxu0 0.0
    %4536 = vmatpush2.msra.mxu0 0.0
    %4537 = vmatprep.subr.mxu0 0.0
    %4538 = vmatpush2.msra.mxu0 0.0
    %4539 = vmatprep.subr.mxu0 0.0
    %4540 = vmatpush2.msra.mxu0 0.0
    %4541 = vmatprep.subr.mxu0 0.0
    %4542 = vmatpush2.msra.mxu0 0.0
    %4543 = vmatprep.mubr.f32.mxu0 0.0
    %4544 = vmatmul.mubr.f32.gmra.mxu0 %v4462
    %v4545 = vpop.f32.mrf.mxu0
    %v4546 = vadd.f32 0.0, %v4545
    %v4547 = vpop.f32.mrf.mxu0
    %4548 = vmatprep.mubr.f32.mxu0 0.0
    %4549 = vmatmul.mubr.f32.gmra.mxu0 %v4465
    %v4550 = vpop.f32.mrf.mxu0
    %v4551 = vadd.f32 0.0, %v4550
    %v4552 = vpop.f32.mrf.mxu0
    %4553 = vmatprep.mubr.f32.mxu0 0.0
    %4554 = vmatmul.mubr.f32.gmra.mxu0 %v4468
    %v4555 = vpop.f32.mrf.mxu0
    %v4556 = vadd.f32 0.0, %v4555
    %v4557 = vpop.f32.mrf.mxu0
    %4558 = vmatprep.mubr.f32.mxu0 0.0
    %4559 = vmatmul.mubr.f32.gmra.mxu0 %v4471
    %v4560 = vpop.f32.mrf.mxu0
    %v4561 = vadd.f32 0.0, %v4560
    %v4562 = vpop.f32.mrf.mxu0
    %4563 = vmatprep.mubr.f32.mxu0 0.0
    %4564 = vmatmul.mubr.f32.gmra.mxu0 %v4474
    %v4565 = vpop.f32.mrf.mxu0
    %v4566 = vadd.f32 0.0, %v4565
    %v4567 = vpop.f32.mrf.mxu0
    %4568 = vmatprep.mubr.f32.mxu0 0.0
    %4569 = vmatmul.mubr.f32.gmra.mxu0 %v4477
    %v4570 = vpop.f32.mrf.mxu0
    %v4571 = vadd.f32 0.0, %v4570
    %v4572 = vpop.f32.mrf.mxu0
    %4573 = vdwg.mxu0
    %v4574 = vadd.f32 %v4257, %v4546
    %v4575 = vadd.f32 %v4258, %v4551
    %v4576 = vadd.f32 %v4259, %v4556
    %v4577 = vadd.f32 %v4260, %v4561
    %v4578 = vadd.f32 %v4261, %v4566
    %v4579 = vadd.f32 %v4262, %v4571
    %v4580 = vld [vmem:[%s2 + $0x1d8] sm:$0xff]
    %v4581 = vld [vmem:[%s2 + $0x1e0] sm:$0xff]
    %v4582 = vld [vmem:[%s2 + $0x1e8] sm:$0xff]
    %v4583 = vld [vmem:[%s2 + $0x1f0] sm:$0xff]
    %v4585 = vsel %vm132, %v4574, 0
    %v4588 = vsel %vm132, %v4575, 0
    %v4591 = vsel %vm132, %v4576, 0
    %v4594 = vsel %vm132, %v4577, 0
    %v4597 = vsel %vm132, %v4578, 0
    %v4600 = vsel %vm132, %v4579, 0
    %4602 = vmatprep.subr.mxu0 0.0
    %4603 = vmatpush1.msra.mxu0 0.0
    %4604 = vmatprep.subr.mxu0 0.0
    %4605 = vmatpush1.msra.mxu0 0.0
    %4606 = vmatprep.subr.mxu0 0.0
    %4607 = vmatpush1.msra.mxu0 0.0
    %4608 = vmatprep.subr.mxu0 0.0
    %4609 = vmatpush1.msra.mxu0 0.0
    %4610 = vmatprep.subr.mxu0 0.0
    %4611 = vmatpush1.msra.mxu0 0.0
    %4612 = vmatprep.subr.mxu0 0.0
    %4613 = vmatpush1.msra.mxu0 0.0
    %4614 = vmatprep.subr.mxu0 0.0
    %4615 = vmatpush1.msra.mxu0 0.0
    %4616 = vmatprep.subr.mxu0 0.0
    %4617 = vmatpush1.msra.mxu0 0.0
    %4618 = vmatprep.subr.mxu0 0.0
    %4619 = vmatpush1.msra.mxu0 0.0
    %4620 = vmatprep.subr.mxu0 0.0
    %4621 = vmatpush1.msra.mxu0 0.0
    %4622 = vmatprep.subr.mxu0 0.0
    %4623 = vmatpush1.msra.mxu0 0.0
    %4624 = vmatprep.subr.mxu0 0.0
    %4625 = vmatpush1.msra.mxu0 0.0
    %4626 = vmatprep.subr.mxu0 0.0
    %4627 = vmatpush1.msra.mxu0 %v4583
    %4628 = vmatprep.subr.mxu0 0.0
    %4629 = vmatpush1.msra.mxu0 %v4582
    %4630 = vmatprep.subr.mxu0 0.0
    %4631 = vmatpush1.msra.mxu0 %v4581
    %4632 = vmatprep.subr.mxu0 0.0
    %4633 = vmatpush1.msra.mxu0 %v4580
    %4634 = vmatprep.subr.mxu0 0.0
    %4635 = vmatpush2.msra.mxu0 0.0
    %4636 = vmatprep.subr.mxu0 0.0
    %4637 = vmatpush2.msra.mxu0 0.0
    %4638 = vmatprep.subr.mxu0 0.0
    %4639 = vmatpush2.msra.mxu0 0.0
    %4640 = vmatprep.subr.mxu0 0.0
    %4641 = vmatpush2.msra.mxu0 0.0
    %4642 = vmatprep.subr.mxu0 0.0
    %4643 = vmatpush2.msra.mxu0 0.0
    %4644 = vmatprep.subr.mxu0 0.0
    %4645 = vmatpush2.msra.mxu0 0.0
    %4646 = vmatprep.subr.mxu0 0.0
    %4647 = vmatpush2.msra.mxu0 0.0
    %4648 = vmatprep.subr.mxu0 0.0
    %4649 = vmatpush2.msra.mxu0 0.0
    %4650 = vmatprep.subr.mxu0 0.0
    %4651 = vmatpush2.msra.mxu0 0.0
    %4652 = vmatprep.subr.mxu0 0.0
    %4653 = vmatpush2.msra.mxu0 0.0
    %4654 = vmatprep.subr.mxu0 0.0
    %4655 = vmatpush2.msra.mxu0 0.0
    %4656 = vmatprep.subr.mxu0 0.0
    %4657 = vmatpush2.msra.mxu0 0.0
    %4658 = vmatprep.subr.mxu0 0.0
    %4659 = vmatpush2.msra.mxu0 0.0
    %4660 = vmatprep.subr.mxu0 0.0
    %4661 = vmatpush2.msra.mxu0 0.0
    %4662 = vmatprep.subr.mxu0 0.0
    %4663 = vmatpush2.msra.mxu0 0.0
    %4664 = vmatprep.subr.mxu0 0.0
    %4665 = vmatpush2.msra.mxu0 0.0
    %4666 = vmatprep.mubr.f32.mxu0 0.0
    %4667 = vmatmul.mubr.f32.gmra.mxu0 %v4585
    %v4668 = vpop.f32.mrf.mxu0
    %v4669 = vadd.f32 0.0, %v4668
    %v4670 = vpop.f32.mrf.mxu0
    %4671 = vmatprep.mubr.f32.mxu0 0.0
    %4672 = vmatmul.mubr.f32.gmra.mxu0 %v4588
    %v4673 = vpop.f32.mrf.mxu0
    %v4674 = vadd.f32 0.0, %v4673
    %v4675 = vpop.f32.mrf.mxu0
    %4676 = vmatprep.mubr.f32.mxu0 0.0
    %4677 = vmatmul.mubr.f32.gmra.mxu0 %v4591
    %v4678 = vpop.f32.mrf.mxu0
    %v4679 = vadd.f32 0.0, %v4678
    %v4680 = vpop.f32.mrf.mxu0
    %4681 = vmatprep.mubr.f32.mxu0 0.0
    %4682 = vmatmul.mubr.f32.gmra.mxu0 %v4594
    %v4683 = vpop.f32.mrf.mxu0
    %v4684 = vadd.f32 0.0, %v4683
    %v4685 = vpop.f32.mrf.mxu0
    %4686 = vmatprep.mubr.f32.mxu0 0.0
    %4687 = vmatmul.mubr.f32.gmra.mxu0 %v4597
    %v4688 = vpop.f32.mrf.mxu0
    %v4689 = vadd.f32 0.0, %v4688
    %v4690 = vpop.f32.mrf.mxu0
    %4691 = vmatprep.mubr.f32.mxu0 0.0
    %4692 = vmatmul.mubr.f32.gmra.mxu0 %v4600
    %v4693 = vpop.f32.mrf.mxu0
    %v4694 = vadd.f32 0.0, %v4693
    %v4695 = vpop.f32.mrf.mxu0
    %4696 = vdwg.mxu0
    %v4697 = vadd.f32 %v2866, %v4669
    %v4698 = vadd.f32 %v2867, %v4674
    %v4699 = vadd.f32 %v2868, %v4679
    %v4700 = vadd.f32 %v2869, %v4684
    %v4701 = vadd.f32 %v2870, %v4689
    %v4702 = vadd.f32 %v2871, %v4694
    %v4703 = vlaneseq
    %v4704 = vshrl.u32 %v4703, 7
    %v4705 = vsub.s32 0, %v4704
    %v4706 = vrot.slane %v2877, %v4705
    %v4707 = vadd.f32 %v4697, %v4706
    %v4708 = vadd.f32 %v4698, %v4706
    %v4709 = vadd.f32 %v4699, %v4706
    %v4710 = vadd.f32 %v4700, %v4706
    %v4711 = vadd.f32 %v4701, %v4706
    %v4712 = vadd.f32 %v4702, %v4706
    %v4713 = vsel %vm132, %v4707, 0.0
    %4714 = vadd.xlane.f32.xlu0 %v4713
    %v4715 = vpop.xlane.xlu0 %4714
    %v4716 = vsel %vm132, %v4708, 0.0
    %4717 = vadd.xlane.f32.xlu0 %v4716
    %v4718 = vpop.xlane.xlu0 %4717
    %v4719 = vsel %vm132, %v4709, 0.0
    %4720 = vadd.xlane.f32.xlu0 %v4719
    %v4721 = vpop.xlane.xlu0 %4720
    %v4722 = vsel %vm132, %v4710, 0.0
    %4723 = vadd.xlane.f32.xlu0 %v4722
    %v4724 = vpop.xlane.xlu0 %4723
    %v4725 = vsel %vm132, %v4711, 0.0
    %4726 = vadd.xlane.f32.xlu0 %v4725
    %v4727 = vpop.xlane.xlu0 %4726
    %v4728 = vsel %vm132, %v4712, 0.0
    %4729 = vadd.xlane.f32.xlu0 %v4728
    %v4730 = vpop.xlane.xlu0 %4729
    %v4731 = vmul.f32 %v4715, %v370
    %v4732 = vmul.f32 %v4718, %v370
    %v4733 = vmul.f32 %v4721, %v370
    %v4734 = vmul.f32 %v4724, %v370
    %v4735 = vmul.f32 %v4727, %v370
    %v4736 = vmul.f32 %v4730, %v370
    %v4737 = vsub.f32 %v4707, %v4731
    %v4738 = vsub.f32 %v4708, %v4732
    %v4739 = vsub.f32 %v4709, %v4733
    %v4740 = vsub.f32 %v4710, %v4734
    %v4741 = vsub.f32 %v4711, %v4735
    %v4742 = vsub.f32 %v4712, %v4736
    %v4743 = vmul.f32 %v4737, %v4737
    %v4744 = vmul.f32 %v4738, %v4738
    %v4745 = vmul.f32 %v4739, %v4739
    %v4746 = vmul.f32 %v4740, %v4740
    %v4747 = vmul.f32 %v4741, %v4741
    %v4748 = vmul.f32 %v4742, %v4742
    %v4749 = vsel %vm132, %v4743, 0.0
    %4750 = vadd.xlane.f32.xlu0 %v4749
    %v4751 = vpop.xlane.xlu0 %4750
    %v4752 = vsel %vm132, %v4744, 0.0
    %4753 = vadd.xlane.f32.xlu0 %v4752
    %v4754 = vpop.xlane.xlu0 %4753
    %v4755 = vsel %vm132, %v4745, 0.0
    %4756 = vadd.xlane.f32.xlu0 %v4755
    %v4757 = vpop.xlane.xlu0 %4756
    %v4758 = vsel %vm132, %v4746, 0.0
    %4759 = vadd.xlane.f32.xlu0 %v4758
    %v4760 = vpop.xlane.xlu0 %4759
    %v4761 = vsel %vm132, %v4747, 0.0
    %4762 = vadd.xlane.f32.xlu0 %v4761
    %v4763 = vpop.xlane.xlu0 %4762
    %v4764 = vsel %vm132, %v4748, 0.0
    %4765 = vadd.xlane.f32.xlu0 %v4764
    %v4766 = vpop.xlane.xlu0 %4765
    %v4767 = vmul.f32 %v4751, %v370
    %v4768 = vmul.f32 %v4754, %v370
    %v4769 = vmul.f32 %v4757, %v370
    %v4770 = vmul.f32 %v4760, %v370
    %v4771 = vmul.f32 %v4763, %v370
    %v4772 = vmul.f32 %v4766, %v370
    %v4773 = vadd.f32 %v4767, 1e-06
    %v4774 = vadd.f32 %v4768, 1e-06
    %v4775 = vadd.f32 %v4769, 1e-06
    %v4776 = vadd.f32 %v4770, 1e-06
    %v4777 = vadd.f32 %v4771, 1e-06
    %v4778 = vadd.f32 %v4772, 1e-06
    %v4779 = vrsqrt.pop %v4773
    %v4780 = vrsqrt.pop %v4774
    %v4781 = vrsqrt.pop %v4775
    %v4782 = vrsqrt.pop %v4776
    %v4783 = vrsqrt.pop %v4777
    %v4784 = vrsqrt.pop %v4778
    %v4785 = vmul.f32 %v4737, %v4779
    %v4786 = vmul.f32 %v4738, %v4780
    %v4787 = vmul.f32 %v4739, %v4781
    %v4788 = vmul.f32 %v4740, %v4782
    %v4789 = vmul.f32 %v4741, %v4783
    %v4790 = vmul.f32 %v4742, %v4784
    %v4791 = vlaneseq
    %v4792 = vshrl.u32 %v4791, 7
    %v4793 = vsub.s32 0, %v4792
    %v4794 = vrot.slane %v2878, %v4793
    %v4795 = vmul.f32 %v4785, %v4794
    %v4796 = vmul.f32 %v4786, %v4794
    %v4797 = vmul.f32 %v4787, %v4794
    %v4798 = vmul.f32 %v4788, %v4794
    %v4799 = vmul.f32 %v4789, %v4794
    %v4800 = vmul.f32 %v4790, %v4794
    %v4801 = vlaneseq
    %v4802 = vshrl.u32 %v4801, 7
    %v4803 = vsub.s32 0, %v4802
    %v4804 = vrot.slane %v2879, %v4803
    %v4805 = vadd.f32 %v4795, %v4804
    %v4806 = vadd.f32 %v4796, %v4804
    %v4807 = vadd.f32 %v4797, %v4804
    %v4808 = vadd.f32 %v4798, %v4804
    %v4809 = vadd.f32 %v4799, %v4804
    %v4810 = vadd.f32 %v4800, %v4804
    %v4811 = vld [vmem:[%s2 + $0x1f8] sm:$0xff]
    %v4812 = vld [vmem:[%s2 + $0x200] sm:$0xff]
    %v4813 = vld [vmem:[%s2 + $0x208] sm:$0xff]
    %v4814 = vld [vmem:[%s2 + $0x210] sm:$0xff]
    %v4815 = vld [vmem:[%s2 + $0x280] sm:$0x1]
    %v4816 = vlaneseq
    %v4817 = vshrl.u32 %v4816, 7
    %v4818 = vsub.s32 0, %v4817
    %v4819 = vrot.slane %v4815, %v4818
    %v4821 = vsel %vm132, %v4805, 0
    %v4824 = vsel %vm132, %v4806, 0
    %v4827 = vsel %vm132, %v4807, 0
    %v4830 = vsel %vm132, %v4808, 0
    %v4833 = vsel %vm132, %v4809, 0
    %v4836 = vsel %vm132, %v4810, 0
    %4838 = vmatprep.subr.mxu0 0.0
    %4839 = vmatpush1.msra.mxu0 0.0
    %4840 = vmatprep.subr.mxu0 0.0
    %4841 = vmatpush1.msra.mxu0 0.0
    %4842 = vmatprep.subr.mxu0 0.0
    %4843 = vmatpush1.msra.mxu0 0.0
    %4844 = vmatprep.subr.mxu0 0.0
    %4845 = vmatpush1.msra.mxu0 0.0
    %4846 = vmatprep.subr.mxu0 0.0
    %4847 = vmatpush1.msra.mxu0 0.0
    %4848 = vmatprep.subr.mxu0 0.0
    %4849 = vmatpush1.msra.mxu0 0.0
    %4850 = vmatprep.subr.mxu0 0.0
    %4851 = vmatpush1.msra.mxu0 0.0
    %4852 = vmatprep.subr.mxu0 0.0
    %4853 = vmatpush1.msra.mxu0 0.0
    %4854 = vmatprep.subr.mxu0 0.0
    %4855 = vmatpush1.msra.mxu0 0.0
    %4856 = vmatprep.subr.mxu0 0.0
    %4857 = vmatpush1.msra.mxu0 0.0
    %4858 = vmatprep.subr.mxu0 0.0
    %4859 = vmatpush1.msra.mxu0 0.0
    %4860 = vmatprep.subr.mxu0 0.0
    %4861 = vmatpush1.msra.mxu0 0.0
    %4862 = vmatprep.subr.mxu0 0.0
    %4863 = vmatpush1.msra.mxu0 %v4814
    %4864 = vmatprep.subr.mxu0 0.0
    %4865 = vmatpush1.msra.mxu0 %v4813
    %4866 = vmatprep.subr.mxu0 0.0
    %4867 = vmatpush1.msra.mxu0 %v4812
    %4868 = vmatprep.subr.mxu0 0.0
    %4869 = vmatpush1.msra.mxu0 %v4811
    %4870 = vmatprep.subr.mxu0 0.0
    %4871 = vmatpush2.msra.mxu0 0.0
    %4872 = vmatprep.subr.mxu0 0.0
    %4873 = vmatpush2.msra.mxu0 0.0
    %4874 = vmatprep.subr.mxu0 0.0
    %4875 = vmatpush2.msra.mxu0 0.0
    %4876 = vmatprep.subr.mxu0 0.0
    %4877 = vmatpush2.msra.mxu0 0.0
    %4878 = vmatprep.subr.mxu0 0.0
    %4879 = vmatpush2.msra.mxu0 0.0
    %4880 = vmatprep.subr.mxu0 0.0
    %4881 = vmatpush2.msra.mxu0 0.0
    %4882 = vmatprep.subr.mxu0 0.0
    %4883 = vmatpush2.msra.mxu0 0.0
    %4884 = vmatprep.subr.mxu0 0.0
    %4885 = vmatpush2.msra.mxu0 0.0
    %4886 = vmatprep.subr.mxu0 0.0
    %4887 = vmatpush2.msra.mxu0 0.0
    %4888 = vmatprep.subr.mxu0 0.0
    %4889 = vmatpush2.msra.mxu0 0.0
    %4890 = vmatprep.subr.mxu0 0.0
    %4891 = vmatpush2.msra.mxu0 0.0
    %4892 = vmatprep.subr.mxu0 0.0
    %4893 = vmatpush2.msra.mxu0 0.0
    %4894 = vmatprep.subr.mxu0 0.0
    %4895 = vmatpush2.msra.mxu0 0.0
    %4896 = vmatprep.subr.mxu0 0.0
    %4897 = vmatpush2.msra.mxu0 0.0
    %4898 = vmatprep.subr.mxu0 0.0
    %4899 = vmatpush2.msra.mxu0 0.0
    %4900 = vmatprep.subr.mxu0 0.0
    %4901 = vmatpush2.msra.mxu0 0.0
    %4902 = vmatprep.mubr.f32.mxu0 0.0
    %4903 = vmatmul.mubr.f32.gmra.mxu0 %v4821
    %v4904 = vpop.f32.mrf.mxu0
    %v4905 = vadd.f32 %v4819, %v4904
    %v4906 = vpop.f32.mrf.mxu0
    %4907 = vmatprep.mubr.f32.mxu0 0.0
    %4908 = vmatmul.mubr.f32.gmra.mxu0 %v4824
    %v4909 = vpop.f32.mrf.mxu0
    %v4910 = vadd.f32 %v4819, %v4909
    %v4911 = vpop.f32.mrf.mxu0
    %4912 = vmatprep.mubr.f32.mxu0 0.0
    %4913 = vmatmul.mubr.f32.gmra.mxu0 %v4827
    %v4914 = vpop.f32.mrf.mxu0
    %v4915 = vadd.f32 %v4819, %v4914
    %v4916 = vpop.f32.mrf.mxu0
    %4917 = vmatprep.mubr.f32.mxu0 0.0
    %4918 = vmatmul.mubr.f32.gmra.mxu0 %v4830
    %v4919 = vpop.f32.mrf.mxu0
    %v4920 = vadd.f32 %v4819, %v4919
    %v4921 = vpop.f32.mrf.mxu0
    %4922 = vmatprep.mubr.f32.mxu0 0.0
    %4923 = vmatmul.mubr.f32.gmra.mxu0 %v4833
    %v4924 = vpop.f32.mrf.mxu0
    %v4925 = vadd.f32 %v4819, %v4924
    %v4926 = vpop.f32.mrf.mxu0
    %4927 = vmatprep.mubr.f32.mxu0 0.0
    %4928 = vmatmul.mubr.f32.gmra.mxu0 %v4836
    %v4929 = vpop.f32.mrf.mxu0
    %v4930 = vadd.f32 %v4819, %v4929
    %v4931 = vpop.f32.mrf.mxu0
    %4932 = vdwg.mxu0
    %v4933 = vmul.f32 %v4905, %v4905
    %v4934 = vmul.f32 %v4910, %v4910
    %v4935 = vmul.f32 %v4915, %v4915
    %v4936 = vmul.f32 %v4920, %v4920
    %v4937 = vmul.f32 %v4925, %v4925
    %v4938 = vmul.f32 %v4930, %v4930
    %v4939 = vmul.f32 %v4905, %v4933
    %v4940 = vmul.f32 %v4910, %v4934
    %v4941 = vmul.f32 %v4915, %v4935
    %v4942 = vmul.f32 %v4920, %v4936
    %v4943 = vmul.f32 %v4925, %v4937
    %v4944 = vmul.f32 %v4930, %v4938
    %v4945 = vmul.f32 %v4939, 0.044715
    %v4946 = vmul.f32 %v4940, 0.044715
    %v4947 = vmul.f32 %v4941, 0.044715
    %v4948 = vmul.f32 %v4942, 0.044715
    %v4949 = vmul.f32 %v4943, 0.044715
    %v4950 = vmul.f32 %v4944, 0.044715
    %v4951 = vadd.f32 %v4905, %v4945
    %v4952 = vadd.f32 %v4910, %v4946
    %v4953 = vadd.f32 %v4915, %v4947
    %v4954 = vadd.f32 %v4920, %v4948
    %v4955 = vadd.f32 %v4925, %v4949
    %v4956 = vadd.f32 %v4930, %v4950
    %v4957 = vmul.f32 %v4951, 0.7978846
    %v4958 = vmul.f32 %v4952, 0.7978846
    %v4959 = vmul.f32 %v4953, 0.7978846
    %v4960 = vmul.f32 %v4954, 0.7978846
    %v4961 = vmul.f32 %v4955, 0.7978846
    %v4962 = vmul.f32 %v4956, 0.7978846
    %v4963 = vtanh.pop %v4957
    %v4964 = vtanh.pop %v4958
    %v4965 = vtanh.pop %v4959
    %v4966 = vtanh.pop %v4960
    %v4967 = vtanh.pop %v4961
    %v4968 = vtanh.pop %v4962
    %v4969 = vadd.f32 %v4963, 1.0
    %v4970 = vadd.f32 %v4964, 1.0
    %v4971 = vadd.f32 %v4965, 1.0
    %v4972 = vadd.f32 %v4966, 1.0
    %v4973 = vadd.f32 %v4967, 1.0
    %v4974 = vadd.f32 %v4968, 1.0
    %v4975 = vmul.f32 %v4969, 0.5
    %v4976 = vmul.f32 %v4970, 0.5
    %v4977 = vmul.f32 %v4971, 0.5
    %v4978 = vmul.f32 %v4972, 0.5
    %v4979 = vmul.f32 %v4973, 0.5
    %v4980 = vmul.f32 %v4974, 0.5
    %v4981 = vmul.f32 %v4905, %v4975
    %v4982 = vmul.f32 %v4910, %v4976
    %v4983 = vmul.f32 %v4915, %v4977
    %v4984 = vmul.f32 %v4920, %v4978
    %v4985 = vmul.f32 %v4925, %v4979
    %v4986 = vmul.f32 %v4930, %v4980
    %v4987 = vld [vmem:[%s2 + $0x238] sm:$0xff]
    %v4988 = vld [vmem:[%s2 + $0x240] sm:$0xff]
    %v4989 = vld [vmem:[%s2 + $0x248] sm:$0xff]
    %v4990 = vld [vmem:[%s2 + $0x250] sm:$0xff]
    %v4992 = vsel %vm132, %v4981, 0
    %v4995 = vsel %vm132, %v4982, 0
    %v4998 = vsel %vm132, %v4983, 0
    %v5001 = vsel %vm132, %v4984, 0
    %v5004 = vsel %vm132, %v4985, 0
    %v5007 = vsel %vm132, %v4986, 0
    %5009 = vmatprep.subr.mxu0 0.0
    %5010 = vmatpush1.msra.mxu0 0.0
    %5011 = vmatprep.subr.mxu0 0.0
    %5012 = vmatpush1.msra.mxu0 0.0
    %5013 = vmatprep.subr.mxu0 0.0
    %5014 = vmatpush1.msra.mxu0 0.0
    %5015 = vmatprep.subr.mxu0 0.0
    %5016 = vmatpush1.msra.mxu0 0.0
    %5017 = vmatprep.subr.mxu0 0.0
    %5018 = vmatpush1.msra.mxu0 0.0
    %5019 = vmatprep.subr.mxu0 0.0
    %5020 = vmatpush1.msra.mxu0 0.0
    %5021 = vmatprep.subr.mxu0 0.0
    %5022 = vmatpush1.msra.mxu0 0.0
    %5023 = vmatprep.subr.mxu0 0.0
    %5024 = vmatpush1.msra.mxu0 0.0
    %5025 = vmatprep.subr.mxu0 0.0
    %5026 = vmatpush1.msra.mxu0 0.0
    %5027 = vmatprep.subr.mxu0 0.0
    %5028 = vmatpush1.msra.mxu0 0.0
    %5029 = vmatprep.subr.mxu0 0.0
    %5030 = vmatpush1.msra.mxu0 0.0
    %5031 = vmatprep.subr.mxu0 0.0
    %5032 = vmatpush1.msra.mxu0 0.0
    %5033 = vmatprep.subr.mxu0 0.0
    %5034 = vmatpush1.msra.mxu0 %v4990
    %5035 = vmatprep.subr.mxu0 0.0
    %5036 = vmatpush1.msra.mxu0 %v4989
    %5037 = vmatprep.subr.mxu0 0.0
    %5038 = vmatpush1.msra.mxu0 %v4988
    %5039 = vmatprep.subr.mxu0 0.0
    %5040 = vmatpush1.msra.mxu0 %v4987
    %5041 = vmatprep.subr.mxu0 0.0
    %5042 = vmatpush2.msra.mxu0 0.0
    %5043 = vmatprep.subr.mxu0 0.0
    %5044 = vmatpush2.msra.mxu0 0.0
    %5045 = vmatprep.subr.mxu0 0.0
    %5046 = vmatpush2.msra.mxu0 0.0
    %5047 = vmatprep.subr.mxu0 0.0
    %5048 = vmatpush2.msra.mxu0 0.0
    %5049 = vmatprep.subr.mxu0 0.0
    %5050 = vmatpush2.msra.mxu0 0.0
    %5051 = vmatprep.subr.mxu0 0.0
    %5052 = vmatpush2.msra.mxu0 0.0
    %5053 = vmatprep.subr.mxu0 0.0
    %5054 = vmatpush2.msra.mxu0 0.0
    %5055 = vmatprep.subr.mxu0 0.0
    %5056 = vmatpush2.msra.mxu0 0.0
    %5057 = vmatprep.subr.mxu0 0.0
    %5058 = vmatpush2.msra.mxu0 0.0
    %5059 = vmatprep.subr.mxu0 0.0
    %5060 = vmatpush2.msra.mxu0 0.0
    %5061 = vmatprep.subr.mxu0 0.0
    %5062 = vmatpush2.msra.mxu0 0.0
    %5063 = vmatprep.subr.mxu0 0.0
    %5064 = vmatpush2.msra.mxu0 0.0
    %5065 = vmatprep.subr.mxu0 0.0
    %5066 = vmatpush2.msra.mxu0 0.0
    %5067 = vmatprep.subr.mxu0 0.0
    %5068 = vmatpush2.msra.mxu0 0.0
    %5069 = vmatprep.subr.mxu0 0.0
    %5070 = vmatpush2.msra.mxu0 0.0
    %5071 = vmatprep.subr.mxu0 0.0
    %5072 = vmatpush2.msra.mxu0 0.0
    %5073 = vmatprep.mubr.f32.mxu0 0.0
    %5074 = vmatmul.mubr.f32.gmra.mxu0 %v4992
    %v5075 = vpop.f32.mrf.mxu0
    %v5076 = vadd.f32 0.0, %v5075
    %v5077 = vpop.f32.mrf.mxu0
    %5078 = vmatprep.mubr.f32.mxu0 0.0
    %5079 = vmatmul.mubr.f32.gmra.mxu0 %v4995
    %v5080 = vpop.f32.mrf.mxu0
    %v5081 = vadd.f32 0.0, %v5080
    %v5082 = vpop.f32.mrf.mxu0
    %5083 = vmatprep.mubr.f32.mxu0 0.0
    %5084 = vmatmul.mubr.f32.gmra.mxu0 %v4998
    %v5085 = vpop.f32.mrf.mxu0
    %v5086 = vadd.f32 0.0, %v5085
    %v5087 = vpop.f32.mrf.mxu0
    %5088 = vmatprep.mubr.f32.mxu0 0.0
    %5089 = vmatmul.mubr.f32.gmra.mxu0 %v5001
    %v5090 = vpop.f32.mrf.mxu0
    %v5091 = vadd.f32 0.0, %v5090
    %v5092 = vpop.f32.mrf.mxu0
    %5093 = vmatprep.mubr.f32.mxu0 0.0
    %5094 = vmatmul.mubr.f32.gmra.mxu0 %v5004
    %v5095 = vpop.f32.mrf.mxu0
    %v5096 = vadd.f32 0.0, %v5095
    %v5097 = vpop.f32.mrf.mxu0
    %5098 = vmatprep.mubr.f32.mxu0 0.0
    %5099 = vmatmul.mubr.f32.gmra.mxu0 %v5007
    %v5100 = vpop.f32.mrf.mxu0
    %v5101 = vadd.f32 0.0, %v5100
    %v5102 = vpop.f32.mrf.mxu0
    %5103 = vdwg.mxu0
    %v5104 = vlaneseq
    %v5105 = vshrl.u32 %v5104, 7
    %v5106 = vsub.s32 0, %v5105
    %v5107 = vrot.slane %v2880, %v5106
    %v5108 = vadd.f32 %v5107, %v5076
    %v5109 = vadd.f32 %v5107, %v5081
    %v5110 = vadd.f32 %v5107, %v5086
    %v5111 = vadd.f32 %v5107, %v5091
    %v5112 = vadd.f32 %v5107, %v5096
    %v5113 = vadd.f32 %v5107, %v5101
    %v5114 = vld [vmem:[%s2 + $0x218] sm:$0xff]
    %v5115 = vld [vmem:[%s2 + $0x220] sm:$0xff]
    %v5116 = vld [vmem:[%s2 + $0x228] sm:$0xff]
    %v5117 = vld [vmem:[%s2 + $0x230] sm:$0xff]
    %v5118 = vld [vmem:[%s2 + $0x281] sm:$0x1]
    %v5119 = vlaneseq
    %v5120 = vshrl.u32 %v5119, 7
    %v5121 = vsub.s32 0, %v5120
    %v5122 = vrot.slane %v5118, %v5121
    %5123 = vmatprep.subr.mxu0 0.0
    %5124 = vmatpush1.msra.mxu0 0.0
    %5125 = vmatprep.subr.mxu0 0.0
    %5126 = vmatpush1.msra.mxu0 0.0
    %5127 = vmatprep.subr.mxu0 0.0
    %5128 = vmatpush1.msra.mxu0 0.0
    %5129 = vmatprep.subr.mxu0 0.0
    %5130 = vmatpush1.msra.mxu0 0.0
    %5131 = vmatprep.subr.mxu0 0.0
    %5132 = vmatpush1.msra.mxu0 0.0
    %5133 = vmatprep.subr.mxu0 0.0
    %5134 = vmatpush1.msra.mxu0 0.0
    %5135 = vmatprep.subr.mxu0 0.0
    %5136 = vmatpush1.msra.mxu0 0.0
    %5137 = vmatprep.subr.mxu0 0.0
    %5138 = vmatpush1.msra.mxu0 0.0
    %5139 = vmatprep.subr.mxu0 0.0
    %5140 = vmatpush1.msra.mxu0 0.0
    %5141 = vmatprep.subr.mxu0 0.0
    %5142 = vmatpush1.msra.mxu0 0.0
    %5143 = vmatprep.subr.mxu0 0.0
    %5144 = vmatpush1.msra.mxu0 0.0
    %5145 = vmatprep.subr.mxu0 0.0
    %5146 = vmatpush1.msra.mxu0 0.0
    %5147 = vmatprep.subr.mxu0 0.0
    %5148 = vmatpush1.msra.mxu0 %v5117
    %5149 = vmatprep.subr.mxu0 0.0
    %5150 = vmatpush1.msra.mxu0 %v5116
    %5151 = vmatprep.subr.mxu0 0.0
    %5152 = vmatpush1.msra.mxu0 %v5115
    %5153 = vmatprep.subr.mxu0 0.0
    %5154 = vmatpush1.msra.mxu0 %v5114
    %5155 = vmatprep.subr.mxu0 0.0
    %5156 = vmatpush2.msra.mxu0 0.0
    %5157 = vmatprep.subr.mxu0 0.0
    %5158 = vmatpush2.msra.mxu0 0.0
    %5159 = vmatprep.subr.mxu0 0.0
    %5160 = vmatpush2.msra.mxu0 0.0
    %5161 = vmatprep.subr.mxu0 0.0
    %5162 = vmatpush2.msra.mxu0 0.0
    %5163 = vmatprep.subr.mxu0 0.0
    %5164 = vmatpush2.msra.mxu0 0.0
    %5165 = vmatprep.subr.mxu0 0.0
    %5166 = vmatpush2.msra.mxu0 0.0
    %5167 = vmatprep.subr.mxu0 0.0
    %5168 = vmatpush2.msra.mxu0 0.0
    %5169 = vmatprep.subr.mxu0 0.0
    %5170 = vmatpush2.msra.mxu0 0.0
    %5171 = vmatprep.subr.mxu0 0.0
    %5172 = vmatpush2.msra.mxu0 0.0
    %5173 = vmatprep.subr.mxu0 0.0
    %5174 = vmatpush2.msra.mxu0 0.0
    %5175 = vmatprep.subr.mxu0 0.0
    %5176 = vmatpush2.msra.mxu0 0.0
    %5177 = vmatprep.subr.mxu0 0.0
    %5178 = vmatpush2.msra.mxu0 0.0
    %5179 = vmatprep.subr.mxu0 0.0
    %5180 = vmatpush2.msra.mxu0 0.0
    %5181 = vmatprep.subr.mxu0 0.0
    %5182 = vmatpush2.msra.mxu0 0.0
    %5183 = vmatprep.subr.mxu0 0.0
    %5184 = vmatpush2.msra.mxu0 0.0
    %5185 = vmatprep.subr.mxu0 0.0
    %5186 = vmatpush2.msra.mxu0 0.0
    %5187 = vmatprep.mubr.f32.mxu0 0.0
    %5188 = vmatmul.mubr.f32.gmra.mxu0 %v4821
    %v5189 = vpop.f32.mrf.mxu0
    %v5190 = vadd.f32 %v5122, %v5189
    %v5191 = vpop.f32.mrf.mxu0
    %5192 = vmatprep.mubr.f32.mxu0 0.0
    %5193 = vmatmul.mubr.f32.gmra.mxu0 %v4824
    %v5194 = vpop.f32.mrf.mxu0
    %v5195 = vadd.f32 %v5122, %v5194
    %v5196 = vpop.f32.mrf.mxu0
    %5197 = vmatprep.mubr.f32.mxu0 0.0
    %5198 = vmatmul.mubr.f32.gmra.mxu0 %v4827
    %v5199 = vpop.f32.mrf.mxu0
    %v5200 = vadd.f32 %v5122, %v5199
    %v5201 = vpop.f32.mrf.mxu0
    %5202 = vmatprep.mubr.f32.mxu0 0.0
    %5203 = vmatmul.mubr.f32.gmra.mxu0 %v4830
    %v5204 = vpop.f32.mrf.mxu0
    %v5205 = vadd.f32 %v5122, %v5204
    %v5206 = vpop.f32.mrf.mxu0
    %5207 = vmatprep.mubr.f32.mxu0 0.0
    %5208 = vmatmul.mubr.f32.gmra.mxu0 %v4833
    %v5209 = vpop.f32.mrf.mxu0
    %v5210 = vadd.f32 %v5122, %v5209
    %v5211 = vpop.f32.mrf.mxu0
    %5212 = vmatprep.mubr.f32.mxu0 0.0
    %5213 = vmatmul.mubr.f32.gmra.mxu0 %v4836
    %v5214 = vpop.f32.mrf.mxu0
    %v5215 = vadd.f32 %v5122, %v5214
    %v5216 = vpop.f32.mrf.mxu0
    %5217 = vdwg.mxu0
    %v5218 = vmul.f32 %v5190, %v5190
    %v5219 = vmul.f32 %v5195, %v5195
    %v5220 = vmul.f32 %v5200, %v5200
    %v5221 = vmul.f32 %v5205, %v5205
    %v5222 = vmul.f32 %v5210, %v5210
    %v5223 = vmul.f32 %v5215, %v5215
    %v5224 = vmul.f32 %v5190, %v5218
    %v5225 = vmul.f32 %v5195, %v5219
    %v5226 = vmul.f32 %v5200, %v5220
    %v5227 = vmul.f32 %v5205, %v5221
    %v5228 = vmul.f32 %v5210, %v5222
    %v5229 = vmul.f32 %v5215, %v5223
    %v5230 = vmul.f32 %v5224, 0.044715
    %v5231 = vmul.f32 %v5225, 0.044715
    %v5232 = vmul.f32 %v5226, 0.044715
    %v5233 = vmul.f32 %v5227, 0.044715
    %v5234 = vmul.f32 %v5228, 0.044715
    %v5235 = vmul.f32 %v5229, 0.044715
    %v5236 = vadd.f32 %v5190, %v5230
    %v5237 = vadd.f32 %v5195, %v5231
    %v5238 = vadd.f32 %v5200, %v5232
    %v5239 = vadd.f32 %v5205, %v5233
    %v5240 = vadd.f32 %v5210, %v5234
    %v5241 = vadd.f32 %v5215, %v5235
    %v5242 = vmul.f32 %v5236, 0.7978846
    %v5243 = vmul.f32 %v5237, 0.7978846
    %v5244 = vmul.f32 %v5238, 0.7978846
    %v5245 = vmul.f32 %v5239, 0.7978846
    %v5246 = vmul.f32 %v5240, 0.7978846
    %v5247 = vmul.f32 %v5241, 0.7978846
    %v5248 = vtanh.pop %v5242
    %v5249 = vtanh.pop %v5243
    %v5250 = vtanh.pop %v5244
    %v5251 = vtanh.pop %v5245
    %v5252 = vtanh.pop %v5246
    %v5253 = vtanh.pop %v5247
    %v5254 = vadd.f32 %v5248, 1.0
    %v5255 = vadd.f32 %v5249, 1.0
    %v5256 = vadd.f32 %v5250, 1.0
    %v5257 = vadd.f32 %v5251, 1.0
    %v5258 = vadd.f32 %v5252, 1.0
    %v5259 = vadd.f32 %v5253, 1.0
    %v5260 = vmul.f32 %v5254, 0.5
    %v5261 = vmul.f32 %v5255, 0.5
    %v5262 = vmul.f32 %v5256, 0.5
    %v5263 = vmul.f32 %v5257, 0.5
    %v5264 = vmul.f32 %v5258, 0.5
    %v5265 = vmul.f32 %v5259, 0.5
    %v5266 = vmul.f32 %v5190, %v5260
    %v5267 = vmul.f32 %v5195, %v5261
    %v5268 = vmul.f32 %v5200, %v5262
    %v5269 = vmul.f32 %v5205, %v5263
    %v5270 = vmul.f32 %v5210, %v5264
    %v5271 = vmul.f32 %v5215, %v5265
    %v5272 = vld [vmem:[%s2 + $0x258] sm:$0xff]
    %v5273 = vld [vmem:[%s2 + $0x260] sm:$0xff]
    %v5274 = vld [vmem:[%s2 + $0x268] sm:$0xff]
    %v5275 = vld [vmem:[%s2 + $0x270] sm:$0xff]
    %v5277 = vsel %vm132, %v5266, 0
    %v5280 = vsel %vm132, %v5267, 0
    %v5283 = vsel %vm132, %v5268, 0
    %v5286 = vsel %vm132, %v5269, 0
    %v5289 = vsel %vm132, %v5270, 0
    %v5292 = vsel %vm132, %v5271, 0
    %5294 = vmatprep.subr.mxu0 0.0
    %5295 = vmatpush1.msra.mxu0 0.0
    %5296 = vmatprep.subr.mxu0 0.0
    %5297 = vmatpush1.msra.mxu0 0.0
    %5298 = vmatprep.subr.mxu0 0.0
    %5299 = vmatpush1.msra.mxu0 0.0
    %5300 = vmatprep.subr.mxu0 0.0
    %5301 = vmatpush1.msra.mxu0 0.0
    %5302 = vmatprep.subr.mxu0 0.0
    %5303 = vmatpush1.msra.mxu0 0.0
    %5304 = vmatprep.subr.mxu0 0.0
    %5305 = vmatpush1.msra.mxu0 0.0
    %5306 = vmatprep.subr.mxu0 0.0
    %5307 = vmatpush1.msra.mxu0 0.0
    %5308 = vmatprep.subr.mxu0 0.0
    %5309 = vmatpush1.msra.mxu0 0.0
    %5310 = vmatprep.subr.mxu0 0.0
    %5311 = vmatpush1.msra.mxu0 0.0
    %5312 = vmatprep.subr.mxu0 0.0
    %5313 = vmatpush1.msra.mxu0 0.0
    %5314 = vmatprep.subr.mxu0 0.0
    %5315 = vmatpush1.msra.mxu0 0.0
    %5316 = vmatprep.subr.mxu0 0.0
    %5317 = vmatpush1.msra.mxu0 0.0
    %5318 = vmatprep.subr.mxu0 0.0
    %5319 = vmatpush1.msra.mxu0 %v5275
    %5320 = vmatprep.subr.mxu0 0.0
    %5321 = vmatpush1.msra.mxu0 %v5274
    %5322 = vmatprep.subr.mxu0 0.0
    %5323 = vmatpush1.msra.mxu0 %v5273
    %5324 = vmatprep.subr.mxu0 0.0
    %5325 = vmatpush1.msra.mxu0 %v5272
    %5326 = vmatprep.subr.mxu0 0.0
    %5327 = vmatpush2.msra.mxu0 0.0
    %5328 = vmatprep.subr.mxu0 0.0
    %5329 = vmatpush2.msra.mxu0 0.0
    %5330 = vmatprep.subr.mxu0 0.0
    %5331 = vmatpush2.msra.mxu0 0.0
    %5332 = vmatprep.subr.mxu0 0.0
    %5333 = vmatpush2.msra.mxu0 0.0
    %5334 = vmatprep.subr.mxu0 0.0
    %5335 = vmatpush2.msra.mxu0 0.0
    %5336 = vmatprep.subr.mxu0 0.0
    %5337 = vmatpush2.msra.mxu0 0.0
    %5338 = vmatprep.subr.mxu0 0.0
    %5339 = vmatpush2.msra.mxu0 0.0
    %5340 = vmatprep.subr.mxu0 0.0
    %5341 = vmatpush2.msra.mxu0 0.0
    %5342 = vmatprep.subr.mxu0 0.0
    %5343 = vmatpush2.msra.mxu0 0.0
    %5344 = vmatprep.subr.mxu0 0.0
    %5345 = vmatpush2.msra.mxu0 0.0
    %5346 = vmatprep.subr.mxu0 0.0
    %5347 = vmatpush2.msra.mxu0 0.0
    %5348 = vmatprep.subr.mxu0 0.0
    %5349 = vmatpush2.msra.mxu0 0.0
    %5350 = vmatprep.subr.mxu0 0.0
    %5351 = vmatpush2.msra.mxu0 0.0
    %5352 = vmatprep.subr.mxu0 0.0
    %5353 = vmatpush2.msra.mxu0 0.0
    %5354 = vmatprep.subr.mxu0 0.0
    %5355 = vmatpush2.msra.mxu0 0.0
    %5356 = vmatprep.subr.mxu0 0.0
    %5357 = vmatpush2.msra.mxu0 0.0
    %5358 = vmatprep.mubr.f32.mxu0 0.0
    %5359 = vmatmul.mubr.f32.gmra.mxu0 %v5277
    %v5360 = vpop.f32.mrf.mxu0
    %v5361 = vadd.f32 0.0, %v5360
    %v5362 = vpop.f32.mrf.mxu0
    %5363 = vmatprep.mubr.f32.mxu0 0.0
    %5364 = vmatmul.mubr.f32.gmra.mxu0 %v5280
    %v5365 = vpop.f32.mrf.mxu0
    %v5366 = vadd.f32 0.0, %v5365
    %v5367 = vpop.f32.mrf.mxu0
    %5368 = vmatprep.mubr.f32.mxu0 0.0
    %5369 = vmatmul.mubr.f32.gmra.mxu0 %v5283
    %v5370 = vpop.f32.mrf.mxu0
    %v5371 = vadd.f32 0.0, %v5370
    %v5372 = vpop.f32.mrf.mxu0
    %5373 = vmatprep.mubr.f32.mxu0 0.0
    %5374 = vmatmul.mubr.f32.gmra.mxu0 %v5286
    %v5375 = vpop.f32.mrf.mxu0
    %v5376 = vadd.f32 0.0, %v5375
    %v5377 = vpop.f32.mrf.mxu0
    %5378 = vmatprep.mubr.f32.mxu0 0.0
    %5379 = vmatmul.mubr.f32.gmra.mxu0 %v5289
    %v5380 = vpop.f32.mrf.mxu0
    %v5381 = vadd.f32 0.0, %v5380
    %v5382 = vpop.f32.mrf.mxu0
    %5383 = vmatprep.mubr.f32.mxu0 0.0
    %5384 = vmatmul.mubr.f32.gmra.mxu0 %v5292
    %v5385 = vpop.f32.mrf.mxu0
    %v5386 = vadd.f32 0.0, %v5385
    %v5387 = vpop.f32.mrf.mxu0
    %5388 = vdwg.mxu0
    %v5389 = vadd.f32 %v5108, %v5361
    %v5390 = vadd.f32 %v5109, %v5366
    %v5391 = vadd.f32 %v5110, %v5371
    %v5392 = vadd.f32 %v5111, %v5376
    %v5393 = vadd.f32 %v5112, %v5381
    %v5394 = vadd.f32 %v5113, %v5386
    %v5395 = vadd.f32 %v4707, %v5389
    %v5396 = vadd.f32 %v4708, %v5390
    %v5397 = vadd.f32 %v4709, %v5391
    %v5398 = vadd.f32 %v4710, %v5392
    %v5399 = vadd.f32 %v4711, %v5393
    %v5400 = vadd.f32 %v4712, %v5394
    %v5401 = vld [vmem:[%s2 + $0x288] sm:$0x1]
    %v5402 = vld [vmem:[%s2 + $0x289] sm:$0x1]
    %v5403 = vsel %vm132, %v5395, 0.0
    %5404 = vadd.xlane.f32.xlu0 %v5403
    %v5405 = vpop.xlane.xlu0 %5404
    %v5406 = vsel %vm132, %v5396, 0.0
    %5407 = vadd.xlane.f32.xlu0 %v5406
    %v5408 = vpop.xlane.xlu0 %5407
    %v5409 = vsel %vm132, %v5397, 0.0
    %5410 = vadd.xlane.f32.xlu0 %v5409
    %v5411 = vpop.xlane.xlu0 %5410
    %v5412 = vsel %vm132, %v5398, 0.0
    %5413 = vadd.xlane.f32.xlu0 %v5412
    %v5414 = vpop.xlane.xlu0 %5413
    %v5415 = vsel %vm132, %v5399, 0.0
    %5416 = vadd.xlane.f32.xlu0 %v5415
    %v5417 = vpop.xlane.xlu0 %5416
    %v5418 = vsel %vm132, %v5400, 0.0
    %5419 = vadd.xlane.f32.xlu0 %v5418
    %v5420 = vpop.xlane.xlu0 %5419
    %v5421 = vmul.f32 %v5405, %v370
    %v5422 = vmul.f32 %v5408, %v370
    %v5423 = vmul.f32 %v5411, %v370
    %v5424 = vmul.f32 %v5414, %v370
    %v5425 = vmul.f32 %v5417, %v370
    %v5426 = vmul.f32 %v5420, %v370
    %v5427 = vsub.f32 %v5395, %v5421
    %v5428 = vsub.f32 %v5396, %v5422
    %v5429 = vsub.f32 %v5397, %v5423
    %v5430 = vsub.f32 %v5398, %v5424
    %v5431 = vsub.f32 %v5399, %v5425
    %v5432 = vsub.f32 %v5400, %v5426
    %v5433 = vmul.f32 %v5427, %v5427
    %v5434 = vmul.f32 %v5428, %v5428
    %v5435 = vmul.f32 %v5429, %v5429
    %v5436 = vmul.f32 %v5430, %v5430
    %v5437 = vmul.f32 %v5431, %v5431
    %v5438 = vmul.f32 %v5432, %v5432
    %v5439 = vsel %vm132, %v5433, 0.0
    %5440 = vadd.xlane.f32.xlu0 %v5439
    %v5441 = vpop.xlane.xlu0 %5440
    %v5442 = vsel %vm132, %v5434, 0.0
    %5443 = vadd.xlane.f32.xlu0 %v5442
    %v5444 = vpop.xlane.xlu0 %5443
    %v5445 = vsel %vm132, %v5435, 0.0
    %5446 = vadd.xlane.f32.xlu0 %v5445
    %v5447 = vpop.xlane.xlu0 %5446
    %v5448 = vsel %vm132, %v5436, 0.0
    %5449 = vadd.xlane.f32.xlu0 %v5448
    %v5450 = vpop.xlane.xlu0 %5449
    %v5451 = vsel %vm132, %v5437, 0.0
    %5452 = vadd.xlane.f32.xlu0 %v5451
    %v5453 = vpop.xlane.xlu0 %5452
    %v5454 = vsel %vm132, %v5438, 0.0
    %5455 = vadd.xlane.f32.xlu0 %v5454
    %v5456 = vpop.xlane.xlu0 %5455
    %v5457 = vmul.f32 %v5441, %v370
    %v5458 = vmul.f32 %v5444, %v370
    %v5459 = vmul.f32 %v5447, %v370
    %v5460 = vmul.f32 %v5450, %v370
    %v5461 = vmul.f32 %v5453, %v370
    %v5462 = vmul.f32 %v5456, %v370
    %v5463 = vadd.f32 %v5457, 1e-06
    %v5464 = vadd.f32 %v5458, 1e-06
    %v5465 = vadd.f32 %v5459, 1e-06
    %v5466 = vadd.f32 %v5460, 1e-06
    %v5467 = vadd.f32 %v5461, 1e-06
    %v5468 = vadd.f32 %v5462, 1e-06
    %v5469 = vrsqrt.pop %v5463
    %v5470 = vrsqrt.pop %v5464
    %v5471 = vrsqrt.pop %v5465
    %v5472 = vrsqrt.pop %v5466
    %v5473 = vrsqrt.pop %v5467
    %v5474 = vrsqrt.pop %v5468
    %v5475 = vmul.f32 %v5427, %v5469
    %v5476 = vmul.f32 %v5428, %v5470
    %v5477 = vmul.f32 %v5429, %v5471
    %v5478 = vmul.f32 %v5430, %v5472
    %v5479 = vmul.f32 %v5431, %v5473
    %v5480 = vmul.f32 %v5432, %v5474
    %v5481 = vlaneseq
    %v5482 = vshrl.u32 %v5481, 7
    %v5483 = vsub.s32 0, %v5482
    %v5484 = vrot.slane %v5401, %v5483
    %v5485 = vmul.f32 %v5475, %v5484
    %v5486 = vmul.f32 %v5476, %v5484
    %v5487 = vmul.f32 %v5477, %v5484
    %v5488 = vmul.f32 %v5478, %v5484
    %v5489 = vmul.f32 %v5479, %v5484
    %v5490 = vmul.f32 %v5480, %v5484
    %v5491 = vlaneseq
    %v5492 = vshrl.u32 %v5491, 7
    %v5493 = vsub.s32 0, %v5492
    %v5494 = vrot.slane %v5402, %v5493
    %v5495 = vadd.f32 %v5485, %v5494
    %v5496 = vadd.f32 %v5486, %v5494
    %v5497 = vadd.f32 %v5487, %v5494
    %v5498 = vadd.f32 %v5488, %v5494
    %v5499 = vadd.f32 %v5489, %v5494
    %v5500 = vadd.f32 %v5490, %v5494
    %v5501 = vmul.u32 %v245, 24
    %vm5502 = vcmp.ge.s32.totalorder %v252, %v5501
    %v5503 = vadd.s32 %v5501, 21
    %vm5504 = vcmp.lt.s32.totalorder %v252, %v5503
    %vm5505 = vmand %vm5502, %vm5504
    %v5506 = vsel %vm5505, 0.04761905, 0.0
    %v5508 = vsel %vm29, %v5506, 0
    %5510 = vmatprep.subr.mxu0 0.0
    %5511 = vmatpush1.msra.mxu0 0.0
    %5512 = vmatprep.subr.mxu0 0.0
    %5513 = vmatpush1.msra.mxu0 0.0
    %5514 = vmatprep.subr.mxu0 0.0
    %5515 = vmatpush1.msra.mxu0 0.0
    %5516 = vmatprep.subr.mxu0 0.0
    %5517 = vmatpush1.msra.mxu0 0.0
    %5518 = vmatprep.subr.mxu0 0.0
    %5519 = vmatpush1.msra.mxu0 0.0
    %5520 = vmatprep.subr.mxu0 0.0
    %5521 = vmatpush1.msra.mxu0 0.0
    %5522 = vmatprep.subr.mxu0 0.0
    %5523 = vmatpush1.msra.mxu0 0.0
    %5524 = vmatprep.subr.mxu0 0.0
    %5525 = vmatpush1.msra.mxu0 0.0
    %5526 = vmatprep.subr.mxu0 0.0
    %5527 = vmatpush1.msra.mxu0 0.0
    %5528 = vmatprep.subr.mxu0 0.0
    %5529 = vmatpush1.msra.mxu0 0.0
    %5530 = vmatprep.subr.mxu0 0.0
    %5531 = vmatpush1.msra.mxu0 %v5500
    %5532 = vmatprep.subr.mxu0 0.0
    %5533 = vmatpush1.msra.mxu0 %v5499
    %5534 = vmatprep.subr.mxu0 0.0
    %5535 = vmatpush1.msra.mxu0 %v5498
    %5536 = vmatprep.subr.mxu0 0.0
    %5537 = vmatpush1.msra.mxu0 %v5497
    %5538 = vmatprep.subr.mxu0 0.0
    %5539 = vmatpush1.msra.mxu0 %v5496
    %5540 = vmatprep.subr.mxu0 0.0
    %5541 = vmatpush1.msra.mxu0 %v5495
    %5542 = vmatprep.subr.mxu0 0.0
    %5543 = vmatpush2.msra.mxu0 0.0
    %5544 = vmatprep.subr.mxu0 0.0
    %5545 = vmatpush2.msra.mxu0 0.0
    %5546 = vmatprep.subr.mxu0 0.0
    %5547 = vmatpush2.msra.mxu0 0.0
    %5548 = vmatprep.subr.mxu0 0.0
    %5549 = vmatpush2.msra.mxu0 0.0
    %5550 = vmatprep.subr.mxu0 0.0
    %5551 = vmatpush2.msra.mxu0 0.0
    %5552 = vmatprep.subr.mxu0 0.0
    %5553 = vmatpush2.msra.mxu0 0.0
    %5554 = vmatprep.subr.mxu0 0.0
    %5555 = vmatpush2.msra.mxu0 0.0
    %5556 = vmatprep.subr.mxu0 0.0
    %5557 = vmatpush2.msra.mxu0 0.0
    %5558 = vmatprep.subr.mxu0 0.0
    %5559 = vmatpush2.msra.mxu0 0.0
    %5560 = vmatprep.subr.mxu0 0.0
    %5561 = vmatpush2.msra.mxu0 0.0
    %5562 = vmatprep.subr.mxu0 0.0
    %5563 = vmatpush2.msra.mxu0 0.0
    %5564 = vmatprep.subr.mxu0 0.0
    %5565 = vmatpush2.msra.mxu0 0.0
    %5566 = vmatprep.subr.mxu0 0.0
    %5567 = vmatpush2.msra.mxu0 0.0
    %5568 = vmatprep.subr.mxu0 0.0
    %5569 = vmatpush2.msra.mxu0 0.0
    %5570 = vmatprep.subr.mxu0 0.0
    %5571 = vmatpush2.msra.mxu0 0.0
    %5572 = vmatprep.subr.mxu0 0.0
    %5573 = vmatpush2.msra.mxu0 0.0
    %5574 = vmatprep.mubr.f32.mxu0 0.0
    %5575 = vmatmul.mubr.f32.gmra.mxu0 %v5508
    %v5576 = vpop.f32.mrf.mxu0
    %v5577 = vadd.f32 0.0, %v5576
    %v5578 = vpop.f32.mrf.mxu0
    %5579 = vdwg.mxu0
    %vm5580 = vcmask 254976
    %5581 = vst.msk [vmem:[#allocation4] sm:$0x3] %vm5580, %v5577
    %v5582 = vld [vmem:[%s2 + $0x290] sm:$0xff]
    %v5583 = vld [vmem:[%s2 + $0x298] sm:$0xff]
    %v5584 = vld [vmem:[%s2 + $0x2a0] sm:$0xff]
    %v5585 = vld [vmem:[%s2 + $0x2a8] sm:$0xff]
    %v5586 = vld [vmem:[%s2 + $0x28a] sm:$0x1]
    %v5587 = vlaneseq
    %v5588 = vshrl.u32 %v5587, 7
    %v5589 = vsub.s32 0, %v5588
    %v5590 = vrot.slane %v5586, %v5589
    %v5592 = vsel %vm132, %v5577, 0
    %5594 = vmatprep.subr.mxu0 0.0
    %5595 = vmatpush1.msra.mxu0 0.0
    %5596 = vmatprep.subr.mxu0 0.0
    %5597 = vmatpush1.msra.mxu0 0.0
    %5598 = vmatprep.subr.mxu0 0.0
    %5599 = vmatpush1.msra.mxu0 0.0
    %5600 = vmatprep.subr.mxu0 0.0
    %5601 = vmatpush1.msra.mxu0 0.0
    %5602 = vmatprep.subr.mxu0 0.0
    %5603 = vmatpush1.msra.mxu0 0.0
    %5604 = vmatprep.subr.mxu0 0.0
    %5605 = vmatpush1.msra.mxu0 0.0
    %5606 = vmatprep.subr.mxu0 0.0
    %5607 = vmatpush1.msra.mxu0 0.0
    %5608 = vmatprep.subr.mxu0 0.0
    %5609 = vmatpush1.msra.mxu0 0.0
    %5610 = vmatprep.subr.mxu0 0.0
    %5611 = vmatpush1.msra.mxu0 0.0
    %5612 = vmatprep.subr.mxu0 0.0
    %5613 = vmatpush1.msra.mxu0 0.0
    %5614 = vmatprep.subr.mxu0 0.0
    %5615 = vmatpush1.msra.mxu0 0.0
    %5616 = vmatprep.subr.mxu0 0.0
    %5617 = vmatpush1.msra.mxu0 0.0
    %5618 = vmatprep.subr.mxu0 0.0
    %5619 = vmatpush1.msra.mxu0 %v5585
    %5620 = vmatprep.subr.mxu0 0.0
    %5621 = vmatpush1.msra.mxu0 %v5584
    %5622 = vmatprep.subr.mxu0 0.0
    %5623 = vmatpush1.msra.mxu0 %v5583
    %5624 = vmatprep.subr.mxu0 0.0
    %5625 = vmatpush1.msra.mxu0 %v5582
    %5626 = vmatprep.subr.mxu0 0.0
    %5627 = vmatpush2.msra.mxu0 0.0
    %5628 = vmatprep.subr.mxu0 0.0
    %5629 = vmatpush2.msra.mxu0 0.0
    %5630 = vmatprep.subr.mxu0 0.0
    %5631 = vmatpush2.msra.mxu0 0.0
    %5632 = vmatprep.subr.mxu0 0.0
    %5633 = vmatpush2.msra.mxu0 0.0
    %5634 = vmatprep.subr.mxu0 0.0
    %5635 = vmatpush2.msra.mxu0 0.0
    %5636 = vmatprep.subr.mxu0 0.0
    %5637 = vmatpush2.msra.mxu0 0.0
    %5638 = vmatprep.subr.mxu0 0.0
    %5639 = vmatpush2.msra.mxu0 0.0
    %5640 = vmatprep.subr.mxu0 0.0
    %5641 = vmatpush2.msra.mxu0 0.0
    %5642 = vmatprep.subr.mxu0 0.0
    %5643 = vmatpush2.msra.mxu0 0.0
    %5644 = vmatprep.subr.mxu0 0.0
    %5645 = vmatpush2.msra.mxu0 0.0
    %5646 = vmatprep.subr.mxu0 0.0
    %5647 = vmatpush2.msra.mxu0 0.0
    %5648 = vmatprep.subr.mxu0 0.0
    %5649 = vmatpush2.msra.mxu0 0.0
    %5650 = vmatprep.subr.mxu0 0.0
    %5651 = vmatpush2.msra.mxu0 0.0
    %5652 = vmatprep.subr.mxu0 0.0
    %5653 = vmatpush2.msra.mxu0 0.0
    %5654 = vmatprep.subr.mxu0 0.0
    %5655 = vmatpush2.msra.mxu0 0.0
    %5656 = vmatprep.subr.mxu0 0.0
    %5657 = vmatpush2.msra.mxu0 0.0
    %5658 = vmatprep.mubr.f32.mxu0 0.0
    %5659 = vmatmul.mubr.f32.gmra.mxu0 %v5592
    %v5660 = vpop.f32.mrf.mxu0
    %v5661 = vadd.f32 %v5590, %v5660
    %v5662 = vpop.f32.mrf.mxu0
    %5663 = vdwg.mxu0
    %vm5664 = vcmask 9216
    %5665 = vst.msk [vmem:[#allocation2] sm:$0x3] %vm5664, %v5661
    // Predicated region
    $region14: #{llnm_forward.1} parent=1 // pred_check
      _
    $region15: #{llnm_forward.1} parent=1 // pred_check_branch
      %5667 = sbr.rel (0) target = $region17
    $region16: #{llnm_forward.1} parent=1 // pred_region
      %s5669 = ssub.s32 32, 32
      %5670 = vsyncadd [#allocation3], %s5669
      %s5672 = sshll.u32 [#allocation2], 4
      %s5673 = int_to_ptr.vmem [resolvable:$true] %s5672
      %5675 = dma.vmem_to_hbm [thread:$0]  %s5673, 32, %s3, [#allocation3]
    $region17: #{llnm_forward.1} parent=1 // pred_fallthru
      _
    // Predicated region
    $region18: #{llnm_forward.1} parent=1 // pred_check
      _
    $region19: #{llnm_forward.1} parent=1 // pred_check_branch
      %5677 = sbr.rel (0) target = $region21
    $region20: #{llnm_forward.1} parent=1 // pred_region
      %s5679 = ssub.s32 32, 32
      %5680 = vsyncadd [#allocation5], %s5679
      %s5682 = sshll.u32 [#allocation4], 4
      %s5683 = int_to_ptr.vmem [resolvable:$true] %s5682
      %5685 = dma.vmem_to_hbm [thread:$0]  %s5683, 32, %s4, [#allocation5]
    $region21: #{llnm_forward.1} parent=1 // pred_fallthru
      _
    // Predicated region
    $region22: #{llnm_forward.1} parent=1 // pred_check
      _
    $region23: #{llnm_forward.1} parent=1 // pred_check_branch
      %5687 = sbr.rel (0) target = $region25
    $region24: #{llnm_forward.1} parent=1 // pred_region
      _
    $region25: #{llnm_forward.1} parent=1 // pred_fallthru
      _
    // Predicated region
    $region26: #{llnm_forward.1} parent=1 // pred_check
      _
    $region27: #{llnm_forward.1} parent=1 // pred_check_branch
      %5689 = sbr.rel (0) target = $region29
    $region28: #{llnm_forward.1} parent=1 // pred_region
      %5690 = dma.done [#allocation3], 32
    $region29: #{llnm_forward.1} parent=1 // pred_fallthru
      _
    // Predicated region
    $region30: #{llnm_forward.1} parent=1 // pred_check
      _
    $region31: #{llnm_forward.1} parent=1 // pred_check_branch
      %5692 = sbr.rel (0) target = $region33
    $region32: #{llnm_forward.1} parent=1 // pred_region
      %5693 = dma.done [#allocation5], 32
    $region33: #{llnm_forward.1} parent=1 // pred_fallthru
      _
    // Predicated region
    $region34: #{llnm_forward.1} parent=1 // pred_check
      _
    $region35: #{llnm_forward.1} parent=1 // pred_check_branch
      %5695 = sbr.rel (0) target = $region37
    $region36: #{llnm_forward.1} parent=1 // pred_region
      _
    $region37: #{llnm_forward.1} parent=1 // pred_fallthru
      _
    %5696 = vsyncpa [#allocation3], 1
    %5697 = vsyncpa [#allocation5], 1

</llo_original>
